<compile_context>
chip_gen: v5e
topology: v5e:2x2
jax: 0.10.0
libtpu: 0.0.40
codegen_flags: <defaults>
</compile_context>

<pallas_src>
import functools

import jax
import jax.numpy as jnp
from jax import lax
from jax.experimental import pallas as pl
from jax.experimental.pallas import tpu as pltpu


# ----------------------------------------------------------------------------
# Pallas kernel
# ----------------------------------------------------------------------------
def _make_bottleneck_kernel(H, W, Cin, P, Cout, TH, downsampling):
    """Fused bottleneck kernel for one (batch, row-tile) grid point."""
    bf16 = jnp.bfloat16

    def kernel(x_ref, w1_ref, b1_ref, w2_ref, b2_ref, w3_ref, b3_ref,
               out_ref, pad_ref):
        t = pl.program_id(1)
        nt = pl.num_programs(1)
        # First row (in the zero-row-padded image) touched by this tile.
        r0 = pl.multiple_of(t * TH, TH)

        # ---- conv1 (1x1) + bias + ReLU over TH+2 halo rows ------------------
        # x_ref holds the zero-row-padded bf16 image (H+2 rows), resident per n.
        xh = x_ref[:, pl.ds(r0, TH + 2), :, :]                   # (1,TH+2,W,Cin)
        y1 = jnp.dot(xh.reshape((TH + 2) * W, Cin), w1_ref[...],
                     preferred_element_type=jnp.float32)
        y1 = jnp.maximum(y1 + b1_ref[...], 0.0)                  # ((TH+2)*W, P)
        pad_ref[:, 1:W + 1, :] = y1.reshape(TH + 2, W, P).astype(bf16)

        # Halo rows coming from the zero-padded image rows must be exactly
        # zero (conv2's padding pads y1 with zeros, not with relu(bias)).
        # NOTE: these stores must stay AFTER the interior y1 store above.
        @pl.when(t == 0)
        def _():
            pad_ref[0:1, :, :] = jnp.zeros((1, W + 2, P), bf16)

        @pl.when(t == nt - 1)
        def _():
            pad_ref[TH + 1:TH + 2, :, :] = jnp.zeros((1, W + 2, P), bf16)

        # Left/right halo columns: zero every step (cheap), never the interior.
        pad_ref[:, 0:1, :] = jnp.zeros((TH + 2, 1, P), bf16)
        pad_ref[:, W + 1:W + 2, :] = jnp.zeros((TH + 2, 1, P), bf16)

        # ---- conv2 (3x3, stride 1, pad 1): 3 accumulating K=3P dots ----------
        # One im2col slab per kh keeps only a third of the 9P slab live.
        y2 = None
        for kh in range(3):
            slab = jnp.concatenate(
                [pad_ref[kh:kh + TH, kw:kw + W, :].reshape(TH * W, P)
                 for kw in range(3)], axis=1)                    # (TH*W, 3P) bf16
            part = jnp.dot(slab, w2_ref[kh * 3 * P:(kh + 1) * 3 * P, :],
                           preferred_element_type=jnp.float32)
            y2 = part if y2 is None else y2 + part
        y2 = jnp.maximum(y2 + b2_ref[...], 0.0)                  # (TH*W, P) f32

        # ---- conv3 (1x1) + residual -------------------------------------------
        xt = x_ref[:, pl.ds(r0 + 1, TH), :, :].reshape(TH * W, Cin)   # bf16
        if downsampling:
            # Fused [w3; wd]: residual add happens inside MXU accumulation.
            lhs = jnp.concatenate([y2.astype(bf16), xt], axis=1)      # (TH*W, P+Cin)
            out = jnp.dot(lhs, w3_ref[...],
                          preferred_element_type=jnp.float32) + b3_ref[...]
        else:
            out = (jnp.dot(y2.astype(bf16), w3_ref[...],
                           preferred_element_type=jnp.float32)
                   + b3_ref[...] + xt)                           # Cin == Cout

        out = jnp.maximum(out, 0.0)
        out_ref[...] = out.reshape(1, TH, W, Cout).astype(out_ref.dtype)

    return kernel


def _vmem_limit_bytes():
    """Per-generation VMEM budget: ~3/4 of capacity (96 MiB v5e/v6e, 48 MiB v7x)."""
    try:
        cap = pltpu.get_tpu_info().vmem_capacity_bytes
    except Exception:
        cap = 64 * 1024 * 1024            # conservative fallback
    return int(min(cap * 3 // 4, 100 * 1024 * 1024))


def bottleneck_pallas(x, params, *, downsampling, th_rows=32):
    """x: (N, H, W, Cin) float32 NHWC. Returns (N, H, W, Cout) float32."""
    N, H, W, Cin = x.shape
    w1, b1 = params["w1"], params["b1"]
    w2, b2 = params["w2"], params["b2"]
    w3, b3 = params["w3"], params["b3"]     # fused [w3; wd] / b3+bd if downsampling
    P = w1.shape[1]
    Cout = w3.shape[1]
    if not downsampling:
        assert Cin == Cout, "identity residual requires Cin == Cout"

    # Row tile: biggest divisor of H <= th_rows (less halo recompute, bigger
    # GEMMs); then shrink if needed so v7x's two TensorCores both get work.
    TH = min(th_rows, H)
    while H % TH != 0:
        TH -= 1
    while (N * (H // TH) < 2 and TH > 1 and TH % 2 == 0
           and H % (TH // 2) == 0):
        TH //= 2
    assert H % TH == 0

    # bf16 input + zero-row padding along H so every tile reads TH+2 rows.
    x_pad = jnp.pad(x.astype(jnp.bfloat16), ((0, 0), (1, 1), (0, 0), (0, 0)))

    full = lambda shape: pl.BlockSpec(shape, lambda n, t: (0,) * len(shape))

    in_specs = [
        pl.BlockSpec((1, H + 2, W, Cin), lambda n, t: (n, 0, 0, 0)),  # x (resident per n)
        full((Cin, P)), full((1, P)),            # conv1 (scale-folded) + bias
        full((9 * P, P)), full((1, P)),          # conv2 im2col weight + bias
        full(w3.shape), full((1, Cout)),         # conv3 (fused w/ downsample) + bias
    ]
    args = [x_pad, w1, b1, w2, b2, w3, b3]

    kernel = _make_bottleneck_kernel(H, W, Cin, P, Cout, TH, downsampling)

    return pl.pallas_call(
        kernel,
        out_shape=jax.ShapeDtypeStruct((N, H, W, Cout), jnp.float32),
        grid_spec=pltpu.PrefetchScalarGridSpec(
            num_scalar_prefetch=0,
            grid=(N, H // TH),
            in_specs=in_specs,
            out_specs=pl.BlockSpec((1, TH, W, Cout), lambda n, t: (n, t, 0, 0)),
            scratch_shapes=[pltpu.VMEM((TH + 2, W + 2, P), jnp.bfloat16)],
        ),
        compiler_params=pltpu.CompilerParams(
            dimension_semantics=("parallel", "parallel"),
            vmem_limit_bytes=_vmem_limit_bytes(),
        ),
    )(*args)


# ----------------------------------------------------------------------------
# Parameter construction (deterministic) and host-side weight preparation
# ----------------------------------------------------------------------------
def _bn_fold(gamma, beta, mean, var, eps=1e-5):
    scale = gamma / jnp.sqrt(var + eps)
    bias = beta - mean * scale
    return scale, bias


def make_raw_params(key, in_places, places, expansion, downsampling):
    """PyTorch-module-like params: HWIO conv weights + eval-mode BN stats."""
    cout = places * expansion
    ks = jax.random.split(key, 8)

    def conv_w(k, kh, kw, cin, co):
        fan_in = kh * kw * cin
        return jax.random.normal(k, (kh, kw, cin, co), jnp.float32) / jnp.sqrt(fan_in)

    def bn(k, c):
        kg, kb, km, kv = jax.random.split(k, 4)
        gamma = jax.random.uniform(kg, (c,), jnp.float32, 0.8, 1.2)
        beta = jax.random.normal(kb, (c,), jnp.float32) * 0.1
        mean = jax.random.normal(km, (c,), jnp.float32) * 0.1
        var = jax.random.uniform(kv, (c,), jnp.float32, 0.8, 1.2)
        return gamma, beta, mean, var

    raw = dict(
        w1=conv_w(ks[0], 1, 1, in_places, places), bn1=bn(ks[1], places),
        w2=conv_w(ks[2], 3, 3, places, places),   bn2=bn(ks[3], places),
        w3=conv_w(ks[4], 1, 1, places, cout),     bn3=bn(ks[5], cout),
    )
    if downsampling:
        raw["wd"] = conv_w(ks[6], 1, 1, in_places, cout)
        raw["bnd"] = bn(ks[7], cout)
    return raw


def prepare_kernel_params(raw, *, downsampling):
    """Fold BN scale into conv weights, reshape to GEMM/im2col form, cast bf16.
    For downsampling blocks, conv3 and the downsample 1x1 are fused into one
    (P+Cin, Cout) weight with a pre-summed bias."""
    def fold(w_hwio, bn):
        s, b = _bn_fold(*bn)
        w = (w_hwio * s).astype(jnp.bfloat16)          # per-out-channel scale fold
        return w, b.reshape(1, -1).astype(jnp.float32)

    w1, b1 = fold(raw["w1"], raw["bn1"])
    w2, b2 = fold(raw["w2"], raw["bn2"])
    w3, b3 = fold(raw["w3"], raw["bn3"])
    cin = raw["w1"].shape[-2]
    P = raw["w1"].shape[-1]
    cout = raw["w3"].shape[-1]
    kp = dict(
        w1=w1.reshape(cin, P), b1=b1,
        w2=w2.reshape(9 * P, P), b2=b2,                # (kh,kw,ci) -> im2col K
    )
    if downsampling:
        wd, bd = fold(raw["wd"], raw["bnd"])
        kp["w3"] = jnp.concatenate(
            [w3.reshape(P, cout), wd.reshape(cin, cout)], axis=0)   # (P+Cin, Cout)
        kp["b3"] = b3 + bd
    else:
        kp["w3"] = w3.reshape(P, cout)
        kp["b3"] = b3
    return kp


# ----------------------------------------------------------------------------
# References for verification
# ----------------------------------------------------------------------------
def bottleneck_reference_f32(x, raw, *, downsampling):
    """Pure-f32 NHWC reference of the PyTorch module (eval-mode BN)."""
    conv = functools.partial(
        lax.conv_general_dilated, window_strides=(1, 1),
        dimension_numbers=("NHWC", "HWIO", "NHWC"),
        precision=lax.Precision.HIGHEST)

    def bn_apply(y, bn):
        gamma, beta, mean, var = bn
        return (y - mean) / jnp.sqrt(var + 1e-5) * gamma + beta

    out = jnp.maximum(bn_apply(conv(x, raw["w1"], padding=[(0, 0), (0, 0)]), raw["bn1"]), 0.0)
    out = jnp.maximum(bn_apply(conv(out, raw["w2"], padding=[(1, 1), (1, 1)]), raw["bn2"]), 0.0)
    out = bn_apply(conv(out, raw["w3"], padding=[(0, 0), (0, 0)]), raw["bn3"])
    res = x
    if downsampling:
        res = bn_apply(conv(x, raw["wd"], padding=[(0, 0), (0, 0)]), raw["bnd"])
    return jnp.maximum(out + res, 0.0)


def bottleneck_reference_matched(x, kp, *, downsampling):
    """Reference at kernel precision (bf16 operands incl. the residual, f32
    accumulation), built from the same folded weights the kernel consumes."""
    bf16, f32 = jnp.bfloat16, jnp.float32
    xb = x.astype(bf16)
    P = kp["w1"].shape[1]

    def conv1x1(inp, w, b=None):
        y = jnp.einsum("nhwc,cd->nhwd", inp.astype(bf16), w,
                       preferred_element_type=f32)
        if b is not None:
            y = y + b.reshape(1, 1, 1, -1)
        return y

    y1 = jnp.maximum(conv1x1(xb, kp["w1"], kp["b1"]), 0.0)
    w2 = kp["w2"].reshape(3, 3, P, P)
    y2 = lax.conv_general_dilated(
        y1.astype(bf16), w2, (1, 1), [(1, 1), (1, 1)],
        dimension_numbers=("NHWC", "HWIO", "NHWC"),
        preferred_element_type=f32) + kp["b2"].reshape(1, 1, 1, -1)
    y2 = jnp.maximum(y2, 0.0)
    if downsampling:
        y3 = (conv1x1(y2, kp["w3"][:P]) + conv1x1(xb, kp["w3"][P:])
              + kp["b3"].reshape(1, 1, 1, -1))
        return jnp.maximum(y3, 0.0)
    y3 = conv1x1(y2, kp["w3"], kp["b3"])
    return jnp.maximum(y3 + xb.astype(f32), 0.0)


# ----------------------------------------------------------------------------
if __name__ == "__main__":
    import numpy as np

    key = jax.random.PRNGKey(0)
    N, H, W = 2, 16, 16
    places, expansion = 128, 4          # P = 128, Cout = 512: lane-dense channels

    # Config A: downsampling residual (1x1 conv + BN on the residual path).
    in_a = 256
    kx, kpk, key = jax.random.split(key, 3)
    x_a = jax.random.normal(kx, (N, H, W, in_a), jnp.float32)
    raw_a = make_raw_params(kpk, in_a, places, expansion, downsampling=True)
    kp_a = prepare_kernel_params(raw_a, downsampling=True)
    out_a = jax.block_until_ready(bottleneck_pallas(x_a, kp_a, downsampling=True))
    ref_a = bottleneck_reference_matched(x_a, kp_a, downsampling=True)
    np.testing.assert_allclose(np.asarray(out_a), np.asarray(ref_a),
                               rtol=5e-3, atol=5e-3)
    ref_a32 = bottleneck_reference_f32(x_a, raw_a, downsampling=True)
    np.testing.assert_allclose(np.asarray(out_a), np.asarray(ref_a32),
                               rtol=5e-2, atol=2e-1)   # loose: bf16 vs f32 reference

    # Config B: identity residual (in_places == places * expansion).
    in_b = places * expansion
    kx2, kpk2, key = jax.random.split(key, 3)
    x_b = jax.random.normal(kx2, (N, H, W, in_b), jnp.float32)
    raw_b = make_raw_params(kpk2, in_b, places, expansion, downsampling=False)
    kp_b = prepare_kernel_params(raw_b, downsampling=False)
    out_b = jax.block_until_ready(bottleneck_pallas(x_b, kp_b, downsampling=False))
    ref_b = bottleneck_reference_matched(x_b, kp_b, downsampling=False)
    np.testing.assert_allclose(np.asarray(out_b), np.asarray(ref_b),
                               rtol=5e-3, atol=5e-3)
    ref_b32 = bottleneck_reference_f32(x_b, raw_b, downsampling=False)
    np.testing.assert_allclose(np.asarray(out_b), np.asarray(ref_b32),
                               rtol=5e-2, atol=2e-1)

    print("KERNEL_OK")
</pallas_src>

<mosaic_0001>
module attributes {stable_mosaic.version = 11 : i64} {
  func.func @kernel(%arg0: i32, %arg1: i32, %arg2: memref<1x18x16x256xbf16, #tpu.memory_space<vmem>>, %arg3: memref<256x128xbf16, #tpu.memory_space<vmem>>, %arg4: memref<1x128xf32, #tpu.memory_space<vmem>>, %arg5: memref<1152x128xbf16, #tpu.memory_space<vmem>>, %arg6: memref<1x128xf32, #tpu.memory_space<vmem>>, %arg7: memref<384x512xbf16, #tpu.memory_space<vmem>>, %arg8: memref<1x512xf32, #tpu.memory_space<vmem>>, %arg9: memref<1x16x16x512xf32, #tpu.memory_space<vmem>>, %arg10: memref<18x18x128xbf16, #tpu.memory_space<vmem>>) attributes {dimension_semantics = [#tpu.dimension_semantics<parallel>, #tpu.dimension_semantics<parallel>], iteration_bounds = array<i64: 2, 1>, scalar_prefetch = 0 : i64, scratch_operands = 1 : i64, tpu.core_type = #tpu.core_type<tc>, window_params = [{transform_indices = @transform_0, window_bounds = array<i64: 1, 18, 16, 256>}, {pipeline_mode = #tpu.pipeline_mode<synchronous>, transform_indices = @transform_1, window_bounds = array<i64: 256, 128>}, {pipeline_mode = #tpu.pipeline_mode<synchronous>, transform_indices = @transform_2, window_bounds = array<i64: 1, 128>}, {pipeline_mode = #tpu.pipeline_mode<synchronous>, transform_indices = @transform_3, window_bounds = array<i64: 1152, 128>}, {pipeline_mode = #tpu.pipeline_mode<synchronous>, transform_indices = @transform_4, window_bounds = array<i64: 1, 128>}, {pipeline_mode = #tpu.pipeline_mode<synchronous>, transform_indices = @transform_5, window_bounds = array<i64: 384, 512>}, {pipeline_mode = #tpu.pipeline_mode<synchronous>, transform_indices = @transform_6, window_bounds = array<i64: 1, 512>}, {transform_indices = @transform_7, window_bounds = array<i64: 1, 16, 16, 512>}]} {
    %c16_i32 = arith.constant 16 : i32
    %0 = arith.muli %arg1, %c16_i32 : i32
    %1 = tpu.assume_multiple %0, 16 : i32
    %c0 = arith.constant 0 : index
    %2 = arith.index_cast %1 : i32 to index
    %c0_0 = arith.constant 0 : index
    %c0_1 = arith.constant 0 : index
    %3 = vector.load %arg2[%c0, %2, %c0_0, %c0_1] : memref<1x18x16x256xbf16, #tpu.memory_space<vmem>>, vector<1x18x16x256xbf16>
    %4 = vector.shape_cast %3 : vector<1x18x16x256xbf16> to vector<288x256xbf16>
    %c0_2 = arith.constant 0 : index
    %c0_3 = arith.constant 0 : index
    %5 = vector.load %arg3[%c0_2, %c0_3] : memref<256x128xbf16, #tpu.memory_space<vmem>>, vector<256x128xbf16>
    %cst = arith.constant dense<0.000000e+00> : vector<288x128xf32>
    %6 = tpu.matmul %4, %5, %cst {dimension_numbers = #tpu.dot_dimension_numbers<[1], [0], [0], [1], [0, 0, 1, 1], [], []>} : vector<288x256xbf16>, vector<256x128xbf16>, vector<288x128xf32> -> vector<288x128xf32>
    %c0_4 = arith.constant 0 : index
    %c0_5 = arith.constant 0 : index
    %7 = vector.load %arg4[%c0_4, %c0_5] : memref<1x128xf32, #tpu.memory_space<vmem>>, vector<1x128xf32>
    %8 = vector.broadcast %7 : vector<1x128xf32> to vector<288x128xf32>
    %9 = arith.addf %6, %8 : vector<288x128xf32>
    %cst_6 = arith.constant 0.000000e+00 : f32
    %10 = vector.broadcast %cst_6 : f32 to vector<288x128xf32>
    %11 = arith.maximumf %9, %10 : vector<288x128xf32>
    %12 = vector.shape_cast %11 : vector<288x128xf32> to vector<18x16x128xf32>
    %13 = arith.truncf %12 : vector<18x16x128xf32> to vector<18x16x128xbf16>
    %c0_7 = arith.constant 0 : index
    %c1 = arith.constant 1 : index
    %c0_8 = arith.constant 0 : index
    %14 = vector.load %arg10[%c0_7, %c1, %c0_8] : memref<18x18x128xbf16, #tpu.memory_space<vmem>>, vector<18x16x128xbf16>
    tpu.vector_store %arg10[%c0_7, %c1, %c0_8], %13 {strides = array<i32>} : memref<18x18x128xbf16, #tpu.memory_space<vmem>>, vector<18x16x128xbf16>,
    %c0_i32 = arith.constant 0 : i32
    %15 = arith.cmpi eq, %arg1, %c0_i32 : i32
    %16 = arith.extui %15 : i1 to i32
    %c0_i32_9 = arith.constant 0 : i32
    %17 = arith.cmpi ne, %16, %c0_i32_9 : i32
    scf.if %17 {
      %cst_68 = arith.constant 0.000000e+00 : bf16
      %74 = vector.broadcast %cst_68 : bf16 to vector<1x18x128xbf16>
      %c0_69 = arith.constant 0 : index
      %c0_70 = arith.constant 0 : index
      %c0_71 = arith.constant 0 : index
      %75 = vector.load %arg10[%c0_69, %c0_70, %c0_71] : memref<18x18x128xbf16, #tpu.memory_space<vmem>>, vector<1x18x128xbf16>
      tpu.vector_store %arg10[%c0_69, %c0_70, %c0_71], %74 {strides = array<i32>} : memref<18x18x128xbf16, #tpu.memory_space<vmem>>, vector<1x18x128xbf16>,
    } else {
    }
    %c0_i32_10 = arith.constant 0 : i32
    %18 = arith.cmpi eq, %arg1, %c0_i32_10 : i32
    %19 = arith.extui %18 : i1 to i32
    %c0_i32_11 = arith.constant 0 : i32
    %20 = arith.cmpi ne, %19, %c0_i32_11 : i32
    scf.if %20 {
      %cst_68 = arith.constant 0.000000e+00 : bf16
      %74 = vector.broadcast %cst_68 : bf16 to vector<1x18x128xbf16>
      %c17_69 = arith.constant 17 : index
      %c0_70 = arith.constant 0 : index
      %c0_71 = arith.constant 0 : index
      %75 = vector.load %arg10[%c17_69, %c0_70, %c0_71] : memref<18x18x128xbf16, #tpu.memory_space<vmem>>, vector<1x18x128xbf16>
      tpu.vector_store %arg10[%c17_69, %c0_70, %c0_71], %74 {strides = array<i32>} : memref<18x18x128xbf16, #tpu.memory_space<vmem>>, vector<1x18x128xbf16>,
    } else {
    }
    %cst_12 = arith.constant 0.000000e+00 : bf16
    %21 = vector.broadcast %cst_12 : bf16 to vector<18x1x128xbf16>
    %c0_13 = arith.constant 0 : index
    %c0_14 = arith.constant 0 : index
    %c0_15 = arith.constant 0 : index
    %22 = vector.load %arg10[%c0_13, %c0_14, %c0_15] : memref<18x18x128xbf16, #tpu.memory_space<vmem>>, vector<18x1x128xbf16>
    tpu.vector_store %arg10[%c0_13, %c0_14, %c0_15], %21 {strides = array<i32>} : memref<18x18x128xbf16, #tpu.memory_space<vmem>>, vector<18x1x128xbf16>,
    %cst_16 = arith.constant 0.000000e+00 : bf16
    %23 = vector.broadcast %cst_16 : bf16 to vector<18x1x128xbf16>
    %c0_17 = arith.constant 0 : index
    %c17 = arith.constant 17 : index
    %c0_18 = arith.constant 0 : index
    %24 = vector.load %arg10[%c0_17, %c17, %c0_18] : memref<18x18x128xbf16, #tpu.memory_space<vmem>>, vector<18x1x128xbf16>
    tpu.vector_store %arg10[%c0_17, %c17, %c0_18], %23 {strides = array<i32>} : memref<18x18x128xbf16, #tpu.memory_space<vmem>>, vector<18x1x128xbf16>,
    %c0_19 = arith.constant 0 : index
    %c0_20 = arith.constant 0 : index
    %c0_21 = arith.constant 0 : index
    %25 = vector.load %arg10[%c0_19, %c0_20, %c0_21] : memref<18x18x128xbf16, #tpu.memory_space<vmem>>, vector<16x16x128xbf16>
    %26 = vector.shape_cast %25 : vector<16x16x128xbf16> to vector<256x128xbf16>
    %c0_22 = arith.constant 0 : index
    %c1_23 = arith.constant 1 : index
    %c0_24 = arith.constant 0 : index
    %27 = vector.load %arg10[%c0_22, %c1_23, %c0_24] : memref<18x18x128xbf16, #tpu.memory_space<vmem>>, vector<16x16x128xbf16>
    %28 = vector.shape_cast %27 : vector<16x16x128xbf16> to vector<256x128xbf16>
    %c0_25 = arith.constant 0 : index
    %c2 = arith.constant 2 : index
    %c0_26 = arith.constant 0 : index
    %29 = vector.load %arg10[%c0_25, %c2, %c0_26] : memref<18x18x128xbf16, #tpu.memory_space<vmem>>, vector<16x16x128xbf16>
    %30 = vector.shape_cast %29 : vector<16x16x128xbf16> to vector<256x128xbf16>
    %31 = tpu.concatenate %26, %28, %30 in 1 : vector<256x128xbf16>, vector<256x128xbf16>, vector<256x128xbf16> -> vector<256x384xbf16>
    %c0_27 = arith.constant 0 : index
    %c0_28 = arith.constant 0 : index
    %32 = vector.load %arg5[%c0_27, %c0_28] : memref<1152x128xbf16, #tpu.memory_space<vmem>>, vector<384x128xbf16>
    %cst_29 = arith.constant dense<0.000000e+00> : vector<256x128xf32>
    %33 = tpu.matmul %31, %32, %cst_29 {dimension_numbers = #tpu.dot_dimension_numbers<[1], [0], [0], [1], [0, 0, 1, 1], [], []>} : vector<256x384xbf16>, vector<384x128xbf16>, vector<256x128xf32> -> vector<256x128xf32>
    %c1_30 = arith.constant 1 : index
    %c0_31 = arith.constant 0 : index
    %c0_32 = arith.constant 0 : index
    %34 = vector.load %arg10[%c1_30, %c0_31, %c0_32] : memref<18x18x128xbf16, #tpu.memory_space<vmem>>, vector<16x16x128xbf16>
    %35 = vector.shape_cast %34 : vector<16x16x128xbf16> to vector<256x128xbf16>
    %c1_33 = arith.constant 1 : index
    %c1_34 = arith.constant 1 : index
    %c0_35 = arith.constant 0 : index
    %36 = vector.load %arg10[%c1_33, %c1_34, %c0_35] : memref<18x18x128xbf16, #tpu.memory_space<vmem>>, vector<16x16x128xbf16>
    %37 = vector.shape_cast %36 : vector<16x16x128xbf16> to vector<256x128xbf16>
    %c1_36 = arith.constant 1 : index
    %c2_37 = arith.constant 2 : index
    %c0_38 = arith.constant 0 : index
    %38 = vector.load %arg10[%c1_36, %c2_37, %c0_38] : memref<18x18x128xbf16, #tpu.memory_space<vmem>>, vector<16x16x128xbf16>
    %39 = vector.shape_cast %38 : vector<16x16x128xbf16> to vector<256x128xbf16>
    %40 = tpu.concatenate %35, %37, %39 in 1 : vector<256x128xbf16>, vector<256x128xbf16>, vector<256x128xbf16> -> vector<256x384xbf16>
    %c384 = arith.constant 384 : index
    %c0_39 = arith.constant 0 : index
    %41 = vector.load %arg5[%c384, %c0_39] : memref<1152x128xbf16, #tpu.memory_space<vmem>>, vector<384x128xbf16>
    %cst_40 = arith.constant dense<0.000000e+00> : vector<256x128xf32>
    %42 = tpu.matmul %40, %41, %cst_40 {dimension_numbers = #tpu.dot_dimension_numbers<[1], [0], [0], [1], [0, 0, 1, 1], [], []>} : vector<256x384xbf16>, vector<384x128xbf16>, vector<256x128xf32> -> vector<256x128xf32>
    %43 = arith.addf %33, %42 : vector<256x128xf32>
    %c2_41 = arith.constant 2 : index
    %c0_42 = arith.constant 0 : index
    %c0_43 = arith.constant 0 : index
    %44 = vector.load %arg10[%c2_41, %c0_42, %c0_43] : memref<18x18x128xbf16, #tpu.memory_space<vmem>>, vector<16x16x128xbf16>
    %45 = vector.shape_cast %44 : vector<16x16x128xbf16> to vector<256x128xbf16>
    %c2_44 = arith.constant 2 : index
    %c1_45 = arith.constant 1 : index
    %c0_46 = arith.constant 0 : index
    %46 = vector.load %arg10[%c2_44, %c1_45, %c0_46] : memref<18x18x128xbf16, #tpu.memory_space<vmem>>, vector<16x16x128xbf16>
    %47 = vector.shape_cast %46 : vector<16x16x128xbf16> to vector<256x128xbf16>
    %c2_47 = arith.constant 2 : index
    %c2_48 = arith.constant 2 : index
    %c0_49 = arith.constant 0 : index
    %48 = vector.load %arg10[%c2_47, %c2_48, %c0_49] : memref<18x18x128xbf16, #tpu.memory_space<vmem>>, vector<16x16x128xbf16>
    %49 = vector.shape_cast %48 : vector<16x16x128xbf16> to vector<256x128xbf16>
    %50 = tpu.concatenate %45, %47, %49 in 1 : vector<256x128xbf16>, vector<256x128xbf16>, vector<256x128xbf16> -> vector<256x384xbf16>
    %c768 = arith.constant 768 : index
    %c0_50 = arith.constant 0 : index
    %51 = vector.load %arg5[%c768, %c0_50] : memref<1152x128xbf16, #tpu.memory_space<vmem>>, vector<384x128xbf16>
    %cst_51 = arith.constant dense<0.000000e+00> : vector<256x128xf32>
    %52 = tpu.matmul %50, %51, %cst_51 {dimension_numbers = #tpu.dot_dimension_numbers<[1], [0], [0], [1], [0, 0, 1, 1], [], []>} : vector<256x384xbf16>, vector<384x128xbf16>, vector<256x128xf32> -> vector<256x128xf32>
    %53 = arith.addf %43, %52 : vector<256x128xf32>
    %c0_52 = arith.constant 0 : index
    %c0_53 = arith.constant 0 : index
    %54 = vector.load %arg6[%c0_52, %c0_53] : memref<1x128xf32, #tpu.memory_space<vmem>>, vector<1x128xf32>
    %55 = vector.broadcast %54 : vector<1x128xf32> to vector<256x128xf32>
    %56 = arith.addf %53, %55 : vector<256x128xf32>
    %cst_54 = arith.constant 0.000000e+00 : f32
    %57 = vector.broadcast %cst_54 : f32 to vector<256x128xf32>
    %58 = arith.maximumf %56, %57 : vector<256x128xf32>
    %c1_i32 = arith.constant 1 : i32
    %59 = arith.addi %1, %c1_i32 : i32
    %c0_55 = arith.constant 0 : index
    %60 = arith.index_cast %59 : i32 to index
    %c0_56 = arith.constant 0 : index
    %c0_57 = arith.constant 0 : index
    %61 = vector.load %arg2[%c0_55, %60, %c0_56, %c0_57] : memref<1x18x16x256xbf16, #tpu.memory_space<vmem>>, vector<1x16x16x256xbf16>
    %62 = vector.shape_cast %61 : vector<1x16x16x256xbf16> to vector<256x256xbf16>
    %63 = arith.truncf %58 : vector<256x128xf32> to vector<256x128xbf16>
    %64 = tpu.concatenate %63, %62 in 1 : vector<256x128xbf16>, vector<256x256xbf16> -> vector<256x384xbf16>
    %c0_58 = arith.constant 0 : index
    %c0_59 = arith.constant 0 : index
    %65 = vector.load %arg7[%c0_58, %c0_59] : memref<384x512xbf16, #tpu.memory_space<vmem>>, vector<384x512xbf16>
    %cst_60 = arith.constant dense<0.000000e+00> : vector<256x512xf32>
    %66 = tpu.matmul %64, %65, %cst_60 {dimension_numbers = #tpu.dot_dimension_numbers<[1], [0], [0], [1], [0, 0, 1, 1], [], []>} : vector<256x384xbf16>, vector<384x512xbf16>, vector<256x512xf32> -> vector<256x512xf32>
    %c0_61 = arith.constant 0 : index
    %c0_62 = arith.constant 0 : index
    %67 = vector.load %arg8[%c0_61, %c0_62] : memref<1x512xf32, #tpu.memory_space<vmem>>, vector<1x512xf32>
    %68 = vector.broadcast %67 : vector<1x512xf32> to vector<256x512xf32>
    %69 = arith.addf %66, %68 : vector<256x512xf32>
    %cst_63 = arith.constant 0.000000e+00 : f32
    %70 = vector.broadcast %cst_63 : f32 to vector<256x512xf32>
    %71 = arith.maximumf %69, %70 : vector<256x512xf32>
    %72 = vector.shape_cast %71 : vector<256x512xf32> to vector<1x16x16x512xf32>
    %c0_64 = arith.constant 0 : index
    %c0_65 = arith.constant 0 : index
    %c0_66 = arith.constant 0 : index
    %c0_67 = arith.constant 0 : index
    %73 = vector.load %arg9[%c0_64, %c0_65, %c0_66, %c0_67] : memref<1x16x16x512xf32, #tpu.memory_space<vmem>>, vector<1x16x16x512xf32>
    tpu.vector_store %arg9[%c0_64, %c0_65, %c0_66, %c0_67], %72 {strides = array<i32>} : memref<1x16x16x512xf32, #tpu.memory_space<vmem>>, vector<1x16x16x512xf32>,
    return
  }
  func.func @transform_0(%arg0: i32, %arg1: i32) -> (i32, i32, i32, i32) {
    %c0_i32 = arith.constant 0 : i32
    %c0_i32_0 = arith.constant 0 : i32
    %c0_i32_1 = arith.constant 0 : i32
    %c0_i32_2 = arith.constant 0 : i32
    return %arg0, %c0_i32, %c0_i32_0, %c0_i32_1 : i32, i32, i32, i32
  }
  func.func @transform_1(%arg0: i32, %arg1: i32) -> (i32, i32) {
    %c0_i32 = arith.constant 0 : i32
    %c0_i32_0 = arith.constant 0 : i32
    %c0_i32_1 = arith.constant 0 : i32
    return %c0_i32, %c0_i32_0 : i32, i32
  }
  func.func @transform_2(%arg0: i32, %arg1: i32) -> (i32, i32) {
    %c0_i32 = arith.constant 0 : i32
    %c0_i32_0 = arith.constant 0 : i32
    %c0_i32_1 = arith.constant 0 : i32
    return %c0_i32, %c0_i32_0 : i32, i32
  }
  func.func @transform_3(%arg0: i32, %arg1: i32) -> (i32, i32) {
    %c0_i32 = arith.constant 0 : i32
    %c0_i32_0 = arith.constant 0 : i32
    %c0_i32_1 = arith.constant 0 : i32
    return %c0_i32, %c0_i32_0 : i32, i32
  }
  func.func @transform_4(%arg0: i32, %arg1: i32) -> (i32, i32) {
    %c0_i32 = arith.constant 0 : i32
    %c0_i32_0 = arith.constant 0 : i32
    %c0_i32_1 = arith.constant 0 : i32
    return %c0_i32, %c0_i32_0 : i32, i32
  }
  func.func @transform_5(%arg0: i32, %arg1: i32) -> (i32, i32) {
    %c0_i32 = arith.constant 0 : i32
    %c0_i32_0 = arith.constant 0 : i32
    %c0_i32_1 = arith.constant 0 : i32
    return %c0_i32, %c0_i32_0 : i32, i32
  }
  func.func @transform_6(%arg0: i32, %arg1: i32) -> (i32, i32) {
    %c0_i32 = arith.constant 0 : i32
    %c0_i32_0 = arith.constant 0 : i32
    %c0_i32_1 = arith.constant 0 : i32
    return %c0_i32, %c0_i32_0 : i32, i32
  }
  func.func @transform_7(%arg0: i32, %arg1: i32) -> (i32, i32, i32, i32) {
    %c0_i32 = arith.constant 0 : i32
    %c0_i32_0 = arith.constant 0 : i32
    %c0_i32_1 = arith.constant 0 : i32
    return %arg0, %arg1, %c0_i32, %c0_i32_0 : i32, i32, i32, i32
  }
}

</mosaic_0001>

<llo_original>
// kernel: tpu_custom_call.1
$region0: #{tpu_custom_call.1}
  #allocation0 [shape = 'u32[]', space=smem, size = 0x4, offset = 0x4, fixed_abs, tag = 'smem constant byte address 0x4 - core index']
  #allocation1 [shape = 'u32[72,128]{1,0:T(1,128)}', space=vmem, size = 0x9000, scoped, tag = 'internal scratch']
  #allocation2 [shape = 'bf16[18,18,128]{2,1,0:T(8,128)(2,1)}', space=vmem, size = 0x1b000, scoped, tag = 'scratch operand']
  %s0 = inlined_call_operand.hbm [shape: bf16[2,18,16,256], index: 0, kind: input, shape index: {}]
  %s1 = inlined_call_operand.hbm [shape: bf16[256,128], index: 1, kind: input, shape index: {}]
  %s2 = inlined_call_operand.vmem [shape: f32[1,128], index: 2, kind: input, shape index: {}]
  %s3 = inlined_call_operand.hbm [shape: bf16[1152,128], index: 3, kind: input, shape index: {}]
  %s4 = inlined_call_operand.hbm [shape: f32[1,128], index: 4, kind: input, shape index: {}]
  %s5 = inlined_call_operand.hbm [shape: bf16[384,512], index: 5, kind: input, shape index: {}]
  %s6 = inlined_call_operand.vmem [shape: f32[1,512], index: 6, kind: input, shape index: {}]
  %s7 = inlined_call_operand.hbm [shape: f32[2,16,16,512], index: 7, kind: output, shape index: {}]
  %s8 = sld [smem:[#allocation0]]
  $region85: #{tpu_custom_call.1} parent=0
    _
  %s10 = ssub.s32 1, %s8
  %s11 = scalar_select 0, %s10, %s8
  $region1: #{tpu_custom_call.1} parent=0
    #allocation3 [shape = 'u8[294912]{0}', space=vmem, size = 0x48000, scoped, tag = 'input window, operand 0']
    #allocation4 [shape = 's32[2]{0}', space=sflag, size = 0x8, scoped, tag = 'scoped memory for tpu_custom_call.1']
    #allocation5 [shape = 's32[2]{0}', space=sflag, size = 0x8, scoped, tag = 'scoped memory for tpu_custom_call.1']
    #allocation6 [shape = 'u8[65536]{0}', space=vmem, size = 0x10000, scoped, tag = 'input window, operand 1, single buffered']
    #allocation7 [shape = 's32[1]{0}', space=sflag, size = 0x4, scoped, tag = 'scoped memory for tpu_custom_call.1']
    #allocation8 [shape = 'u8[294912]{0}', space=vmem, size = 0x48000, scoped, tag = 'input window, operand 3, single buffered']
    #allocation9 [shape = 'u8[512]{0}', space=vmem, size = 0x400, scoped, tag = 'input window, operand 4, single buffered']
    #allocation10 [shape = 's32[1]{0}', space=sflag, size = 0x4, scoped, tag = 'scoped memory for tpu_custom_call.1']
    #allocation11 [shape = 'u8[393216]{0}', space=vmem, size = 0x60000, scoped, tag = 'input window, operand 5, single buffered']
    #allocation12 [shape = 'u8[1048576]{0}', space=vmem, size = 0x100000, scoped, tag = 'output window, operand 0']
    %12 = vsyncpa [#allocation4], 0
    %s13 = scalar_lea.sflag [#allocation4], 1
    %14 = vsyncpa %s13, 0
    %15 = vsyncpa [#allocation7], 0
    %16 = vsyncpa [#allocation10], 0
    %17 = vsyncpa [#allocation5], 0
    %s18 = scalar_lea.sflag [#allocation5], 1
    %19 = vsyncpa %s18, 0
    loop: start=0, step=1, limit=4
    $region2: #{tpu_custom_call.1} parent=1 // loop_pre_header
      _
    $region3: #{tpu_custom_call.1} parent=1 // loop_header
      %s21 = sphi 0, %s25
      %p22 = scmp.ge.s32.totalorder %s21, 4
      %s28 = sphi 0, %s40
      %s29 = sphi 0, %s36
      %s30 = sphi 0, %s28
      %s31 = sphi 0, %s29
      %s32 = sphi 0, %s30
      %s33 = sphi 0, %s31
      %s43 = sphi 0, %s45
      %s46 = sphi 0, %s43
      %s47 = sphi 0, %s46
      %s63 = sphi 0, %s47
      %s67 = sphi 0, %s67
      %s69 = sphi 0, %s67
      %s70 = sphi 0, %s69
      %s84 = sphi 0, %s70
      %s88 = sphi 0, %s88
      %s90 = sphi 0, %s88
      %s91 = sphi 0, %s90
      %s105 = sphi 0, %s91
      %s109 = sphi 0, %s109
      %s111 = sphi 0, %s109
      %s112 = sphi 0, %s111
      %s126 = sphi 0, %s112
      %s130 = sphi 0, %s130
      %s132 = sphi 0, %s130
      %s133 = sphi 0, %s132
      %s147 = sphi 0, %s133
      %s151 = sphi 0, %s151
      %s153 = sphi 0, %s151
      %s154 = sphi 0, %s153
      %s168 = sphi 0, %s154
      %s172 = sphi 0, %s172
      %s174 = sphi 0, %s172
      %s175 = sphi 0, %s174
      %s189 = sphi 0, %s175
      %s197 = sphi 0, %s199
      %s200 = sphi 0, %s197
      %s201 = sphi 0, %s200
      %s217 = sphi 0, %s201
    $region4: #{tpu_custom_call.1} parent=1 // loop_header_branch
      %24 = sbr.rel (%p22) target = $region8
    $region5: #{tpu_custom_call.1} parent=1 // loop_body
      %s26 = ssub.s32 %s21, 1
      %s27 = ssub.s32 %s21, 2
      %s34 = sadd.s32 1, %s29
      %p35 = scmp.ge.s32.totalorder %s34, 1
      %s36 = scalar_select %p35, 0, %s34
      %s37 = sadd.s32 1, %s28
      %s38 = scalar_select %p35, %s37, %s28
      %p39 = scmp.ge.s32.totalorder %s38, 2
      %s40 = scalar_select %p39, 0, %s38
      %s41 = ssub.s32 %s28, %s40
      %p42 = scmp.eq.s32.totalorder %s41, 0
      %s44 = sadd.s32 %s43, 1
      %s45 = scalar_select %p42, %s43, %s44
      %p48 = pneg %p42
      %p49 = scmp.eq.s32.totalorder %s21, 1
      %p50 = por %p48, %p49
      %p51 = scmp.ne.s32.totalorder %s43, %s46
      %p52 = scmp.eq.s32.totalorder %s21, 0
      %p53 = por %p51, %p52
      %p54 = scmp.ne.s32.totalorder %s43, %s46
      %p55 = scmp.eq.s32.totalorder %s26, 1
      %p56 = por %p54, %p55
      %p57 = scmp.ne.s32.totalorder %s46, %s47
      %p58 = scmp.eq.s32.totalorder %s26, 0
      %p59 = por %p57, %p58
      %p60 = scmp.ne.s32.totalorder %s46, %s47
      %p61 = scmp.eq.s32.totalorder %s27, 1
      %p62 = por %p60, %p61
      %p64 = scmp.ne.s32.totalorder %s47, %s63
      %p65 = scmp.eq.s32.totalorder %s27, 0
      %p66 = por %p64, %p65
      %s68 = sadd.s32 %s67, 1
      %p71 = scmp.eq.s32.totalorder %s21, 1
      %p72 = scmp.ne.s32.totalorder %s67, %s69
      %p73 = scmp.eq.s32.totalorder %s21, 0
      %p74 = por %p72, %p73
      %p75 = scmp.ne.s32.totalorder %s67, %s69
      %p76 = scmp.eq.s32.totalorder %s26, 1
      %p77 = por %p75, %p76
      %p78 = scmp.ne.s32.totalorder %s69, %s70
      %p79 = scmp.eq.s32.totalorder %s26, 0
      %p80 = por %p78, %p79
      %p81 = scmp.ne.s32.totalorder %s69, %s70
      %p82 = scmp.eq.s32.totalorder %s27, 1
      %p83 = por %p81, %p82
      %p85 = scmp.ne.s32.totalorder %s70, %s84
      %p86 = scmp.eq.s32.totalorder %s27, 0
      %p87 = por %p85, %p86
      %s89 = sadd.s32 %s88, 1
      %p92 = scmp.eq.s32.totalorder %s21, 1
      %p93 = scmp.ne.s32.totalorder %s88, %s90
      %p94 = scmp.eq.s32.totalorder %s21, 0
      %p95 = por %p93, %p94
      %p96 = scmp.ne.s32.totalorder %s88, %s90
      %p97 = scmp.eq.s32.totalorder %s26, 1
      %p98 = por %p96, %p97
      %p99 = scmp.ne.s32.totalorder %s90, %s91
      %p100 = scmp.eq.s32.totalorder %s26, 0
      %p101 = por %p99, %p100
      %p102 = scmp.ne.s32.totalorder %s90, %s91
      %p103 = scmp.eq.s32.totalorder %s27, 1
      %p104 = por %p102, %p103
      %p106 = scmp.ne.s32.totalorder %s91, %s105
      %p107 = scmp.eq.s32.totalorder %s27, 0
      %p108 = por %p106, %p107
      %s110 = sadd.s32 %s109, 1
      %p113 = scmp.eq.s32.totalorder %s21, 1
      %p114 = scmp.ne.s32.totalorder %s109, %s111
      %p115 = scmp.eq.s32.totalorder %s21, 0
      %p116 = por %p114, %p115
      %p117 = scmp.ne.s32.totalorder %s109, %s111
      %p118 = scmp.eq.s32.totalorder %s26, 1
      %p119 = por %p117, %p118
      %p120 = scmp.ne.s32.totalorder %s111, %s112
      %p121 = scmp.eq.s32.totalorder %s26, 0
      %p122 = por %p120, %p121
      %p123 = scmp.ne.s32.totalorder %s111, %s112
      %p124 = scmp.eq.s32.totalorder %s27, 1
      %p125 = por %p123, %p124
      %p127 = scmp.ne.s32.totalorder %s112, %s126
      %p128 = scmp.eq.s32.totalorder %s27, 0
      %p129 = por %p127, %p128
      %s131 = sadd.s32 %s130, 1
      %p134 = scmp.eq.s32.totalorder %s21, 1
      %p135 = scmp.ne.s32.totalorder %s130, %s132
      %p136 = scmp.eq.s32.totalorder %s21, 0
      %p137 = por %p135, %p136
      %p138 = scmp.ne.s32.totalorder %s130, %s132
      %p139 = scmp.eq.s32.totalorder %s26, 1
      %p140 = por %p138, %p139
      %p141 = scmp.ne.s32.totalorder %s132, %s133
      %p142 = scmp.eq.s32.totalorder %s26, 0
      %p143 = por %p141, %p142
      %p144 = scmp.ne.s32.totalorder %s132, %s133
      %p145 = scmp.eq.s32.totalorder %s27, 1
      %p146 = por %p144, %p145
      %p148 = scmp.ne.s32.totalorder %s133, %s147
      %p149 = scmp.eq.s32.totalorder %s27, 0
      %p150 = por %p148, %p149
      %s152 = sadd.s32 %s151, 1
      %p155 = scmp.eq.s32.totalorder %s21, 1
      %p156 = scmp.ne.s32.totalorder %s151, %s153
      %p157 = scmp.eq.s32.totalorder %s21, 0
      %p158 = por %p156, %p157
      %p159 = scmp.ne.s32.totalorder %s151, %s153
      %p160 = scmp.eq.s32.totalorder %s26, 1
      %p161 = por %p159, %p160
      %p162 = scmp.ne.s32.totalorder %s153, %s154
      %p163 = scmp.eq.s32.totalorder %s26, 0
      %p164 = por %p162, %p163
      %p165 = scmp.ne.s32.totalorder %s153, %s154
      %p166 = scmp.eq.s32.totalorder %s27, 1
      %p167 = por %p165, %p166
      %p169 = scmp.ne.s32.totalorder %s154, %s168
      %p170 = scmp.eq.s32.totalorder %s27, 0
      %p171 = por %p169, %p170
      %s173 = sadd.s32 %s172, 1
      %p176 = scmp.eq.s32.totalorder %s21, 1
      %p177 = scmp.ne.s32.totalorder %s172, %s174
      %p178 = scmp.eq.s32.totalorder %s21, 0
      %p179 = por %p177, %p178
      %p180 = scmp.ne.s32.totalorder %s172, %s174
      %p181 = scmp.eq.s32.totalorder %s26, 1
      %p182 = por %p180, %p181
      %p183 = scmp.ne.s32.totalorder %s174, %s175
      %p184 = scmp.eq.s32.totalorder %s26, 0
      %p185 = por %p183, %p184
      %p186 = scmp.ne.s32.totalorder %s174, %s175
      %p187 = scmp.eq.s32.totalorder %s27, 1
      %p188 = por %p186, %p187
      %p190 = scmp.ne.s32.totalorder %s175, %s189
      %p191 = scmp.eq.s32.totalorder %s27, 0
      %p192 = por %p190, %p191
      %s193 = ssub.s32 %s28, %s40
      %s194 = ssub.s32 %s29, %s36
      %s195 = sor.u32 %s193, %s194
      %p196 = scmp.eq.s32.totalorder %s195, 0
      %s198 = sadd.s32 %s197, 1
      %s199 = scalar_select %p196, %s197, %s198
      %p202 = pneg %p196
      %p203 = scmp.eq.s32.totalorder %s21, 1
      %p204 = por %p202, %p203
      %p205 = scmp.ne.s32.totalorder %s197, %s200
      %p206 = scmp.eq.s32.totalorder %s21, 0
      %p207 = por %p205, %p206
      %p208 = scmp.ne.s32.totalorder %s197, %s200
      %p209 = scmp.eq.s32.totalorder %s26, 1
      %p210 = por %p208, %p209
      %p211 = scmp.ne.s32.totalorder %s200, %s201
      %p212 = scmp.eq.s32.totalorder %s26, 0
      %p213 = por %p211, %p212
      %p214 = scmp.ne.s32.totalorder %s200, %s201
      %p215 = scmp.eq.s32.totalorder %s27, 1
      %p216 = por %p214, %p215
      %p218 = scmp.ne.s32.totalorder %s201, %s217
      %p219 = scmp.eq.s32.totalorder %s27, 0
      %p220 = por %p218, %p219
      %p221 = scmp.le.s32.totalorder 1, %s21
      %p222 = scmp.lt.s32.totalorder %s21, 3
      %p223 = pnand %p221, %p222
      %p224 = pneg %p223
      // Predicated region
      $region9: #{tpu_custom_call.1} parent=5 // pred_check
        _
      $region10: #{tpu_custom_call.1} parent=5 // pred_check_branch
        %226 = sbr.rel (%p223) target = $region12
      $region11: #{tpu_custom_call.1} parent=5 // pred_region
        %s227 = ssub.s32 %s21, 1
        // Predicated region
        $region13: #{tpu_custom_call.1} parent=11 // pred_check
          %p228 = pneg %p80
        $region14: #{tpu_custom_call.1} parent=11 // pred_check_branch
          %230 = sbr.rel (%p228) target = $region16
        $region15: #{tpu_custom_call.1} parent=11 // pred_region
          %232 = vsyncadd [#allocation7], 0
          %s233 = sshll.u32 %s1, 4
          %s234 = int_to_ptr.hbm [resolvable:$true] %s233
          %s235 = sshll.u32 [#allocation6], 4
          %s236 = int_to_ptr.vmem [resolvable:$true] %s235
          %241 = dma.hbm_to_vmem [thread:$0]  %s234, 2048, %s236, [#allocation7], 64, 64, 4
        $region16: #{tpu_custom_call.1} parent=11 // pred_fallthru
          _
        // Predicated region
        $region17: #{tpu_custom_call.1} parent=11 // pred_check
          %p242 = pneg %p101
        $region18: #{tpu_custom_call.1} parent=11 // pred_check_branch
          %244 = sbr.rel (%p242) target = $region20
        $region19: #{tpu_custom_call.1} parent=11 // pred_region
          _
        $region20: #{tpu_custom_call.1} parent=11 // pred_fallthru
          _
        // Predicated region
        $region21: #{tpu_custom_call.1} parent=11 // pred_check
          %p245 = pneg %p122
        $region22: #{tpu_custom_call.1} parent=11 // pred_check_branch
          %247 = sbr.rel (%p245) target = $region24
        $region23: #{tpu_custom_call.1} parent=11 // pred_region
          %249 = vsyncadd [#allocation7], 0
          %s250 = sshll.u32 %s3, 4
          %s251 = int_to_ptr.hbm [resolvable:$true] %s250
          %s252 = sshll.u32 [#allocation8], 4
          %s253 = int_to_ptr.vmem [resolvable:$true] %s252
          %258 = dma.hbm_to_vmem [thread:$0]  %s251, 9216, %s253, [#allocation7], 64, 64, 4
        $region24: #{tpu_custom_call.1} parent=11 // pred_fallthru
          _
        // Predicated region
        $region25: #{tpu_custom_call.1} parent=11 // pred_check
          %p259 = pneg %p143
        $region26: #{tpu_custom_call.1} parent=11 // pred_check_branch
          %261 = sbr.rel (%p259) target = $region28
        $region27: #{tpu_custom_call.1} parent=11 // pred_region
          %263 = vsyncadd [#allocation10], 0
          %s265 = sshll.u32 %s4, 4
          %s266 = int_to_ptr.hbm [resolvable:$true] %s265
          %s267 = sshll.u32 [#allocation9], 4
          %s268 = int_to_ptr.vmem [resolvable:$true] %s267
          %270 = dma.hbm_to_vmem [thread:$0]  %s266, 16, %s268, [#allocation10]
        $region28: #{tpu_custom_call.1} parent=11 // pred_fallthru
          _
        // Predicated region
        $region29: #{tpu_custom_call.1} parent=11 // pred_check
          %p271 = pneg %p164
        $region30: #{tpu_custom_call.1} parent=11 // pred_check_branch
          %273 = sbr.rel (%p271) target = $region32
        $region31: #{tpu_custom_call.1} parent=11 // pred_region
          %275 = vsyncadd [#allocation10], 0
          %s276 = sshll.u32 %s5, 4
          %s277 = int_to_ptr.hbm [resolvable:$true] %s276
          %s278 = sshll.u32 [#allocation11], 4
          %s279 = int_to_ptr.vmem [resolvable:$true] %s278
          %284 = dma.hbm_to_vmem [thread:$0]  %s277, 12288, %s279, [#allocation10], 256, 256, 16
        $region32: #{tpu_custom_call.1} parent=11 // pred_fallthru
          _
        // Predicated region
        $region33: #{tpu_custom_call.1} parent=11 // pred_check
          %p285 = pneg %p185
        $region34: #{tpu_custom_call.1} parent=11 // pred_check_branch
          %287 = sbr.rel (%p285) target = $region36
        $region35: #{tpu_custom_call.1} parent=11 // pred_region
          _
        $region36: #{tpu_custom_call.1} parent=11 // pred_fallthru
          _
      $region12: #{tpu_custom_call.1} parent=5 // pred_fallthru
        _
      %p288 = scmp.lt.s32.totalorder %s21, 2
      // Predicated region
      $region37: #{tpu_custom_call.1} parent=5 // pred_check
        %p289 = pneg %p288
      $region38: #{tpu_custom_call.1} parent=5 // pred_check_branch
        %291 = sbr.rel (%p289) target = $region40
      $region39: #{tpu_custom_call.1} parent=5 // pred_region
        // Predicated region
        $region41: #{tpu_custom_call.1} parent=39 // pred_check
          %p292 = pneg %p53
        $region42: #{tpu_custom_call.1} parent=39 // pred_check_branch
          %294 = sbr.rel (%p292) target = $region44
        $region43: #{tpu_custom_call.1} parent=39 // pred_region
          %s295 = sand.u32 %s43, 1
          %s296 = scalar_lea.sflag [#allocation4], %s295
          %s297 = sand.u32 %s43, 1
          %s298 = smul.addr %s297, 288
          %s299 = scalar_lea.vmem [#allocation3], %s298
          %301 = vsyncadd %s296, 0
          %s302 = smul.addr %s28, 72
          %s303 = smul.addr %s302, 4
          %s304 = scalar_lea.hbm %s0, %s303
          %s305 = sshll.u32 %s304, 4
          %s306 = int_to_ptr.hbm [resolvable:$true] %s305
          %s307 = sshll.u32 %s299, 4
          %s308 = int_to_ptr.vmem [resolvable:$true] %s307
          %313 = dma.hbm_to_vmem [thread:$0]  %s306, 4608, %s308, %s296, 128, 128, 8
        $region44: #{tpu_custom_call.1} parent=39 // pred_fallthru
          _
      $region40: #{tpu_custom_call.1} parent=5 // pred_fallthru
        _
      %p314 = scmp.le.s32.totalorder 1, %s21
      %p315 = scmp.lt.s32.totalorder %s21, 3
      %p316 = pnand %p314, %p315
      %p317 = pneg %p316
      // Predicated region
      $region45: #{tpu_custom_call.1} parent=5 // pred_check
        _
      $region46: #{tpu_custom_call.1} parent=5 // pred_check_branch
        %319 = sbr.rel (%p316) target = $region48
      $region47: #{tpu_custom_call.1} parent=5 // pred_region
        %s320 = ssub.s32 %s21, 1
        %s321 = sand.u32 %s46, 1
        %s322 = scalar_lea.sflag [#allocation4], %s321
        %s323 = sand.u32 %s46, 1
        %s324 = smul.addr %s323, 288
        %s325 = scalar_lea.vmem [#allocation3], %s324
        // Predicated region
        $region49: #{tpu_custom_call.1} parent=47 // pred_check
          %p326 = pneg %p59
        $region50: #{tpu_custom_call.1} parent=47 // pred_check_branch
          %328 = sbr.rel (%p326) target = $region52
        $region51: #{tpu_custom_call.1} parent=47 // pred_region
          %330 = dma.done %s322, 4608
        $region52: #{tpu_custom_call.1} parent=47 // pred_fallthru
          _
        // Predicated region
        $region53: #{tpu_custom_call.1} parent=47 // pred_check
          %p331 = pneg %p80
        $region54: #{tpu_custom_call.1} parent=47 // pred_check_branch
          %333 = sbr.rel (%p331) target = $region56
        $region55: #{tpu_custom_call.1} parent=47 // pred_region
          %335 = dma.done [#allocation7], 2048
        $region56: #{tpu_custom_call.1} parent=47 // pred_fallthru
          _
        // Predicated region
        $region57: #{tpu_custom_call.1} parent=47 // pred_check
          %p336 = pneg %p122
        $region58: #{tpu_custom_call.1} parent=47 // pred_check_branch
          %338 = sbr.rel (%p336) target = $region60
        $region59: #{tpu_custom_call.1} parent=47 // pred_region
          %340 = dma.done [#allocation7], 9216
        $region60: #{tpu_custom_call.1} parent=47 // pred_fallthru
          _
        // Predicated region
        $region61: #{tpu_custom_call.1} parent=47 // pred_check
          %p341 = pneg %p143
        $region62: #{tpu_custom_call.1} parent=47 // pred_check_branch
          %343 = sbr.rel (%p341) target = $region64
        $region63: #{tpu_custom_call.1} parent=47 // pred_region
          %345 = dma.done [#allocation10], 16
        $region64: #{tpu_custom_call.1} parent=47 // pred_fallthru
          _
        // Predicated region
        $region65: #{tpu_custom_call.1} parent=47 // pred_check
          %p346 = pneg %p164
        $region66: #{tpu_custom_call.1} parent=47 // pred_check_branch
          %348 = sbr.rel (%p346) target = $region68
        $region67: #{tpu_custom_call.1} parent=47 // pred_region
          %350 = dma.done [#allocation10], 12288
        $region68: #{tpu_custom_call.1} parent=47 // pred_fallthru
          _
        %s351 = sand.u32 %s46, 1
        %s352 = scalar_lea.sflag [#allocation4], %s351
        %s353 = sand.u32 %s46, 1
        %s354 = smul.addr %s353, 288
        %s355 = scalar_lea.vmem [#allocation3], %s354
        %p356 = pneg %p59
        %p357 = pneg %p56
        %p358 = pneg %p80
        %p359 = pneg %p77
        %p360 = pneg %p101
        %p361 = pneg %p98
        %p362 = pneg %p122
        %p363 = pneg %p119
        %p364 = pneg %p143
        %p365 = pneg %p140
        %p366 = pneg %p164
        %p367 = pneg %p161
        %p368 = pneg %p185
        %p369 = pneg %p182
        %p370 = pneg %p213
        %p371 = pneg %p210
        %s372 = sand.u32 %s200, 1
        %s373 = scalar_lea.sflag [#allocation5], %s372
        %s374 = sand.u32 %s200, 1
        %s375 = smul.addr %s374, 1024
        %s376 = scalar_lea.vmem [#allocation12], %s375
        %s377 = smul.u32 16, %s31
        %s379 = smul.u32 %s31, 16
        %s380 = smul.u32 %s379, 4
        %s381 = smul.addr %s380, 4
        %s382 = scalar_lea.vmem %s325, %s381 [#allocation3]
        %v383 = vld [vmem:[%s382] sm:$0xff]
        %v384 = vld [vmem:[%s382 + $0x8] sm:$0xff]
        %v385 = vld [vmem:[%s382 + $0x10] sm:$0xff]
        %v386 = vld [vmem:[%s382 + $0x18] sm:$0xff]
        %v387 = vld [vmem:[%s382 + $0x20] sm:$0xff]
        %v388 = vld [vmem:[%s382 + $0x28] sm:$0xff]
        %v389 = vld [vmem:[%s382 + $0x30] sm:$0xff]
        %v390 = vld [vmem:[%s382 + $0x38] sm:$0xff]
        %v391 = vld [vmem:[%s382 + $0x40] sm:$0xff]
        %v392 = vld [vmem:[%s382 + $0x48] sm:$0xff]
        %v393 = vld [vmem:[%s382 + $0x50] sm:$0xff]
        %v394 = vld [vmem:[%s382 + $0x58] sm:$0xff]
        %v395 = vld [vmem:[%s382 + $0x60] sm:$0xff]
        %v396 = vld [vmem:[%s382 + $0x68] sm:$0xff]
        %v397 = vld [vmem:[%s382 + $0x70] sm:$0xff]
        %v398 = vld [vmem:[%s382 + $0x78] sm:$0xff]
        %v399 = vld [vmem:[%s382 + $0x80] sm:$0xff]
        %v400 = vld [vmem:[%s382 + $0x88] sm:$0xff]
        %v401 = vld [vmem:[%s382 + $0x90] sm:$0xff]
        %v402 = vld [vmem:[%s382 + $0x98] sm:$0xff]
        %v403 = vld [vmem:[%s382 + $0xa0] sm:$0xff]
        %v404 = vld [vmem:[%s382 + $0xa8] sm:$0xff]
        %v405 = vld [vmem:[%s382 + $0xb0] sm:$0xff]
        %v406 = vld [vmem:[%s382 + $0xb8] sm:$0xff]
        %v407 = vld [vmem:[%s382 + $0xc0] sm:$0xff]
        %v408 = vld [vmem:[%s382 + $0xc8] sm:$0xff]
        %v409 = vld [vmem:[%s382 + $0xd0] sm:$0xff]
        %v410 = vld [vmem:[%s382 + $0xd8] sm:$0xff]
        %v411 = vld [vmem:[%s382 + $0xe0] sm:$0xff]
        %v412 = vld [vmem:[%s382 + $0xe8] sm:$0xff]
        %v413 = vld [vmem:[%s382 + $0xf0] sm:$0xff]
        %v414 = vld [vmem:[%s382 + $0xf8] sm:$0xff]
        %v415 = vld [vmem:[%s382 + $0x100] sm:$0xff]
        %v416 = vld [vmem:[%s382 + $0x108] sm:$0xff]
        %v417 = vld [vmem:[%s382 + $0x110] sm:$0xff]
        %v418 = vld [vmem:[%s382 + $0x118] sm:$0xff]
        %v419 = vld [vmem:[#allocation6] sm:$0xf]
        %v420 = vld [vmem:[#allocation6 + $0x4] sm:$0xf]
        %v421 = vld [vmem:[#allocation6 + $0x8] sm:$0xf]
        %v422 = vld [vmem:[#allocation6 + $0xc] sm:$0xf]
        %v423 = vld [vmem:[#allocation6 + $0x10] sm:$0xf]
        %v424 = vld [vmem:[#allocation6 + $0x14] sm:$0xf]
        %v425 = vld [vmem:[#allocation6 + $0x18] sm:$0xf]
        %v426 = vld [vmem:[#allocation6 + $0x1c] sm:$0xf]
        %v427 = vld [vmem:[#allocation6 + $0x20] sm:$0xf]
        %v428 = vld [vmem:[#allocation6 + $0x24] sm:$0xf]
        %v429 = vld [vmem:[#allocation6 + $0x28] sm:$0xf]
        %v430 = vld [vmem:[#allocation6 + $0x2c] sm:$0xf]
        %v431 = vld [vmem:[#allocation6 + $0x30] sm:$0xf]
        %v432 = vld [vmem:[#allocation6 + $0x34] sm:$0xf]
        %v433 = vld [vmem:[#allocation6 + $0x38] sm:$0xf]
        %v434 = vld [vmem:[#allocation6 + $0x3c] sm:$0xf]
        %v435 = vld [vmem:[#allocation6 + $0x40] sm:$0xf]
        %v436 = vld [vmem:[#allocation6 + $0x44] sm:$0xf]
        %v437 = vld [vmem:[#allocation6 + $0x48] sm:$0xf]
        %v438 = vld [vmem:[#allocation6 + $0x4c] sm:$0xf]
        %v439 = vld [vmem:[#allocation6 + $0x50] sm:$0xf]
        %v440 = vld [vmem:[#allocation6 + $0x54] sm:$0xf]
        %v441 = vld [vmem:[#allocation6 + $0x58] sm:$0xf]
        %v442 = vld [vmem:[#allocation6 + $0x5c] sm:$0xf]
        %v443 = vld [vmem:[#allocation6 + $0x60] sm:$0xf]
        %v444 = vld [vmem:[#allocation6 + $0x64] sm:$0xf]
        %v445 = vld [vmem:[#allocation6 + $0x68] sm:$0xf]
        %v446 = vld [vmem:[#allocation6 + $0x6c] sm:$0xf]
        %v447 = vld [vmem:[#allocation6 + $0x70] sm:$0xf]
        %v448 = vld [vmem:[#allocation6 + $0x74] sm:$0xf]
        %v449 = vld [vmem:[#allocation6 + $0x78] sm:$0xf]
        %v450 = vld [vmem:[#allocation6 + $0x7c] sm:$0xf]
        %v451 = vld [vmem:[%s2] sm:$0x1]
        %v453 = vperm.slane %v451, 0
        %v491 = vunpack.c.l.b16 %v383
        %v492 = vunpack.c.h.b16 %v383
        %v493 = vunpack.c.l.b16 %v384
        %v494 = vunpack.c.h.b16 %v384
        %v495 = vunpack.c.l.b16 %v385
        %v496 = vunpack.c.h.b16 %v385
        %v497 = vunpack.c.l.b16 %v386
        %v498 = vunpack.c.h.b16 %v386
        %v499 = vunpack.c.l.b16 %v387
        %v500 = vunpack.c.h.b16 %v387
        %v501 = vunpack.c.l.b16 %v388
        %v502 = vunpack.c.h.b16 %v388
        %v503 = vunpack.c.l.b16 %v389
        %v504 = vunpack.c.h.b16 %v389
        %v505 = vunpack.c.l.b16 %v390
        %v506 = vunpack.c.h.b16 %v390
        %v507 = vunpack.c.l.b16 %v391
        %v508 = vunpack.c.h.b16 %v391
        %v509 = vunpack.c.l.b16 %v392
        %v510 = vunpack.c.h.b16 %v392
        %v511 = vunpack.c.l.b16 %v393
        %v512 = vunpack.c.h.b16 %v393
        %v513 = vunpack.c.l.b16 %v394
        %v514 = vunpack.c.h.b16 %v394
        %v515 = vunpack.c.l.b16 %v395
        %v516 = vunpack.c.h.b16 %v395
        %v517 = vunpack.c.l.b16 %v396
        %v518 = vunpack.c.h.b16 %v396
        %v519 = vunpack.c.l.b16 %v397
        %v520 = vunpack.c.h.b16 %v397
        %v521 = vunpack.c.l.b16 %v398
        %v522 = vunpack.c.h.b16 %v398
        %v523 = vunpack.c.l.b16 %v399
        %v524 = vunpack.c.h.b16 %v399
        %v525 = vunpack.c.l.b16 %v400
        %v526 = vunpack.c.h.b16 %v400
        %v527 = vunpack.c.l.b16 %v401
        %v528 = vunpack.c.h.b16 %v401
        %v529 = vunpack.c.l.b16 %v402
        %v530 = vunpack.c.h.b16 %v402
        %v531 = vunpack.c.l.b16 %v403
        %v532 = vunpack.c.h.b16 %v403
        %v533 = vunpack.c.l.b16 %v404
        %v534 = vunpack.c.h.b16 %v404
        %v535 = vunpack.c.l.b16 %v405
        %v536 = vunpack.c.h.b16 %v405
        %v537 = vunpack.c.l.b16 %v406
        %v538 = vunpack.c.h.b16 %v406
        %v539 = vunpack.c.l.b16 %v407
        %v540 = vunpack.c.h.b16 %v407
        %v541 = vunpack.c.l.b16 %v408
        %v542 = vunpack.c.h.b16 %v408
        %v543 = vunpack.c.l.b16 %v409
        %v544 = vunpack.c.h.b16 %v409
        %v545 = vunpack.c.l.b16 %v410
        %v546 = vunpack.c.h.b16 %v410
        %v547 = vunpack.c.l.b16 %v411
        %v548 = vunpack.c.h.b16 %v411
        %v549 = vunpack.c.l.b16 %v412
        %v550 = vunpack.c.h.b16 %v412
        %v551 = vunpack.c.l.b16 %v413
        %v552 = vunpack.c.h.b16 %v413
        %v553 = vunpack.c.l.b16 %v414
        %v554 = vunpack.c.h.b16 %v414
        %v555 = vunpack.c.l.b16 %v415
        %v556 = vunpack.c.h.b16 %v415
        %v557 = vunpack.c.l.b16 %v416
        %v558 = vunpack.c.h.b16 %v416
        %v559 = vunpack.c.l.b16 %v417
        %v560 = vunpack.c.h.b16 %v417
        %v561 = vunpack.c.l.b16 %v418
        %v562 = vunpack.c.h.b16 %v418
        %v563 = vpack.c.b16 %v493, %v491
        %v564 = vpack.c.b16 %v494, %v492
        %v565 = vpack.c.b16 %v497, %v495
        %v566 = vpack.c.b16 %v498, %v496
        %v567 = vpack.c.b16 %v501, %v499
        %v568 = vpack.c.b16 %v502, %v500
        %v569 = vpack.c.b16 %v505, %v503
        %v570 = vpack.c.b16 %v506, %v504
        %v571 = vpack.c.b16 %v509, %v507
        %v572 = vpack.c.b16 %v510, %v508
        %v573 = vpack.c.b16 %v513, %v511
        %v574 = vpack.c.b16 %v514, %v512
        %v575 = vpack.c.b16 %v517, %v515
        %v576 = vpack.c.b16 %v518, %v516
        %v577 = vpack.c.b16 %v521, %v519
        %v578 = vpack.c.b16 %v522, %v520
        %v579 = vpack.c.b16 %v525, %v523
        %v580 = vpack.c.b16 %v526, %v524
        %v581 = vpack.c.b16 %v529, %v527
        %v582 = vpack.c.b16 %v530, %v528
        %v583 = vpack.c.b16 %v533, %v531
        %v584 = vpack.c.b16 %v534, %v532
        %v585 = vpack.c.b16 %v537, %v535
        %v586 = vpack.c.b16 %v538, %v536
        %v587 = vpack.c.b16 %v541, %v539
        %v588 = vpack.c.b16 %v542, %v540
        %v589 = vpack.c.b16 %v545, %v543
        %v590 = vpack.c.b16 %v546, %v544
        %v591 = vpack.c.b16 %v549, %v547
        %v592 = vpack.c.b16 %v550, %v548
        %v593 = vpack.c.b16 %v553, %v551
        %v594 = vpack.c.b16 %v554, %v552
        %v595 = vpack.c.b16 %v557, %v555
        %v596 = vpack.c.b16 %v558, %v556
        %v597 = vpack.c.b16 %v561, %v559
        %v598 = vpack.c.b16 %v562, %v560
        %v667 = vunpack.c.l.b16 %v419
        %v668 = vunpack.c.l.b16 %v420
        %v669 = vunpack.c.l.b16 %v421
        %v670 = vunpack.c.l.b16 %v422
        %v671 = vunpack.c.l.b16 %v423
        %v672 = vunpack.c.l.b16 %v424
        %v673 = vunpack.c.l.b16 %v425
        %v674 = vunpack.c.l.b16 %v426
        %v675 = vunpack.c.l.b16 %v427
        %v676 = vunpack.c.l.b16 %v428
        %v677 = vunpack.c.l.b16 %v429
        %v678 = vunpack.c.l.b16 %v430
        %v679 = vunpack.c.l.b16 %v431
        %v680 = vunpack.c.l.b16 %v432
        %v681 = vunpack.c.l.b16 %v433
        %v682 = vunpack.c.l.b16 %v434
        %v683 = vunpack.c.l.b16 %v435
        %v684 = vunpack.c.l.b16 %v436
        %v685 = vunpack.c.l.b16 %v437
        %v686 = vunpack.c.l.b16 %v438
        %v687 = vunpack.c.l.b16 %v439
        %v688 = vunpack.c.l.b16 %v440
        %v689 = vunpack.c.l.b16 %v441
        %v690 = vunpack.c.l.b16 %v442
        %v691 = vunpack.c.l.b16 %v443
        %v692 = vunpack.c.l.b16 %v444
        %v693 = vunpack.c.l.b16 %v445
        %v694 = vunpack.c.l.b16 %v446
        %v695 = vunpack.c.l.b16 %v447
        %v696 = vunpack.c.l.b16 %v448
        %v697 = vunpack.c.l.b16 %v449
        %v698 = vunpack.c.l.b16 %v450
        %v699 = vpack.c.b16 %v668, %v667
        %v700 = vpack.c.b16 %v670, %v669
        %v701 = vpack.c.b16 %v672, %v671
        %v702 = vpack.c.b16 %v674, %v673
        %v703 = vpack.c.b16 %v676, %v675
        %v704 = vpack.c.b16 %v678, %v677
        %v705 = vpack.c.b16 %v680, %v679
        %v706 = vpack.c.b16 %v682, %v681
        %v707 = vpack.c.b16 %v684, %v683
        %v708 = vpack.c.b16 %v686, %v685
        %v709 = vpack.c.b16 %v688, %v687
        %v710 = vpack.c.b16 %v690, %v689
        %v711 = vpack.c.b16 %v692, %v691
        %v712 = vpack.c.b16 %v694, %v693
        %v713 = vpack.c.b16 %v696, %v695
        %v714 = vpack.c.b16 %v698, %v697
        %731 = vmatpush.bf16.msra.mxu0 %v706
        %732 = vmatpush.bf16.msra.mxu0 %v705
        %733 = vmatpush.bf16.msra.mxu0 %v704
        %734 = vmatpush.bf16.msra.mxu0 %v703
        %735 = vmatpush.bf16.msra.mxu0 %v702
        %736 = vmatpush.bf16.msra.mxu0 %v701
        %737 = vmatpush.bf16.msra.mxu0 %v700
        %738 = vmatpush.bf16.msra.mxu0 %v699
        %739 = vmatmul.bf16.gmra.mxu0 %v563
        %v740 = vpop.f32.mrf.mxu0
        %v741 = vadd.f32 %v453, %v740
        %v742 = vpop.f32.mrf.mxu0
        %v743 = vadd.f32 %v453, %v742
        %744 = vmatmul.bf16.gmra.mxu0 %v565
        %v745 = vpop.f32.mrf.mxu0
        %v746 = vadd.f32 %v453, %v745
        %v747 = vpop.f32.mrf.mxu0
        %v748 = vadd.f32 %v453, %v747
        %749 = vmatmul.bf16.gmra.mxu0 %v567
        %v750 = vpop.f32.mrf.mxu0
        %v751 = vadd.f32 %v453, %v750
        %v752 = vpop.f32.mrf.mxu0
        %v753 = vadd.f32 %v453, %v752
        %754 = vmatmul.bf16.gmra.mxu0 %v569
        %v755 = vpop.f32.mrf.mxu0
        %v756 = vadd.f32 %v453, %v755
        %v757 = vpop.f32.mrf.mxu0
        %v758 = vadd.f32 %v453, %v757
        %759 = vmatmul.bf16.gmra.mxu0 %v571
        %v760 = vpop.f32.mrf.mxu0
        %v761 = vadd.f32 %v453, %v760
        %v762 = vpop.f32.mrf.mxu0
        %v763 = vadd.f32 %v453, %v762
        %764 = vmatmul.bf16.gmra.mxu0 %v573
        %v765 = vpop.f32.mrf.mxu0
        %v766 = vadd.f32 %v453, %v765
        %v767 = vpop.f32.mrf.mxu0
        %v768 = vadd.f32 %v453, %v767
        %769 = vmatmul.bf16.gmra.mxu0 %v575
        %v770 = vpop.f32.mrf.mxu0
        %v771 = vadd.f32 %v453, %v770
        %v772 = vpop.f32.mrf.mxu0
        %v773 = vadd.f32 %v453, %v772
        %774 = vmatmul.bf16.gmra.mxu0 %v577
        %v775 = vpop.f32.mrf.mxu0
        %v776 = vadd.f32 %v453, %v775
        %v777 = vpop.f32.mrf.mxu0
        %v778 = vadd.f32 %v453, %v777
        %779 = vmatmul.bf16.gmra.mxu0 %v579
        %v780 = vpop.f32.mrf.mxu0
        %v781 = vadd.f32 %v453, %v780
        %v782 = vpop.f32.mrf.mxu0
        %v783 = vadd.f32 %v453, %v782
        %784 = vmatmul.bf16.gmra.mxu0 %v581
        %v785 = vpop.f32.mrf.mxu0
        %v786 = vadd.f32 %v453, %v785
        %v787 = vpop.f32.mrf.mxu0
        %v788 = vadd.f32 %v453, %v787
        %789 = vmatmul.bf16.gmra.mxu0 %v583
        %v790 = vpop.f32.mrf.mxu0
        %v791 = vadd.f32 %v453, %v790
        %v792 = vpop.f32.mrf.mxu0
        %v793 = vadd.f32 %v453, %v792
        %794 = vmatmul.bf16.gmra.mxu0 %v585
        %v795 = vpop.f32.mrf.mxu0
        %v796 = vadd.f32 %v453, %v795
        %v797 = vpop.f32.mrf.mxu0
        %v798 = vadd.f32 %v453, %v797
        %799 = vmatmul.bf16.gmra.mxu0 %v587
        %v800 = vpop.f32.mrf.mxu0
        %v801 = vadd.f32 %v453, %v800
        %v802 = vpop.f32.mrf.mxu0
        %v803 = vadd.f32 %v453, %v802
        %804 = vmatmul.bf16.gmra.mxu0 %v589
        %v805 = vpop.f32.mrf.mxu0
        %v806 = vadd.f32 %v453, %v805
        %v807 = vpop.f32.mrf.mxu0
        %v808 = vadd.f32 %v453, %v807
        %809 = vmatmul.bf16.gmra.mxu0 %v591
        %v810 = vpop.f32.mrf.mxu0
        %v811 = vadd.f32 %v453, %v810
        %v812 = vpop.f32.mrf.mxu0
        %v813 = vadd.f32 %v453, %v812
        %814 = vmatmul.bf16.gmra.mxu0 %v593
        %v815 = vpop.f32.mrf.mxu0
        %v816 = vadd.f32 %v453, %v815
        %v817 = vpop.f32.mrf.mxu0
        %v818 = vadd.f32 %v453, %v817
        %819 = vmatmul.bf16.gmra.mxu0 %v595
        %v820 = vpop.f32.mrf.mxu0
        %v821 = vadd.f32 %v453, %v820
        %v822 = vpop.f32.mrf.mxu0
        %v823 = vadd.f32 %v453, %v822
        %824 = vmatmul.bf16.gmra.mxu0 %v597
        %v825 = vpop.f32.mrf.mxu0
        %v826 = vadd.f32 %v453, %v825
        %v827 = vpop.f32.mrf.mxu0
        %v828 = vadd.f32 %v453, %v827
        %829 = vdwg.mxu0
        %830 = vmatpush.bf16.msra.mxu0 %v714
        %831 = vmatpush.bf16.msra.mxu0 %v713
        %832 = vmatpush.bf16.msra.mxu0 %v712
        %833 = vmatpush.bf16.msra.mxu0 %v711
        %834 = vmatpush.bf16.msra.mxu0 %v710
        %835 = vmatpush.bf16.msra.mxu0 %v709
        %836 = vmatpush.bf16.msra.mxu0 %v708
        %837 = vmatpush.bf16.msra.mxu0 %v707
        %838 = vmatmul.bf16.gmra.mxu0 %v564
        %v839 = vpop.f32.mrf.mxu0
        %v840 = vadd.f32 %v741, %v839
        %v841 = vpop.f32.mrf.mxu0
        %v842 = vadd.f32 %v743, %v841
        %843 = vmatmul.bf16.gmra.mxu0 %v566
        %v844 = vpop.f32.mrf.mxu0
        %v845 = vadd.f32 %v746, %v844
        %v846 = vpop.f32.mrf.mxu0
        %v847 = vadd.f32 %v748, %v846
        %848 = vmatmul.bf16.gmra.mxu0 %v568
        %v849 = vpop.f32.mrf.mxu0
        %v850 = vadd.f32 %v751, %v849
        %v851 = vpop.f32.mrf.mxu0
        %v852 = vadd.f32 %v753, %v851
        %853 = vmatmul.bf16.gmra.mxu0 %v570
        %v854 = vpop.f32.mrf.mxu0
        %v855 = vadd.f32 %v756, %v854
        %v856 = vpop.f32.mrf.mxu0
        %v857 = vadd.f32 %v758, %v856
        %858 = vmatmul.bf16.gmra.mxu0 %v572
        %v859 = vpop.f32.mrf.mxu0
        %v860 = vadd.f32 %v761, %v859
        %v861 = vpop.f32.mrf.mxu0
        %v862 = vadd.f32 %v763, %v861
        %863 = vmatmul.bf16.gmra.mxu0 %v574
        %v864 = vpop.f32.mrf.mxu0
        %v865 = vadd.f32 %v766, %v864
        %v866 = vpop.f32.mrf.mxu0
        %v867 = vadd.f32 %v768, %v866
        %868 = vmatmul.bf16.gmra.mxu0 %v576
        %v869 = vpop.f32.mrf.mxu0
        %v870 = vadd.f32 %v771, %v869
        %v871 = vpop.f32.mrf.mxu0
        %v872 = vadd.f32 %v773, %v871
        %873 = vmatmul.bf16.gmra.mxu0 %v578
        %v874 = vpop.f32.mrf.mxu0
        %v875 = vadd.f32 %v776, %v874
        %v876 = vpop.f32.mrf.mxu0
        %v877 = vadd.f32 %v778, %v876
        %878 = vmatmul.bf16.gmra.mxu0 %v580
        %v879 = vpop.f32.mrf.mxu0
        %v880 = vadd.f32 %v781, %v879
        %v881 = vpop.f32.mrf.mxu0
        %v882 = vadd.f32 %v783, %v881
        %883 = vmatmul.bf16.gmra.mxu0 %v582
        %v884 = vpop.f32.mrf.mxu0
        %v885 = vadd.f32 %v786, %v884
        %v886 = vpop.f32.mrf.mxu0
        %v887 = vadd.f32 %v788, %v886
        %888 = vmatmul.bf16.gmra.mxu0 %v584
        %v889 = vpop.f32.mrf.mxu0
        %v890 = vadd.f32 %v791, %v889
        %v891 = vpop.f32.mrf.mxu0
        %v892 = vadd.f32 %v793, %v891
        %893 = vmatmul.bf16.gmra.mxu0 %v586
        %v894 = vpop.f32.mrf.mxu0
        %v895 = vadd.f32 %v796, %v894
        %v896 = vpop.f32.mrf.mxu0
        %v897 = vadd.f32 %v798, %v896
        %898 = vmatmul.bf16.gmra.mxu0 %v588
        %v899 = vpop.f32.mrf.mxu0
        %v900 = vadd.f32 %v801, %v899
        %v901 = vpop.f32.mrf.mxu0
        %v902 = vadd.f32 %v803, %v901
        %903 = vmatmul.bf16.gmra.mxu0 %v590
        %v904 = vpop.f32.mrf.mxu0
        %v905 = vadd.f32 %v806, %v904
        %v906 = vpop.f32.mrf.mxu0
        %v907 = vadd.f32 %v808, %v906
        %908 = vmatmul.bf16.gmra.mxu0 %v592
        %v909 = vpop.f32.mrf.mxu0
        %v910 = vadd.f32 %v811, %v909
        %v911 = vpop.f32.mrf.mxu0
        %v912 = vadd.f32 %v813, %v911
        %913 = vmatmul.bf16.gmra.mxu0 %v594
        %v914 = vpop.f32.mrf.mxu0
        %v915 = vadd.f32 %v816, %v914
        %v916 = vpop.f32.mrf.mxu0
        %v917 = vadd.f32 %v818, %v916
        %918 = vmatmul.bf16.gmra.mxu0 %v596
        %v919 = vpop.f32.mrf.mxu0
        %v920 = vadd.f32 %v821, %v919
        %v921 = vpop.f32.mrf.mxu0
        %v922 = vadd.f32 %v823, %v921
        %923 = vmatmul.bf16.gmra.mxu0 %v598
        %v924 = vpop.f32.mrf.mxu0
        %v925 = vadd.f32 %v826, %v924
        %v926 = vpop.f32.mrf.mxu0
        %v927 = vadd.f32 %v828, %v926
        %928 = vdwg.mxu0
        %v929 = vmax.f32 %v840, 0.0
        %v930 = vmax.f32 %v842, 0.0
        %v931 = vmax.f32 %v845, 0.0
        %v932 = vmax.f32 %v847, 0.0
        %v933 = vmax.f32 %v850, 0.0
        %v934 = vmax.f32 %v852, 0.0
        %v935 = vmax.f32 %v855, 0.0
        %v936 = vmax.f32 %v857, 0.0
        %v937 = vmax.f32 %v860, 0.0
        %v938 = vmax.f32 %v862, 0.0
        %v939 = vmax.f32 %v865, 0.0
        %v940 = vmax.f32 %v867, 0.0
        %v941 = vmax.f32 %v870, 0.0
        %v942 = vmax.f32 %v872, 0.0
        %v943 = vmax.f32 %v875, 0.0
        %v944 = vmax.f32 %v877, 0.0
        %v945 = vmax.f32 %v880, 0.0
        %v946 = vmax.f32 %v882, 0.0
        %v947 = vmax.f32 %v885, 0.0
        %v948 = vmax.f32 %v887, 0.0
        %v949 = vmax.f32 %v890, 0.0
        %v950 = vmax.f32 %v892, 0.0
        %v951 = vmax.f32 %v895, 0.0
        %v952 = vmax.f32 %v897, 0.0
        %v953 = vmax.f32 %v900, 0.0
        %v954 = vmax.f32 %v902, 0.0
        %v955 = vmax.f32 %v905, 0.0
        %v956 = vmax.f32 %v907, 0.0
        %v957 = vmax.f32 %v910, 0.0
        %v958 = vmax.f32 %v912, 0.0
        %v959 = vmax.f32 %v915, 0.0
        %v960 = vmax.f32 %v917, 0.0
        %v961 = vmax.f32 %v920, 0.0
        %v962 = vmax.f32 %v922, 0.0
        %v963 = vmax.f32 %v925, 0.0
        %v964 = vmax.f32 %v927, 0.0
        %v965 = vpack.c.bf16 %v929, %v929
        %v966 = vpack.c.bf16 %v930, %v930
        %v967 = vpack.c.bf16 %v931, %v931
        %v968 = vpack.c.bf16 %v932, %v932
        %v969 = vpack.c.bf16 %v933, %v933
        %v970 = vpack.c.bf16 %v934, %v934
        %v971 = vpack.c.bf16 %v935, %v935
        %v972 = vpack.c.bf16 %v936, %v936
        %v973 = vpack.c.bf16 %v937, %v937
        %v974 = vpack.c.bf16 %v938, %v938
        %v975 = vpack.c.bf16 %v939, %v939
        %v976 = vpack.c.bf16 %v940, %v940
        %v977 = vpack.c.bf16 %v941, %v941
        %v978 = vpack.c.bf16 %v942, %v942
        %v979 = vpack.c.bf16 %v943, %v943
        %v980 = vpack.c.bf16 %v944, %v944
        %v981 = vpack.c.bf16 %v945, %v945
        %v982 = vpack.c.bf16 %v946, %v946
        %v983 = vpack.c.bf16 %v947, %v947
        %v984 = vpack.c.bf16 %v948, %v948
        %v985 = vpack.c.bf16 %v949, %v949
        %v986 = vpack.c.bf16 %v950, %v950
        %v987 = vpack.c.bf16 %v951, %v951
        %v988 = vpack.c.bf16 %v952, %v952
        %v989 = vpack.c.bf16 %v953, %v953
        %v990 = vpack.c.bf16 %v954, %v954
        %v991 = vpack.c.bf16 %v955, %v955
        %v992 = vpack.c.bf16 %v956, %v956
        %v993 = vpack.c.bf16 %v957, %v957
        %v994 = vpack.c.bf16 %v958, %v958
        %v995 = vpack.c.bf16 %v959, %v959
        %v996 = vpack.c.bf16 %v960, %v960
        %v997 = vpack.c.bf16 %v961, %v961
        %v998 = vpack.c.bf16 %v962, %v962
        %v999 = vpack.c.bf16 %v963, %v963
        %v1000 = vpack.c.bf16 %v964, %v964
        %vm1001 = vsmask.f32 256
        %vm1002 = vsmask.f32 4368
        %vm1003 = vmor %vm1001, %vm1002
        %v1005 = vshrl.u32 %v965, 16
        %v1007 = vrot.slane %v1005, 7
        %v1008 = vshll.u32 %v965, 16
        %v1010 = vor.u32 %v1007, %v1008
        %v1011 = vrot.slane %v1007, 4
        %v1013 = vshrl.u32 %v966, 16
        %v1015 = vrot.slane %v1013, 7
        %v1016 = vshll.u32 %v966, 16
        %v1018 = vor.u32 %v1015, %v1016
        %v1019 = vsel %vm1003, %v1011, %v1018
        %v1020 = vrot.slane %v1015, 4
        %v1022 = vshrl.u32 %v967, 16
        %v1024 = vrot.slane %v1022, 7
        %v1025 = vshll.u32 %v967, 16
        %v1027 = vor.u32 %v1024, %v1025
        %v1028 = vrot.slane %v1024, 4
        %v1030 = vshrl.u32 %v968, 16
        %v1032 = vrot.slane %v1030, 7
        %v1033 = vshll.u32 %v968, 16
        %v1035 = vor.u32 %v1032, %v1033
        %v1036 = vsel %vm1003, %v1028, %v1035
        %v1037 = vrot.slane %v1032, 4
        %v1039 = vshrl.u32 %v969, 16
        %v1041 = vrot.slane %v1039, 7
        %v1042 = vshll.u32 %v969, 16
        %v1044 = vor.u32 %v1041, %v1042
        %v1045 = vrot.slane %v1041, 4
        %v1047 = vshrl.u32 %v970, 16
        %v1049 = vrot.slane %v1047, 7
        %v1050 = vshll.u32 %v970, 16
        %v1052 = vor.u32 %v1049, %v1050
        %v1053 = vsel %vm1003, %v1045, %v1052
        %v1054 = vrot.slane %v1049, 4
        %v1056 = vshrl.u32 %v971, 16
        %v1058 = vrot.slane %v1056, 7
        %v1059 = vshll.u32 %v971, 16
        %v1061 = vor.u32 %v1058, %v1059
        %v1062 = vrot.slane %v1058, 4
        %v1064 = vshrl.u32 %v972, 16
        %v1066 = vrot.slane %v1064, 7
        %v1067 = vshll.u32 %v972, 16
        %v1069 = vor.u32 %v1066, %v1067
        %v1070 = vsel %vm1003, %v1062, %v1069
        %v1071 = vrot.slane %v1066, 4
        %v1073 = vshrl.u32 %v973, 16
        %v1075 = vrot.slane %v1073, 7
        %v1076 = vshll.u32 %v973, 16
        %v1078 = vor.u32 %v1075, %v1076
        %v1079 = vrot.slane %v1075, 4
        %v1081 = vshrl.u32 %v974, 16
        %v1083 = vrot.slane %v1081, 7
        %v1084 = vshll.u32 %v974, 16
        %v1086 = vor.u32 %v1083, %v1084
        %v1087 = vsel %vm1003, %v1079, %v1086
        %v1088 = vrot.slane %v1083, 4
        %v1090 = vshrl.u32 %v975, 16
        %v1092 = vrot.slane %v1090, 7
        %v1093 = vshll.u32 %v975, 16
        %v1095 = vor.u32 %v1092, %v1093
        %v1096 = vrot.slane %v1092, 4
        %v1098 = vshrl.u32 %v976, 16
        %v1100 = vrot.slane %v1098, 7
        %v1101 = vshll.u32 %v976, 16
        %v1103 = vor.u32 %v1100, %v1101
        %v1104 = vsel %vm1003, %v1096, %v1103
        %v1105 = vrot.slane %v1100, 4
        %v1107 = vshrl.u32 %v977, 16
        %v1109 = vrot.slane %v1107, 7
        %v1110 = vshll.u32 %v977, 16
        %v1112 = vor.u32 %v1109, %v1110
        %v1113 = vrot.slane %v1109, 4
        %v1115 = vshrl.u32 %v978, 16
        %v1117 = vrot.slane %v1115, 7
        %v1118 = vshll.u32 %v978, 16
        %v1120 = vor.u32 %v1117, %v1118
        %v1121 = vsel %vm1003, %v1113, %v1120
        %v1122 = vrot.slane %v1117, 4
        %v1124 = vshrl.u32 %v979, 16
        %v1126 = vrot.slane %v1124, 7
        %v1127 = vshll.u32 %v979, 16
        %v1129 = vor.u32 %v1126, %v1127
        %v1130 = vrot.slane %v1126, 4
        %v1132 = vshrl.u32 %v980, 16
        %v1134 = vrot.slane %v1132, 7
        %v1135 = vshll.u32 %v980, 16
        %v1137 = vor.u32 %v1134, %v1135
        %v1138 = vsel %vm1003, %v1130, %v1137
        %v1139 = vrot.slane %v1134, 4
        %v1141 = vshrl.u32 %v981, 16
        %v1143 = vrot.slane %v1141, 7
        %v1144 = vshll.u32 %v981, 16
        %v1146 = vor.u32 %v1143, %v1144
        %v1147 = vrot.slane %v1143, 4
        %v1149 = vshrl.u32 %v982, 16
        %v1151 = vrot.slane %v1149, 7
        %v1152 = vshll.u32 %v982, 16
        %v1154 = vor.u32 %v1151, %v1152
        %v1155 = vsel %vm1003, %v1147, %v1154
        %v1156 = vrot.slane %v1151, 4
        %v1158 = vshrl.u32 %v983, 16
        %v1160 = vrot.slane %v1158, 7
        %v1161 = vshll.u32 %v983, 16
        %v1163 = vor.u32 %v1160, %v1161
        %v1164 = vrot.slane %v1160, 4
        %v1166 = vshrl.u32 %v984, 16
        %v1168 = vrot.slane %v1166, 7
        %v1169 = vshll.u32 %v984, 16
        %v1171 = vor.u32 %v1168, %v1169
        %v1172 = vsel %vm1003, %v1164, %v1171
        %v1173 = vrot.slane %v1168, 4
        %v1175 = vshrl.u32 %v985, 16
        %v1177 = vrot.slane %v1175, 7
        %v1178 = vshll.u32 %v985, 16
        %v1180 = vor.u32 %v1177, %v1178
        %v1181 = vrot.slane %v1177, 4
        %v1183 = vshrl.u32 %v986, 16
        %v1185 = vrot.slane %v1183, 7
        %v1186 = vshll.u32 %v986, 16
        %v1188 = vor.u32 %v1185, %v1186
        %v1189 = vsel %vm1003, %v1181, %v1188
        %v1190 = vrot.slane %v1185, 4
        %v1192 = vshrl.u32 %v987, 16
        %v1194 = vrot.slane %v1192, 7
        %v1195 = vshll.u32 %v987, 16
        %v1197 = vor.u32 %v1194, %v1195
        %v1198 = vrot.slane %v1194, 4
        %v1200 = vshrl.u32 %v988, 16
        %v1202 = vrot.slane %v1200, 7
        %v1203 = vshll.u32 %v988, 16
        %v1205 = vor.u32 %v1202, %v1203
        %v1206 = vsel %vm1003, %v1198, %v1205
        %v1207 = vrot.slane %v1202, 4
        %v1209 = vshrl.u32 %v989, 16
        %v1211 = vrot.slane %v1209, 7
        %v1212 = vshll.u32 %v989, 16
        %v1214 = vor.u32 %v1211, %v1212
        %v1215 = vrot.slane %v1211, 4
        %v1217 = vshrl.u32 %v990, 16
        %v1219 = vrot.slane %v1217, 7
        %v1220 = vshll.u32 %v990, 16
        %v1222 = vor.u32 %v1219, %v1220
        %v1223 = vsel %vm1003, %v1215, %v1222
        %v1224 = vrot.slane %v1219, 4
        %v1226 = vshrl.u32 %v991, 16
        %v1228 = vrot.slane %v1226, 7
        %v1229 = vshll.u32 %v991, 16
        %v1231 = vor.u32 %v1228, %v1229
        %v1232 = vrot.slane %v1228, 4
        %v1234 = vshrl.u32 %v992, 16
        %v1236 = vrot.slane %v1234, 7
        %v1237 = vshll.u32 %v992, 16
        %v1239 = vor.u32 %v1236, %v1237
        %v1240 = vsel %vm1003, %v1232, %v1239
        %v1241 = vrot.slane %v1236, 4
        %v1243 = vshrl.u32 %v993, 16
        %v1245 = vrot.slane %v1243, 7
        %v1246 = vshll.u32 %v993, 16
        %v1248 = vor.u32 %v1245, %v1246
        %v1249 = vrot.slane %v1245, 4
        %v1251 = vshrl.u32 %v994, 16
        %v1253 = vrot.slane %v1251, 7
        %v1254 = vshll.u32 %v994, 16
        %v1256 = vor.u32 %v1253, %v1254
        %v1257 = vsel %vm1003, %v1249, %v1256
        %v1258 = vrot.slane %v1253, 4
        %v1260 = vshrl.u32 %v995, 16
        %v1262 = vrot.slane %v1260, 7
        %v1263 = vshll.u32 %v995, 16
        %v1265 = vor.u32 %v1262, %v1263
        %v1266 = vrot.slane %v1262, 4
        %v1268 = vshrl.u32 %v996, 16
        %v1270 = vrot.slane %v1268, 7
        %v1271 = vshll.u32 %v996, 16
        %v1273 = vor.u32 %v1270, %v1271
        %v1274 = vsel %vm1003, %v1266, %v1273
        %v1275 = vrot.slane %v1270, 4
        %v1277 = vshrl.u32 %v997, 16
        %v1279 = vrot.slane %v1277, 7
        %v1280 = vshll.u32 %v997, 16
        %v1282 = vor.u32 %v1279, %v1280
        %v1283 = vrot.slane %v1279, 4
        %v1285 = vshrl.u32 %v998, 16
        %v1287 = vrot.slane %v1285, 7
        %v1288 = vshll.u32 %v998, 16
        %v1290 = vor.u32 %v1287, %v1288
        %v1291 = vsel %vm1003, %v1283, %v1290
        %v1292 = vrot.slane %v1287, 4
        %v1294 = vshrl.u32 %v999, 16
        %v1296 = vrot.slane %v1294, 7
        %v1297 = vshll.u32 %v999, 16
        %v1299 = vor.u32 %v1296, %v1297
        %v1300 = vrot.slane %v1296, 4
        %v1302 = vshrl.u32 %v1000, 16
        %v1304 = vrot.slane %v1302, 7
        %v1305 = vshll.u32 %v1000, 16
        %v1307 = vor.u32 %v1304, %v1305
        %v1308 = vsel %vm1003, %v1300, %v1307
        %v1309 = vrot.slane %v1304, 4
        %vm1364 = vcmask 1043456
        %vm1365 = vsmask.f32 7938
        %vm1366 = vmand %vm1364, %vm1365
        %v1367 = vld [vmem:[#allocation2] sm:$0xf]
        %v1368 = vsel %vm1366, %v1010, %v1367
        %1369 = vst [vmem:[#allocation2] sm:$0xf] %v1368
        %1370 = vst [vmem:[#allocation2 + $0x4] sm:$0xf] %v1019
        %vm1371 = vcmask 1040384
        %vm1372 = vmand %vm1371, %vm1001
        %v1373 = vld [vmem:[#allocation2 + $0x8] sm:$0x1]
        %v1374 = vsel %vm1372, %v1020, %v1373
        %1375 = vst [vmem:[#allocation2 + $0x8] sm:$0x1] %v1374
        %v1376 = vld [vmem:[#allocation2 + $0xc] sm:$0xf]
        %v1377 = vsel %vm1366, %v1027, %v1376
        %1378 = vst [vmem:[#allocation2 + $0xc] sm:$0xf] %v1377
        %1379 = vst [vmem:[#allocation2 + $0x10] sm:$0xf] %v1036
        %v1380 = vld [vmem:[#allocation2 + $0x14] sm:$0x1]
        %v1381 = vsel %vm1372, %v1037, %v1380
        %1382 = vst [vmem:[#allocation2 + $0x14] sm:$0x1] %v1381
        %v1383 = vld [vmem:[#allocation2 + $0x18] sm:$0xf]
        %v1384 = vsel %vm1366, %v1044, %v1383
        %1385 = vst [vmem:[#allocation2 + $0x18] sm:$0xf] %v1384
        %1386 = vst [vmem:[#allocation2 + $0x1c] sm:$0xf] %v1053
        %v1387 = vld [vmem:[#allocation2 + $0x20] sm:$0x1]
        %v1388 = vsel %vm1372, %v1054, %v1387
        %1389 = vst [vmem:[#allocation2 + $0x20] sm:$0x1] %v1388
        %v1390 = vld [vmem:[#allocation2 + $0x24] sm:$0xf]
        %v1391 = vsel %vm1366, %v1061, %v1390
        %1392 = vst [vmem:[#allocation2 + $0x24] sm:$0xf] %v1391
        %1393 = vst [vmem:[#allocation2 + $0x28] sm:$0xf] %v1070
        %v1394 = vld [vmem:[#allocation2 + $0x2c] sm:$0x1]
        %v1395 = vsel %vm1372, %v1071, %v1394
        %1396 = vst [vmem:[#allocation2 + $0x2c] sm:$0x1] %v1395
        %v1397 = vld [vmem:[#allocation2 + $0x30] sm:$0xf]
        %v1398 = vsel %vm1366, %v1078, %v1397
        %1399 = vst [vmem:[#allocation2 + $0x30] sm:$0xf] %v1398
        %1400 = vst [vmem:[#allocation2 + $0x34] sm:$0xf] %v1087
        %v1401 = vld [vmem:[#allocation2 + $0x38] sm:$0x1]
        %v1402 = vsel %vm1372, %v1088, %v1401
        %1403 = vst [vmem:[#allocation2 + $0x38] sm:$0x1] %v1402
        %v1404 = vld [vmem:[#allocation2 + $0x3c] sm:$0xf]
        %v1405 = vsel %vm1366, %v1095, %v1404
        %1406 = vst [vmem:[#allocation2 + $0x3c] sm:$0xf] %v1405
        %1407 = vst [vmem:[#allocation2 + $0x40] sm:$0xf] %v1104
        %v1408 = vld [vmem:[#allocation2 + $0x44] sm:$0x1]
        %v1409 = vsel %vm1372, %v1105, %v1408
        %1410 = vst [vmem:[#allocation2 + $0x44] sm:$0x1] %v1409
        %v1411 = vld [vmem:[#allocation2 + $0x48] sm:$0xf]
        %v1412 = vsel %vm1366, %v1112, %v1411
        %1413 = vst [vmem:[#allocation2 + $0x48] sm:$0xf] %v1412
        %1414 = vst [vmem:[#allocation2 + $0x4c] sm:$0xf] %v1121
        %v1415 = vld [vmem:[#allocation2 + $0x50] sm:$0x1]
        %v1416 = vsel %vm1372, %v1122, %v1415
        %1417 = vst [vmem:[#allocation2 + $0x50] sm:$0x1] %v1416
        %v1418 = vld [vmem:[#allocation2 + $0x54] sm:$0xf]
        %v1419 = vsel %vm1366, %v1129, %v1418
        %1420 = vst [vmem:[#allocation2 + $0x54] sm:$0xf] %v1419
        %1421 = vst [vmem:[#allocation2 + $0x58] sm:$0xf] %v1138
        %v1422 = vld [vmem:[#allocation2 + $0x5c] sm:$0x1]
        %v1423 = vsel %vm1372, %v1139, %v1422
        %1424 = vst [vmem:[#allocation2 + $0x5c] sm:$0x1] %v1423
        %v1425 = vld [vmem:[#allocation2 + $0x60] sm:$0xf]
        %v1426 = vsel %vm1366, %v1146, %v1425
        %1427 = vst [vmem:[#allocation2 + $0x60] sm:$0xf] %v1426
        %1428 = vst [vmem:[#allocation2 + $0x64] sm:$0xf] %v1155
        %v1429 = vld [vmem:[#allocation2 + $0x68] sm:$0x1]
        %v1430 = vsel %vm1372, %v1156, %v1429
        %1431 = vst [vmem:[#allocation2 + $0x68] sm:$0x1] %v1430
        %v1432 = vld [vmem:[#allocation2 + $0x6c] sm:$0xf]
        %v1433 = vsel %vm1366, %v1163, %v1432
        %1434 = vst [vmem:[#allocation2 + $0x6c] sm:$0xf] %v1433
        %1435 = vst [vmem:[#allocation2 + $0x70] sm:$0xf] %v1172
        %v1436 = vld [vmem:[#allocation2 + $0x74] sm:$0x1]
        %v1437 = vsel %vm1372, %v1173, %v1436
        %1438 = vst [vmem:[#allocation2 + $0x74] sm:$0x1] %v1437
        %v1439 = vld [vmem:[#allocation2 + $0x78] sm:$0xf]
        %v1440 = vsel %vm1366, %v1180, %v1439
        %1441 = vst [vmem:[#allocation2 + $0x78] sm:$0xf] %v1440
        %1442 = vst [vmem:[#allocation2 + $0x7c] sm:$0xf] %v1189
        %v1443 = vld [vmem:[#allocation2 + $0x80] sm:$0x1]
        %v1444 = vsel %vm1372, %v1190, %v1443
        %1445 = vst [vmem:[#allocation2 + $0x80] sm:$0x1] %v1444
        %v1446 = vld [vmem:[#allocation2 + $0x84] sm:$0xf]
        %v1447 = vsel %vm1366, %v1197, %v1446
        %1448 = vst [vmem:[#allocation2 + $0x84] sm:$0xf] %v1447
        %1449 = vst [vmem:[#allocation2 + $0x88] sm:$0xf] %v1206
        %v1450 = vld [vmem:[#allocation2 + $0x8c] sm:$0x1]
        %v1451 = vsel %vm1372, %v1207, %v1450
        %1452 = vst [vmem:[#allocation2 + $0x8c] sm:$0x1] %v1451
        %v1453 = vld [vmem:[#allocation2 + $0x90] sm:$0xf]
        %v1454 = vsel %vm1366, %v1214, %v1453
        %1455 = vst [vmem:[#allocation2 + $0x90] sm:$0xf] %v1454
        %1456 = vst [vmem:[#allocation2 + $0x94] sm:$0xf] %v1223
        %v1457 = vld [vmem:[#allocation2 + $0x98] sm:$0x1]
        %v1458 = vsel %vm1372, %v1224, %v1457
        %1459 = vst [vmem:[#allocation2 + $0x98] sm:$0x1] %v1458
        %v1460 = vld [vmem:[#allocation2 + $0x9c] sm:$0xf]
        %v1461 = vsel %vm1366, %v1231, %v1460
        %1462 = vst [vmem:[#allocation2 + $0x9c] sm:$0xf] %v1461
        %1463 = vst [vmem:[#allocation2 + $0xa0] sm:$0xf] %v1240
        %v1464 = vld [vmem:[#allocation2 + $0xa4] sm:$0x1]
        %v1465 = vsel %vm1372, %v1241, %v1464
        %1466 = vst [vmem:[#allocation2 + $0xa4] sm:$0x1] %v1465
        %v1467 = vld [vmem:[#allocation2 + $0xa8] sm:$0xf]
        %v1468 = vsel %vm1366, %v1248, %v1467
        %1469 = vst [vmem:[#allocation2 + $0xa8] sm:$0xf] %v1468
        %1470 = vst [vmem:[#allocation2 + $0xac] sm:$0xf] %v1257
        %v1471 = vld [vmem:[#allocation2 + $0xb0] sm:$0x1]
        %v1472 = vsel %vm1372, %v1258, %v1471
        %1473 = vst [vmem:[#allocation2 + $0xb0] sm:$0x1] %v1472
        %v1474 = vld [vmem:[#allocation2 + $0xb4] sm:$0xf]
        %v1475 = vsel %vm1366, %v1265, %v1474
        %1476 = vst [vmem:[#allocation2 + $0xb4] sm:$0xf] %v1475
        %1477 = vst [vmem:[#allocation2 + $0xb8] sm:$0xf] %v1274
        %v1478 = vld [vmem:[#allocation2 + $0xbc] sm:$0x1]
        %v1479 = vsel %vm1372, %v1275, %v1478
        %1480 = vst [vmem:[#allocation2 + $0xbc] sm:$0x1] %v1479
        %v1481 = vld [vmem:[#allocation2 + $0xc0] sm:$0xf]
        %v1482 = vsel %vm1366, %v1282, %v1481
        %1483 = vst [vmem:[#allocation2 + $0xc0] sm:$0xf] %v1482
        %1484 = vst [vmem:[#allocation2 + $0xc4] sm:$0xf] %v1291
        %v1485 = vld [vmem:[#allocation2 + $0xc8] sm:$0x1]
        %v1486 = vsel %vm1372, %v1292, %v1485
        %1487 = vst [vmem:[#allocation2 + $0xc8] sm:$0x1] %v1486
        %v1488 = vld [vmem:[#allocation2 + $0xcc] sm:$0xf]
        %v1489 = vsel %vm1366, %v1299, %v1488
        %1490 = vst [vmem:[#allocation2 + $0xcc] sm:$0xf] %v1489
        %1491 = vst [vmem:[#allocation2 + $0xd0] sm:$0xf] %v1308
        %v1492 = vld [vmem:[#allocation2 + $0xd4] sm:$0x1]
        %v1493 = vsel %vm1372, %v1309, %v1492
        %1494 = vst [vmem:[#allocation2 + $0xd4] sm:$0x1] %v1493
        %p1495 = scmp.eq.s32.totalorder %s31, 0
        // Predicated region
        $region69: #{tpu_custom_call.1} parent=47 // pred_check
          %p1496 = pneg %p1495
        $region70: #{tpu_custom_call.1} parent=47 // pred_check_branch
          %1498 = sbr.rel (%p1496) target = $region72
        $region71: #{tpu_custom_call.1} parent=47 // pred_region
          %1499 = vst [vmem:[#allocation2] sm:$0xf] 0
          %1500 = vst [vmem:[#allocation2 + $0x4] sm:$0xf] 0
          %1501 = vst [vmem:[#allocation2 + $0x8] sm:$0x1] 0
          %s1502 = scalar_lea.vmem [#allocation2], 204
          %1503 = vst [vmem:[%s1502] sm:$0xf] 0
          %1504 = vst [vmem:[%s1502 + $0x4] sm:$0xf] 0
          %1505 = vst [vmem:[%s1502 + $0x8] sm:$0x1] 0
        $region72: #{tpu_custom_call.1} parent=47 // pred_fallthru
          _
        %v1506 = vld [vmem:[#allocation2] sm:$0x1]
        %v1507 = vsel %vm1372, 0, %v1506
        %1508 = vst [vmem:[#allocation2] sm:$0x1] %v1507
        %v1509 = vld [vmem:[#allocation2 + $0xc] sm:$0x1]
        %v1510 = vsel %vm1372, 0, %v1509
        %1511 = vst [vmem:[#allocation2 + $0xc] sm:$0x1] %v1510
        %v1512 = vld [vmem:[#allocation2 + $0x18] sm:$0x1]
        %v1513 = vsel %vm1372, 0, %v1512
        %1514 = vst [vmem:[#allocation2 + $0x18] sm:$0x1] %v1513
        %v1515 = vld [vmem:[#allocation2 + $0x24] sm:$0x1]
        %v1516 = vsel %vm1372, 0, %v1515
        %1517 = vst [vmem:[#allocation2 + $0x24] sm:$0x1] %v1516
        %v1518 = vld [vmem:[#allocation2 + $0x30] sm:$0x1]
        %v1519 = vsel %vm1372, 0, %v1518
        %1520 = vst [vmem:[#allocation2 + $0x30] sm:$0x1] %v1519
        %v1521 = vld [vmem:[#allocation2 + $0x3c] sm:$0x1]
        %v1522 = vsel %vm1372, 0, %v1521
        %1523 = vst [vmem:[#allocation2 + $0x3c] sm:$0x1] %v1522
        %v1524 = vld [vmem:[#allocation2 + $0x48] sm:$0x1]
        %v1525 = vsel %vm1372, 0, %v1524
        %1526 = vst [vmem:[#allocation2 + $0x48] sm:$0x1] %v1525
        %v1527 = vld [vmem:[#allocation2 + $0x54] sm:$0x1]
        %v1528 = vsel %vm1372, 0, %v1527
        %1529 = vst [vmem:[#allocation2 + $0x54] sm:$0x1] %v1528
        %v1530 = vld [vmem:[#allocation2 + $0x60] sm:$0x1]
        %v1531 = vsel %vm1372, 0, %v1530
        %1532 = vst [vmem:[#allocation2 + $0x60] sm:$0x1] %v1531
        %v1533 = vld [vmem:[#allocation2 + $0x6c] sm:$0x1]
        %v1534 = vsel %vm1372, 0, %v1533
        %1535 = vst [vmem:[#allocation2 + $0x6c] sm:$0x1] %v1534
        %v1536 = vld [vmem:[#allocation2 + $0x78] sm:$0x1]
        %v1537 = vsel %vm1372, 0, %v1536
        %1538 = vst [vmem:[#allocation2 + $0x78] sm:$0x1] %v1537
        %v1539 = vld [vmem:[#allocation2 + $0x84] sm:$0x1]
        %v1540 = vsel %vm1372, 0, %v1539
        %1541 = vst [vmem:[#allocation2 + $0x84] sm:$0x1] %v1540
        %v1542 = vld [vmem:[#allocation2 + $0x90] sm:$0x1]
        %v1543 = vsel %vm1372, 0, %v1542
        %1544 = vst [vmem:[#allocation2 + $0x90] sm:$0x1] %v1543
        %v1545 = vld [vmem:[#allocation2 + $0x9c] sm:$0x1]
        %v1546 = vsel %vm1372, 0, %v1545
        %1547 = vst [vmem:[#allocation2 + $0x9c] sm:$0x1] %v1546
        %v1548 = vld [vmem:[#allocation2 + $0xa8] sm:$0x1]
        %v1549 = vsel %vm1372, 0, %v1548
        %1550 = vst [vmem:[#allocation2 + $0xa8] sm:$0x1] %v1549
        %v1551 = vld [vmem:[#allocation2 + $0xb4] sm:$0x1]
        %v1552 = vsel %vm1372, 0, %v1551
        %1553 = vst [vmem:[#allocation2 + $0xb4] sm:$0x1] %v1552
        %v1554 = vld [vmem:[#allocation2 + $0xc0] sm:$0x1]
        %v1555 = vsel %vm1372, 0, %v1554
        %1556 = vst [vmem:[#allocation2 + $0xc0] sm:$0x1] %v1555
        %v1557 = vld [vmem:[#allocation2 + $0xcc] sm:$0x1]
        %v1558 = vsel %vm1372, 0, %v1557
        %1559 = vst [vmem:[#allocation2 + $0xcc] sm:$0x1] %v1558
        %vm1560 = vmand %vm1371, %vm1365
        %v1561 = vld [vmem:[#allocation2 + $0x8] sm:$0x1]
        %v1562 = vsel %vm1560, 0, %v1561
        %1563 = vst [vmem:[#allocation2 + $0x8] sm:$0x1] %v1562
        %v1564 = vld [vmem:[#allocation2 + $0x14] sm:$0x1]
        %v1565 = vsel %vm1560, 0, %v1564
        %1566 = vst [vmem:[#allocation2 + $0x14] sm:$0x1] %v1565
        %v1567 = vld [vmem:[#allocation2 + $0x20] sm:$0x1]
        %v1568 = vsel %vm1560, 0, %v1567
        %1569 = vst [vmem:[#allocation2 + $0x20] sm:$0x1] %v1568
        %v1570 = vld [vmem:[#allocation2 + $0x2c] sm:$0x1]
        %v1571 = vsel %vm1560, 0, %v1570
        %1572 = vst [vmem:[#allocation2 + $0x2c] sm:$0x1] %v1571
        %v1573 = vld [vmem:[#allocation2 + $0x38] sm:$0x1]
        %v1574 = vsel %vm1560, 0, %v1573
        %1575 = vst [vmem:[#allocation2 + $0x38] sm:$0x1] %v1574
        %v1576 = vld [vmem:[#allocation2 + $0x44] sm:$0x1]
        %v1577 = vsel %vm1560, 0, %v1576
        %1578 = vst [vmem:[#allocation2 + $0x44] sm:$0x1] %v1577
        %v1579 = vld [vmem:[#allocation2 + $0x50] sm:$0x1]
        %v1580 = vsel %vm1560, 0, %v1579
        %1581 = vst [vmem:[#allocation2 + $0x50] sm:$0x1] %v1580
        %v1582 = vld [vmem:[#allocation2 + $0x5c] sm:$0x1]
        %v1583 = vsel %vm1560, 0, %v1582
        %1584 = vst [vmem:[#allocation2 + $0x5c] sm:$0x1] %v1583
        %v1585 = vld [vmem:[#allocation2 + $0x68] sm:$0x1]
        %v1586 = vsel %vm1560, 0, %v1585
        %1587 = vst [vmem:[#allocation2 + $0x68] sm:$0x1] %v1586
        %v1588 = vld [vmem:[#allocation2 + $0x74] sm:$0x1]
        %v1589 = vsel %vm1560, 0, %v1588
        %1590 = vst [vmem:[#allocation2 + $0x74] sm:$0x1] %v1589
        %v1591 = vld [vmem:[#allocation2 + $0x80] sm:$0x1]
        %v1592 = vsel %vm1560, 0, %v1591
        %1593 = vst [vmem:[#allocation2 + $0x80] sm:$0x1] %v1592
        %v1594 = vld [vmem:[#allocation2 + $0x8c] sm:$0x1]
        %v1595 = vsel %vm1560, 0, %v1594
        %1596 = vst [vmem:[#allocation2 + $0x8c] sm:$0x1] %v1595
        %v1597 = vld [vmem:[#allocation2 + $0x98] sm:$0x1]
        %v1598 = vsel %vm1560, 0, %v1597
        %1599 = vst [vmem:[#allocation2 + $0x98] sm:$0x1] %v1598
        %v1600 = vld [vmem:[#allocation2 + $0xa4] sm:$0x1]
        %v1601 = vsel %vm1560, 0, %v1600
        %1602 = vst [vmem:[#allocation2 + $0xa4] sm:$0x1] %v1601
        %v1603 = vld [vmem:[#allocation2 + $0xb0] sm:$0x1]
        %v1604 = vsel %vm1560, 0, %v1603
        %1605 = vst [vmem:[#allocation2 + $0xb0] sm:$0x1] %v1604
        %v1606 = vld [vmem:[#allocation2 + $0xbc] sm:$0x1]
        %v1607 = vsel %vm1560, 0, %v1606
        %1608 = vst [vmem:[#allocation2 + $0xbc] sm:$0x1] %v1607
        %v1609 = vld [vmem:[#allocation2 + $0xc8] sm:$0x1]
        %v1610 = vsel %vm1560, 0, %v1609
        %1611 = vst [vmem:[#allocation2 + $0xc8] sm:$0x1] %v1610
        %v1612 = vld [vmem:[#allocation2 + $0xd4] sm:$0x1]
        %v1613 = vsel %vm1560, 0, %v1612
        %1614 = vst [vmem:[#allocation2 + $0xd4] sm:$0x1] %v1613
        %v1615 = vld [vmem:[#allocation2] sm:$0xf]
        %v1616 = vld [vmem:[#allocation2 + $0x4] sm:$0xf]
        %v1617 = vld [vmem:[#allocation2 + $0xc] sm:$0xf]
        %v1618 = vld [vmem:[#allocation2 + $0x10] sm:$0xf]
        %v1619 = vld [vmem:[#allocation2 + $0x18] sm:$0xf]
        %v1620 = vld [vmem:[#allocation2 + $0x1c] sm:$0xf]
        %v1621 = vld [vmem:[#allocation2 + $0x24] sm:$0xf]
        %v1622 = vld [vmem:[#allocation2 + $0x28] sm:$0xf]
        %v1623 = vld [vmem:[#allocation2 + $0x30] sm:$0xf]
        %v1624 = vld [vmem:[#allocation2 + $0x34] sm:$0xf]
        %v1625 = vld [vmem:[#allocation2 + $0x3c] sm:$0xf]
        %v1626 = vld [vmem:[#allocation2 + $0x40] sm:$0xf]
        %v1627 = vld [vmem:[#allocation2 + $0x48] sm:$0xf]
        %v1628 = vld [vmem:[#allocation2 + $0x4c] sm:$0xf]
        %v1629 = vld [vmem:[#allocation2 + $0x54] sm:$0xf]
        %v1630 = vld [vmem:[#allocation2 + $0x58] sm:$0xf]
        %v1631 = vld [vmem:[#allocation2 + $0x60] sm:$0xf]
        %v1632 = vld [vmem:[#allocation2 + $0x64] sm:$0xf]
        %v1633 = vld [vmem:[#allocation2 + $0x6c] sm:$0xf]
        %v1634 = vld [vmem:[#allocation2 + $0x70] sm:$0xf]
        %v1635 = vld [vmem:[#allocation2 + $0x78] sm:$0xf]
        %v1636 = vld [vmem:[#allocation2 + $0x7c] sm:$0xf]
        %v1637 = vld [vmem:[#allocation2 + $0x84] sm:$0xf]
        %v1638 = vld [vmem:[#allocation2 + $0x88] sm:$0xf]
        %v1639 = vld [vmem:[#allocation2 + $0x90] sm:$0xf]
        %v1640 = vld [vmem:[#allocation2 + $0x94] sm:$0xf]
        %v1641 = vld [vmem:[#allocation2 + $0x9c] sm:$0xf]
        %v1642 = vld [vmem:[#allocation2 + $0xa0] sm:$0xf]
        %v1643 = vld [vmem:[#allocation2 + $0xa8] sm:$0xf]
        %v1644 = vld [vmem:[#allocation2 + $0xac] sm:$0xf]
        %v1645 = vld [vmem:[#allocation2 + $0xb4] sm:$0xf]
        %v1646 = vld [vmem:[#allocation2 + $0xb8] sm:$0xf]
        %v1647 = vld [vmem:[#allocation2 + $0x8] sm:$0x1]
        %v1648 = vld [vmem:[#allocation2 + $0x14] sm:$0x1]
        %v1649 = vld [vmem:[#allocation2 + $0x20] sm:$0x1]
        %v1650 = vld [vmem:[#allocation2 + $0x2c] sm:$0x1]
        %v1651 = vld [vmem:[#allocation2 + $0x38] sm:$0x1]
        %v1652 = vld [vmem:[#allocation2 + $0x44] sm:$0x1]
        %v1653 = vld [vmem:[#allocation2 + $0x50] sm:$0x1]
        %v1654 = vld [vmem:[#allocation2 + $0x5c] sm:$0x1]
        %v1655 = vld [vmem:[#allocation2 + $0x68] sm:$0x1]
        %v1656 = vld [vmem:[#allocation2 + $0x74] sm:$0x1]
        %v1657 = vld [vmem:[#allocation2 + $0x80] sm:$0x1]
        %v1658 = vld [vmem:[#allocation2 + $0x8c] sm:$0x1]
        %v1659 = vld [vmem:[#allocation2 + $0x98] sm:$0x1]
        %v1660 = vld [vmem:[#allocation2 + $0xa4] sm:$0x1]
        %v1661 = vld [vmem:[#allocation2 + $0xb0] sm:$0x1]
        %v1662 = vld [vmem:[#allocation2 + $0xbc] sm:$0x1]
        %vm1663 = vsmask.f32 3328
        %vm1664 = vsmask.f32 7440
        %vm1665 = vmor %vm1663, %vm1664
        %v1667 = vshrl.u32 %v1615, 16
        %v1669 = vrot.slane %v1667, 4
        %v1670 = vshll.u32 %v1615, 16
        %v1672 = vrot.slane %v1670, 5
        %v1673 = vor.u32 %v1669, %v1672
        %v1674 = vrot.slane %v1673, 4
        %v1676 = vshll.u32 %v1616, 16
        %v1678 = vrot.slane %v1676, 5
        %v1679 = vsel %vm1665, %v1674, %v1678
        %v1680 = vshrl.u32 %v1616, 16
        %v1682 = vrot.slane %v1680, 4
        %v1683 = vor.u32 %v1682, %v1678
        %v1684 = vrot.slane %v1683, 4
        %v1686 = vshll.u32 %v1647, 16
        %v1688 = vrot.slane %v1686, 5
        %v1689 = vsel %vm1665, %v1684, %v1688
        %v1691 = vshrl.u32 %v1617, 16
        %v1693 = vrot.slane %v1691, 4
        %v1694 = vshll.u32 %v1617, 16
        %v1696 = vrot.slane %v1694, 5
        %v1697 = vor.u32 %v1693, %v1696
        %v1698 = vrot.slane %v1697, 4
        %v1700 = vshll.u32 %v1618, 16
        %v1702 = vrot.slane %v1700, 5
        %v1703 = vsel %vm1665, %v1698, %v1702
        %v1704 = vshrl.u32 %v1618, 16
        %v1706 = vrot.slane %v1704, 4
        %v1707 = vor.u32 %v1706, %v1702
        %v1708 = vrot.slane %v1707, 4
        %v1710 = vshll.u32 %v1648, 16
        %v1712 = vrot.slane %v1710, 5
        %v1713 = vsel %vm1665, %v1708, %v1712
        %v1715 = vshrl.u32 %v1619, 16
        %v1717 = vrot.slane %v1715, 4
        %v1718 = vshll.u32 %v1619, 16
        %v1720 = vrot.slane %v1718, 5
        %v1721 = vor.u32 %v1717, %v1720
        %v1722 = vrot.slane %v1721, 4
        %v1724 = vshll.u32 %v1620, 16
        %v1726 = vrot.slane %v1724, 5
        %v1727 = vsel %vm1665, %v1722, %v1726
        %v1728 = vshrl.u32 %v1620, 16
        %v1730 = vrot.slane %v1728, 4
        %v1731 = vor.u32 %v1730, %v1726
        %v1732 = vrot.slane %v1731, 4
        %v1734 = vshll.u32 %v1649, 16
        %v1736 = vrot.slane %v1734, 5
        %v1737 = vsel %vm1665, %v1732, %v1736
        %v1739 = vshrl.u32 %v1621, 16
        %v1741 = vrot.slane %v1739, 4
        %v1742 = vshll.u32 %v1621, 16
        %v1744 = vrot.slane %v1742, 5
        %v1745 = vor.u32 %v1741, %v1744
        %v1746 = vrot.slane %v1745, 4
        %v1748 = vshll.u32 %v1622, 16
        %v1750 = vrot.slane %v1748, 5
        %v1751 = vsel %vm1665, %v1746, %v1750
        %v1752 = vshrl.u32 %v1622, 16
        %v1754 = vrot.slane %v1752, 4
        %v1755 = vor.u32 %v1754, %v1750
        %v1756 = vrot.slane %v1755, 4
        %v1758 = vshll.u32 %v1650, 16
        %v1760 = vrot.slane %v1758, 5
        %v1761 = vsel %vm1665, %v1756, %v1760
        %v1763 = vshrl.u32 %v1623, 16
        %v1765 = vrot.slane %v1763, 4
        %v1766 = vshll.u32 %v1623, 16
        %v1768 = vrot.slane %v1766, 5
        %v1769 = vor.u32 %v1765, %v1768
        %v1770 = vrot.slane %v1769, 4
        %v1772 = vshll.u32 %v1624, 16
        %v1774 = vrot.slane %v1772, 5
        %v1775 = vsel %vm1665, %v1770, %v1774
        %v1776 = vshrl.u32 %v1624, 16
        %v1778 = vrot.slane %v1776, 4
        %v1779 = vor.u32 %v1778, %v1774
        %v1780 = vrot.slane %v1779, 4
        %v1782 = vshll.u32 %v1651, 16
        %v1784 = vrot.slane %v1782, 5
        %v1785 = vsel %vm1665, %v1780, %v1784
        %v1787 = vshrl.u32 %v1625, 16
        %v1789 = vrot.slane %v1787, 4
        %v1790 = vshll.u32 %v1625, 16
        %v1792 = vrot.slane %v1790, 5
        %v1793 = vor.u32 %v1789, %v1792
        %v1794 = vrot.slane %v1793, 4
        %v1796 = vshll.u32 %v1626, 16
        %v1798 = vrot.slane %v1796, 5
        %v1799 = vsel %vm1665, %v1794, %v1798
        %v1800 = vshrl.u32 %v1626, 16
        %v1802 = vrot.slane %v1800, 4
        %v1803 = vor.u32 %v1802, %v1798
        %v1804 = vrot.slane %v1803, 4
        %v1806 = vshll.u32 %v1652, 16
        %v1808 = vrot.slane %v1806, 5
        %v1809 = vsel %vm1665, %v1804, %v1808
        %v1811 = vshrl.u32 %v1627, 16
        %v1813 = vrot.slane %v1811, 4
        %v1814 = vshll.u32 %v1627, 16
        %v1816 = vrot.slane %v1814, 5
        %v1817 = vor.u32 %v1813, %v1816
        %v1818 = vrot.slane %v1817, 4
        %v1820 = vshll.u32 %v1628, 16
        %v1822 = vrot.slane %v1820, 5
        %v1823 = vsel %vm1665, %v1818, %v1822
        %v1824 = vshrl.u32 %v1628, 16
        %v1826 = vrot.slane %v1824, 4
        %v1827 = vor.u32 %v1826, %v1822
        %v1828 = vrot.slane %v1827, 4
        %v1830 = vshll.u32 %v1653, 16
        %v1832 = vrot.slane %v1830, 5
        %v1833 = vsel %vm1665, %v1828, %v1832
        %v1835 = vshrl.u32 %v1629, 16
        %v1837 = vrot.slane %v1835, 4
        %v1838 = vshll.u32 %v1629, 16
        %v1840 = vrot.slane %v1838, 5
        %v1841 = vor.u32 %v1837, %v1840
        %v1842 = vrot.slane %v1841, 4
        %v1844 = vshll.u32 %v1630, 16
        %v1846 = vrot.slane %v1844, 5
        %v1847 = vsel %vm1665, %v1842, %v1846
        %v1848 = vshrl.u32 %v1630, 16
        %v1850 = vrot.slane %v1848, 4
        %v1851 = vor.u32 %v1850, %v1846
        %v1852 = vrot.slane %v1851, 4
        %v1854 = vshll.u32 %v1654, 16
        %v1856 = vrot.slane %v1854, 5
        %v1857 = vsel %vm1665, %v1852, %v1856
        %v1859 = vshrl.u32 %v1631, 16
        %v1861 = vrot.slane %v1859, 4
        %v1862 = vshll.u32 %v1631, 16
        %v1864 = vrot.slane %v1862, 5
        %v1865 = vor.u32 %v1861, %v1864
        %v1866 = vrot.slane %v1865, 4
        %v1868 = vshll.u32 %v1632, 16
        %v1870 = vrot.slane %v1868, 5
        %v1871 = vsel %vm1665, %v1866, %v1870
        %v1872 = vshrl.u32 %v1632, 16
        %v1874 = vrot.slane %v1872, 4
        %v1875 = vor.u32 %v1874, %v1870
        %v1876 = vrot.slane %v1875, 4
        %v1878 = vshll.u32 %v1655, 16
        %v1880 = vrot.slane %v1878, 5
        %v1881 = vsel %vm1665, %v1876, %v1880
        %v1883 = vshrl.u32 %v1633, 16
        %v1885 = vrot.slane %v1883, 4
        %v1886 = vshll.u32 %v1633, 16
        %v1888 = vrot.slane %v1886, 5
        %v1889 = vor.u32 %v1885, %v1888
        %v1890 = vrot.slane %v1889, 4
        %v1892 = vshll.u32 %v1634, 16
        %v1894 = vrot.slane %v1892, 5
        %v1895 = vsel %vm1665, %v1890, %v1894
        %v1896 = vshrl.u32 %v1634, 16
        %v1898 = vrot.slane %v1896, 4
        %v1899 = vor.u32 %v1898, %v1894
        %v1900 = vrot.slane %v1899, 4
        %v1902 = vshll.u32 %v1656, 16
        %v1904 = vrot.slane %v1902, 5
        %v1905 = vsel %vm1665, %v1900, %v1904
        %v1907 = vshrl.u32 %v1635, 16
        %v1909 = vrot.slane %v1907, 4
        %v1910 = vshll.u32 %v1635, 16
        %v1912 = vrot.slane %v1910, 5
        %v1913 = vor.u32 %v1909, %v1912
        %v1914 = vrot.slane %v1913, 4
        %v1916 = vshll.u32 %v1636, 16
        %v1918 = vrot.slane %v1916, 5
        %v1919 = vsel %vm1665, %v1914, %v1918
        %v1920 = vshrl.u32 %v1636, 16
        %v1922 = vrot.slane %v1920, 4
        %v1923 = vor.u32 %v1922, %v1918
        %v1924 = vrot.slane %v1923, 4
        %v1926 = vshll.u32 %v1657, 16
        %v1928 = vrot.slane %v1926, 5
        %v1929 = vsel %vm1665, %v1924, %v1928
        %v1931 = vshrl.u32 %v1637, 16
        %v1933 = vrot.slane %v1931, 4
        %v1934 = vshll.u32 %v1637, 16
        %v1936 = vrot.slane %v1934, 5
        %v1937 = vor.u32 %v1933, %v1936
        %v1938 = vrot.slane %v1937, 4
        %v1940 = vshll.u32 %v1638, 16
        %v1942 = vrot.slane %v1940, 5
        %v1943 = vsel %vm1665, %v1938, %v1942
        %v1944 = vshrl.u32 %v1638, 16
        %v1946 = vrot.slane %v1944, 4
        %v1947 = vor.u32 %v1946, %v1942
        %v1948 = vrot.slane %v1947, 4
        %v1950 = vshll.u32 %v1658, 16
        %v1952 = vrot.slane %v1950, 5
        %v1953 = vsel %vm1665, %v1948, %v1952
        %v1955 = vshrl.u32 %v1639, 16
        %v1957 = vrot.slane %v1955, 4
        %v1958 = vshll.u32 %v1639, 16
        %v1960 = vrot.slane %v1958, 5
        %v1961 = vor.u32 %v1957, %v1960
        %v1962 = vrot.slane %v1961, 4
        %v1964 = vshll.u32 %v1640, 16
        %v1966 = vrot.slane %v1964, 5
        %v1967 = vsel %vm1665, %v1962, %v1966
        %v1968 = vshrl.u32 %v1640, 16
        %v1970 = vrot.slane %v1968, 4
        %v1971 = vor.u32 %v1970, %v1966
        %v1972 = vrot.slane %v1971, 4
        %v1974 = vshll.u32 %v1659, 16
        %v1976 = vrot.slane %v1974, 5
        %v1977 = vsel %vm1665, %v1972, %v1976
        %v1979 = vshrl.u32 %v1641, 16
        %v1981 = vrot.slane %v1979, 4
        %v1982 = vshll.u32 %v1641, 16
        %v1984 = vrot.slane %v1982, 5
        %v1985 = vor.u32 %v1981, %v1984
        %v1986 = vrot.slane %v1985, 4
        %v1988 = vshll.u32 %v1642, 16
        %v1990 = vrot.slane %v1988, 5
        %v1991 = vsel %vm1665, %v1986, %v1990
        %v1992 = vshrl.u32 %v1642, 16
        %v1994 = vrot.slane %v1992, 4
        %v1995 = vor.u32 %v1994, %v1990
        %v1996 = vrot.slane %v1995, 4
        %v1998 = vshll.u32 %v1660, 16
        %v2000 = vrot.slane %v1998, 5
        %v2001 = vsel %vm1665, %v1996, %v2000
        %v2003 = vshrl.u32 %v1643, 16
        %v2005 = vrot.slane %v2003, 4
        %v2006 = vshll.u32 %v1643, 16
        %v2008 = vrot.slane %v2006, 5
        %v2009 = vor.u32 %v2005, %v2008
        %v2010 = vrot.slane %v2009, 4
        %v2012 = vshll.u32 %v1644, 16
        %v2014 = vrot.slane %v2012, 5
        %v2015 = vsel %vm1665, %v2010, %v2014
        %v2016 = vshrl.u32 %v1644, 16
        %v2018 = vrot.slane %v2016, 4
        %v2019 = vor.u32 %v2018, %v2014
        %v2020 = vrot.slane %v2019, 4
        %v2022 = vshll.u32 %v1661, 16
        %v2024 = vrot.slane %v2022, 5
        %v2025 = vsel %vm1665, %v2020, %v2024
        %v2027 = vshrl.u32 %v1645, 16
        %v2029 = vrot.slane %v2027, 4
        %v2030 = vshll.u32 %v1645, 16
        %v2032 = vrot.slane %v2030, 5
        %v2033 = vor.u32 %v2029, %v2032
        %v2034 = vrot.slane %v2033, 4
        %v2036 = vshll.u32 %v1646, 16
        %v2038 = vrot.slane %v2036, 5
        %v2039 = vsel %vm1665, %v2034, %v2038
        %v2040 = vshrl.u32 %v1646, 16
        %v2042 = vrot.slane %v2040, 4
        %v2043 = vor.u32 %v2042, %v2038
        %v2044 = vrot.slane %v2043, 4
        %v2046 = vshll.u32 %v1662, 16
        %v2048 = vrot.slane %v2046, 5
        %v2049 = vsel %vm1665, %v2044, %v2048
        %v2050 = vld [vmem:[#allocation2] sm:$0xe]
        %v2051 = vld [vmem:[#allocation2 + $0xc] sm:$0xe]
        %v2052 = vld [vmem:[#allocation2 + $0x18] sm:$0xe]
        %v2053 = vld [vmem:[#allocation2 + $0x24] sm:$0xe]
        %v2054 = vld [vmem:[#allocation2 + $0x30] sm:$0xe]
        %v2055 = vld [vmem:[#allocation2 + $0x3c] sm:$0xe]
        %v2056 = vld [vmem:[#allocation2 + $0x48] sm:$0xe]
        %v2057 = vld [vmem:[#allocation2 + $0x54] sm:$0xe]
        %v2058 = vld [vmem:[#allocation2 + $0x60] sm:$0xe]
        %v2059 = vld [vmem:[#allocation2 + $0x6c] sm:$0xe]
        %v2060 = vld [vmem:[#allocation2 + $0x78] sm:$0xe]
        %v2061 = vld [vmem:[#allocation2 + $0x84] sm:$0xe]
        %v2062 = vld [vmem:[#allocation2 + $0x90] sm:$0xe]
        %v2063 = vld [vmem:[#allocation2 + $0x9c] sm:$0xe]
        %v2064 = vld [vmem:[#allocation2 + $0xa8] sm:$0xe]
        %v2065 = vld [vmem:[#allocation2 + $0xb4] sm:$0xe]
        %vm2114 = vcmask 1042432
        %vm2115 = vcmask 1046532
        %vm2116 = vmor %vm2114, %vm2115
        %v2117 = vrot.slane %v2050, 5
        %v2118 = vrot.slane %v2117, 4
        %v2119 = vrot.slane %v1616, 5
        %v2120 = vsel %vm2116, %v2118, %v2119
        %v2121 = vrot.slane %v2119, 4
        %v2122 = vrot.slane %v1647, 5
        %v2123 = vsel %vm2116, %v2121, %v2122
        %v2124 = vrot.slane %v2051, 5
        %v2125 = vrot.slane %v2124, 4
        %v2126 = vrot.slane %v1618, 5
        %v2127 = vsel %vm2116, %v2125, %v2126
        %v2128 = vrot.slane %v2126, 4
        %v2129 = vrot.slane %v1648, 5
        %v2130 = vsel %vm2116, %v2128, %v2129
        %v2131 = vrot.slane %v2052, 5
        %v2132 = vrot.slane %v2131, 4
        %v2133 = vrot.slane %v1620, 5
        %v2134 = vsel %vm2116, %v2132, %v2133
        %v2135 = vrot.slane %v2133, 4
        %v2136 = vrot.slane %v1649, 5
        %v2137 = vsel %vm2116, %v2135, %v2136
        %v2138 = vrot.slane %v2053, 5
        %v2139 = vrot.slane %v2138, 4
        %v2140 = vrot.slane %v1622, 5
        %v2141 = vsel %vm2116, %v2139, %v2140
        %v2142 = vrot.slane %v2140, 4
        %v2143 = vrot.slane %v1650, 5
        %v2144 = vsel %vm2116, %v2142, %v2143
        %v2145 = vrot.slane %v2054, 5
        %v2146 = vrot.slane %v2145, 4
        %v2147 = vrot.slane %v1624, 5
        %v2148 = vsel %vm2116, %v2146, %v2147
        %v2149 = vrot.slane %v2147, 4
        %v2150 = vrot.slane %v1651, 5
        %v2151 = vsel %vm2116, %v2149, %v2150
        %v2152 = vrot.slane %v2055, 5
        %v2153 = vrot.slane %v2152, 4
        %v2154 = vrot.slane %v1626, 5
        %v2155 = vsel %vm2116, %v2153, %v2154
        %v2156 = vrot.slane %v2154, 4
        %v2157 = vrot.slane %v1652, 5
        %v2158 = vsel %vm2116, %v2156, %v2157
        %v2159 = vrot.slane %v2056, 5
        %v2160 = vrot.slane %v2159, 4
        %v2161 = vrot.slane %v1628, 5
        %v2162 = vsel %vm2116, %v2160, %v2161
        %v2163 = vrot.slane %v2161, 4
        %v2164 = vrot.slane %v1653, 5
        %v2165 = vsel %vm2116, %v2163, %v2164
        %v2166 = vrot.slane %v2057, 5
        %v2167 = vrot.slane %v2166, 4
        %v2168 = vrot.slane %v1630, 5
        %v2169 = vsel %vm2116, %v2167, %v2168
        %v2170 = vrot.slane %v2168, 4
        %v2171 = vrot.slane %v1654, 5
        %v2172 = vsel %vm2116, %v2170, %v2171
        %v2173 = vrot.slane %v2058, 5
        %v2174 = vrot.slane %v2173, 4
        %v2175 = vrot.slane %v1632, 5
        %v2176 = vsel %vm2116, %v2174, %v2175
        %v2177 = vrot.slane %v2175, 4
        %v2178 = vrot.slane %v1655, 5
        %v2179 = vsel %vm2116, %v2177, %v2178
        %v2180 = vrot.slane %v2059, 5
        %v2181 = vrot.slane %v2180, 4
        %v2182 = vrot.slane %v1634, 5
        %v2183 = vsel %vm2116, %v2181, %v2182
        %v2184 = vrot.slane %v2182, 4
        %v2185 = vrot.slane %v1656, 5
        %v2186 = vsel %vm2116, %v2184, %v2185
        %v2187 = vrot.slane %v2060, 5
        %v2188 = vrot.slane %v2187, 4
        %v2189 = vrot.slane %v1636, 5
        %v2190 = vsel %vm2116, %v2188, %v2189
        %v2191 = vrot.slane %v2189, 4
        %v2192 = vrot.slane %v1657, 5
        %v2193 = vsel %vm2116, %v2191, %v2192
        %v2194 = vrot.slane %v2061, 5
        %v2195 = vrot.slane %v2194, 4
        %v2196 = vrot.slane %v1638, 5
        %v2197 = vsel %vm2116, %v2195, %v2196
        %v2198 = vrot.slane %v2196, 4
        %v2199 = vrot.slane %v1658, 5
        %v2200 = vsel %vm2116, %v2198, %v2199
        %v2201 = vrot.slane %v2062, 5
        %v2202 = vrot.slane %v2201, 4
        %v2203 = vrot.slane %v1640, 5
        %v2204 = vsel %vm2116, %v2202, %v2203
        %v2205 = vrot.slane %v2203, 4
        %v2206 = vrot.slane %v1659, 5
        %v2207 = vsel %vm2116, %v2205, %v2206
        %v2208 = vrot.slane %v2063, 5
        %v2209 = vrot.slane %v2208, 4
        %v2210 = vrot.slane %v1642, 5
        %v2211 = vsel %vm2116, %v2209, %v2210
        %v2212 = vrot.slane %v2210, 4
        %v2213 = vrot.slane %v1660, 5
        %v2214 = vsel %vm2116, %v2212, %v2213
        %v2215 = vrot.slane %v2064, 5
        %v2216 = vrot.slane %v2215, 4
        %v2217 = vrot.slane %v1644, 5
        %v2218 = vsel %vm2116, %v2216, %v2217
        %v2219 = vrot.slane %v2217, 4
        %v2220 = vrot.slane %v1661, 5
        %v2221 = vsel %vm2116, %v2219, %v2220
        %v2222 = vrot.slane %v2065, 5
        %v2223 = vrot.slane %v2222, 4
        %v2224 = vrot.slane %v1646, 5
        %v2225 = vsel %vm2116, %v2223, %v2224
        %v2226 = vrot.slane %v2224, 4
        %v2227 = vrot.slane %v1662, 5
        %v2228 = vsel %vm2116, %v2226, %v2227
        %v2245 = vunpack.c.l.b16 %v1615
        %v2246 = vunpack.c.l.b16 %v1616
        %v2247 = vunpack.c.l.b16 %v1617
        %v2248 = vunpack.c.l.b16 %v1618
        %v2249 = vunpack.c.l.b16 %v1619
        %v2250 = vunpack.c.l.b16 %v1620
        %v2251 = vunpack.c.l.b16 %v1621
        %v2252 = vunpack.c.l.b16 %v1622
        %v2253 = vunpack.c.l.b16 %v1623
        %v2254 = vunpack.c.l.b16 %v1624
        %v2255 = vunpack.c.l.b16 %v1625
        %v2256 = vunpack.c.l.b16 %v1626
        %v2257 = vunpack.c.l.b16 %v1627
        %v2258 = vunpack.c.l.b16 %v1628
        %v2259 = vunpack.c.l.b16 %v1629
        %v2260 = vunpack.c.l.b16 %v1630
        %v2261 = vunpack.c.l.b16 %v1631
        %v2262 = vunpack.c.l.b16 %v1632
        %v2263 = vunpack.c.l.b16 %v1633
        %v2264 = vunpack.c.l.b16 %v1634
        %v2265 = vunpack.c.l.b16 %v1635
        %v2266 = vunpack.c.l.b16 %v1636
        %v2267 = vunpack.c.l.b16 %v1637
        %v2268 = vunpack.c.l.b16 %v1638
        %v2269 = vunpack.c.l.b16 %v1639
        %v2270 = vunpack.c.l.b16 %v1640
        %v2271 = vunpack.c.l.b16 %v1641
        %v2272 = vunpack.c.l.b16 %v1642
        %v2273 = vunpack.c.l.b16 %v1643
        %v2274 = vunpack.c.l.b16 %v1644
        %v2275 = vunpack.c.l.b16 %v1645
        %v2276 = vunpack.c.l.b16 %v1646
        %v2277 = vpack.c.b16 %v2246, %v2245
        %v2278 = vpack.c.b16 %v2248, %v2247
        %v2279 = vpack.c.b16 %v2250, %v2249
        %v2280 = vpack.c.b16 %v2252, %v2251
        %v2281 = vpack.c.b16 %v2254, %v2253
        %v2282 = vpack.c.b16 %v2256, %v2255
        %v2283 = vpack.c.b16 %v2258, %v2257
        %v2284 = vpack.c.b16 %v2260, %v2259
        %v2285 = vpack.c.b16 %v2262, %v2261
        %v2286 = vpack.c.b16 %v2264, %v2263
        %v2287 = vpack.c.b16 %v2266, %v2265
        %v2288 = vpack.c.b16 %v2268, %v2267
        %v2289 = vpack.c.b16 %v2270, %v2269
        %v2290 = vpack.c.b16 %v2272, %v2271
        %v2291 = vpack.c.b16 %v2274, %v2273
        %v2292 = vpack.c.b16 %v2276, %v2275
        %v2309 = vunpack.c.l.b16 %v1679
        %v2310 = vunpack.c.l.b16 %v1689
        %v2311 = vunpack.c.l.b16 %v1703
        %v2312 = vunpack.c.l.b16 %v1713
        %v2313 = vunpack.c.l.b16 %v1727
        %v2314 = vunpack.c.l.b16 %v1737
        %v2315 = vunpack.c.l.b16 %v1751
        %v2316 = vunpack.c.l.b16 %v1761
        %v2317 = vunpack.c.l.b16 %v1775
        %v2318 = vunpack.c.l.b16 %v1785
        %v2319 = vunpack.c.l.b16 %v1799
        %v2320 = vunpack.c.l.b16 %v1809
        %v2321 = vunpack.c.l.b16 %v1823
        %v2322 = vunpack.c.l.b16 %v1833
        %v2323 = vunpack.c.l.b16 %v1847
        %v2324 = vunpack.c.l.b16 %v1857
        %v2325 = vunpack.c.l.b16 %v1871
        %v2326 = vunpack.c.l.b16 %v1881
        %v2327 = vunpack.c.l.b16 %v1895
        %v2328 = vunpack.c.l.b16 %v1905
        %v2329 = vunpack.c.l.b16 %v1919
        %v2330 = vunpack.c.l.b16 %v1929
        %v2331 = vunpack.c.l.b16 %v1943
        %v2332 = vunpack.c.l.b16 %v1953
        %v2333 = vunpack.c.l.b16 %v1967
        %v2334 = vunpack.c.l.b16 %v1977
        %v2335 = vunpack.c.l.b16 %v1991
        %v2336 = vunpack.c.l.b16 %v2001
        %v2337 = vunpack.c.l.b16 %v2015
        %v2338 = vunpack.c.l.b16 %v2025
        %v2339 = vunpack.c.l.b16 %v2039
        %v2340 = vunpack.c.l.b16 %v2049
        %v2341 = vpack.c.b16 %v2310, %v2309
        %v2342 = vpack.c.b16 %v2312, %v2311
        %v2343 = vpack.c.b16 %v2314, %v2313
        %v2344 = vpack.c.b16 %v2316, %v2315
        %v2345 = vpack.c.b16 %v2318, %v2317
        %v2346 = vpack.c.b16 %v2320, %v2319
        %v2347 = vpack.c.b16 %v2322, %v2321
        %v2348 = vpack.c.b16 %v2324, %v2323
        %v2349 = vpack.c.b16 %v2326, %v2325
        %v2350 = vpack.c.b16 %v2328, %v2327
        %v2351 = vpack.c.b16 %v2330, %v2329
        %v2352 = vpack.c.b16 %v2332, %v2331
        %v2353 = vpack.c.b16 %v2334, %v2333
        %v2354 = vpack.c.b16 %v2336, %v2335
        %v2355 = vpack.c.b16 %v2338, %v2337
        %v2356 = vpack.c.b16 %v2340, %v2339
        %v2373 = vunpack.c.l.b16 %v2120
        %v2374 = vunpack.c.l.b16 %v2123
        %v2375 = vunpack.c.l.b16 %v2127
        %v2376 = vunpack.c.l.b16 %v2130
        %v2377 = vunpack.c.l.b16 %v2134
        %v2378 = vunpack.c.l.b16 %v2137
        %v2379 = vunpack.c.l.b16 %v2141
        %v2380 = vunpack.c.l.b16 %v2144
        %v2381 = vunpack.c.l.b16 %v2148
        %v2382 = vunpack.c.l.b16 %v2151
        %v2383 = vunpack.c.l.b16 %v2155
        %v2384 = vunpack.c.l.b16 %v2158
        %v2385 = vunpack.c.l.b16 %v2162
        %v2386 = vunpack.c.l.b16 %v2165
        %v2387 = vunpack.c.l.b16 %v2169
        %v2388 = vunpack.c.l.b16 %v2172
        %v2389 = vunpack.c.l.b16 %v2176
        %v2390 = vunpack.c.l.b16 %v2179
        %v2391 = vunpack.c.l.b16 %v2183
        %v2392 = vunpack.c.l.b16 %v2186
        %v2393 = vunpack.c.l.b16 %v2190
        %v2394 = vunpack.c.l.b16 %v2193
        %v2395 = vunpack.c.l.b16 %v2197
        %v2396 = vunpack.c.l.b16 %v2200
        %v2397 = vunpack.c.l.b16 %v2204
        %v2398 = vunpack.c.l.b16 %v2207
        %v2399 = vunpack.c.l.b16 %v2211
        %v2400 = vunpack.c.l.b16 %v2214
        %v2401 = vunpack.c.l.b16 %v2218
        %v2402 = vunpack.c.l.b16 %v2221
        %v2403 = vunpack.c.l.b16 %v2225
        %v2404 = vunpack.c.l.b16 %v2228
        %v2405 = vpack.c.b16 %v2374, %v2373
        %v2406 = vpack.c.b16 %v2376, %v2375
        %v2407 = vpack.c.b16 %v2378, %v2377
        %v2408 = vpack.c.b16 %v2380, %v2379
        %v2409 = vpack.c.b16 %v2382, %v2381
        %v2410 = vpack.c.b16 %v2384, %v2383
        %v2411 = vpack.c.b16 %v2386, %v2385
        %v2412 = vpack.c.b16 %v2388, %v2387
        %v2413 = vpack.c.b16 %v2390, %v2389
        %v2414 = vpack.c.b16 %v2392, %v2391
        %v2415 = vpack.c.b16 %v2394, %v2393
        %v2416 = vpack.c.b16 %v2396, %v2395
        %v2417 = vpack.c.b16 %v2398, %v2397
        %v2418 = vpack.c.b16 %v2400, %v2399
        %v2419 = vpack.c.b16 %v2402, %v2401
        %v2420 = vpack.c.b16 %v2404, %v2403
        %v2437 = vld [vmem:[#allocation8] sm:$0xf]
        %v2438 = vld [vmem:[#allocation8 + $0x4] sm:$0xf]
        %v2439 = vld [vmem:[#allocation8 + $0x8] sm:$0xf]
        %v2440 = vld [vmem:[#allocation8 + $0xc] sm:$0xf]
        %v2441 = vld [vmem:[#allocation8 + $0x10] sm:$0xf]
        %v2442 = vld [vmem:[#allocation8 + $0x14] sm:$0xf]
        %v2443 = vld [vmem:[#allocation8 + $0x18] sm:$0xf]
        %v2444 = vld [vmem:[#allocation8 + $0x1c] sm:$0xf]
        %v2445 = vld [vmem:[#allocation8 + $0x20] sm:$0xf]
        %v2446 = vld [vmem:[#allocation8 + $0x24] sm:$0xf]
        %v2447 = vld [vmem:[#allocation8 + $0x28] sm:$0xf]
        %v2448 = vld [vmem:[#allocation8 + $0x2c] sm:$0xf]
        %v2449 = vld [vmem:[#allocation8 + $0x30] sm:$0xf]
        %v2450 = vld [vmem:[#allocation8 + $0x34] sm:$0xf]
        %v2451 = vld [vmem:[#allocation8 + $0x38] sm:$0xf]
        %v2452 = vld [vmem:[#allocation8 + $0x3c] sm:$0xf]
        %v2453 = vld [vmem:[#allocation8 + $0x40] sm:$0xf]
        %v2454 = vld [vmem:[#allocation8 + $0x44] sm:$0xf]
        %v2455 = vld [vmem:[#allocation8 + $0x48] sm:$0xf]
        %v2456 = vld [vmem:[#allocation8 + $0x4c] sm:$0xf]
        %v2457 = vld [vmem:[#allocation8 + $0x50] sm:$0xf]
        %v2458 = vld [vmem:[#allocation8 + $0x54] sm:$0xf]
        %v2459 = vld [vmem:[#allocation8 + $0x58] sm:$0xf]
        %v2460 = vld [vmem:[#allocation8 + $0x5c] sm:$0xf]
        %v2461 = vld [vmem:[#allocation8 + $0x60] sm:$0xf]
        %v2462 = vld [vmem:[#allocation8 + $0x64] sm:$0xf]
        %v2463 = vld [vmem:[#allocation8 + $0x68] sm:$0xf]
        %v2464 = vld [vmem:[#allocation8 + $0x6c] sm:$0xf]
        %v2465 = vld [vmem:[#allocation8 + $0x70] sm:$0xf]
        %v2466 = vld [vmem:[#allocation8 + $0x74] sm:$0xf]
        %v2467 = vld [vmem:[#allocation8 + $0x78] sm:$0xf]
        %v2468 = vld [vmem:[#allocation8 + $0x7c] sm:$0xf]
        %v2469 = vld [vmem:[#allocation8 + $0x80] sm:$0xf]
        %v2470 = vld [vmem:[#allocation8 + $0x84] sm:$0xf]
        %v2471 = vld [vmem:[#allocation8 + $0x88] sm:$0xf]
        %v2472 = vld [vmem:[#allocation8 + $0x8c] sm:$0xf]
        %v2473 = vld [vmem:[#allocation8 + $0x90] sm:$0xf]
        %v2474 = vld [vmem:[#allocation8 + $0x94] sm:$0xf]
        %v2475 = vld [vmem:[#allocation8 + $0x98] sm:$0xf]
        %v2476 = vld [vmem:[#allocation8 + $0x9c] sm:$0xf]
        %v2477 = vld [vmem:[#allocation8 + $0xa0] sm:$0xf]
        %v2478 = vld [vmem:[#allocation8 + $0xa4] sm:$0xf]
        %v2479 = vld [vmem:[#allocation8 + $0xa8] sm:$0xf]
        %v2480 = vld [vmem:[#allocation8 + $0xac] sm:$0xf]
        %v2481 = vld [vmem:[#allocation8 + $0xb0] sm:$0xf]
        %v2482 = vld [vmem:[#allocation8 + $0xb4] sm:$0xf]
        %v2483 = vld [vmem:[#allocation8 + $0xb8] sm:$0xf]
        %v2484 = vld [vmem:[#allocation8 + $0xbc] sm:$0xf]
        %s2485 = scalar_lea.vmem [#allocation2], 12
        %v2486 = vld [vmem:[%s2485] sm:$0xf]
        %v2487 = vld [vmem:[%s2485 + $0x4] sm:$0xf]
        %v2488 = vld [vmem:[%s2485 + $0xc] sm:$0xf]
        %v2489 = vld [vmem:[%s2485 + $0x10] sm:$0xf]
        %v2490 = vld [vmem:[%s2485 + $0x18] sm:$0xf]
        %v2491 = vld [vmem:[%s2485 + $0x1c] sm:$0xf]
        %v2492 = vld [vmem:[%s2485 + $0x24] sm:$0xf]
        %v2493 = vld [vmem:[%s2485 + $0x28] sm:$0xf]
        %v2494 = vld [vmem:[%s2485 + $0x30] sm:$0xf]
        %v2495 = vld [vmem:[%s2485 + $0x34] sm:$0xf]
        %v2496 = vld [vmem:[%s2485 + $0x3c] sm:$0xf]
        %v2497 = vld [vmem:[%s2485 + $0x40] sm:$0xf]
        %v2498 = vld [vmem:[%s2485 + $0x48] sm:$0xf]
        %v2499 = vld [vmem:[%s2485 + $0x4c] sm:$0xf]
        %v2500 = vld [vmem:[%s2485 + $0x54] sm:$0xf]
        %v2501 = vld [vmem:[%s2485 + $0x58] sm:$0xf]
        %v2502 = vld [vmem:[%s2485 + $0x60] sm:$0xf]
        %v2503 = vld [vmem:[%s2485 + $0x64] sm:$0xf]
        %v2504 = vld [vmem:[%s2485 + $0x6c] sm:$0xf]
        %v2505 = vld [vmem:[%s2485 + $0x70] sm:$0xf]
        %v2506 = vld [vmem:[%s2485 + $0x78] sm:$0xf]
        %v2507 = vld [vmem:[%s2485 + $0x7c] sm:$0xf]
        %v2508 = vld [vmem:[%s2485 + $0x84] sm:$0xf]
        %v2509 = vld [vmem:[%s2485 + $0x88] sm:$0xf]
        %v2510 = vld [vmem:[%s2485 + $0x90] sm:$0xf]
        %v2511 = vld [vmem:[%s2485 + $0x94] sm:$0xf]
        %v2512 = vld [vmem:[%s2485 + $0x9c] sm:$0xf]
        %v2513 = vld [vmem:[%s2485 + $0xa0] sm:$0xf]
        %v2514 = vld [vmem:[%s2485 + $0xa8] sm:$0xf]
        %v2515 = vld [vmem:[%s2485 + $0xac] sm:$0xf]
        %v2516 = vld [vmem:[%s2485 + $0xb4] sm:$0xf]
        %v2517 = vld [vmem:[%s2485 + $0xb8] sm:$0xf]
        %v2518 = vld [vmem:[%s2485 + $0x8] sm:$0x1]
        %v2519 = vld [vmem:[%s2485 + $0x14] sm:$0x1]
        %v2520 = vld [vmem:[%s2485 + $0x20] sm:$0x1]
        %v2521 = vld [vmem:[%s2485 + $0x2c] sm:$0x1]
        %v2522 = vld [vmem:[%s2485 + $0x38] sm:$0x1]
        %v2523 = vld [vmem:[%s2485 + $0x44] sm:$0x1]
        %v2524 = vld [vmem:[%s2485 + $0x50] sm:$0x1]
        %v2525 = vld [vmem:[%s2485 + $0x5c] sm:$0x1]
        %v2526 = vld [vmem:[%s2485 + $0x68] sm:$0x1]
        %v2527 = vld [vmem:[%s2485 + $0x74] sm:$0x1]
        %v2528 = vld [vmem:[%s2485 + $0x80] sm:$0x1]
        %v2529 = vld [vmem:[%s2485 + $0x8c] sm:$0x1]
        %v2530 = vld [vmem:[%s2485 + $0x98] sm:$0x1]
        %v2531 = vld [vmem:[%s2485 + $0xa4] sm:$0x1]
        %v2532 = vld [vmem:[%s2485 + $0xb0] sm:$0x1]
        %v2533 = vld [vmem:[%s2485 + $0xbc] sm:$0x1]
        %v2535 = vshrl.u32 %v2486, 16
        %v2537 = vrot.slane %v2535, 4
        %v2538 = vshll.u32 %v2486, 16
        %v2540 = vrot.slane %v2538, 5
        %v2541 = vor.u32 %v2537, %v2540
        %v2542 = vrot.slane %v2541, 4
        %v2544 = vshll.u32 %v2487, 16
        %v2546 = vrot.slane %v2544, 5
        %v2547 = vsel %vm1665, %v2542, %v2546
        %v2548 = vshrl.u32 %v2487, 16
        %v2550 = vrot.slane %v2548, 4
        %v2551 = vor.u32 %v2550, %v2546
        %v2552 = vrot.slane %v2551, 4
        %v2554 = vshll.u32 %v2518, 16
        %v2556 = vrot.slane %v2554, 5
        %v2557 = vsel %vm1665, %v2552, %v2556
        %v2559 = vshrl.u32 %v2488, 16
        %v2561 = vrot.slane %v2559, 4
        %v2562 = vshll.u32 %v2488, 16
        %v2564 = vrot.slane %v2562, 5
        %v2565 = vor.u32 %v2561, %v2564
        %v2566 = vrot.slane %v2565, 4
        %v2568 = vshll.u32 %v2489, 16
        %v2570 = vrot.slane %v2568, 5
        %v2571 = vsel %vm1665, %v2566, %v2570
        %v2572 = vshrl.u32 %v2489, 16
        %v2574 = vrot.slane %v2572, 4
        %v2575 = vor.u32 %v2574, %v2570
        %v2576 = vrot.slane %v2575, 4
        %v2578 = vshll.u32 %v2519, 16
        %v2580 = vrot.slane %v2578, 5
        %v2581 = vsel %vm1665, %v2576, %v2580
        %v2583 = vshrl.u32 %v2490, 16
        %v2585 = vrot.slane %v2583, 4
        %v2586 = vshll.u32 %v2490, 16
        %v2588 = vrot.slane %v2586, 5
        %v2589 = vor.u32 %v2585, %v2588
        %v2590 = vrot.slane %v2589, 4
        %v2592 = vshll.u32 %v2491, 16
        %v2594 = vrot.slane %v2592, 5
        %v2595 = vsel %vm1665, %v2590, %v2594
        %v2596 = vshrl.u32 %v2491, 16
        %v2598 = vrot.slane %v2596, 4
        %v2599 = vor.u32 %v2598, %v2594
        %v2600 = vrot.slane %v2599, 4
        %v2602 = vshll.u32 %v2520, 16
        %v2604 = vrot.slane %v2602, 5
        %v2605 = vsel %vm1665, %v2600, %v2604
        %v2607 = vshrl.u32 %v2492, 16
        %v2609 = vrot.slane %v2607, 4
        %v2610 = vshll.u32 %v2492, 16
        %v2612 = vrot.slane %v2610, 5
        %v2613 = vor.u32 %v2609, %v2612
        %v2614 = vrot.slane %v2613, 4
        %v2616 = vshll.u32 %v2493, 16
        %v2618 = vrot.slane %v2616, 5
        %v2619 = vsel %vm1665, %v2614, %v2618
        %v2620 = vshrl.u32 %v2493, 16
        %v2622 = vrot.slane %v2620, 4
        %v2623 = vor.u32 %v2622, %v2618
        %v2624 = vrot.slane %v2623, 4
        %v2626 = vshll.u32 %v2521, 16
        %v2628 = vrot.slane %v2626, 5
        %v2629 = vsel %vm1665, %v2624, %v2628
        %v2631 = vshrl.u32 %v2494, 16
        %v2633 = vrot.slane %v2631, 4
        %v2634 = vshll.u32 %v2494, 16
        %v2636 = vrot.slane %v2634, 5
        %v2637 = vor.u32 %v2633, %v2636
        %v2638 = vrot.slane %v2637, 4
        %v2640 = vshll.u32 %v2495, 16
        %v2642 = vrot.slane %v2640, 5
        %v2643 = vsel %vm1665, %v2638, %v2642
        %v2644 = vshrl.u32 %v2495, 16
        %v2646 = vrot.slane %v2644, 4
        %v2647 = vor.u32 %v2646, %v2642
        %v2648 = vrot.slane %v2647, 4
        %v2650 = vshll.u32 %v2522, 16
        %v2652 = vrot.slane %v2650, 5
        %v2653 = vsel %vm1665, %v2648, %v2652
        %v2655 = vshrl.u32 %v2496, 16
        %v2657 = vrot.slane %v2655, 4
        %v2658 = vshll.u32 %v2496, 16
        %v2660 = vrot.slane %v2658, 5
        %v2661 = vor.u32 %v2657, %v2660
        %v2662 = vrot.slane %v2661, 4
        %v2664 = vshll.u32 %v2497, 16
        %v2666 = vrot.slane %v2664, 5
        %v2667 = vsel %vm1665, %v2662, %v2666
        %v2668 = vshrl.u32 %v2497, 16
        %v2670 = vrot.slane %v2668, 4
        %v2671 = vor.u32 %v2670, %v2666
        %v2672 = vrot.slane %v2671, 4
        %v2674 = vshll.u32 %v2523, 16
        %v2676 = vrot.slane %v2674, 5
        %v2677 = vsel %vm1665, %v2672, %v2676
        %v2679 = vshrl.u32 %v2498, 16
        %v2681 = vrot.slane %v2679, 4
        %v2682 = vshll.u32 %v2498, 16
        %v2684 = vrot.slane %v2682, 5
        %v2685 = vor.u32 %v2681, %v2684
        %v2686 = vrot.slane %v2685, 4
        %v2688 = vshll.u32 %v2499, 16
        %v2690 = vrot.slane %v2688, 5
        %v2691 = vsel %vm1665, %v2686, %v2690
        %v2692 = vshrl.u32 %v2499, 16
        %v2694 = vrot.slane %v2692, 4
        %v2695 = vor.u32 %v2694, %v2690
        %v2696 = vrot.slane %v2695, 4
        %v2698 = vshll.u32 %v2524, 16
        %v2700 = vrot.slane %v2698, 5
        %v2701 = vsel %vm1665, %v2696, %v2700
        %v2703 = vshrl.u32 %v2500, 16
        %v2705 = vrot.slane %v2703, 4
        %v2706 = vshll.u32 %v2500, 16
        %v2708 = vrot.slane %v2706, 5
        %v2709 = vor.u32 %v2705, %v2708
        %v2710 = vrot.slane %v2709, 4
        %v2712 = vshll.u32 %v2501, 16
        %v2714 = vrot.slane %v2712, 5
        %v2715 = vsel %vm1665, %v2710, %v2714
        %v2716 = vshrl.u32 %v2501, 16
        %v2718 = vrot.slane %v2716, 4
        %v2719 = vor.u32 %v2718, %v2714
        %v2720 = vrot.slane %v2719, 4
        %v2722 = vshll.u32 %v2525, 16
        %v2724 = vrot.slane %v2722, 5
        %v2725 = vsel %vm1665, %v2720, %v2724
        %v2727 = vshrl.u32 %v2502, 16
        %v2729 = vrot.slane %v2727, 4
        %v2730 = vshll.u32 %v2502, 16
        %v2732 = vrot.slane %v2730, 5
        %v2733 = vor.u32 %v2729, %v2732
        %v2734 = vrot.slane %v2733, 4
        %v2736 = vshll.u32 %v2503, 16
        %v2738 = vrot.slane %v2736, 5
        %v2739 = vsel %vm1665, %v2734, %v2738
        %v2740 = vshrl.u32 %v2503, 16
        %v2742 = vrot.slane %v2740, 4
        %v2743 = vor.u32 %v2742, %v2738
        %v2744 = vrot.slane %v2743, 4
        %v2746 = vshll.u32 %v2526, 16
        %v2748 = vrot.slane %v2746, 5
        %v2749 = vsel %vm1665, %v2744, %v2748
        %v2751 = vshrl.u32 %v2504, 16
        %v2753 = vrot.slane %v2751, 4
        %v2754 = vshll.u32 %v2504, 16
        %v2756 = vrot.slane %v2754, 5
        %v2757 = vor.u32 %v2753, %v2756
        %v2758 = vrot.slane %v2757, 4
        %v2760 = vshll.u32 %v2505, 16
        %v2762 = vrot.slane %v2760, 5
        %v2763 = vsel %vm1665, %v2758, %v2762
        %v2764 = vshrl.u32 %v2505, 16
        %v2766 = vrot.slane %v2764, 4
        %v2767 = vor.u32 %v2766, %v2762
        %v2768 = vrot.slane %v2767, 4
        %v2770 = vshll.u32 %v2527, 16
        %v2772 = vrot.slane %v2770, 5
        %v2773 = vsel %vm1665, %v2768, %v2772
        %v2775 = vshrl.u32 %v2506, 16
        %v2777 = vrot.slane %v2775, 4
        %v2778 = vshll.u32 %v2506, 16
        %v2780 = vrot.slane %v2778, 5
        %v2781 = vor.u32 %v2777, %v2780
        %v2782 = vrot.slane %v2781, 4
        %v2784 = vshll.u32 %v2507, 16
        %v2786 = vrot.slane %v2784, 5
        %v2787 = vsel %vm1665, %v2782, %v2786
        %v2788 = vshrl.u32 %v2507, 16
        %v2790 = vrot.slane %v2788, 4
        %v2791 = vor.u32 %v2790, %v2786
        %v2792 = vrot.slane %v2791, 4
        %v2794 = vshll.u32 %v2528, 16
        %v2796 = vrot.slane %v2794, 5
        %v2797 = vsel %vm1665, %v2792, %v2796
        %v2799 = vshrl.u32 %v2508, 16
        %v2801 = vrot.slane %v2799, 4
        %v2802 = vshll.u32 %v2508, 16
        %v2804 = vrot.slane %v2802, 5
        %v2805 = vor.u32 %v2801, %v2804
        %v2806 = vrot.slane %v2805, 4
        %v2808 = vshll.u32 %v2509, 16
        %v2810 = vrot.slane %v2808, 5
        %v2811 = vsel %vm1665, %v2806, %v2810
        %v2812 = vshrl.u32 %v2509, 16
        %v2814 = vrot.slane %v2812, 4
        %v2815 = vor.u32 %v2814, %v2810
        %v2816 = vrot.slane %v2815, 4
        %v2818 = vshll.u32 %v2529, 16
        %v2820 = vrot.slane %v2818, 5
        %v2821 = vsel %vm1665, %v2816, %v2820
        %v2823 = vshrl.u32 %v2510, 16
        %v2825 = vrot.slane %v2823, 4
        %v2826 = vshll.u32 %v2510, 16
        %v2828 = vrot.slane %v2826, 5
        %v2829 = vor.u32 %v2825, %v2828
        %v2830 = vrot.slane %v2829, 4
        %v2832 = vshll.u32 %v2511, 16
        %v2834 = vrot.slane %v2832, 5
        %v2835 = vsel %vm1665, %v2830, %v2834
        %v2836 = vshrl.u32 %v2511, 16
        %v2838 = vrot.slane %v2836, 4
        %v2839 = vor.u32 %v2838, %v2834
        %v2840 = vrot.slane %v2839, 4
        %v2842 = vshll.u32 %v2530, 16
        %v2844 = vrot.slane %v2842, 5
        %v2845 = vsel %vm1665, %v2840, %v2844
        %v2847 = vshrl.u32 %v2512, 16
        %v2849 = vrot.slane %v2847, 4
        %v2850 = vshll.u32 %v2512, 16
        %v2852 = vrot.slane %v2850, 5
        %v2853 = vor.u32 %v2849, %v2852
        %v2854 = vrot.slane %v2853, 4
        %v2856 = vshll.u32 %v2513, 16
        %v2858 = vrot.slane %v2856, 5
        %v2859 = vsel %vm1665, %v2854, %v2858
        %v2860 = vshrl.u32 %v2513, 16
        %v2862 = vrot.slane %v2860, 4
        %v2863 = vor.u32 %v2862, %v2858
        %v2864 = vrot.slane %v2863, 4
        %v2866 = vshll.u32 %v2531, 16
        %v2868 = vrot.slane %v2866, 5
        %v2869 = vsel %vm1665, %v2864, %v2868
        %v2871 = vshrl.u32 %v2514, 16
        %v2873 = vrot.slane %v2871, 4
        %v2874 = vshll.u32 %v2514, 16
        %v2876 = vrot.slane %v2874, 5
        %v2877 = vor.u32 %v2873, %v2876
        %v2878 = vrot.slane %v2877, 4
        %v2880 = vshll.u32 %v2515, 16
        %v2882 = vrot.slane %v2880, 5
        %v2883 = vsel %vm1665, %v2878, %v2882
        %v2884 = vshrl.u32 %v2515, 16
        %v2886 = vrot.slane %v2884, 4
        %v2887 = vor.u32 %v2886, %v2882
        %v2888 = vrot.slane %v2887, 4
        %v2890 = vshll.u32 %v2532, 16
        %v2892 = vrot.slane %v2890, 5
        %v2893 = vsel %vm1665, %v2888, %v2892
        %v2895 = vshrl.u32 %v2516, 16
        %v2897 = vrot.slane %v2895, 4
        %v2898 = vshll.u32 %v2516, 16
        %v2900 = vrot.slane %v2898, 5
        %v2901 = vor.u32 %v2897, %v2900
        %v2902 = vrot.slane %v2901, 4
        %v2904 = vshll.u32 %v2517, 16
        %v2906 = vrot.slane %v2904, 5
        %v2907 = vsel %vm1665, %v2902, %v2906
        %v2908 = vshrl.u32 %v2517, 16
        %v2910 = vrot.slane %v2908, 4
        %v2911 = vor.u32 %v2910, %v2906
        %v2912 = vrot.slane %v2911, 4
        %v2914 = vshll.u32 %v2533, 16
        %v2916 = vrot.slane %v2914, 5
        %v2917 = vsel %vm1665, %v2912, %v2916
        %v2918 = vld [vmem:[%s2485] sm:$0xe]
        %v2919 = vld [vmem:[%s2485 + $0xc] sm:$0xe]
        %v2920 = vld [vmem:[%s2485 + $0x18] sm:$0xe]
        %v2921 = vld [vmem:[%s2485 + $0x24] sm:$0xe]
        %v2922 = vld [vmem:[%s2485 + $0x30] sm:$0xe]
        %v2923 = vld [vmem:[%s2485 + $0x3c] sm:$0xe]
        %v2924 = vld [vmem:[%s2485 + $0x48] sm:$0xe]
        %v2925 = vld [vmem:[%s2485 + $0x54] sm:$0xe]
        %v2926 = vld [vmem:[%s2485 + $0x60] sm:$0xe]
        %v2927 = vld [vmem:[%s2485 + $0x6c] sm:$0xe]
        %v2928 = vld [vmem:[%s2485 + $0x78] sm:$0xe]
        %v2929 = vld [vmem:[%s2485 + $0x84] sm:$0xe]
        %v2930 = vld [vmem:[%s2485 + $0x90] sm:$0xe]
        %v2931 = vld [vmem:[%s2485 + $0x9c] sm:$0xe]
        %v2932 = vld [vmem:[%s2485 + $0xa8] sm:$0xe]
        %v2933 = vld [vmem:[%s2485 + $0xb4] sm:$0xe]
        %v2982 = vrot.slane %v2918, 5
        %v2983 = vrot.slane %v2982, 4
        %v2984 = vrot.slane %v2487, 5
        %v2985 = vsel %vm2116, %v2983, %v2984
        %v2986 = vrot.slane %v2984, 4
        %v2987 = vrot.slane %v2518, 5
        %v2988 = vsel %vm2116, %v2986, %v2987
        %v2989 = vrot.slane %v2919, 5
        %v2990 = vrot.slane %v2989, 4
        %v2991 = vrot.slane %v2489, 5
        %v2992 = vsel %vm2116, %v2990, %v2991
        %v2993 = vrot.slane %v2991, 4
        %v2994 = vrot.slane %v2519, 5
        %v2995 = vsel %vm2116, %v2993, %v2994
        %v2996 = vrot.slane %v2920, 5
        %v2997 = vrot.slane %v2996, 4
        %v2998 = vrot.slane %v2491, 5
        %v2999 = vsel %vm2116, %v2997, %v2998
        %v3000 = vrot.slane %v2998, 4
        %v3001 = vrot.slane %v2520, 5
        %v3002 = vsel %vm2116, %v3000, %v3001
        %v3003 = vrot.slane %v2921, 5
        %v3004 = vrot.slane %v3003, 4
        %v3005 = vrot.slane %v2493, 5
        %v3006 = vsel %vm2116, %v3004, %v3005
        %v3007 = vrot.slane %v3005, 4
        %v3008 = vrot.slane %v2521, 5
        %v3009 = vsel %vm2116, %v3007, %v3008
        %v3010 = vrot.slane %v2922, 5
        %v3011 = vrot.slane %v3010, 4
        %v3012 = vrot.slane %v2495, 5
        %v3013 = vsel %vm2116, %v3011, %v3012
        %v3014 = vrot.slane %v3012, 4
        %v3015 = vrot.slane %v2522, 5
        %v3016 = vsel %vm2116, %v3014, %v3015
        %v3017 = vrot.slane %v2923, 5
        %v3018 = vrot.slane %v3017, 4
        %v3019 = vrot.slane %v2497, 5
        %v3020 = vsel %vm2116, %v3018, %v3019
        %v3021 = vrot.slane %v3019, 4
        %v3022 = vrot.slane %v2523, 5
        %v3023 = vsel %vm2116, %v3021, %v3022
        %v3024 = vrot.slane %v2924, 5
        %v3025 = vrot.slane %v3024, 4
        %v3026 = vrot.slane %v2499, 5
        %v3027 = vsel %vm2116, %v3025, %v3026
        %v3028 = vrot.slane %v3026, 4
        %v3029 = vrot.slane %v2524, 5
        %v3030 = vsel %vm2116, %v3028, %v3029
        %v3031 = vrot.slane %v2925, 5
        %v3032 = vrot.slane %v3031, 4
        %v3033 = vrot.slane %v2501, 5
        %v3034 = vsel %vm2116, %v3032, %v3033
        %v3035 = vrot.slane %v3033, 4
        %v3036 = vrot.slane %v2525, 5
        %v3037 = vsel %vm2116, %v3035, %v3036
        %v3038 = vrot.slane %v2926, 5
        %v3039 = vrot.slane %v3038, 4
        %v3040 = vrot.slane %v2503, 5
        %v3041 = vsel %vm2116, %v3039, %v3040
        %v3042 = vrot.slane %v3040, 4
        %v3043 = vrot.slane %v2526, 5
        %v3044 = vsel %vm2116, %v3042, %v3043
        %v3045 = vrot.slane %v2927, 5
        %v3046 = vrot.slane %v3045, 4
        %v3047 = vrot.slane %v2505, 5
        %v3048 = vsel %vm2116, %v3046, %v3047
        %v3049 = vrot.slane %v3047, 4
        %v3050 = vrot.slane %v2527, 5
        %v3051 = vsel %vm2116, %v3049, %v3050
        %v3052 = vrot.slane %v2928, 5
        %v3053 = vrot.slane %v3052, 4
        %v3054 = vrot.slane %v2507, 5
        %v3055 = vsel %vm2116, %v3053, %v3054
        %v3056 = vrot.slane %v3054, 4
        %v3057 = vrot.slane %v2528, 5
        %v3058 = vsel %vm2116, %v3056, %v3057
        %v3059 = vrot.slane %v2929, 5
        %v3060 = vrot.slane %v3059, 4
        %v3061 = vrot.slane %v2509, 5
        %v3062 = vsel %vm2116, %v3060, %v3061
        %v3063 = vrot.slane %v3061, 4
        %v3064 = vrot.slane %v2529, 5
        %v3065 = vsel %vm2116, %v3063, %v3064
        %v3066 = vrot.slane %v2930, 5
        %v3067 = vrot.slane %v3066, 4
        %v3068 = vrot.slane %v2511, 5
        %v3069 = vsel %vm2116, %v3067, %v3068
        %v3070 = vrot.slane %v3068, 4
        %v3071 = vrot.slane %v2530, 5
        %v3072 = vsel %vm2116, %v3070, %v3071
        %v3073 = vrot.slane %v2931, 5
        %v3074 = vrot.slane %v3073, 4
        %v3075 = vrot.slane %v2513, 5
        %v3076 = vsel %vm2116, %v3074, %v3075
        %v3077 = vrot.slane %v3075, 4
        %v3078 = vrot.slane %v2531, 5
        %v3079 = vsel %vm2116, %v3077, %v3078
        %v3080 = vrot.slane %v2932, 5
        %v3081 = vrot.slane %v3080, 4
        %v3082 = vrot.slane %v2515, 5
        %v3083 = vsel %vm2116, %v3081, %v3082
        %v3084 = vrot.slane %v3082, 4
        %v3085 = vrot.slane %v2532, 5
        %v3086 = vsel %vm2116, %v3084, %v3085
        %v3087 = vrot.slane %v2933, 5
        %v3088 = vrot.slane %v3087, 4
        %v3089 = vrot.slane %v2517, 5
        %v3090 = vsel %vm2116, %v3088, %v3089
        %v3091 = vrot.slane %v3089, 4
        %v3092 = vrot.slane %v2533, 5
        %v3093 = vsel %vm2116, %v3091, %v3092
        %v3110 = vunpack.c.l.b16 %v2486
        %v3111 = vunpack.c.l.b16 %v2487
        %v3112 = vunpack.c.l.b16 %v2488
        %v3113 = vunpack.c.l.b16 %v2489
        %v3114 = vunpack.c.l.b16 %v2490
        %v3115 = vunpack.c.l.b16 %v2491
        %v3116 = vunpack.c.l.b16 %v2492
        %v3117 = vunpack.c.l.b16 %v2493
        %v3118 = vunpack.c.l.b16 %v2494
        %v3119 = vunpack.c.l.b16 %v2495
        %v3120 = vunpack.c.l.b16 %v2496
        %v3121 = vunpack.c.l.b16 %v2497
        %v3122 = vunpack.c.l.b16 %v2498
        %v3123 = vunpack.c.l.b16 %v2499
        %v3124 = vunpack.c.l.b16 %v2500
        %v3125 = vunpack.c.l.b16 %v2501
        %v3126 = vunpack.c.l.b16 %v2502
        %v3127 = vunpack.c.l.b16 %v2503
        %v3128 = vunpack.c.l.b16 %v2504
        %v3129 = vunpack.c.l.b16 %v2505
        %v3130 = vunpack.c.l.b16 %v2506
        %v3131 = vunpack.c.l.b16 %v2507
        %v3132 = vunpack.c.l.b16 %v2508
        %v3133 = vunpack.c.l.b16 %v2509
        %v3134 = vunpack.c.l.b16 %v2510
        %v3135 = vunpack.c.l.b16 %v2511
        %v3136 = vunpack.c.l.b16 %v2512
        %v3137 = vunpack.c.l.b16 %v2513
        %v3138 = vunpack.c.l.b16 %v2514
        %v3139 = vunpack.c.l.b16 %v2515
        %v3140 = vunpack.c.l.b16 %v2516
        %v3141 = vunpack.c.l.b16 %v2517
        %v3142 = vpack.c.b16 %v3111, %v3110
        %v3143 = vpack.c.b16 %v3113, %v3112
        %v3144 = vpack.c.b16 %v3115, %v3114
        %v3145 = vpack.c.b16 %v3117, %v3116
        %v3146 = vpack.c.b16 %v3119, %v3118
        %v3147 = vpack.c.b16 %v3121, %v3120
        %v3148 = vpack.c.b16 %v3123, %v3122
        %v3149 = vpack.c.b16 %v3125, %v3124
        %v3150 = vpack.c.b16 %v3127, %v3126
        %v3151 = vpack.c.b16 %v3129, %v3128
        %v3152 = vpack.c.b16 %v3131, %v3130
        %v3153 = vpack.c.b16 %v3133, %v3132
        %v3154 = vpack.c.b16 %v3135, %v3134
        %v3155 = vpack.c.b16 %v3137, %v3136
        %v3156 = vpack.c.b16 %v3139, %v3138
        %v3157 = vpack.c.b16 %v3141, %v3140
        %v3174 = vunpack.c.l.b16 %v2547
        %v3175 = vunpack.c.l.b16 %v2557
        %v3176 = vunpack.c.l.b16 %v2571
        %v3177 = vunpack.c.l.b16 %v2581
        %v3178 = vunpack.c.l.b16 %v2595
        %v3179 = vunpack.c.l.b16 %v2605
        %v3180 = vunpack.c.l.b16 %v2619
        %v3181 = vunpack.c.l.b16 %v2629
        %v3182 = vunpack.c.l.b16 %v2643
        %v3183 = vunpack.c.l.b16 %v2653
        %v3184 = vunpack.c.l.b16 %v2667
        %v3185 = vunpack.c.l.b16 %v2677
        %v3186 = vunpack.c.l.b16 %v2691
        %v3187 = vunpack.c.l.b16 %v2701
        %v3188 = vunpack.c.l.b16 %v2715
        %v3189 = vunpack.c.l.b16 %v2725
        %v3190 = vunpack.c.l.b16 %v2739
        %v3191 = vunpack.c.l.b16 %v2749
        %v3192 = vunpack.c.l.b16 %v2763
        %v3193 = vunpack.c.l.b16 %v2773
        %v3194 = vunpack.c.l.b16 %v2787
        %v3195 = vunpack.c.l.b16 %v2797
        %v3196 = vunpack.c.l.b16 %v2811
        %v3197 = vunpack.c.l.b16 %v2821
        %v3198 = vunpack.c.l.b16 %v2835
        %v3199 = vunpack.c.l.b16 %v2845
        %v3200 = vunpack.c.l.b16 %v2859
        %v3201 = vunpack.c.l.b16 %v2869
        %v3202 = vunpack.c.l.b16 %v2883
        %v3203 = vunpack.c.l.b16 %v2893
        %v3204 = vunpack.c.l.b16 %v2907
        %v3205 = vunpack.c.l.b16 %v2917
        %v3206 = vpack.c.b16 %v3175, %v3174
        %v3207 = vpack.c.b16 %v3177, %v3176
        %v3208 = vpack.c.b16 %v3179, %v3178
        %v3209 = vpack.c.b16 %v3181, %v3180
        %v3210 = vpack.c.b16 %v3183, %v3182
        %v3211 = vpack.c.b16 %v3185, %v3184
        %v3212 = vpack.c.b16 %v3187, %v3186
        %v3213 = vpack.c.b16 %v3189, %v3188
        %v3214 = vpack.c.b16 %v3191, %v3190
        %v3215 = vpack.c.b16 %v3193, %v3192
        %v3216 = vpack.c.b16 %v3195, %v3194
        %v3217 = vpack.c.b16 %v3197, %v3196
        %v3218 = vpack.c.b16 %v3199, %v3198
        %v3219 = vpack.c.b16 %v3201, %v3200
        %v3220 = vpack.c.b16 %v3203, %v3202
        %v3221 = vpack.c.b16 %v3205, %v3204
        %v3238 = vunpack.c.l.b16 %v2985
        %v3239 = vunpack.c.l.b16 %v2988
        %v3240 = vunpack.c.l.b16 %v2992
        %v3241 = vunpack.c.l.b16 %v2995
        %v3242 = vunpack.c.l.b16 %v2999
        %v3243 = vunpack.c.l.b16 %v3002
        %v3244 = vunpack.c.l.b16 %v3006
        %v3245 = vunpack.c.l.b16 %v3009
        %v3246 = vunpack.c.l.b16 %v3013
        %v3247 = vunpack.c.l.b16 %v3016
        %v3248 = vunpack.c.l.b16 %v3020
        %v3249 = vunpack.c.l.b16 %v3023
        %v3250 = vunpack.c.l.b16 %v3027
        %v3251 = vunpack.c.l.b16 %v3030
        %v3252 = vunpack.c.l.b16 %v3034
        %v3253 = vunpack.c.l.b16 %v3037
        %v3254 = vunpack.c.l.b16 %v3041
        %v3255 = vunpack.c.l.b16 %v3044
        %v3256 = vunpack.c.l.b16 %v3048
        %v3257 = vunpack.c.l.b16 %v3051
        %v3258 = vunpack.c.l.b16 %v3055
        %v3259 = vunpack.c.l.b16 %v3058
        %v3260 = vunpack.c.l.b16 %v3062
        %v3261 = vunpack.c.l.b16 %v3065
        %v3262 = vunpack.c.l.b16 %v3069
        %v3263 = vunpack.c.l.b16 %v3072
        %v3264 = vunpack.c.l.b16 %v3076
        %v3265 = vunpack.c.l.b16 %v3079
        %v3266 = vunpack.c.l.b16 %v3083
        %v3267 = vunpack.c.l.b16 %v3086
        %v3268 = vunpack.c.l.b16 %v3090
        %v3269 = vunpack.c.l.b16 %v3093
        %v3270 = vpack.c.b16 %v3239, %v3238
        %v3271 = vpack.c.b16 %v3241, %v3240
        %v3272 = vpack.c.b16 %v3243, %v3242
        %v3273 = vpack.c.b16 %v3245, %v3244
        %v3274 = vpack.c.b16 %v3247, %v3246
        %v3275 = vpack.c.b16 %v3249, %v3248
        %v3276 = vpack.c.b16 %v3251, %v3250
        %v3277 = vpack.c.b16 %v3253, %v3252
        %v3278 = vpack.c.b16 %v3255, %v3254
        %v3279 = vpack.c.b16 %v3257, %v3256
        %v3280 = vpack.c.b16 %v3259, %v3258
        %v3281 = vpack.c.b16 %v3261, %v3260
        %v3282 = vpack.c.b16 %v3263, %v3262
        %v3283 = vpack.c.b16 %v3265, %v3264
        %v3284 = vpack.c.b16 %v3267, %v3266
        %v3285 = vpack.c.b16 %v3269, %v3268
        %v3302 = vld [vmem:[#allocation8 + $0xc0] sm:$0xf]
        %v3303 = vld [vmem:[#allocation8 + $0xc4] sm:$0xf]
        %v3304 = vld [vmem:[#allocation8 + $0xc8] sm:$0xf]
        %v3305 = vld [vmem:[#allocation8 + $0xcc] sm:$0xf]
        %v3306 = vld [vmem:[#allocation8 + $0xd0] sm:$0xf]
        %v3307 = vld [vmem:[#allocation8 + $0xd4] sm:$0xf]
        %v3308 = vld [vmem:[#allocation8 + $0xd8] sm:$0xf]
        %v3309 = vld [vmem:[#allocation8 + $0xdc] sm:$0xf]
        %v3310 = vld [vmem:[#allocation8 + $0xe0] sm:$0xf]
        %v3311 = vld [vmem:[#allocation8 + $0xe4] sm:$0xf]
        %v3312 = vld [vmem:[#allocation8 + $0xe8] sm:$0xf]
        %v3313 = vld [vmem:[#allocation8 + $0xec] sm:$0xf]
        %v3314 = vld [vmem:[#allocation8 + $0xf0] sm:$0xf]
        %v3315 = vld [vmem:[#allocation8 + $0xf4] sm:$0xf]
        %v3316 = vld [vmem:[#allocation8 + $0xf8] sm:$0xf]
        %v3317 = vld [vmem:[#allocation8 + $0xfc] sm:$0xf]
        %v3318 = vld [vmem:[#allocation8 + $0x100] sm:$0xf]
        %v3319 = vld [vmem:[#allocation8 + $0x104] sm:$0xf]
        %v3320 = vld [vmem:[#allocation8 + $0x108] sm:$0xf]
        %v3321 = vld [vmem:[#allocation8 + $0x10c] sm:$0xf]
        %v3322 = vld [vmem:[#allocation8 + $0x110] sm:$0xf]
        %v3323 = vld [vmem:[#allocation8 + $0x114] sm:$0xf]
        %v3324 = vld [vmem:[#allocation8 + $0x118] sm:$0xf]
        %v3325 = vld [vmem:[#allocation8 + $0x11c] sm:$0xf]
        %v3326 = vld [vmem:[#allocation8 + $0x120] sm:$0xf]
        %v3327 = vld [vmem:[#allocation8 + $0x124] sm:$0xf]
        %v3328 = vld [vmem:[#allocation8 + $0x128] sm:$0xf]
        %v3329 = vld [vmem:[#allocation8 + $0x12c] sm:$0xf]
        %v3330 = vld [vmem:[#allocation8 + $0x130] sm:$0xf]
        %v3331 = vld [vmem:[#allocation8 + $0x134] sm:$0xf]
        %v3332 = vld [vmem:[#allocation8 + $0x138] sm:$0xf]
        %v3333 = vld [vmem:[#allocation8 + $0x13c] sm:$0xf]
        %v3334 = vld [vmem:[#allocation8 + $0x140] sm:$0xf]
        %v3335 = vld [vmem:[#allocation8 + $0x144] sm:$0xf]
        %v3336 = vld [vmem:[#allocation8 + $0x148] sm:$0xf]
        %v3337 = vld [vmem:[#allocation8 + $0x14c] sm:$0xf]
        %v3338 = vld [vmem:[#allocation8 + $0x150] sm:$0xf]
        %v3339 = vld [vmem:[#allocation8 + $0x154] sm:$0xf]
        %v3340 = vld [vmem:[#allocation8 + $0x158] sm:$0xf]
        %v3341 = vld [vmem:[#allocation8 + $0x15c] sm:$0xf]
        %v3342 = vld [vmem:[#allocation8 + $0x160] sm:$0xf]
        %v3343 = vld [vmem:[#allocation8 + $0x164] sm:$0xf]
        %v3344 = vld [vmem:[#allocation8 + $0x168] sm:$0xf]
        %v3345 = vld [vmem:[#allocation8 + $0x16c] sm:$0xf]
        %v3346 = vld [vmem:[#allocation8 + $0x170] sm:$0xf]
        %v3347 = vld [vmem:[#allocation8 + $0x174] sm:$0xf]
        %v3348 = vld [vmem:[#allocation8 + $0x178] sm:$0xf]
        %v3349 = vld [vmem:[#allocation8 + $0x17c] sm:$0xf]
        %v3398 = vunpack.c.l.b16 %v3302
        %v3399 = vunpack.c.l.b16 %v3303
        %v3400 = vunpack.c.l.b16 %v3304
        %v3401 = vunpack.c.l.b16 %v3305
        %v3402 = vunpack.c.l.b16 %v3306
        %v3403 = vunpack.c.l.b16 %v3307
        %v3404 = vunpack.c.l.b16 %v3308
        %v3405 = vunpack.c.l.b16 %v3309
        %v3406 = vunpack.c.l.b16 %v3310
        %v3407 = vunpack.c.l.b16 %v3311
        %v3408 = vunpack.c.l.b16 %v3312
        %v3409 = vunpack.c.l.b16 %v3313
        %v3410 = vunpack.c.l.b16 %v3314
        %v3411 = vunpack.c.l.b16 %v3315
        %v3412 = vunpack.c.l.b16 %v3316
        %v3413 = vunpack.c.l.b16 %v3317
        %v3414 = vunpack.c.l.b16 %v3318
        %v3415 = vunpack.c.l.b16 %v3319
        %v3416 = vunpack.c.l.b16 %v3320
        %v3417 = vunpack.c.l.b16 %v3321
        %v3418 = vunpack.c.l.b16 %v3322
        %v3419 = vunpack.c.l.b16 %v3323
        %v3420 = vunpack.c.l.b16 %v3324
        %v3421 = vunpack.c.l.b16 %v3325
        %v3422 = vunpack.c.l.b16 %v3326
        %v3423 = vunpack.c.l.b16 %v3327
        %v3424 = vunpack.c.l.b16 %v3328
        %v3425 = vunpack.c.l.b16 %v3329
        %v3426 = vunpack.c.l.b16 %v3330
        %v3427 = vunpack.c.l.b16 %v3331
        %v3428 = vunpack.c.l.b16 %v3332
        %v3429 = vunpack.c.l.b16 %v3333
        %v3430 = vunpack.c.l.b16 %v3334
        %v3431 = vunpack.c.l.b16 %v3335
        %v3432 = vunpack.c.l.b16 %v3336
        %v3433 = vunpack.c.l.b16 %v3337
        %v3434 = vunpack.c.l.b16 %v3338
        %v3435 = vunpack.c.l.b16 %v3339
        %v3436 = vunpack.c.l.b16 %v3340
        %v3437 = vunpack.c.l.b16 %v3341
        %v3438 = vunpack.c.l.b16 %v3342
        %v3439 = vunpack.c.l.b16 %v3343
        %v3440 = vunpack.c.l.b16 %v3344
        %v3441 = vunpack.c.l.b16 %v3345
        %v3442 = vunpack.c.l.b16 %v3346
        %v3443 = vunpack.c.l.b16 %v3347
        %v3444 = vunpack.c.l.b16 %v3348
        %v3445 = vunpack.c.l.b16 %v3349
        %v3446 = vpack.c.b16 %v3399, %v3398
        %v3447 = vpack.c.b16 %v3401, %v3400
        %v3448 = vpack.c.b16 %v3403, %v3402
        %v3449 = vpack.c.b16 %v3405, %v3404
        %v3450 = vpack.c.b16 %v3407, %v3406
        %v3451 = vpack.c.b16 %v3409, %v3408
        %v3452 = vpack.c.b16 %v3411, %v3410
        %v3453 = vpack.c.b16 %v3413, %v3412
        %v3454 = vpack.c.b16 %v3415, %v3414
        %v3455 = vpack.c.b16 %v3417, %v3416
        %v3456 = vpack.c.b16 %v3419, %v3418
        %v3457 = vpack.c.b16 %v3421, %v3420
        %v3458 = vpack.c.b16 %v3423, %v3422
        %v3459 = vpack.c.b16 %v3425, %v3424
        %v3460 = vpack.c.b16 %v3427, %v3426
        %v3461 = vpack.c.b16 %v3429, %v3428
        %v3462 = vpack.c.b16 %v3431, %v3430
        %v3463 = vpack.c.b16 %v3433, %v3432
        %v3464 = vpack.c.b16 %v3435, %v3434
        %v3465 = vpack.c.b16 %v3437, %v3436
        %v3466 = vpack.c.b16 %v3439, %v3438
        %v3467 = vpack.c.b16 %v3441, %v3440
        %v3468 = vpack.c.b16 %v3443, %v3442
        %v3469 = vpack.c.b16 %v3445, %v3444
        %3494 = vmatpush.bf16.msra.mxu0 %v3453
        %3495 = vmatpush.bf16.msra.mxu0 %v3452
        %3496 = vmatpush.bf16.msra.mxu0 %v3451
        %3497 = vmatpush.bf16.msra.mxu0 %v3450
        %3498 = vmatpush.bf16.msra.mxu0 %v3449
        %3499 = vmatpush.bf16.msra.mxu0 %v3448
        %3500 = vmatpush.bf16.msra.mxu0 %v3447
        %3501 = vmatpush.bf16.msra.mxu0 %v3446
        %3502 = vmatmul.bf16.gmra.mxu0 %v3142
        %v3503 = vpop.f32.mrf.mxu0
        %v3504 = vadd.f32 0.0, %v3503
        %v3505 = vpop.f32.mrf.mxu0
        %v3506 = vadd.f32 0.0, %v3505
        %3507 = vmatmul.bf16.gmra.mxu0 %v3143
        %v3508 = vpop.f32.mrf.mxu0
        %v3509 = vadd.f32 0.0, %v3508
        %v3510 = vpop.f32.mrf.mxu0
        %v3511 = vadd.f32 0.0, %v3510
        %3512 = vmatmul.bf16.gmra.mxu0 %v3144
        %v3513 = vpop.f32.mrf.mxu0
        %v3514 = vadd.f32 0.0, %v3513
        %v3515 = vpop.f32.mrf.mxu0
        %v3516 = vadd.f32 0.0, %v3515
        %3517 = vmatmul.bf16.gmra.mxu0 %v3145
        %v3518 = vpop.f32.mrf.mxu0
        %v3519 = vadd.f32 0.0, %v3518
        %v3520 = vpop.f32.mrf.mxu0
        %v3521 = vadd.f32 0.0, %v3520
        %3522 = vmatmul.bf16.gmra.mxu0 %v3146
        %v3523 = vpop.f32.mrf.mxu0
        %v3524 = vadd.f32 0.0, %v3523
        %v3525 = vpop.f32.mrf.mxu0
        %v3526 = vadd.f32 0.0, %v3525
        %3527 = vmatmul.bf16.gmra.mxu0 %v3147
        %v3528 = vpop.f32.mrf.mxu0
        %v3529 = vadd.f32 0.0, %v3528
        %v3530 = vpop.f32.mrf.mxu0
        %v3531 = vadd.f32 0.0, %v3530
        %3532 = vmatmul.bf16.gmra.mxu0 %v3148
        %v3533 = vpop.f32.mrf.mxu0
        %v3534 = vadd.f32 0.0, %v3533
        %v3535 = vpop.f32.mrf.mxu0
        %v3536 = vadd.f32 0.0, %v3535
        %3537 = vmatmul.bf16.gmra.mxu0 %v3149
        %v3538 = vpop.f32.mrf.mxu0
        %v3539 = vadd.f32 0.0, %v3538
        %v3540 = vpop.f32.mrf.mxu0
        %v3541 = vadd.f32 0.0, %v3540
        %3542 = vmatmul.bf16.gmra.mxu0 %v3150
        %v3543 = vpop.f32.mrf.mxu0
        %v3544 = vadd.f32 0.0, %v3543
        %v3545 = vpop.f32.mrf.mxu0
        %v3546 = vadd.f32 0.0, %v3545
        %3547 = vmatmul.bf16.gmra.mxu0 %v3151
        %v3548 = vpop.f32.mrf.mxu0
        %v3549 = vadd.f32 0.0, %v3548
        %v3550 = vpop.f32.mrf.mxu0
        %v3551 = vadd.f32 0.0, %v3550
        %3552 = vmatmul.bf16.gmra.mxu0 %v3152
        %v3553 = vpop.f32.mrf.mxu0
        %v3554 = vadd.f32 0.0, %v3553
        %v3555 = vpop.f32.mrf.mxu0
        %v3556 = vadd.f32 0.0, %v3555
        %3557 = vmatmul.bf16.gmra.mxu0 %v3153
        %v3558 = vpop.f32.mrf.mxu0
        %v3559 = vadd.f32 0.0, %v3558
        %v3560 = vpop.f32.mrf.mxu0
        %v3561 = vadd.f32 0.0, %v3560
        %3562 = vmatmul.bf16.gmra.mxu0 %v3154
        %v3563 = vpop.f32.mrf.mxu0
        %v3564 = vadd.f32 0.0, %v3563
        %v3565 = vpop.f32.mrf.mxu0
        %v3566 = vadd.f32 0.0, %v3565
        %3567 = vmatmul.bf16.gmra.mxu0 %v3155
        %v3568 = vpop.f32.mrf.mxu0
        %v3569 = vadd.f32 0.0, %v3568
        %v3570 = vpop.f32.mrf.mxu0
        %v3571 = vadd.f32 0.0, %v3570
        %3572 = vmatmul.bf16.gmra.mxu0 %v3156
        %v3573 = vpop.f32.mrf.mxu0
        %v3574 = vadd.f32 0.0, %v3573
        %v3575 = vpop.f32.mrf.mxu0
        %v3576 = vadd.f32 0.0, %v3575
        %3577 = vmatmul.bf16.gmra.mxu0 %v3157
        %v3578 = vpop.f32.mrf.mxu0
        %v3579 = vadd.f32 0.0, %v3578
        %v3580 = vpop.f32.mrf.mxu0
        %v3581 = vadd.f32 0.0, %v3580
        %3582 = vdwg.mxu0
        %3583 = vmatpush.bf16.msra.mxu0 %v3461
        %3584 = vmatpush.bf16.msra.mxu0 %v3460
        %3585 = vmatpush.bf16.msra.mxu0 %v3459
        %3586 = vmatpush.bf16.msra.mxu0 %v3458
        %3587 = vmatpush.bf16.msra.mxu0 %v3457
        %3588 = vmatpush.bf16.msra.mxu0 %v3456
        %3589 = vmatpush.bf16.msra.mxu0 %v3455
        %3590 = vmatpush.bf16.msra.mxu0 %v3454
        %3591 = vmatmul.bf16.gmra.mxu0 %v3206
        %v3592 = vpop.f32.mrf.mxu0
        %v3593 = vadd.f32 %v3504, %v3592
        %v3594 = vpop.f32.mrf.mxu0
        %v3595 = vadd.f32 %v3506, %v3594
        %3596 = vmatmul.bf16.gmra.mxu0 %v3207
        %v3597 = vpop.f32.mrf.mxu0
        %v3598 = vadd.f32 %v3509, %v3597
        %v3599 = vpop.f32.mrf.mxu0
        %v3600 = vadd.f32 %v3511, %v3599
        %3601 = vmatmul.bf16.gmra.mxu0 %v3208
        %v3602 = vpop.f32.mrf.mxu0
        %v3603 = vadd.f32 %v3514, %v3602
        %v3604 = vpop.f32.mrf.mxu0
        %v3605 = vadd.f32 %v3516, %v3604
        %3606 = vmatmul.bf16.gmra.mxu0 %v3209
        %v3607 = vpop.f32.mrf.mxu0
        %v3608 = vadd.f32 %v3519, %v3607
        %v3609 = vpop.f32.mrf.mxu0
        %v3610 = vadd.f32 %v3521, %v3609
        %3611 = vmatmul.bf16.gmra.mxu0 %v3210
        %v3612 = vpop.f32.mrf.mxu0
        %v3613 = vadd.f32 %v3524, %v3612
        %v3614 = vpop.f32.mrf.mxu0
        %v3615 = vadd.f32 %v3526, %v3614
        %3616 = vmatmul.bf16.gmra.mxu0 %v3211
        %v3617 = vpop.f32.mrf.mxu0
        %v3618 = vadd.f32 %v3529, %v3617
        %v3619 = vpop.f32.mrf.mxu0
        %v3620 = vadd.f32 %v3531, %v3619
        %3621 = vmatmul.bf16.gmra.mxu0 %v3212
        %v3622 = vpop.f32.mrf.mxu0
        %v3623 = vadd.f32 %v3534, %v3622
        %v3624 = vpop.f32.mrf.mxu0
        %v3625 = vadd.f32 %v3536, %v3624
        %3626 = vmatmul.bf16.gmra.mxu0 %v3213
        %v3627 = vpop.f32.mrf.mxu0
        %v3628 = vadd.f32 %v3539, %v3627
        %v3629 = vpop.f32.mrf.mxu0
        %v3630 = vadd.f32 %v3541, %v3629
        %3631 = vmatmul.bf16.gmra.mxu0 %v3214
        %v3632 = vpop.f32.mrf.mxu0
        %v3633 = vadd.f32 %v3544, %v3632
        %v3634 = vpop.f32.mrf.mxu0
        %v3635 = vadd.f32 %v3546, %v3634
        %3636 = vmatmul.bf16.gmra.mxu0 %v3215
        %v3637 = vpop.f32.mrf.mxu0
        %v3638 = vadd.f32 %v3549, %v3637
        %v3639 = vpop.f32.mrf.mxu0
        %v3640 = vadd.f32 %v3551, %v3639
        %3641 = vmatmul.bf16.gmra.mxu0 %v3216
        %v3642 = vpop.f32.mrf.mxu0
        %v3643 = vadd.f32 %v3554, %v3642
        %v3644 = vpop.f32.mrf.mxu0
        %v3645 = vadd.f32 %v3556, %v3644
        %3646 = vmatmul.bf16.gmra.mxu0 %v3217
        %v3647 = vpop.f32.mrf.mxu0
        %v3648 = vadd.f32 %v3559, %v3647
        %v3649 = vpop.f32.mrf.mxu0
        %v3650 = vadd.f32 %v3561, %v3649
        %3651 = vmatmul.bf16.gmra.mxu0 %v3218
        %v3652 = vpop.f32.mrf.mxu0
        %v3653 = vadd.f32 %v3564, %v3652
        %v3654 = vpop.f32.mrf.mxu0
        %v3655 = vadd.f32 %v3566, %v3654
        %3656 = vmatmul.bf16.gmra.mxu0 %v3219
        %v3657 = vpop.f32.mrf.mxu0
        %v3658 = vadd.f32 %v3569, %v3657
        %v3659 = vpop.f32.mrf.mxu0
        %v3660 = vadd.f32 %v3571, %v3659
        %3661 = vmatmul.bf16.gmra.mxu0 %v3220
        %v3662 = vpop.f32.mrf.mxu0
        %v3663 = vadd.f32 %v3574, %v3662
        %v3664 = vpop.f32.mrf.mxu0
        %v3665 = vadd.f32 %v3576, %v3664
        %3666 = vmatmul.bf16.gmra.mxu0 %v3221
        %v3667 = vpop.f32.mrf.mxu0
        %v3668 = vadd.f32 %v3579, %v3667
        %v3669 = vpop.f32.mrf.mxu0
        %v3670 = vadd.f32 %v3581, %v3669
        %3671 = vdwg.mxu0
        %3672 = vmatpush.bf16.msra.mxu0 %v3469
        %3673 = vmatpush.bf16.msra.mxu0 %v3468
        %3674 = vmatpush.bf16.msra.mxu0 %v3467
        %3675 = vmatpush.bf16.msra.mxu0 %v3466
        %3676 = vmatpush.bf16.msra.mxu0 %v3465
        %3677 = vmatpush.bf16.msra.mxu0 %v3464
        %3678 = vmatpush.bf16.msra.mxu0 %v3463
        %3679 = vmatpush.bf16.msra.mxu0 %v3462
        %3680 = vmatmul.bf16.gmra.mxu0 %v3270
        %v3681 = vpop.f32.mrf.mxu0
        %v3682 = vadd.f32 %v3593, %v3681
        %v3683 = vpop.f32.mrf.mxu0
        %v3684 = vadd.f32 %v3595, %v3683
        %3685 = vmatmul.bf16.gmra.mxu0 %v3271
        %v3686 = vpop.f32.mrf.mxu0
        %v3687 = vadd.f32 %v3598, %v3686
        %v3688 = vpop.f32.mrf.mxu0
        %v3689 = vadd.f32 %v3600, %v3688
        %3690 = vmatmul.bf16.gmra.mxu0 %v3272
        %v3691 = vpop.f32.mrf.mxu0
        %v3692 = vadd.f32 %v3603, %v3691
        %v3693 = vpop.f32.mrf.mxu0
        %v3694 = vadd.f32 %v3605, %v3693
        %3695 = vmatmul.bf16.gmra.mxu0 %v3273
        %v3696 = vpop.f32.mrf.mxu0
        %v3697 = vadd.f32 %v3608, %v3696
        %v3698 = vpop.f32.mrf.mxu0
        %v3699 = vadd.f32 %v3610, %v3698
        %3700 = vmatmul.bf16.gmra.mxu0 %v3274
        %v3701 = vpop.f32.mrf.mxu0
        %v3702 = vadd.f32 %v3613, %v3701
        %v3703 = vpop.f32.mrf.mxu0
        %v3704 = vadd.f32 %v3615, %v3703
        %3705 = vmatmul.bf16.gmra.mxu0 %v3275
        %v3706 = vpop.f32.mrf.mxu0
        %v3707 = vadd.f32 %v3618, %v3706
        %v3708 = vpop.f32.mrf.mxu0
        %v3709 = vadd.f32 %v3620, %v3708
        %3710 = vmatmul.bf16.gmra.mxu0 %v3276
        %v3711 = vpop.f32.mrf.mxu0
        %v3712 = vadd.f32 %v3623, %v3711
        %v3713 = vpop.f32.mrf.mxu0
        %v3714 = vadd.f32 %v3625, %v3713
        %3715 = vmatmul.bf16.gmra.mxu0 %v3277
        %v3716 = vpop.f32.mrf.mxu0
        %v3717 = vadd.f32 %v3628, %v3716
        %v3718 = vpop.f32.mrf.mxu0
        %v3719 = vadd.f32 %v3630, %v3718
        %3720 = vmatmul.bf16.gmra.mxu0 %v3278
        %v3721 = vpop.f32.mrf.mxu0
        %v3722 = vadd.f32 %v3633, %v3721
        %v3723 = vpop.f32.mrf.mxu0
        %v3724 = vadd.f32 %v3635, %v3723
        %3725 = vmatmul.bf16.gmra.mxu0 %v3279
        %v3726 = vpop.f32.mrf.mxu0
        %v3727 = vadd.f32 %v3638, %v3726
        %v3728 = vpop.f32.mrf.mxu0
        %v3729 = vadd.f32 %v3640, %v3728
        %3730 = vmatmul.bf16.gmra.mxu0 %v3280
        %v3731 = vpop.f32.mrf.mxu0
        %v3732 = vadd.f32 %v3643, %v3731
        %v3733 = vpop.f32.mrf.mxu0
        %v3734 = vadd.f32 %v3645, %v3733
        %3735 = vmatmul.bf16.gmra.mxu0 %v3281
        %v3736 = vpop.f32.mrf.mxu0
        %v3737 = vadd.f32 %v3648, %v3736
        %v3738 = vpop.f32.mrf.mxu0
        %v3739 = vadd.f32 %v3650, %v3738
        %3740 = vmatmul.bf16.gmra.mxu0 %v3282
        %v3741 = vpop.f32.mrf.mxu0
        %v3742 = vadd.f32 %v3653, %v3741
        %v3743 = vpop.f32.mrf.mxu0
        %v3744 = vadd.f32 %v3655, %v3743
        %3745 = vmatmul.bf16.gmra.mxu0 %v3283
        %v3746 = vpop.f32.mrf.mxu0
        %v3747 = vadd.f32 %v3658, %v3746
        %v3748 = vpop.f32.mrf.mxu0
        %v3749 = vadd.f32 %v3660, %v3748
        %3750 = vmatmul.bf16.gmra.mxu0 %v3284
        %v3751 = vpop.f32.mrf.mxu0
        %v3752 = vadd.f32 %v3663, %v3751
        %v3753 = vpop.f32.mrf.mxu0
        %v3754 = vadd.f32 %v3665, %v3753
        %3755 = vmatmul.bf16.gmra.mxu0 %v3285
        %v3756 = vpop.f32.mrf.mxu0
        %v3757 = vadd.f32 %v3668, %v3756
        %v3758 = vpop.f32.mrf.mxu0
        %v3759 = vadd.f32 %v3670, %v3758
        %3760 = vdwg.mxu0
        %v3809 = vunpack.c.l.b16 %v2437
        %v3810 = vunpack.c.l.b16 %v2438
        %v3811 = vunpack.c.l.b16 %v2439
        %v3812 = vunpack.c.l.b16 %v2440
        %v3813 = vunpack.c.l.b16 %v2441
        %v3814 = vunpack.c.l.b16 %v2442
        %v3815 = vunpack.c.l.b16 %v2443
        %v3816 = vunpack.c.l.b16 %v2444
        %v3817 = vunpack.c.l.b16 %v2445
        %v3818 = vunpack.c.l.b16 %v2446
        %v3819 = vunpack.c.l.b16 %v2447
        %v3820 = vunpack.c.l.b16 %v2448
        %v3821 = vunpack.c.l.b16 %v2449
        %v3822 = vunpack.c.l.b16 %v2450
        %v3823 = vunpack.c.l.b16 %v2451
        %v3824 = vunpack.c.l.b16 %v2452
        %v3825 = vunpack.c.l.b16 %v2453
        %v3826 = vunpack.c.l.b16 %v2454
        %v3827 = vunpack.c.l.b16 %v2455
        %v3828 = vunpack.c.l.b16 %v2456
        %v3829 = vunpack.c.l.b16 %v2457
        %v3830 = vunpack.c.l.b16 %v2458
        %v3831 = vunpack.c.l.b16 %v2459
        %v3832 = vunpack.c.l.b16 %v2460
        %v3833 = vunpack.c.l.b16 %v2461
        %v3834 = vunpack.c.l.b16 %v2462
        %v3835 = vunpack.c.l.b16 %v2463
        %v3836 = vunpack.c.l.b16 %v2464
        %v3837 = vunpack.c.l.b16 %v2465
        %v3838 = vunpack.c.l.b16 %v2466
        %v3839 = vunpack.c.l.b16 %v2467
        %v3840 = vunpack.c.l.b16 %v2468
        %v3841 = vunpack.c.l.b16 %v2469
        %v3842 = vunpack.c.l.b16 %v2470
        %v3843 = vunpack.c.l.b16 %v2471
        %v3844 = vunpack.c.l.b16 %v2472
        %v3845 = vunpack.c.l.b16 %v2473
        %v3846 = vunpack.c.l.b16 %v2474
        %v3847 = vunpack.c.l.b16 %v2475
        %v3848 = vunpack.c.l.b16 %v2476
        %v3849 = vunpack.c.l.b16 %v2477
        %v3850 = vunpack.c.l.b16 %v2478
        %v3851 = vunpack.c.l.b16 %v2479
        %v3852 = vunpack.c.l.b16 %v2480
        %v3853 = vunpack.c.l.b16 %v2481
        %v3854 = vunpack.c.l.b16 %v2482
        %v3855 = vunpack.c.l.b16 %v2483
        %v3856 = vunpack.c.l.b16 %v2484
        %v3857 = vpack.c.b16 %v3810, %v3809
        %v3858 = vpack.c.b16 %v3812, %v3811
        %v3859 = vpack.c.b16 %v3814, %v3813
        %v3860 = vpack.c.b16 %v3816, %v3815
        %v3861 = vpack.c.b16 %v3818, %v3817
        %v3862 = vpack.c.b16 %v3820, %v3819
        %v3863 = vpack.c.b16 %v3822, %v3821
        %v3864 = vpack.c.b16 %v3824, %v3823
        %v3865 = vpack.c.b16 %v3826, %v3825
        %v3866 = vpack.c.b16 %v3828, %v3827
        %v3867 = vpack.c.b16 %v3830, %v3829
        %v3868 = vpack.c.b16 %v3832, %v3831
        %v3869 = vpack.c.b16 %v3834, %v3833
        %v3870 = vpack.c.b16 %v3836, %v3835
        %v3871 = vpack.c.b16 %v3838, %v3837
        %v3872 = vpack.c.b16 %v3840, %v3839
        %v3873 = vpack.c.b16 %v3842, %v3841
        %v3874 = vpack.c.b16 %v3844, %v3843
        %v3875 = vpack.c.b16 %v3846, %v3845
        %v3876 = vpack.c.b16 %v3848, %v3847
        %v3877 = vpack.c.b16 %v3850, %v3849
        %v3878 = vpack.c.b16 %v3852, %v3851
        %v3879 = vpack.c.b16 %v3854, %v3853
        %v3880 = vpack.c.b16 %v3856, %v3855
        %3905 = vmatpush.bf16.msra.mxu0 %v3864
        %3906 = vmatpush.bf16.msra.mxu0 %v3863
        %3907 = vmatpush.bf16.msra.mxu0 %v3862
        %3908 = vmatpush.bf16.msra.mxu0 %v3861
        %3909 = vmatpush.bf16.msra.mxu0 %v3860
        %3910 = vmatpush.bf16.msra.mxu0 %v3859
        %3911 = vmatpush.bf16.msra.mxu0 %v3858
        %3912 = vmatpush.bf16.msra.mxu0 %v3857
        %3913 = vmatmul.bf16.gmra.mxu0 %v2277
        %v3914 = vpop.f32.mrf.mxu0
        %v3915 = vadd.f32 %v3682, %v3914
        %v3916 = vpop.f32.mrf.mxu0
        %v3917 = vadd.f32 %v3684, %v3916
        %3918 = vmatmul.bf16.gmra.mxu0 %v2278
        %v3919 = vpop.f32.mrf.mxu0
        %v3920 = vadd.f32 %v3687, %v3919
        %v3921 = vpop.f32.mrf.mxu0
        %v3922 = vadd.f32 %v3689, %v3921
        %3923 = vmatmul.bf16.gmra.mxu0 %v2279
        %v3924 = vpop.f32.mrf.mxu0
        %v3925 = vadd.f32 %v3692, %v3924
        %v3926 = vpop.f32.mrf.mxu0
        %v3927 = vadd.f32 %v3694, %v3926
        %3928 = vmatmul.bf16.gmra.mxu0 %v2280
        %v3929 = vpop.f32.mrf.mxu0
        %v3930 = vadd.f32 %v3697, %v3929
        %v3931 = vpop.f32.mrf.mxu0
        %v3932 = vadd.f32 %v3699, %v3931
        %3933 = vmatmul.bf16.gmra.mxu0 %v2281
        %v3934 = vpop.f32.mrf.mxu0
        %v3935 = vadd.f32 %v3702, %v3934
        %v3936 = vpop.f32.mrf.mxu0
        %v3937 = vadd.f32 %v3704, %v3936
        %3938 = vmatmul.bf16.gmra.mxu0 %v2282
        %v3939 = vpop.f32.mrf.mxu0
        %v3940 = vadd.f32 %v3707, %v3939
        %v3941 = vpop.f32.mrf.mxu0
        %v3942 = vadd.f32 %v3709, %v3941
        %3943 = vmatmul.bf16.gmra.mxu0 %v2283
        %v3944 = vpop.f32.mrf.mxu0
        %v3945 = vadd.f32 %v3712, %v3944
        %v3946 = vpop.f32.mrf.mxu0
        %v3947 = vadd.f32 %v3714, %v3946
        %3948 = vmatmul.bf16.gmra.mxu0 %v2284
        %v3949 = vpop.f32.mrf.mxu0
        %v3950 = vadd.f32 %v3717, %v3949
        %v3951 = vpop.f32.mrf.mxu0
        %v3952 = vadd.f32 %v3719, %v3951
        %3953 = vmatmul.bf16.gmra.mxu0 %v2285
        %v3954 = vpop.f32.mrf.mxu0
        %v3955 = vadd.f32 %v3722, %v3954
        %v3956 = vpop.f32.mrf.mxu0
        %v3957 = vadd.f32 %v3724, %v3956
        %3958 = vmatmul.bf16.gmra.mxu0 %v2286
        %v3959 = vpop.f32.mrf.mxu0
        %v3960 = vadd.f32 %v3727, %v3959
        %v3961 = vpop.f32.mrf.mxu0
        %v3962 = vadd.f32 %v3729, %v3961
        %3963 = vmatmul.bf16.gmra.mxu0 %v2287
        %v3964 = vpop.f32.mrf.mxu0
        %v3965 = vadd.f32 %v3732, %v3964
        %v3966 = vpop.f32.mrf.mxu0
        %v3967 = vadd.f32 %v3734, %v3966
        %3968 = vmatmul.bf16.gmra.mxu0 %v2288
        %v3969 = vpop.f32.mrf.mxu0
        %v3970 = vadd.f32 %v3737, %v3969
        %v3971 = vpop.f32.mrf.mxu0
        %v3972 = vadd.f32 %v3739, %v3971
        %3973 = vmatmul.bf16.gmra.mxu0 %v2289
        %v3974 = vpop.f32.mrf.mxu0
        %v3975 = vadd.f32 %v3742, %v3974
        %v3976 = vpop.f32.mrf.mxu0
        %v3977 = vadd.f32 %v3744, %v3976
        %3978 = vmatmul.bf16.gmra.mxu0 %v2290
        %v3979 = vpop.f32.mrf.mxu0
        %v3980 = vadd.f32 %v3747, %v3979
        %v3981 = vpop.f32.mrf.mxu0
        %v3982 = vadd.f32 %v3749, %v3981
        %3983 = vmatmul.bf16.gmra.mxu0 %v2291
        %v3984 = vpop.f32.mrf.mxu0
        %v3985 = vadd.f32 %v3752, %v3984
        %v3986 = vpop.f32.mrf.mxu0
        %v3987 = vadd.f32 %v3754, %v3986
        %3988 = vmatmul.bf16.gmra.mxu0 %v2292
        %v3989 = vpop.f32.mrf.mxu0
        %v3990 = vadd.f32 %v3757, %v3989
        %v3991 = vpop.f32.mrf.mxu0
        %v3992 = vadd.f32 %v3759, %v3991
        %3993 = vdwg.mxu0
        %3994 = vmatpush.bf16.msra.mxu0 %v3872
        %3995 = vmatpush.bf16.msra.mxu0 %v3871
        %3996 = vmatpush.bf16.msra.mxu0 %v3870
        %3997 = vmatpush.bf16.msra.mxu0 %v3869
        %3998 = vmatpush.bf16.msra.mxu0 %v3868
        %3999 = vmatpush.bf16.msra.mxu0 %v3867
        %4000 = vmatpush.bf16.msra.mxu0 %v3866
        %4001 = vmatpush.bf16.msra.mxu0 %v3865
        %4002 = vmatmul.bf16.gmra.mxu0 %v2341
        %v4003 = vpop.f32.mrf.mxu0
        %v4004 = vadd.f32 %v3915, %v4003
        %v4005 = vpop.f32.mrf.mxu0
        %v4006 = vadd.f32 %v3917, %v4005
        %4007 = vmatmul.bf16.gmra.mxu0 %v2342
        %v4008 = vpop.f32.mrf.mxu0
        %v4009 = vadd.f32 %v3920, %v4008
        %v4010 = vpop.f32.mrf.mxu0
        %v4011 = vadd.f32 %v3922, %v4010
        %4012 = vmatmul.bf16.gmra.mxu0 %v2343
        %v4013 = vpop.f32.mrf.mxu0
        %v4014 = vadd.f32 %v3925, %v4013
        %v4015 = vpop.f32.mrf.mxu0
        %v4016 = vadd.f32 %v3927, %v4015
        %4017 = vmatmul.bf16.gmra.mxu0 %v2344
        %v4018 = vpop.f32.mrf.mxu0
        %v4019 = vadd.f32 %v3930, %v4018
        %v4020 = vpop.f32.mrf.mxu0
        %v4021 = vadd.f32 %v3932, %v4020
        %4022 = vmatmul.bf16.gmra.mxu0 %v2345
        %v4023 = vpop.f32.mrf.mxu0
        %v4024 = vadd.f32 %v3935, %v4023
        %v4025 = vpop.f32.mrf.mxu0
        %v4026 = vadd.f32 %v3937, %v4025
        %4027 = vmatmul.bf16.gmra.mxu0 %v2346
        %v4028 = vpop.f32.mrf.mxu0
        %v4029 = vadd.f32 %v3940, %v4028
        %v4030 = vpop.f32.mrf.mxu0
        %v4031 = vadd.f32 %v3942, %v4030
        %4032 = vmatmul.bf16.gmra.mxu0 %v2347
        %v4033 = vpop.f32.mrf.mxu0
        %v4034 = vadd.f32 %v3945, %v4033
        %v4035 = vpop.f32.mrf.mxu0
        %v4036 = vadd.f32 %v3947, %v4035
        %4037 = vmatmul.bf16.gmra.mxu0 %v2348
        %v4038 = vpop.f32.mrf.mxu0
        %v4039 = vadd.f32 %v3950, %v4038
        %v4040 = vpop.f32.mrf.mxu0
        %v4041 = vadd.f32 %v3952, %v4040
        %4042 = vmatmul.bf16.gmra.mxu0 %v2349
        %v4043 = vpop.f32.mrf.mxu0
        %v4044 = vadd.f32 %v3955, %v4043
        %v4045 = vpop.f32.mrf.mxu0
        %v4046 = vadd.f32 %v3957, %v4045
        %4047 = vmatmul.bf16.gmra.mxu0 %v2350
        %v4048 = vpop.f32.mrf.mxu0
        %v4049 = vadd.f32 %v3960, %v4048
        %v4050 = vpop.f32.mrf.mxu0
        %v4051 = vadd.f32 %v3962, %v4050
        %4052 = vmatmul.bf16.gmra.mxu0 %v2351
        %v4053 = vpop.f32.mrf.mxu0
        %v4054 = vadd.f32 %v3965, %v4053
        %v4055 = vpop.f32.mrf.mxu0
        %v4056 = vadd.f32 %v3967, %v4055
        %4057 = vmatmul.bf16.gmra.mxu0 %v2352
        %v4058 = vpop.f32.mrf.mxu0
        %v4059 = vadd.f32 %v3970, %v4058
        %v4060 = vpop.f32.mrf.mxu0
        %v4061 = vadd.f32 %v3972, %v4060
        %4062 = vmatmul.bf16.gmra.mxu0 %v2353
        %v4063 = vpop.f32.mrf.mxu0
        %v4064 = vadd.f32 %v3975, %v4063
        %v4065 = vpop.f32.mrf.mxu0
        %v4066 = vadd.f32 %v3977, %v4065
        %4067 = vmatmul.bf16.gmra.mxu0 %v2354
        %v4068 = vpop.f32.mrf.mxu0
        %v4069 = vadd.f32 %v3980, %v4068
        %v4070 = vpop.f32.mrf.mxu0
        %v4071 = vadd.f32 %v3982, %v4070
        %4072 = vmatmul.bf16.gmra.mxu0 %v2355
        %v4073 = vpop.f32.mrf.mxu0
        %v4074 = vadd.f32 %v3985, %v4073
        %v4075 = vpop.f32.mrf.mxu0
        %v4076 = vadd.f32 %v3987, %v4075
        %4077 = vmatmul.bf16.gmra.mxu0 %v2356
        %v4078 = vpop.f32.mrf.mxu0
        %v4079 = vadd.f32 %v3990, %v4078
        %v4080 = vpop.f32.mrf.mxu0
        %v4081 = vadd.f32 %v3992, %v4080
        %4082 = vdwg.mxu0
        %4083 = vmatpush.bf16.msra.mxu0 %v3880
        %4084 = vmatpush.bf16.msra.mxu0 %v3879
        %4085 = vmatpush.bf16.msra.mxu0 %v3878
        %4086 = vmatpush.bf16.msra.mxu0 %v3877
        %4087 = vmatpush.bf16.msra.mxu0 %v3876
        %4088 = vmatpush.bf16.msra.mxu0 %v3875
        %4089 = vmatpush.bf16.msra.mxu0 %v3874
        %4090 = vmatpush.bf16.msra.mxu0 %v3873
        %4091 = vmatmul.bf16.gmra.mxu0 %v2405
        %v4092 = vpop.f32.mrf.mxu0
        %v4093 = vadd.f32 %v4004, %v4092
        %v4094 = vpop.f32.mrf.mxu0
        %v4095 = vadd.f32 %v4006, %v4094
        %4096 = vmatmul.bf16.gmra.mxu0 %v2406
        %v4097 = vpop.f32.mrf.mxu0
        %v4098 = vadd.f32 %v4009, %v4097
        %v4099 = vpop.f32.mrf.mxu0
        %v4100 = vadd.f32 %v4011, %v4099
        %4101 = vmatmul.bf16.gmra.mxu0 %v2407
        %v4102 = vpop.f32.mrf.mxu0
        %v4103 = vadd.f32 %v4014, %v4102
        %v4104 = vpop.f32.mrf.mxu0
        %v4105 = vadd.f32 %v4016, %v4104
        %4106 = vmatmul.bf16.gmra.mxu0 %v2408
        %v4107 = vpop.f32.mrf.mxu0
        %v4108 = vadd.f32 %v4019, %v4107
        %v4109 = vpop.f32.mrf.mxu0
        %v4110 = vadd.f32 %v4021, %v4109
        %4111 = vmatmul.bf16.gmra.mxu0 %v2409
        %v4112 = vpop.f32.mrf.mxu0
        %v4113 = vadd.f32 %v4024, %v4112
        %v4114 = vpop.f32.mrf.mxu0
        %v4115 = vadd.f32 %v4026, %v4114
        %4116 = vmatmul.bf16.gmra.mxu0 %v2410
        %v4117 = vpop.f32.mrf.mxu0
        %v4118 = vadd.f32 %v4029, %v4117
        %v4119 = vpop.f32.mrf.mxu0
        %v4120 = vadd.f32 %v4031, %v4119
        %4121 = vmatmul.bf16.gmra.mxu0 %v2411
        %v4122 = vpop.f32.mrf.mxu0
        %v4123 = vadd.f32 %v4034, %v4122
        %v4124 = vpop.f32.mrf.mxu0
        %v4125 = vadd.f32 %v4036, %v4124
        %4126 = vmatmul.bf16.gmra.mxu0 %v2412
        %v4127 = vpop.f32.mrf.mxu0
        %v4128 = vadd.f32 %v4039, %v4127
        %v4129 = vpop.f32.mrf.mxu0
        %v4130 = vadd.f32 %v4041, %v4129
        %4131 = vmatmul.bf16.gmra.mxu0 %v2413
        %v4132 = vpop.f32.mrf.mxu0
        %v4133 = vadd.f32 %v4044, %v4132
        %v4134 = vpop.f32.mrf.mxu0
        %v4135 = vadd.f32 %v4046, %v4134
        %4136 = vmatmul.bf16.gmra.mxu0 %v2414
        %v4137 = vpop.f32.mrf.mxu0
        %v4138 = vadd.f32 %v4049, %v4137
        %v4139 = vpop.f32.mrf.mxu0
        %v4140 = vadd.f32 %v4051, %v4139
        %4141 = vmatmul.bf16.gmra.mxu0 %v2415
        %v4142 = vpop.f32.mrf.mxu0
        %v4143 = vadd.f32 %v4054, %v4142
        %v4144 = vpop.f32.mrf.mxu0
        %v4145 = vadd.f32 %v4056, %v4144
        %4146 = vmatmul.bf16.gmra.mxu0 %v2416
        %v4147 = vpop.f32.mrf.mxu0
        %v4148 = vadd.f32 %v4059, %v4147
        %v4149 = vpop.f32.mrf.mxu0
        %v4150 = vadd.f32 %v4061, %v4149
        %4151 = vmatmul.bf16.gmra.mxu0 %v2417
        %v4152 = vpop.f32.mrf.mxu0
        %v4153 = vadd.f32 %v4064, %v4152
        %v4154 = vpop.f32.mrf.mxu0
        %v4155 = vadd.f32 %v4066, %v4154
        %4156 = vmatmul.bf16.gmra.mxu0 %v2418
        %v4157 = vpop.f32.mrf.mxu0
        %v4158 = vadd.f32 %v4069, %v4157
        %v4159 = vpop.f32.mrf.mxu0
        %v4160 = vadd.f32 %v4071, %v4159
        %4161 = vmatmul.bf16.gmra.mxu0 %v2419
        %v4162 = vpop.f32.mrf.mxu0
        %v4163 = vadd.f32 %v4074, %v4162
        %v4164 = vpop.f32.mrf.mxu0
        %v4165 = vadd.f32 %v4076, %v4164
        %4166 = vmatmul.bf16.gmra.mxu0 %v2420
        %v4167 = vpop.f32.mrf.mxu0
        %v4168 = vadd.f32 %v4079, %v4167
        %v4169 = vpop.f32.mrf.mxu0
        %v4170 = vadd.f32 %v4081, %v4169
        %4171 = vdwg.mxu0
        %s4172 = scalar_lea.vmem [#allocation2], 24
        %v4173 = vld [vmem:[%s4172] sm:$0xf]
        %v4174 = vld [vmem:[%s4172 + $0x4] sm:$0xf]
        %v4175 = vld [vmem:[%s4172 + $0xc] sm:$0xf]
        %v4176 = vld [vmem:[%s4172 + $0x10] sm:$0xf]
        %v4177 = vld [vmem:[%s4172 + $0x18] sm:$0xf]
        %v4178 = vld [vmem:[%s4172 + $0x1c] sm:$0xf]
        %v4179 = vld [vmem:[%s4172 + $0x24] sm:$0xf]
        %v4180 = vld [vmem:[%s4172 + $0x28] sm:$0xf]
        %v4181 = vld [vmem:[%s4172 + $0x30] sm:$0xf]
        %v4182 = vld [vmem:[%s4172 + $0x34] sm:$0xf]
        %v4183 = vld [vmem:[%s4172 + $0x3c] sm:$0xf]
        %v4184 = vld [vmem:[%s4172 + $0x40] sm:$0xf]
        %v4185 = vld [vmem:[%s4172 + $0x48] sm:$0xf]
        %v4186 = vld [vmem:[%s4172 + $0x4c] sm:$0xf]
        %v4187 = vld [vmem:[%s4172 + $0x54] sm:$0xf]
        %v4188 = vld [vmem:[%s4172 + $0x58] sm:$0xf]
        %v4189 = vld [vmem:[%s4172 + $0x60] sm:$0xf]
        %v4190 = vld [vmem:[%s4172 + $0x64] sm:$0xf]
        %v4191 = vld [vmem:[%s4172 + $0x6c] sm:$0xf]
        %v4192 = vld [vmem:[%s4172 + $0x70] sm:$0xf]
        %v4193 = vld [vmem:[%s4172 + $0x78] sm:$0xf]
        %v4194 = vld [vmem:[%s4172 + $0x7c] sm:$0xf]
        %v4195 = vld [vmem:[%s4172 + $0x84] sm:$0xf]
        %v4196 = vld [vmem:[%s4172 + $0x88] sm:$0xf]
        %v4197 = vld [vmem:[%s4172 + $0x90] sm:$0xf]
        %v4198 = vld [vmem:[%s4172 + $0x94] sm:$0xf]
        %v4199 = vld [vmem:[%s4172 + $0x9c] sm:$0xf]
        %v4200 = vld [vmem:[%s4172 + $0xa0] sm:$0xf]
        %v4201 = vld [vmem:[%s4172 + $0xa8] sm:$0xf]
        %v4202 = vld [vmem:[%s4172 + $0xac] sm:$0xf]
        %v4203 = vld [vmem:[%s4172 + $0xb4] sm:$0xf]
        %v4204 = vld [vmem:[%s4172 + $0xb8] sm:$0xf]
        %v4205 = vld [vmem:[%s4172 + $0x8] sm:$0x1]
        %v4206 = vld [vmem:[%s4172 + $0x14] sm:$0x1]
        %v4207 = vld [vmem:[%s4172 + $0x20] sm:$0x1]
        %v4208 = vld [vmem:[%s4172 + $0x2c] sm:$0x1]
        %v4209 = vld [vmem:[%s4172 + $0x38] sm:$0x1]
        %v4210 = vld [vmem:[%s4172 + $0x44] sm:$0x1]
        %v4211 = vld [vmem:[%s4172 + $0x50] sm:$0x1]
        %v4212 = vld [vmem:[%s4172 + $0x5c] sm:$0x1]
        %v4213 = vld [vmem:[%s4172 + $0x68] sm:$0x1]
        %v4214 = vld [vmem:[%s4172 + $0x74] sm:$0x1]
        %v4215 = vld [vmem:[%s4172 + $0x80] sm:$0x1]
        %v4216 = vld [vmem:[%s4172 + $0x8c] sm:$0x1]
        %v4217 = vld [vmem:[%s4172 + $0x98] sm:$0x1]
        %v4218 = vld [vmem:[%s4172 + $0xa4] sm:$0x1]
        %v4219 = vld [vmem:[%s4172 + $0xb0] sm:$0x1]
        %v4220 = vld [vmem:[%s4172 + $0xbc] sm:$0x1]
        %v4222 = vshrl.u32 %v4173, 16
        %v4224 = vrot.slane %v4222, 4
        %v4225 = vshll.u32 %v4173, 16
        %v4227 = vrot.slane %v4225, 5
        %v4228 = vor.u32 %v4224, %v4227
        %v4229 = vrot.slane %v4228, 4
        %v4231 = vshll.u32 %v4174, 16
        %v4233 = vrot.slane %v4231, 5
        %v4234 = vsel %vm1665, %v4229, %v4233
        %v4235 = vshrl.u32 %v4174, 16
        %v4237 = vrot.slane %v4235, 4
        %v4238 = vor.u32 %v4237, %v4233
        %v4239 = vrot.slane %v4238, 4
        %v4241 = vshll.u32 %v4205, 16
        %v4243 = vrot.slane %v4241, 5
        %v4244 = vsel %vm1665, %v4239, %v4243
        %v4246 = vshrl.u32 %v4175, 16
        %v4248 = vrot.slane %v4246, 4
        %v4249 = vshll.u32 %v4175, 16
        %v4251 = vrot.slane %v4249, 5
        %v4252 = vor.u32 %v4248, %v4251
        %v4253 = vrot.slane %v4252, 4
        %v4255 = vshll.u32 %v4176, 16
        %v4257 = vrot.slane %v4255, 5
        %v4258 = vsel %vm1665, %v4253, %v4257
        %v4259 = vshrl.u32 %v4176, 16
        %v4261 = vrot.slane %v4259, 4
        %v4262 = vor.u32 %v4261, %v4257
        %v4263 = vrot.slane %v4262, 4
        %v4265 = vshll.u32 %v4206, 16
        %v4267 = vrot.slane %v4265, 5
        %v4268 = vsel %vm1665, %v4263, %v4267
        %v4270 = vshrl.u32 %v4177, 16
        %v4272 = vrot.slane %v4270, 4
        %v4273 = vshll.u32 %v4177, 16
        %v4275 = vrot.slane %v4273, 5
        %v4276 = vor.u32 %v4272, %v4275
        %v4277 = vrot.slane %v4276, 4
        %v4279 = vshll.u32 %v4178, 16
        %v4281 = vrot.slane %v4279, 5
        %v4282 = vsel %vm1665, %v4277, %v4281
        %v4283 = vshrl.u32 %v4178, 16
        %v4285 = vrot.slane %v4283, 4
        %v4286 = vor.u32 %v4285, %v4281
        %v4287 = vrot.slane %v4286, 4
        %v4289 = vshll.u32 %v4207, 16
        %v4291 = vrot.slane %v4289, 5
        %v4292 = vsel %vm1665, %v4287, %v4291
        %v4294 = vshrl.u32 %v4179, 16
        %v4296 = vrot.slane %v4294, 4
        %v4297 = vshll.u32 %v4179, 16
        %v4299 = vrot.slane %v4297, 5
        %v4300 = vor.u32 %v4296, %v4299
        %v4301 = vrot.slane %v4300, 4
        %v4303 = vshll.u32 %v4180, 16
        %v4305 = vrot.slane %v4303, 5
        %v4306 = vsel %vm1665, %v4301, %v4305
        %v4307 = vshrl.u32 %v4180, 16
        %v4309 = vrot.slane %v4307, 4
        %v4310 = vor.u32 %v4309, %v4305
        %v4311 = vrot.slane %v4310, 4
        %v4313 = vshll.u32 %v4208, 16
        %v4315 = vrot.slane %v4313, 5
        %v4316 = vsel %vm1665, %v4311, %v4315
        %v4318 = vshrl.u32 %v4181, 16
        %v4320 = vrot.slane %v4318, 4
        %v4321 = vshll.u32 %v4181, 16
        %v4323 = vrot.slane %v4321, 5
        %v4324 = vor.u32 %v4320, %v4323
        %v4325 = vrot.slane %v4324, 4
        %v4327 = vshll.u32 %v4182, 16
        %v4329 = vrot.slane %v4327, 5
        %v4330 = vsel %vm1665, %v4325, %v4329
        %v4331 = vshrl.u32 %v4182, 16
        %v4333 = vrot.slane %v4331, 4
        %v4334 = vor.u32 %v4333, %v4329
        %v4335 = vrot.slane %v4334, 4
        %v4337 = vshll.u32 %v4209, 16
        %v4339 = vrot.slane %v4337, 5
        %v4340 = vsel %vm1665, %v4335, %v4339
        %v4342 = vshrl.u32 %v4183, 16
        %v4344 = vrot.slane %v4342, 4
        %v4345 = vshll.u32 %v4183, 16
        %v4347 = vrot.slane %v4345, 5
        %v4348 = vor.u32 %v4344, %v4347
        %v4349 = vrot.slane %v4348, 4
        %v4351 = vshll.u32 %v4184, 16
        %v4353 = vrot.slane %v4351, 5
        %v4354 = vsel %vm1665, %v4349, %v4353
        %v4355 = vshrl.u32 %v4184, 16
        %v4357 = vrot.slane %v4355, 4
        %v4358 = vor.u32 %v4357, %v4353
        %v4359 = vrot.slane %v4358, 4
        %v4361 = vshll.u32 %v4210, 16
        %v4363 = vrot.slane %v4361, 5
        %v4364 = vsel %vm1665, %v4359, %v4363
        %v4366 = vshrl.u32 %v4185, 16
        %v4368 = vrot.slane %v4366, 4
        %v4369 = vshll.u32 %v4185, 16
        %v4371 = vrot.slane %v4369, 5
        %v4372 = vor.u32 %v4368, %v4371
        %v4373 = vrot.slane %v4372, 4
        %v4375 = vshll.u32 %v4186, 16
        %v4377 = vrot.slane %v4375, 5
        %v4378 = vsel %vm1665, %v4373, %v4377
        %v4379 = vshrl.u32 %v4186, 16
        %v4381 = vrot.slane %v4379, 4
        %v4382 = vor.u32 %v4381, %v4377
        %v4383 = vrot.slane %v4382, 4
        %v4385 = vshll.u32 %v4211, 16
        %v4387 = vrot.slane %v4385, 5
        %v4388 = vsel %vm1665, %v4383, %v4387
        %v4390 = vshrl.u32 %v4187, 16
        %v4392 = vrot.slane %v4390, 4
        %v4393 = vshll.u32 %v4187, 16
        %v4395 = vrot.slane %v4393, 5
        %v4396 = vor.u32 %v4392, %v4395
        %v4397 = vrot.slane %v4396, 4
        %v4399 = vshll.u32 %v4188, 16
        %v4401 = vrot.slane %v4399, 5
        %v4402 = vsel %vm1665, %v4397, %v4401
        %v4403 = vshrl.u32 %v4188, 16
        %v4405 = vrot.slane %v4403, 4
        %v4406 = vor.u32 %v4405, %v4401
        %v4407 = vrot.slane %v4406, 4
        %v4409 = vshll.u32 %v4212, 16
        %v4411 = vrot.slane %v4409, 5
        %v4412 = vsel %vm1665, %v4407, %v4411
        %v4414 = vshrl.u32 %v4189, 16
        %v4416 = vrot.slane %v4414, 4
        %v4417 = vshll.u32 %v4189, 16
        %v4419 = vrot.slane %v4417, 5
        %v4420 = vor.u32 %v4416, %v4419
        %v4421 = vrot.slane %v4420, 4
        %v4423 = vshll.u32 %v4190, 16
        %v4425 = vrot.slane %v4423, 5
        %v4426 = vsel %vm1665, %v4421, %v4425
        %v4427 = vshrl.u32 %v4190, 16
        %v4429 = vrot.slane %v4427, 4
        %v4430 = vor.u32 %v4429, %v4425
        %v4431 = vrot.slane %v4430, 4
        %v4433 = vshll.u32 %v4213, 16
        %v4435 = vrot.slane %v4433, 5
        %v4436 = vsel %vm1665, %v4431, %v4435
        %v4438 = vshrl.u32 %v4191, 16
        %v4440 = vrot.slane %v4438, 4
        %v4441 = vshll.u32 %v4191, 16
        %v4443 = vrot.slane %v4441, 5
        %v4444 = vor.u32 %v4440, %v4443
        %v4445 = vrot.slane %v4444, 4
        %v4447 = vshll.u32 %v4192, 16
        %v4449 = vrot.slane %v4447, 5
        %v4450 = vsel %vm1665, %v4445, %v4449
        %v4451 = vshrl.u32 %v4192, 16
        %v4453 = vrot.slane %v4451, 4
        %v4454 = vor.u32 %v4453, %v4449
        %v4455 = vrot.slane %v4454, 4
        %v4457 = vshll.u32 %v4214, 16
        %v4459 = vrot.slane %v4457, 5
        %v4460 = vsel %vm1665, %v4455, %v4459
        %v4462 = vshrl.u32 %v4193, 16
        %v4464 = vrot.slane %v4462, 4
        %v4465 = vshll.u32 %v4193, 16
        %v4467 = vrot.slane %v4465, 5
        %v4468 = vor.u32 %v4464, %v4467
        %v4469 = vrot.slane %v4468, 4
        %v4471 = vshll.u32 %v4194, 16
        %v4473 = vrot.slane %v4471, 5
        %v4474 = vsel %vm1665, %v4469, %v4473
        %v4475 = vshrl.u32 %v4194, 16
        %v4477 = vrot.slane %v4475, 4
        %v4478 = vor.u32 %v4477, %v4473
        %v4479 = vrot.slane %v4478, 4
        %v4481 = vshll.u32 %v4215, 16
        %v4483 = vrot.slane %v4481, 5
        %v4484 = vsel %vm1665, %v4479, %v4483
        %v4486 = vshrl.u32 %v4195, 16
        %v4488 = vrot.slane %v4486, 4
        %v4489 = vshll.u32 %v4195, 16
        %v4491 = vrot.slane %v4489, 5
        %v4492 = vor.u32 %v4488, %v4491
        %v4493 = vrot.slane %v4492, 4
        %v4495 = vshll.u32 %v4196, 16
        %v4497 = vrot.slane %v4495, 5
        %v4498 = vsel %vm1665, %v4493, %v4497
        %v4499 = vshrl.u32 %v4196, 16
        %v4501 = vrot.slane %v4499, 4
        %v4502 = vor.u32 %v4501, %v4497
        %v4503 = vrot.slane %v4502, 4
        %v4505 = vshll.u32 %v4216, 16
        %v4507 = vrot.slane %v4505, 5
        %v4508 = vsel %vm1665, %v4503, %v4507
        %v4510 = vshrl.u32 %v4197, 16
        %v4512 = vrot.slane %v4510, 4
        %v4513 = vshll.u32 %v4197, 16
        %v4515 = vrot.slane %v4513, 5
        %v4516 = vor.u32 %v4512, %v4515
        %v4517 = vrot.slane %v4516, 4
        %v4519 = vshll.u32 %v4198, 16
        %v4521 = vrot.slane %v4519, 5
        %v4522 = vsel %vm1665, %v4517, %v4521
        %v4523 = vshrl.u32 %v4198, 16
        %v4525 = vrot.slane %v4523, 4
        %v4526 = vor.u32 %v4525, %v4521
        %v4527 = vrot.slane %v4526, 4
        %v4529 = vshll.u32 %v4217, 16
        %v4531 = vrot.slane %v4529, 5
        %v4532 = vsel %vm1665, %v4527, %v4531
        %v4534 = vshrl.u32 %v4199, 16
        %v4536 = vrot.slane %v4534, 4
        %v4537 = vshll.u32 %v4199, 16
        %v4539 = vrot.slane %v4537, 5
        %v4540 = vor.u32 %v4536, %v4539
        %v4541 = vrot.slane %v4540, 4
        %v4543 = vshll.u32 %v4200, 16
        %v4545 = vrot.slane %v4543, 5
        %v4546 = vsel %vm1665, %v4541, %v4545
        %v4547 = vshrl.u32 %v4200, 16
        %v4549 = vrot.slane %v4547, 4
        %v4550 = vor.u32 %v4549, %v4545
        %v4551 = vrot.slane %v4550, 4
        %v4553 = vshll.u32 %v4218, 16
        %v4555 = vrot.slane %v4553, 5
        %v4556 = vsel %vm1665, %v4551, %v4555
        %v4558 = vshrl.u32 %v4201, 16
        %v4560 = vrot.slane %v4558, 4
        %v4561 = vshll.u32 %v4201, 16
        %v4563 = vrot.slane %v4561, 5
        %v4564 = vor.u32 %v4560, %v4563
        %v4565 = vrot.slane %v4564, 4
        %v4567 = vshll.u32 %v4202, 16
        %v4569 = vrot.slane %v4567, 5
        %v4570 = vsel %vm1665, %v4565, %v4569
        %v4571 = vshrl.u32 %v4202, 16
        %v4573 = vrot.slane %v4571, 4
        %v4574 = vor.u32 %v4573, %v4569
        %v4575 = vrot.slane %v4574, 4
        %v4577 = vshll.u32 %v4219, 16
        %v4579 = vrot.slane %v4577, 5
        %v4580 = vsel %vm1665, %v4575, %v4579
        %v4582 = vshrl.u32 %v4203, 16
        %v4584 = vrot.slane %v4582, 4
        %v4585 = vshll.u32 %v4203, 16
        %v4587 = vrot.slane %v4585, 5
        %v4588 = vor.u32 %v4584, %v4587
        %v4589 = vrot.slane %v4588, 4
        %v4591 = vshll.u32 %v4204, 16
        %v4593 = vrot.slane %v4591, 5
        %v4594 = vsel %vm1665, %v4589, %v4593
        %v4595 = vshrl.u32 %v4204, 16
        %v4597 = vrot.slane %v4595, 4
        %v4598 = vor.u32 %v4597, %v4593
        %v4599 = vrot.slane %v4598, 4
        %v4601 = vshll.u32 %v4220, 16
        %v4603 = vrot.slane %v4601, 5
        %v4604 = vsel %vm1665, %v4599, %v4603
        %v4605 = vld [vmem:[%s4172] sm:$0xe]
        %v4606 = vld [vmem:[%s4172 + $0xc] sm:$0xe]
        %v4607 = vld [vmem:[%s4172 + $0x18] sm:$0xe]
        %v4608 = vld [vmem:[%s4172 + $0x24] sm:$0xe]
        %v4609 = vld [vmem:[%s4172 + $0x30] sm:$0xe]
        %v4610 = vld [vmem:[%s4172 + $0x3c] sm:$0xe]
        %v4611 = vld [vmem:[%s4172 + $0x48] sm:$0xe]
        %v4612 = vld [vmem:[%s4172 + $0x54] sm:$0xe]
        %v4613 = vld [vmem:[%s4172 + $0x60] sm:$0xe]
        %v4614 = vld [vmem:[%s4172 + $0x6c] sm:$0xe]
        %v4615 = vld [vmem:[%s4172 + $0x78] sm:$0xe]
        %v4616 = vld [vmem:[%s4172 + $0x84] sm:$0xe]
        %v4617 = vld [vmem:[%s4172 + $0x90] sm:$0xe]
        %v4618 = vld [vmem:[%s4172 + $0x9c] sm:$0xe]
        %v4619 = vld [vmem:[%s4172 + $0xa8] sm:$0xe]
        %v4620 = vld [vmem:[%s4172 + $0xb4] sm:$0xe]
        %v4669 = vrot.slane %v4605, 5
        %v4670 = vrot.slane %v4669, 4
        %v4671 = vrot.slane %v4174, 5
        %v4672 = vsel %vm2116, %v4670, %v4671
        %v4673 = vrot.slane %v4671, 4
        %v4674 = vrot.slane %v4205, 5
        %v4675 = vsel %vm2116, %v4673, %v4674
        %v4676 = vrot.slane %v4606, 5
        %v4677 = vrot.slane %v4676, 4
        %v4678 = vrot.slane %v4176, 5
        %v4679 = vsel %vm2116, %v4677, %v4678
        %v4680 = vrot.slane %v4678, 4
        %v4681 = vrot.slane %v4206, 5
        %v4682 = vsel %vm2116, %v4680, %v4681
        %v4683 = vrot.slane %v4607, 5
        %v4684 = vrot.slane %v4683, 4
        %v4685 = vrot.slane %v4178, 5
        %v4686 = vsel %vm2116, %v4684, %v4685
        %v4687 = vrot.slane %v4685, 4
        %v4688 = vrot.slane %v4207, 5
        %v4689 = vsel %vm2116, %v4687, %v4688
        %v4690 = vrot.slane %v4608, 5
        %v4691 = vrot.slane %v4690, 4
        %v4692 = vrot.slane %v4180, 5
        %v4693 = vsel %vm2116, %v4691, %v4692
        %v4694 = vrot.slane %v4692, 4
        %v4695 = vrot.slane %v4208, 5
        %v4696 = vsel %vm2116, %v4694, %v4695
        %v4697 = vrot.slane %v4609, 5
        %v4698 = vrot.slane %v4697, 4
        %v4699 = vrot.slane %v4182, 5
        %v4700 = vsel %vm2116, %v4698, %v4699
        %v4701 = vrot.slane %v4699, 4
        %v4702 = vrot.slane %v4209, 5
        %v4703 = vsel %vm2116, %v4701, %v4702
        %v4704 = vrot.slane %v4610, 5
        %v4705 = vrot.slane %v4704, 4
        %v4706 = vrot.slane %v4184, 5
        %v4707 = vsel %vm2116, %v4705, %v4706
        %v4708 = vrot.slane %v4706, 4
        %v4709 = vrot.slane %v4210, 5
        %v4710 = vsel %vm2116, %v4708, %v4709
        %v4711 = vrot.slane %v4611, 5
        %v4712 = vrot.slane %v4711, 4
        %v4713 = vrot.slane %v4186, 5
        %v4714 = vsel %vm2116, %v4712, %v4713
        %v4715 = vrot.slane %v4713, 4
        %v4716 = vrot.slane %v4211, 5
        %v4717 = vsel %vm2116, %v4715, %v4716
        %v4718 = vrot.slane %v4612, 5
        %v4719 = vrot.slane %v4718, 4
        %v4720 = vrot.slane %v4188, 5
        %v4721 = vsel %vm2116, %v4719, %v4720
        %v4722 = vrot.slane %v4720, 4
        %v4723 = vrot.slane %v4212, 5
        %v4724 = vsel %vm2116, %v4722, %v4723
        %v4725 = vrot.slane %v4613, 5
        %v4726 = vrot.slane %v4725, 4
        %v4727 = vrot.slane %v4190, 5
        %v4728 = vsel %vm2116, %v4726, %v4727
        %v4729 = vrot.slane %v4727, 4
        %v4730 = vrot.slane %v4213, 5
        %v4731 = vsel %vm2116, %v4729, %v4730
        %v4732 = vrot.slane %v4614, 5
        %v4733 = vrot.slane %v4732, 4
        %v4734 = vrot.slane %v4192, 5
        %v4735 = vsel %vm2116, %v4733, %v4734
        %v4736 = vrot.slane %v4734, 4
        %v4737 = vrot.slane %v4214, 5
        %v4738 = vsel %vm2116, %v4736, %v4737
        %v4739 = vrot.slane %v4615, 5
        %v4740 = vrot.slane %v4739, 4
        %v4741 = vrot.slane %v4194, 5
        %v4742 = vsel %vm2116, %v4740, %v4741
        %v4743 = vrot.slane %v4741, 4
        %v4744 = vrot.slane %v4215, 5
        %v4745 = vsel %vm2116, %v4743, %v4744
        %v4746 = vrot.slane %v4616, 5
        %v4747 = vrot.slane %v4746, 4
        %v4748 = vrot.slane %v4196, 5
        %v4749 = vsel %vm2116, %v4747, %v4748
        %v4750 = vrot.slane %v4748, 4
        %v4751 = vrot.slane %v4216, 5
        %v4752 = vsel %vm2116, %v4750, %v4751
        %v4753 = vrot.slane %v4617, 5
        %v4754 = vrot.slane %v4753, 4
        %v4755 = vrot.slane %v4198, 5
        %v4756 = vsel %vm2116, %v4754, %v4755
        %v4757 = vrot.slane %v4755, 4
        %v4758 = vrot.slane %v4217, 5
        %v4759 = vsel %vm2116, %v4757, %v4758
        %v4760 = vrot.slane %v4618, 5
        %v4761 = vrot.slane %v4760, 4
        %v4762 = vrot.slane %v4200, 5
        %v4763 = vsel %vm2116, %v4761, %v4762
        %v4764 = vrot.slane %v4762, 4
        %v4765 = vrot.slane %v4218, 5
        %v4766 = vsel %vm2116, %v4764, %v4765
        %v4767 = vrot.slane %v4619, 5
        %v4768 = vrot.slane %v4767, 4
        %v4769 = vrot.slane %v4202, 5
        %v4770 = vsel %vm2116, %v4768, %v4769
        %v4771 = vrot.slane %v4769, 4
        %v4772 = vrot.slane %v4219, 5
        %v4773 = vsel %vm2116, %v4771, %v4772
        %v4774 = vrot.slane %v4620, 5
        %v4775 = vrot.slane %v4774, 4
        %v4776 = vrot.slane %v4204, 5
        %v4777 = vsel %vm2116, %v4775, %v4776
        %v4778 = vrot.slane %v4776, 4
        %v4779 = vrot.slane %v4220, 5
        %v4780 = vsel %vm2116, %v4778, %v4779
        %v4797 = vunpack.c.l.b16 %v4173
        %v4798 = vunpack.c.l.b16 %v4174
        %v4799 = vunpack.c.l.b16 %v4175
        %v4800 = vunpack.c.l.b16 %v4176
        %v4801 = vunpack.c.l.b16 %v4177
        %v4802 = vunpack.c.l.b16 %v4178
        %v4803 = vunpack.c.l.b16 %v4179
        %v4804 = vunpack.c.l.b16 %v4180
        %v4805 = vunpack.c.l.b16 %v4181
        %v4806 = vunpack.c.l.b16 %v4182
        %v4807 = vunpack.c.l.b16 %v4183
        %v4808 = vunpack.c.l.b16 %v4184
        %v4809 = vunpack.c.l.b16 %v4185
        %v4810 = vunpack.c.l.b16 %v4186
        %v4811 = vunpack.c.l.b16 %v4187
        %v4812 = vunpack.c.l.b16 %v4188
        %v4813 = vunpack.c.l.b16 %v4189
        %v4814 = vunpack.c.l.b16 %v4190
        %v4815 = vunpack.c.l.b16 %v4191
        %v4816 = vunpack.c.l.b16 %v4192
        %v4817 = vunpack.c.l.b16 %v4193
        %v4818 = vunpack.c.l.b16 %v4194
        %v4819 = vunpack.c.l.b16 %v4195
        %v4820 = vunpack.c.l.b16 %v4196
        %v4821 = vunpack.c.l.b16 %v4197
        %v4822 = vunpack.c.l.b16 %v4198
        %v4823 = vunpack.c.l.b16 %v4199
        %v4824 = vunpack.c.l.b16 %v4200
        %v4825 = vunpack.c.l.b16 %v4201
        %v4826 = vunpack.c.l.b16 %v4202
        %v4827 = vunpack.c.l.b16 %v4203
        %v4828 = vunpack.c.l.b16 %v4204
        %v4829 = vpack.c.b16 %v4798, %v4797
        %v4830 = vpack.c.b16 %v4800, %v4799
        %v4831 = vpack.c.b16 %v4802, %v4801
        %v4832 = vpack.c.b16 %v4804, %v4803
        %v4833 = vpack.c.b16 %v4806, %v4805
        %v4834 = vpack.c.b16 %v4808, %v4807
        %v4835 = vpack.c.b16 %v4810, %v4809
        %v4836 = vpack.c.b16 %v4812, %v4811
        %v4837 = vpack.c.b16 %v4814, %v4813
        %v4838 = vpack.c.b16 %v4816, %v4815
        %v4839 = vpack.c.b16 %v4818, %v4817
        %v4840 = vpack.c.b16 %v4820, %v4819
        %v4841 = vpack.c.b16 %v4822, %v4821
        %v4842 = vpack.c.b16 %v4824, %v4823
        %v4843 = vpack.c.b16 %v4826, %v4825
        %v4844 = vpack.c.b16 %v4828, %v4827
        %v4861 = vunpack.c.l.b16 %v4234
        %v4862 = vunpack.c.l.b16 %v4244
        %v4863 = vunpack.c.l.b16 %v4258
        %v4864 = vunpack.c.l.b16 %v4268
        %v4865 = vunpack.c.l.b16 %v4282
        %v4866 = vunpack.c.l.b16 %v4292
        %v4867 = vunpack.c.l.b16 %v4306
        %v4868 = vunpack.c.l.b16 %v4316
        %v4869 = vunpack.c.l.b16 %v4330
        %v4870 = vunpack.c.l.b16 %v4340
        %v4871 = vunpack.c.l.b16 %v4354
        %v4872 = vunpack.c.l.b16 %v4364
        %v4873 = vunpack.c.l.b16 %v4378
        %v4874 = vunpack.c.l.b16 %v4388
        %v4875 = vunpack.c.l.b16 %v4402
        %v4876 = vunpack.c.l.b16 %v4412
        %v4877 = vunpack.c.l.b16 %v4426
        %v4878 = vunpack.c.l.b16 %v4436
        %v4879 = vunpack.c.l.b16 %v4450
        %v4880 = vunpack.c.l.b16 %v4460
        %v4881 = vunpack.c.l.b16 %v4474
        %v4882 = vunpack.c.l.b16 %v4484
        %v4883 = vunpack.c.l.b16 %v4498
        %v4884 = vunpack.c.l.b16 %v4508
        %v4885 = vunpack.c.l.b16 %v4522
        %v4886 = vunpack.c.l.b16 %v4532
        %v4887 = vunpack.c.l.b16 %v4546
        %v4888 = vunpack.c.l.b16 %v4556
        %v4889 = vunpack.c.l.b16 %v4570
        %v4890 = vunpack.c.l.b16 %v4580
        %v4891 = vunpack.c.l.b16 %v4594
        %v4892 = vunpack.c.l.b16 %v4604
        %v4893 = vpack.c.b16 %v4862, %v4861
        %v4894 = vpack.c.b16 %v4864, %v4863
        %v4895 = vpack.c.b16 %v4866, %v4865
        %v4896 = vpack.c.b16 %v4868, %v4867
        %v4897 = vpack.c.b16 %v4870, %v4869
        %v4898 = vpack.c.b16 %v4872, %v4871
        %v4899 = vpack.c.b16 %v4874, %v4873
        %v4900 = vpack.c.b16 %v4876, %v4875
        %v4901 = vpack.c.b16 %v4878, %v4877
        %v4902 = vpack.c.b16 %v4880, %v4879
        %v4903 = vpack.c.b16 %v4882, %v4881
        %v4904 = vpack.c.b16 %v4884, %v4883
        %v4905 = vpack.c.b16 %v4886, %v4885
        %v4906 = vpack.c.b16 %v4888, %v4887
        %v4907 = vpack.c.b16 %v4890, %v4889
        %v4908 = vpack.c.b16 %v4892, %v4891
        %v4925 = vunpack.c.l.b16 %v4672
        %v4926 = vunpack.c.l.b16 %v4675
        %v4927 = vunpack.c.l.b16 %v4679
        %v4928 = vunpack.c.l.b16 %v4682
        %v4929 = vunpack.c.l.b16 %v4686
        %v4930 = vunpack.c.l.b16 %v4689
        %v4931 = vunpack.c.l.b16 %v4693
        %v4932 = vunpack.c.l.b16 %v4696
        %v4933 = vunpack.c.l.b16 %v4700
        %v4934 = vunpack.c.l.b16 %v4703
        %v4935 = vunpack.c.l.b16 %v4707
        %v4936 = vunpack.c.l.b16 %v4710
        %v4937 = vunpack.c.l.b16 %v4714
        %v4938 = vunpack.c.l.b16 %v4717
        %v4939 = vunpack.c.l.b16 %v4721
        %v4940 = vunpack.c.l.b16 %v4724
        %v4941 = vunpack.c.l.b16 %v4728
        %v4942 = vunpack.c.l.b16 %v4731
        %v4943 = vunpack.c.l.b16 %v4735
        %v4944 = vunpack.c.l.b16 %v4738
        %v4945 = vunpack.c.l.b16 %v4742
        %v4946 = vunpack.c.l.b16 %v4745
        %v4947 = vunpack.c.l.b16 %v4749
        %v4948 = vunpack.c.l.b16 %v4752
        %v4949 = vunpack.c.l.b16 %v4756
        %v4950 = vunpack.c.l.b16 %v4759
        %v4951 = vunpack.c.l.b16 %v4763
        %v4952 = vunpack.c.l.b16 %v4766
        %v4953 = vunpack.c.l.b16 %v4770
        %v4954 = vunpack.c.l.b16 %v4773
        %v4955 = vunpack.c.l.b16 %v4777
        %v4956 = vunpack.c.l.b16 %v4780
        %v4957 = vpack.c.b16 %v4926, %v4925
        %v4958 = vpack.c.b16 %v4928, %v4927
        %v4959 = vpack.c.b16 %v4930, %v4929
        %v4960 = vpack.c.b16 %v4932, %v4931
        %v4961 = vpack.c.b16 %v4934, %v4933
        %v4962 = vpack.c.b16 %v4936, %v4935
        %v4963 = vpack.c.b16 %v4938, %v4937
        %v4964 = vpack.c.b16 %v4940, %v4939
        %v4965 = vpack.c.b16 %v4942, %v4941
        %v4966 = vpack.c.b16 %v4944, %v4943
        %v4967 = vpack.c.b16 %v4946, %v4945
        %v4968 = vpack.c.b16 %v4948, %v4947
        %v4969 = vpack.c.b16 %v4950, %v4949
        %v4970 = vpack.c.b16 %v4952, %v4951
        %v4971 = vpack.c.b16 %v4954, %v4953
        %v4972 = vpack.c.b16 %v4956, %v4955
        %v4989 = vld [vmem:[#allocation8 + $0x180] sm:$0xf]
        %v4990 = vld [vmem:[#allocation8 + $0x184] sm:$0xf]
        %v4991 = vld [vmem:[#allocation8 + $0x188] sm:$0xf]
        %v4992 = vld [vmem:[#allocation8 + $0x18c] sm:$0xf]
        %v4993 = vld [vmem:[#allocation8 + $0x190] sm:$0xf]
        %v4994 = vld [vmem:[#allocation8 + $0x194] sm:$0xf]
        %v4995 = vld [vmem:[#allocation8 + $0x198] sm:$0xf]
        %v4996 = vld [vmem:[#allocation8 + $0x19c] sm:$0xf]
        %v4997 = vld [vmem:[#allocation8 + $0x1a0] sm:$0xf]
        %v4998 = vld [vmem:[#allocation8 + $0x1a4] sm:$0xf]
        %v4999 = vld [vmem:[#allocation8 + $0x1a8] sm:$0xf]
        %v5000 = vld [vmem:[#allocation8 + $0x1ac] sm:$0xf]
        %v5001 = vld [vmem:[#allocation8 + $0x1b0] sm:$0xf]
        %v5002 = vld [vmem:[#allocation8 + $0x1b4] sm:$0xf]
        %v5003 = vld [vmem:[#allocation8 + $0x1b8] sm:$0xf]
        %v5004 = vld [vmem:[#allocation8 + $0x1bc] sm:$0xf]
        %v5005 = vld [vmem:[#allocation8 + $0x1c0] sm:$0xf]
        %v5006 = vld [vmem:[#allocation8 + $0x1c4] sm:$0xf]
        %v5007 = vld [vmem:[#allocation8 + $0x1c8] sm:$0xf]
        %v5008 = vld [vmem:[#allocation8 + $0x1cc] sm:$0xf]
        %v5009 = vld [vmem:[#allocation8 + $0x1d0] sm:$0xf]
        %v5010 = vld [vmem:[#allocation8 + $0x1d4] sm:$0xf]
        %v5011 = vld [vmem:[#allocation8 + $0x1d8] sm:$0xf]
        %v5012 = vld [vmem:[#allocation8 + $0x1dc] sm:$0xf]
        %v5013 = vld [vmem:[#allocation8 + $0x1e0] sm:$0xf]
        %v5014 = vld [vmem:[#allocation8 + $0x1e4] sm:$0xf]
        %v5015 = vld [vmem:[#allocation8 + $0x1e8] sm:$0xf]
        %v5016 = vld [vmem:[#allocation8 + $0x1ec] sm:$0xf]
        %v5017 = vld [vmem:[#allocation8 + $0x1f0] sm:$0xf]
        %v5018 = vld [vmem:[#allocation8 + $0x1f4] sm:$0xf]
        %v5019 = vld [vmem:[#allocation8 + $0x1f8] sm:$0xf]
        %v5020 = vld [vmem:[#allocation8 + $0x1fc] sm:$0xf]
        %v5021 = vld [vmem:[#allocation8 + $0x200] sm:$0xf]
        %v5022 = vld [vmem:[#allocation8 + $0x204] sm:$0xf]
        %v5023 = vld [vmem:[#allocation8 + $0x208] sm:$0xf]
        %v5024 = vld [vmem:[#allocation8 + $0x20c] sm:$0xf]
        %v5025 = vld [vmem:[#allocation8 + $0x210] sm:$0xf]
        %v5026 = vld [vmem:[#allocation8 + $0x214] sm:$0xf]
        %v5027 = vld [vmem:[#allocation8 + $0x218] sm:$0xf]
        %v5028 = vld [vmem:[#allocation8 + $0x21c] sm:$0xf]
        %v5029 = vld [vmem:[#allocation8 + $0x220] sm:$0xf]
        %v5030 = vld [vmem:[#allocation8 + $0x224] sm:$0xf]
        %v5031 = vld [vmem:[#allocation8 + $0x228] sm:$0xf]
        %v5032 = vld [vmem:[#allocation8 + $0x22c] sm:$0xf]
        %v5033 = vld [vmem:[#allocation8 + $0x230] sm:$0xf]
        %v5034 = vld [vmem:[#allocation8 + $0x234] sm:$0xf]
        %v5035 = vld [vmem:[#allocation8 + $0x238] sm:$0xf]
        %v5036 = vld [vmem:[#allocation8 + $0x23c] sm:$0xf]
        %v5085 = vunpack.c.l.b16 %v4989
        %v5086 = vunpack.c.l.b16 %v4990
        %v5087 = vunpack.c.l.b16 %v4991
        %v5088 = vunpack.c.l.b16 %v4992
        %v5089 = vunpack.c.l.b16 %v4993
        %v5090 = vunpack.c.l.b16 %v4994
        %v5091 = vunpack.c.l.b16 %v4995
        %v5092 = vunpack.c.l.b16 %v4996
        %v5093 = vunpack.c.l.b16 %v4997
        %v5094 = vunpack.c.l.b16 %v4998
        %v5095 = vunpack.c.l.b16 %v4999
        %v5096 = vunpack.c.l.b16 %v5000
        %v5097 = vunpack.c.l.b16 %v5001
        %v5098 = vunpack.c.l.b16 %v5002
        %v5099 = vunpack.c.l.b16 %v5003
        %v5100 = vunpack.c.l.b16 %v5004
        %v5101 = vunpack.c.l.b16 %v5005
        %v5102 = vunpack.c.l.b16 %v5006
        %v5103 = vunpack.c.l.b16 %v5007
        %v5104 = vunpack.c.l.b16 %v5008
        %v5105 = vunpack.c.l.b16 %v5009
        %v5106 = vunpack.c.l.b16 %v5010
        %v5107 = vunpack.c.l.b16 %v5011
        %v5108 = vunpack.c.l.b16 %v5012
        %v5109 = vunpack.c.l.b16 %v5013
        %v5110 = vunpack.c.l.b16 %v5014
        %v5111 = vunpack.c.l.b16 %v5015
        %v5112 = vunpack.c.l.b16 %v5016
        %v5113 = vunpack.c.l.b16 %v5017
        %v5114 = vunpack.c.l.b16 %v5018
        %v5115 = vunpack.c.l.b16 %v5019
        %v5116 = vunpack.c.l.b16 %v5020
        %v5117 = vunpack.c.l.b16 %v5021
        %v5118 = vunpack.c.l.b16 %v5022
        %v5119 = vunpack.c.l.b16 %v5023
        %v5120 = vunpack.c.l.b16 %v5024
        %v5121 = vunpack.c.l.b16 %v5025
        %v5122 = vunpack.c.l.b16 %v5026
        %v5123 = vunpack.c.l.b16 %v5027
        %v5124 = vunpack.c.l.b16 %v5028
        %v5125 = vunpack.c.l.b16 %v5029
        %v5126 = vunpack.c.l.b16 %v5030
        %v5127 = vunpack.c.l.b16 %v5031
        %v5128 = vunpack.c.l.b16 %v5032
        %v5129 = vunpack.c.l.b16 %v5033
        %v5130 = vunpack.c.l.b16 %v5034
        %v5131 = vunpack.c.l.b16 %v5035
        %v5132 = vunpack.c.l.b16 %v5036
        %v5133 = vpack.c.b16 %v5086, %v5085
        %v5134 = vpack.c.b16 %v5088, %v5087
        %v5135 = vpack.c.b16 %v5090, %v5089
        %v5136 = vpack.c.b16 %v5092, %v5091
        %v5137 = vpack.c.b16 %v5094, %v5093
        %v5138 = vpack.c.b16 %v5096, %v5095
        %v5139 = vpack.c.b16 %v5098, %v5097
        %v5140 = vpack.c.b16 %v5100, %v5099
        %v5141 = vpack.c.b16 %v5102, %v5101
        %v5142 = vpack.c.b16 %v5104, %v5103
        %v5143 = vpack.c.b16 %v5106, %v5105
        %v5144 = vpack.c.b16 %v5108, %v5107
        %v5145 = vpack.c.b16 %v5110, %v5109
        %v5146 = vpack.c.b16 %v5112, %v5111
        %v5147 = vpack.c.b16 %v5114, %v5113
        %v5148 = vpack.c.b16 %v5116, %v5115
        %v5149 = vpack.c.b16 %v5118, %v5117
        %v5150 = vpack.c.b16 %v5120, %v5119
        %v5151 = vpack.c.b16 %v5122, %v5121
        %v5152 = vpack.c.b16 %v5124, %v5123
        %v5153 = vpack.c.b16 %v5126, %v5125
        %v5154 = vpack.c.b16 %v5128, %v5127
        %v5155 = vpack.c.b16 %v5130, %v5129
        %v5156 = vpack.c.b16 %v5132, %v5131
        %5181 = vmatpush.bf16.msra.mxu0 %v5140
        %5182 = vmatpush.bf16.msra.mxu0 %v5139
        %5183 = vmatpush.bf16.msra.mxu0 %v5138
        %5184 = vmatpush.bf16.msra.mxu0 %v5137
        %5185 = vmatpush.bf16.msra.mxu0 %v5136
        %5186 = vmatpush.bf16.msra.mxu0 %v5135
        %5187 = vmatpush.bf16.msra.mxu0 %v5134
        %5188 = vmatpush.bf16.msra.mxu0 %v5133
        %5189 = vmatmul.bf16.gmra.mxu0 %v4829
        %v5190 = vpop.f32.mrf.mxu0
        %v5191 = vadd.f32 0.0, %v5190
        %v5192 = vpop.f32.mrf.mxu0
        %v5193 = vadd.f32 0.0, %v5192
        %5194 = vmatmul.bf16.gmra.mxu0 %v4830
        %v5195 = vpop.f32.mrf.mxu0
        %v5196 = vadd.f32 0.0, %v5195
        %v5197 = vpop.f32.mrf.mxu0
        %v5198 = vadd.f32 0.0, %v5197
        %5199 = vmatmul.bf16.gmra.mxu0 %v4831
        %v5200 = vpop.f32.mrf.mxu0
        %v5201 = vadd.f32 0.0, %v5200
        %v5202 = vpop.f32.mrf.mxu0
        %v5203 = vadd.f32 0.0, %v5202
        %5204 = vmatmul.bf16.gmra.mxu0 %v4832
        %v5205 = vpop.f32.mrf.mxu0
        %v5206 = vadd.f32 0.0, %v5205
        %v5207 = vpop.f32.mrf.mxu0
        %v5208 = vadd.f32 0.0, %v5207
        %5209 = vmatmul.bf16.gmra.mxu0 %v4833
        %v5210 = vpop.f32.mrf.mxu0
        %v5211 = vadd.f32 0.0, %v5210
        %v5212 = vpop.f32.mrf.mxu0
        %v5213 = vadd.f32 0.0, %v5212
        %5214 = vmatmul.bf16.gmra.mxu0 %v4834
        %v5215 = vpop.f32.mrf.mxu0
        %v5216 = vadd.f32 0.0, %v5215
        %v5217 = vpop.f32.mrf.mxu0
        %v5218 = vadd.f32 0.0, %v5217
        %5219 = vmatmul.bf16.gmra.mxu0 %v4835
        %v5220 = vpop.f32.mrf.mxu0
        %v5221 = vadd.f32 0.0, %v5220
        %v5222 = vpop.f32.mrf.mxu0
        %v5223 = vadd.f32 0.0, %v5222
        %5224 = vmatmul.bf16.gmra.mxu0 %v4836
        %v5225 = vpop.f32.mrf.mxu0
        %v5226 = vadd.f32 0.0, %v5225
        %v5227 = vpop.f32.mrf.mxu0
        %v5228 = vadd.f32 0.0, %v5227
        %5229 = vmatmul.bf16.gmra.mxu0 %v4837
        %v5230 = vpop.f32.mrf.mxu0
        %v5231 = vadd.f32 0.0, %v5230
        %v5232 = vpop.f32.mrf.mxu0
        %v5233 = vadd.f32 0.0, %v5232
        %5234 = vmatmul.bf16.gmra.mxu0 %v4838
        %v5235 = vpop.f32.mrf.mxu0
        %v5236 = vadd.f32 0.0, %v5235
        %v5237 = vpop.f32.mrf.mxu0
        %v5238 = vadd.f32 0.0, %v5237
        %5239 = vmatmul.bf16.gmra.mxu0 %v4839
        %v5240 = vpop.f32.mrf.mxu0
        %v5241 = vadd.f32 0.0, %v5240
        %v5242 = vpop.f32.mrf.mxu0
        %v5243 = vadd.f32 0.0, %v5242
        %5244 = vmatmul.bf16.gmra.mxu0 %v4840
        %v5245 = vpop.f32.mrf.mxu0
        %v5246 = vadd.f32 0.0, %v5245
        %v5247 = vpop.f32.mrf.mxu0
        %v5248 = vadd.f32 0.0, %v5247
        %5249 = vmatmul.bf16.gmra.mxu0 %v4841
        %v5250 = vpop.f32.mrf.mxu0
        %v5251 = vadd.f32 0.0, %v5250
        %v5252 = vpop.f32.mrf.mxu0
        %v5253 = vadd.f32 0.0, %v5252
        %5254 = vmatmul.bf16.gmra.mxu0 %v4842
        %v5255 = vpop.f32.mrf.mxu0
        %v5256 = vadd.f32 0.0, %v5255
        %v5257 = vpop.f32.mrf.mxu0
        %v5258 = vadd.f32 0.0, %v5257
        %5259 = vmatmul.bf16.gmra.mxu0 %v4843
        %v5260 = vpop.f32.mrf.mxu0
        %v5261 = vadd.f32 0.0, %v5260
        %v5262 = vpop.f32.mrf.mxu0
        %v5263 = vadd.f32 0.0, %v5262
        %5264 = vmatmul.bf16.gmra.mxu0 %v4844
        %v5265 = vpop.f32.mrf.mxu0
        %v5266 = vadd.f32 0.0, %v5265
        %v5267 = vpop.f32.mrf.mxu0
        %v5268 = vadd.f32 0.0, %v5267
        %5269 = vdwg.mxu0
        %5270 = vmatpush.bf16.msra.mxu0 %v5148
        %5271 = vmatpush.bf16.msra.mxu0 %v5147
        %5272 = vmatpush.bf16.msra.mxu0 %v5146
        %5273 = vmatpush.bf16.msra.mxu0 %v5145
        %5274 = vmatpush.bf16.msra.mxu0 %v5144
        %5275 = vmatpush.bf16.msra.mxu0 %v5143
        %5276 = vmatpush.bf16.msra.mxu0 %v5142
        %5277 = vmatpush.bf16.msra.mxu0 %v5141
        %5278 = vmatmul.bf16.gmra.mxu0 %v4893
        %v5279 = vpop.f32.mrf.mxu0
        %v5280 = vadd.f32 %v5191, %v5279
        %v5281 = vpop.f32.mrf.mxu0
        %v5282 = vadd.f32 %v5193, %v5281
        %5283 = vmatmul.bf16.gmra.mxu0 %v4894
        %v5284 = vpop.f32.mrf.mxu0
        %v5285 = vadd.f32 %v5196, %v5284
        %v5286 = vpop.f32.mrf.mxu0
        %v5287 = vadd.f32 %v5198, %v5286
        %5288 = vmatmul.bf16.gmra.mxu0 %v4895
        %v5289 = vpop.f32.mrf.mxu0
        %v5290 = vadd.f32 %v5201, %v5289
        %v5291 = vpop.f32.mrf.mxu0
        %v5292 = vadd.f32 %v5203, %v5291
        %5293 = vmatmul.bf16.gmra.mxu0 %v4896
        %v5294 = vpop.f32.mrf.mxu0
        %v5295 = vadd.f32 %v5206, %v5294
        %v5296 = vpop.f32.mrf.mxu0
        %v5297 = vadd.f32 %v5208, %v5296
        %5298 = vmatmul.bf16.gmra.mxu0 %v4897
        %v5299 = vpop.f32.mrf.mxu0
        %v5300 = vadd.f32 %v5211, %v5299
        %v5301 = vpop.f32.mrf.mxu0
        %v5302 = vadd.f32 %v5213, %v5301
        %5303 = vmatmul.bf16.gmra.mxu0 %v4898
        %v5304 = vpop.f32.mrf.mxu0
        %v5305 = vadd.f32 %v5216, %v5304
        %v5306 = vpop.f32.mrf.mxu0
        %v5307 = vadd.f32 %v5218, %v5306
        %5308 = vmatmul.bf16.gmra.mxu0 %v4899
        %v5309 = vpop.f32.mrf.mxu0
        %v5310 = vadd.f32 %v5221, %v5309
        %v5311 = vpop.f32.mrf.mxu0
        %v5312 = vadd.f32 %v5223, %v5311
        %5313 = vmatmul.bf16.gmra.mxu0 %v4900
        %v5314 = vpop.f32.mrf.mxu0
        %v5315 = vadd.f32 %v5226, %v5314
        %v5316 = vpop.f32.mrf.mxu0
        %v5317 = vadd.f32 %v5228, %v5316
        %5318 = vmatmul.bf16.gmra.mxu0 %v4901
        %v5319 = vpop.f32.mrf.mxu0
        %v5320 = vadd.f32 %v5231, %v5319
        %v5321 = vpop.f32.mrf.mxu0
        %v5322 = vadd.f32 %v5233, %v5321
        %5323 = vmatmul.bf16.gmra.mxu0 %v4902
        %v5324 = vpop.f32.mrf.mxu0
        %v5325 = vadd.f32 %v5236, %v5324
        %v5326 = vpop.f32.mrf.mxu0
        %v5327 = vadd.f32 %v5238, %v5326
        %5328 = vmatmul.bf16.gmra.mxu0 %v4903
        %v5329 = vpop.f32.mrf.mxu0
        %v5330 = vadd.f32 %v5241, %v5329
        %v5331 = vpop.f32.mrf.mxu0
        %v5332 = vadd.f32 %v5243, %v5331
        %5333 = vmatmul.bf16.gmra.mxu0 %v4904
        %v5334 = vpop.f32.mrf.mxu0
        %v5335 = vadd.f32 %v5246, %v5334
        %v5336 = vpop.f32.mrf.mxu0
        %v5337 = vadd.f32 %v5248, %v5336
        %5338 = vmatmul.bf16.gmra.mxu0 %v4905
        %v5339 = vpop.f32.mrf.mxu0
        %v5340 = vadd.f32 %v5251, %v5339
        %v5341 = vpop.f32.mrf.mxu0
        %v5342 = vadd.f32 %v5253, %v5341
        %5343 = vmatmul.bf16.gmra.mxu0 %v4906
        %v5344 = vpop.f32.mrf.mxu0
        %v5345 = vadd.f32 %v5256, %v5344
        %v5346 = vpop.f32.mrf.mxu0
        %v5347 = vadd.f32 %v5258, %v5346
        %5348 = vmatmul.bf16.gmra.mxu0 %v4907
        %v5349 = vpop.f32.mrf.mxu0
        %v5350 = vadd.f32 %v5261, %v5349
        %v5351 = vpop.f32.mrf.mxu0
        %v5352 = vadd.f32 %v5263, %v5351
        %5353 = vmatmul.bf16.gmra.mxu0 %v4908
        %v5354 = vpop.f32.mrf.mxu0
        %v5355 = vadd.f32 %v5266, %v5354
        %v5356 = vpop.f32.mrf.mxu0
        %v5357 = vadd.f32 %v5268, %v5356
        %5358 = vdwg.mxu0
        %5359 = vmatpush.bf16.msra.mxu0 %v5156
        %5360 = vmatpush.bf16.msra.mxu0 %v5155
        %5361 = vmatpush.bf16.msra.mxu0 %v5154
        %5362 = vmatpush.bf16.msra.mxu0 %v5153
        %5363 = vmatpush.bf16.msra.mxu0 %v5152
        %5364 = vmatpush.bf16.msra.mxu0 %v5151
        %5365 = vmatpush.bf16.msra.mxu0 %v5150
        %5366 = vmatpush.bf16.msra.mxu0 %v5149
        %5367 = vmatmul.bf16.gmra.mxu0 %v4957
        %v5368 = vpop.f32.mrf.mxu0
        %v5369 = vadd.f32 %v5280, %v5368
        %v5370 = vpop.f32.mrf.mxu0
        %v5371 = vadd.f32 %v5282, %v5370
        %5372 = vmatmul.bf16.gmra.mxu0 %v4958
        %v5373 = vpop.f32.mrf.mxu0
        %v5374 = vadd.f32 %v5285, %v5373
        %v5375 = vpop.f32.mrf.mxu0
        %v5376 = vadd.f32 %v5287, %v5375
        %5377 = vmatmul.bf16.gmra.mxu0 %v4959
        %v5378 = vpop.f32.mrf.mxu0
        %v5379 = vadd.f32 %v5290, %v5378
        %v5380 = vpop.f32.mrf.mxu0
        %v5381 = vadd.f32 %v5292, %v5380
        %5382 = vmatmul.bf16.gmra.mxu0 %v4960
        %v5383 = vpop.f32.mrf.mxu0
        %v5384 = vadd.f32 %v5295, %v5383
        %v5385 = vpop.f32.mrf.mxu0
        %v5386 = vadd.f32 %v5297, %v5385
        %5387 = vmatmul.bf16.gmra.mxu0 %v4961
        %v5388 = vpop.f32.mrf.mxu0
        %v5389 = vadd.f32 %v5300, %v5388
        %v5390 = vpop.f32.mrf.mxu0
        %v5391 = vadd.f32 %v5302, %v5390
        %5392 = vmatmul.bf16.gmra.mxu0 %v4962
        %v5393 = vpop.f32.mrf.mxu0
        %v5394 = vadd.f32 %v5305, %v5393
        %v5395 = vpop.f32.mrf.mxu0
        %v5396 = vadd.f32 %v5307, %v5395
        %5397 = vmatmul.bf16.gmra.mxu0 %v4963
        %v5398 = vpop.f32.mrf.mxu0
        %v5399 = vadd.f32 %v5310, %v5398
        %v5400 = vpop.f32.mrf.mxu0
        %v5401 = vadd.f32 %v5312, %v5400
        %5402 = vmatmul.bf16.gmra.mxu0 %v4964
        %v5403 = vpop.f32.mrf.mxu0
        %v5404 = vadd.f32 %v5315, %v5403
        %v5405 = vpop.f32.mrf.mxu0
        %v5406 = vadd.f32 %v5317, %v5405
        %5407 = vmatmul.bf16.gmra.mxu0 %v4965
        %v5408 = vpop.f32.mrf.mxu0
        %v5409 = vadd.f32 %v5320, %v5408
        %v5410 = vpop.f32.mrf.mxu0
        %v5411 = vadd.f32 %v5322, %v5410
        %5412 = vmatmul.bf16.gmra.mxu0 %v4966
        %v5413 = vpop.f32.mrf.mxu0
        %v5414 = vadd.f32 %v5325, %v5413
        %v5415 = vpop.f32.mrf.mxu0
        %v5416 = vadd.f32 %v5327, %v5415
        %5417 = vmatmul.bf16.gmra.mxu0 %v4967
        %v5418 = vpop.f32.mrf.mxu0
        %v5419 = vadd.f32 %v5330, %v5418
        %v5420 = vpop.f32.mrf.mxu0
        %v5421 = vadd.f32 %v5332, %v5420
        %5422 = vmatmul.bf16.gmra.mxu0 %v4968
        %v5423 = vpop.f32.mrf.mxu0
        %v5424 = vadd.f32 %v5335, %v5423
        %v5425 = vpop.f32.mrf.mxu0
        %v5426 = vadd.f32 %v5337, %v5425
        %5427 = vmatmul.bf16.gmra.mxu0 %v4969
        %v5428 = vpop.f32.mrf.mxu0
        %v5429 = vadd.f32 %v5340, %v5428
        %v5430 = vpop.f32.mrf.mxu0
        %v5431 = vadd.f32 %v5342, %v5430
        %5432 = vmatmul.bf16.gmra.mxu0 %v4970
        %v5433 = vpop.f32.mrf.mxu0
        %v5434 = vadd.f32 %v5345, %v5433
        %v5435 = vpop.f32.mrf.mxu0
        %v5436 = vadd.f32 %v5347, %v5435
        %5437 = vmatmul.bf16.gmra.mxu0 %v4971
        %v5438 = vpop.f32.mrf.mxu0
        %v5439 = vadd.f32 %v5350, %v5438
        %v5440 = vpop.f32.mrf.mxu0
        %v5441 = vadd.f32 %v5352, %v5440
        %5442 = vmatmul.bf16.gmra.mxu0 %v4972
        %v5443 = vpop.f32.mrf.mxu0
        %v5444 = vadd.f32 %v5355, %v5443
        %v5445 = vpop.f32.mrf.mxu0
        %v5446 = vadd.f32 %v5357, %v5445
        %5447 = vdwg.mxu0
        %v5448 = vadd.f32 %v4093, %v5369
        %v5449 = vadd.f32 %v4095, %v5371
        %v5450 = vadd.f32 %v4098, %v5374
        %v5451 = vadd.f32 %v4100, %v5376
        %v5452 = vadd.f32 %v4103, %v5379
        %v5453 = vadd.f32 %v4105, %v5381
        %v5454 = vadd.f32 %v4108, %v5384
        %v5455 = vadd.f32 %v4110, %v5386
        %v5456 = vadd.f32 %v4113, %v5389
        %v5457 = vadd.f32 %v4115, %v5391
        %v5458 = vadd.f32 %v4118, %v5394
        %v5459 = vadd.f32 %v4120, %v5396
        %v5460 = vadd.f32 %v4123, %v5399
        %v5461 = vadd.f32 %v4125, %v5401
        %v5462 = vadd.f32 %v4128, %v5404
        %v5463 = vadd.f32 %v4130, %v5406
        %v5464 = vadd.f32 %v4133, %v5409
        %v5465 = vadd.f32 %v4135, %v5411
        %v5466 = vadd.f32 %v4138, %v5414
        %v5467 = vadd.f32 %v4140, %v5416
        %v5468 = vadd.f32 %v4143, %v5419
        %v5469 = vadd.f32 %v4145, %v5421
        %v5470 = vadd.f32 %v4148, %v5424
        %v5471 = vadd.f32 %v4150, %v5426
        %v5472 = vadd.f32 %v4153, %v5429
        %v5473 = vadd.f32 %v4155, %v5431
        %v5474 = vadd.f32 %v4158, %v5434
        %v5475 = vadd.f32 %v4160, %v5436
        %v5476 = vadd.f32 %v4163, %v5439
        %v5477 = vadd.f32 %v4165, %v5441
        %v5478 = vadd.f32 %v4168, %v5444
        %v5479 = vadd.f32 %v4170, %v5446
        %v5480 = vld [vmem:[#allocation9] sm:$0x1]
        %v5482 = vperm.slane %v5480, 0
        %v5484 = vadd.f32 %v5448, %v5482
        %v5485 = vadd.f32 %v5449, %v5482
        %v5486 = vadd.f32 %v5450, %v5482
        %v5487 = vadd.f32 %v5451, %v5482
        %v5488 = vadd.f32 %v5452, %v5482
        %v5489 = vadd.f32 %v5453, %v5482
        %v5490 = vadd.f32 %v5454, %v5482
        %v5491 = vadd.f32 %v5455, %v5482
        %v5492 = vadd.f32 %v5456, %v5482
        %v5493 = vadd.f32 %v5457, %v5482
        %v5494 = vadd.f32 %v5458, %v5482
        %v5495 = vadd.f32 %v5459, %v5482
        %v5496 = vadd.f32 %v5460, %v5482
        %v5497 = vadd.f32 %v5461, %v5482
        %v5498 = vadd.f32 %v5462, %v5482
        %v5499 = vadd.f32 %v5463, %v5482
        %v5500 = vadd.f32 %v5464, %v5482
        %v5501 = vadd.f32 %v5465, %v5482
        %v5502 = vadd.f32 %v5466, %v5482
        %v5503 = vadd.f32 %v5467, %v5482
        %v5504 = vadd.f32 %v5468, %v5482
        %v5505 = vadd.f32 %v5469, %v5482
        %v5506 = vadd.f32 %v5470, %v5482
        %v5507 = vadd.f32 %v5471, %v5482
        %v5508 = vadd.f32 %v5472, %v5482
        %v5509 = vadd.f32 %v5473, %v5482
        %v5510 = vadd.f32 %v5474, %v5482
        %v5511 = vadd.f32 %v5475, %v5482
        %v5512 = vadd.f32 %v5476, %v5482
        %v5513 = vadd.f32 %v5477, %v5482
        %v5514 = vadd.f32 %v5478, %v5482
        %v5515 = vadd.f32 %v5479, %v5482
        %v5516 = vmax.f32 %v5484, 0.0
        %v5517 = vmax.f32 %v5485, 0.0
        %v5518 = vmax.f32 %v5486, 0.0
        %v5519 = vmax.f32 %v5487, 0.0
        %v5520 = vmax.f32 %v5488, 0.0
        %v5521 = vmax.f32 %v5489, 0.0
        %v5522 = vmax.f32 %v5490, 0.0
        %v5523 = vmax.f32 %v5491, 0.0
        %v5524 = vmax.f32 %v5492, 0.0
        %v5525 = vmax.f32 %v5493, 0.0
        %v5526 = vmax.f32 %v5494, 0.0
        %v5527 = vmax.f32 %v5495, 0.0
        %v5528 = vmax.f32 %v5496, 0.0
        %v5529 = vmax.f32 %v5497, 0.0
        %v5530 = vmax.f32 %v5498, 0.0
        %v5531 = vmax.f32 %v5499, 0.0
        %v5532 = vmax.f32 %v5500, 0.0
        %v5533 = vmax.f32 %v5501, 0.0
        %v5534 = vmax.f32 %v5502, 0.0
        %v5535 = vmax.f32 %v5503, 0.0
        %v5536 = vmax.f32 %v5504, 0.0
        %v5537 = vmax.f32 %v5505, 0.0
        %v5538 = vmax.f32 %v5506, 0.0
        %v5539 = vmax.f32 %v5507, 0.0
        %v5540 = vmax.f32 %v5508, 0.0
        %v5541 = vmax.f32 %v5509, 0.0
        %v5542 = vmax.f32 %v5510, 0.0
        %v5543 = vmax.f32 %v5511, 0.0
        %v5544 = vmax.f32 %v5512, 0.0
        %v5545 = vmax.f32 %v5513, 0.0
        %v5546 = vmax.f32 %v5514, 0.0
        %v5547 = vmax.f32 %v5515, 0.0
        %s5548 = sadd.s32 %s379, 1
        %s5549 = smul.u32 %s5548, 4
        %s5550 = smul.addr %s5549, 4
        %s5551 = scalar_lea.vmem %s325, %s5550 [#allocation3]
        %v5552 = vld [vmem:[%s5551] sm:$0xff]
        %v5553 = vld [vmem:[%s5551 + $0x8] sm:$0xff]
        %v5554 = vld [vmem:[%s5551 + $0x10] sm:$0xff]
        %v5555 = vld [vmem:[%s5551 + $0x18] sm:$0xff]
        %v5556 = vld [vmem:[%s5551 + $0x20] sm:$0xff]
        %v5557 = vld [vmem:[%s5551 + $0x28] sm:$0xff]
        %v5558 = vld [vmem:[%s5551 + $0x30] sm:$0xff]
        %v5559 = vld [vmem:[%s5551 + $0x38] sm:$0xff]
        %v5560 = vld [vmem:[%s5551 + $0x40] sm:$0xff]
        %v5561 = vld [vmem:[%s5551 + $0x48] sm:$0xff]
        %v5562 = vld [vmem:[%s5551 + $0x50] sm:$0xff]
        %v5563 = vld [vmem:[%s5551 + $0x58] sm:$0xff]
        %v5564 = vld [vmem:[%s5551 + $0x60] sm:$0xff]
        %v5565 = vld [vmem:[%s5551 + $0x68] sm:$0xff]
        %v5566 = vld [vmem:[%s5551 + $0x70] sm:$0xff]
        %v5567 = vld [vmem:[%s5551 + $0x78] sm:$0xff]
        %v5568 = vld [vmem:[%s5551 + $0x80] sm:$0xff]
        %v5569 = vld [vmem:[%s5551 + $0x88] sm:$0xff]
        %v5570 = vld [vmem:[%s5551 + $0x90] sm:$0xff]
        %v5571 = vld [vmem:[%s5551 + $0x98] sm:$0xff]
        %v5572 = vld [vmem:[%s5551 + $0xa0] sm:$0xff]
        %v5573 = vld [vmem:[%s5551 + $0xa8] sm:$0xff]
        %v5574 = vld [vmem:[%s5551 + $0xb0] sm:$0xff]
        %v5575 = vld [vmem:[%s5551 + $0xb8] sm:$0xff]
        %v5576 = vld [vmem:[%s5551 + $0xc0] sm:$0xff]
        %v5577 = vld [vmem:[%s5551 + $0xc8] sm:$0xff]
        %v5578 = vld [vmem:[%s5551 + $0xd0] sm:$0xff]
        %v5579 = vld [vmem:[%s5551 + $0xd8] sm:$0xff]
        %v5580 = vld [vmem:[%s5551 + $0xe0] sm:$0xff]
        %v5581 = vld [vmem:[%s5551 + $0xe8] sm:$0xff]
        %v5582 = vld [vmem:[%s5551 + $0xf0] sm:$0xff]
        %v5583 = vld [vmem:[%s5551 + $0xf8] sm:$0xff]
        %v5584 = vpack.c.bf16 %v5516, %v5516
        %v5585 = vpack.c.bf16 %v5517, %v5517
        %v5586 = vpack.c.bf16 %v5518, %v5518
        %v5587 = vpack.c.bf16 %v5519, %v5519
        %v5588 = vpack.c.bf16 %v5520, %v5520
        %v5589 = vpack.c.bf16 %v5521, %v5521
        %v5590 = vpack.c.bf16 %v5522, %v5522
        %v5591 = vpack.c.bf16 %v5523, %v5523
        %v5592 = vpack.c.bf16 %v5524, %v5524
        %v5593 = vpack.c.bf16 %v5525, %v5525
        %v5594 = vpack.c.bf16 %v5526, %v5526
        %v5595 = vpack.c.bf16 %v5527, %v5527
        %v5596 = vpack.c.bf16 %v5528, %v5528
        %v5597 = vpack.c.bf16 %v5529, %v5529
        %v5598 = vpack.c.bf16 %v5530, %v5530
        %v5599 = vpack.c.bf16 %v5531, %v5531
        %v5600 = vpack.c.bf16 %v5532, %v5532
        %v5601 = vpack.c.bf16 %v5533, %v5533
        %v5602 = vpack.c.bf16 %v5534, %v5534
        %v5603 = vpack.c.bf16 %v5535, %v5535
        %v5604 = vpack.c.bf16 %v5536, %v5536
        %v5605 = vpack.c.bf16 %v5537, %v5537
        %v5606 = vpack.c.bf16 %v5538, %v5538
        %v5607 = vpack.c.bf16 %v5539, %v5539
        %v5608 = vpack.c.bf16 %v5540, %v5540
        %v5609 = vpack.c.bf16 %v5541, %v5541
        %v5610 = vpack.c.bf16 %v5542, %v5542
        %v5611 = vpack.c.bf16 %v5543, %v5543
        %v5612 = vpack.c.bf16 %v5544, %v5544
        %v5613 = vpack.c.bf16 %v5545, %v5545
        %v5614 = vpack.c.bf16 %v5546, %v5546
        %v5615 = vpack.c.bf16 %v5547, %v5547
        %v5648 = vunpack.c.l.b16 %v5584
        %v5649 = vunpack.c.l.b16 %v5585
        %v5650 = vunpack.c.l.b16 %v5586
        %v5651 = vunpack.c.l.b16 %v5587
        %v5652 = vunpack.c.l.b16 %v5588
        %v5653 = vunpack.c.l.b16 %v5589
        %v5654 = vunpack.c.l.b16 %v5590
        %v5655 = vunpack.c.l.b16 %v5591
        %v5656 = vunpack.c.l.b16 %v5592
        %v5657 = vunpack.c.l.b16 %v5593
        %v5658 = vunpack.c.l.b16 %v5594
        %v5659 = vunpack.c.l.b16 %v5595
        %v5660 = vunpack.c.l.b16 %v5596
        %v5661 = vunpack.c.l.b16 %v5597
        %v5662 = vunpack.c.l.b16 %v5598
        %v5663 = vunpack.c.l.b16 %v5599
        %v5664 = vunpack.c.l.b16 %v5600
        %v5665 = vunpack.c.l.b16 %v5601
        %v5666 = vunpack.c.l.b16 %v5602
        %v5667 = vunpack.c.l.b16 %v5603
        %v5668 = vunpack.c.l.b16 %v5604
        %v5669 = vunpack.c.l.b16 %v5605
        %v5670 = vunpack.c.l.b16 %v5606
        %v5671 = vunpack.c.l.b16 %v5607
        %v5672 = vunpack.c.l.b16 %v5608
        %v5673 = vunpack.c.l.b16 %v5609
        %v5674 = vunpack.c.l.b16 %v5610
        %v5675 = vunpack.c.l.b16 %v5611
        %v5676 = vunpack.c.l.b16 %v5612
        %v5677 = vunpack.c.l.b16 %v5613
        %v5678 = vunpack.c.l.b16 %v5614
        %v5679 = vunpack.c.l.b16 %v5615
        %v5680 = vpack.c.b16 %v5649, %v5648
        %v5681 = vpack.c.b16 %v5651, %v5650
        %v5682 = vpack.c.b16 %v5653, %v5652
        %v5683 = vpack.c.b16 %v5655, %v5654
        %v5684 = vpack.c.b16 %v5657, %v5656
        %v5685 = vpack.c.b16 %v5659, %v5658
        %v5686 = vpack.c.b16 %v5661, %v5660
        %v5687 = vpack.c.b16 %v5663, %v5662
        %v5688 = vpack.c.b16 %v5665, %v5664
        %v5689 = vpack.c.b16 %v5667, %v5666
        %v5690 = vpack.c.b16 %v5669, %v5668
        %v5691 = vpack.c.b16 %v5671, %v5670
        %v5692 = vpack.c.b16 %v5673, %v5672
        %v5693 = vpack.c.b16 %v5675, %v5674
        %v5694 = vpack.c.b16 %v5677, %v5676
        %v5695 = vpack.c.b16 %v5679, %v5678
        %v5744 = vunpack.c.l.b16 %v5552
        %v5745 = vunpack.c.h.b16 %v5552
        %v5746 = vunpack.c.l.b16 %v5553
        %v5747 = vunpack.c.h.b16 %v5553
        %v5748 = vunpack.c.l.b16 %v5554
        %v5749 = vunpack.c.h.b16 %v5554
        %v5750 = vunpack.c.l.b16 %v5555
        %v5751 = vunpack.c.h.b16 %v5555
        %v5752 = vunpack.c.l.b16 %v5556
        %v5753 = vunpack.c.h.b16 %v5556
        %v5754 = vunpack.c.l.b16 %v5557
        %v5755 = vunpack.c.h.b16 %v5557
        %v5756 = vunpack.c.l.b16 %v5558
        %v5757 = vunpack.c.h.b16 %v5558
        %v5758 = vunpack.c.l.b16 %v5559
        %v5759 = vunpack.c.h.b16 %v5559
        %v5760 = vunpack.c.l.b16 %v5560
        %v5761 = vunpack.c.h.b16 %v5560
        %v5762 = vunpack.c.l.b16 %v5561
        %v5763 = vunpack.c.h.b16 %v5561
        %v5764 = vunpack.c.l.b16 %v5562
        %v5765 = vunpack.c.h.b16 %v5562
        %v5766 = vunpack.c.l.b16 %v5563
        %v5767 = vunpack.c.h.b16 %v5563
        %v5768 = vunpack.c.l.b16 %v5564
        %v5769 = vunpack.c.h.b16 %v5564
        %v5770 = vunpack.c.l.b16 %v5565
        %v5771 = vunpack.c.h.b16 %v5565
        %v5772 = vunpack.c.l.b16 %v5566
        %v5773 = vunpack.c.h.b16 %v5566
        %v5774 = vunpack.c.l.b16 %v5567
        %v5775 = vunpack.c.h.b16 %v5567
        %v5776 = vunpack.c.l.b16 %v5568
        %v5777 = vunpack.c.h.b16 %v5568
        %v5778 = vunpack.c.l.b16 %v5569
        %v5779 = vunpack.c.h.b16 %v5569
        %v5780 = vunpack.c.l.b16 %v5570
        %v5781 = vunpack.c.h.b16 %v5570
        %v5782 = vunpack.c.l.b16 %v5571
        %v5783 = vunpack.c.h.b16 %v5571
        %v5784 = vunpack.c.l.b16 %v5572
        %v5785 = vunpack.c.h.b16 %v5572
        %v5786 = vunpack.c.l.b16 %v5573
        %v5787 = vunpack.c.h.b16 %v5573
        %v5788 = vunpack.c.l.b16 %v5574
        %v5789 = vunpack.c.h.b16 %v5574
        %v5790 = vunpack.c.l.b16 %v5575
        %v5791 = vunpack.c.h.b16 %v5575
        %v5792 = vunpack.c.l.b16 %v5576
        %v5793 = vunpack.c.h.b16 %v5576
        %v5794 = vunpack.c.l.b16 %v5577
        %v5795 = vunpack.c.h.b16 %v5577
        %v5796 = vunpack.c.l.b16 %v5578
        %v5797 = vunpack.c.h.b16 %v5578
        %v5798 = vunpack.c.l.b16 %v5579
        %v5799 = vunpack.c.h.b16 %v5579
        %v5800 = vunpack.c.l.b16 %v5580
        %v5801 = vunpack.c.h.b16 %v5580
        %v5802 = vunpack.c.l.b16 %v5581
        %v5803 = vunpack.c.h.b16 %v5581
        %v5804 = vunpack.c.l.b16 %v5582
        %v5805 = vunpack.c.h.b16 %v5582
        %v5806 = vunpack.c.l.b16 %v5583
        %v5807 = vunpack.c.h.b16 %v5583
        %v5808 = vpack.c.b16 %v5746, %v5744
        %v5809 = vpack.c.b16 %v5747, %v5745
        %v5810 = vpack.c.b16 %v5750, %v5748
        %v5811 = vpack.c.b16 %v5751, %v5749
        %v5812 = vpack.c.b16 %v5754, %v5752
        %v5813 = vpack.c.b16 %v5755, %v5753
        %v5814 = vpack.c.b16 %v5758, %v5756
        %v5815 = vpack.c.b16 %v5759, %v5757
        %v5816 = vpack.c.b16 %v5762, %v5760
        %v5817 = vpack.c.b16 %v5763, %v5761
        %v5818 = vpack.c.b16 %v5766, %v5764
        %v5819 = vpack.c.b16 %v5767, %v5765
        %v5820 = vpack.c.b16 %v5770, %v5768
        %v5821 = vpack.c.b16 %v5771, %v5769
        %v5822 = vpack.c.b16 %v5774, %v5772
        %v5823 = vpack.c.b16 %v5775, %v5773
        %v5824 = vpack.c.b16 %v5778, %v5776
        %v5825 = vpack.c.b16 %v5779, %v5777
        %v5826 = vpack.c.b16 %v5782, %v5780
        %v5827 = vpack.c.b16 %v5783, %v5781
        %v5828 = vpack.c.b16 %v5786, %v5784
        %v5829 = vpack.c.b16 %v5787, %v5785
        %v5830 = vpack.c.b16 %v5790, %v5788
        %v5831 = vpack.c.b16 %v5791, %v5789
        %v5832 = vpack.c.b16 %v5794, %v5792
        %v5833 = vpack.c.b16 %v5795, %v5793
        %v5834 = vpack.c.b16 %v5798, %v5796
        %v5835 = vpack.c.b16 %v5799, %v5797
        %v5836 = vpack.c.b16 %v5802, %v5800
        %v5837 = vpack.c.b16 %v5803, %v5801
        %v5838 = vpack.c.b16 %v5806, %v5804
        %v5839 = vpack.c.b16 %v5807, %v5805
        %v5872 = vld [vmem:[#allocation11] sm:$0xff]
        %v5873 = vld [vmem:[#allocation11 + $0x8] sm:$0xff]
        %v5874 = vld [vmem:[#allocation11 + $0x10] sm:$0xff]
        %v5875 = vld [vmem:[#allocation11 + $0x18] sm:$0xff]
        %v5876 = vld [vmem:[#allocation11 + $0x20] sm:$0xff]
        %v5877 = vld [vmem:[#allocation11 + $0x28] sm:$0xff]
        %v5878 = vld [vmem:[#allocation11 + $0x30] sm:$0xff]
        %v5879 = vld [vmem:[#allocation11 + $0x38] sm:$0xff]
        %v5880 = vld [vmem:[#allocation11 + $0x40] sm:$0xff]
        %v5881 = vld [vmem:[#allocation11 + $0x48] sm:$0xff]
        %v5882 = vld [vmem:[#allocation11 + $0x50] sm:$0xff]
        %v5883 = vld [vmem:[#allocation11 + $0x58] sm:$0xff]
        %v5884 = vld [vmem:[#allocation11 + $0x60] sm:$0xff]
        %v5885 = vld [vmem:[#allocation11 + $0x68] sm:$0xff]
        %v5886 = vld [vmem:[#allocation11 + $0x70] sm:$0xff]
        %v5887 = vld [vmem:[#allocation11 + $0x78] sm:$0xff]
        %v5888 = vld [vmem:[#allocation11 + $0x80] sm:$0xff]
        %v5889 = vld [vmem:[#allocation11 + $0x88] sm:$0xff]
        %v5890 = vld [vmem:[#allocation11 + $0x90] sm:$0xff]
        %v5891 = vld [vmem:[#allocation11 + $0x98] sm:$0xff]
        %v5892 = vld [vmem:[#allocation11 + $0xa0] sm:$0xff]
        %v5893 = vld [vmem:[#allocation11 + $0xa8] sm:$0xff]
        %v5894 = vld [vmem:[#allocation11 + $0xb0] sm:$0xff]
        %v5895 = vld [vmem:[#allocation11 + $0xb8] sm:$0xff]
        %v5896 = vld [vmem:[#allocation11 + $0xc0] sm:$0xff]
        %v5897 = vld [vmem:[#allocation11 + $0xc8] sm:$0xff]
        %v5898 = vld [vmem:[#allocation11 + $0xd0] sm:$0xff]
        %v5899 = vld [vmem:[#allocation11 + $0xd8] sm:$0xff]
        %v5900 = vld [vmem:[#allocation11 + $0xe0] sm:$0xff]
        %v5901 = vld [vmem:[#allocation11 + $0xe8] sm:$0xff]
        %v5902 = vld [vmem:[#allocation11 + $0xf0] sm:$0xff]
        %v5903 = vld [vmem:[#allocation11 + $0xf8] sm:$0xff]
        %v5904 = vld [vmem:[#allocation11 + $0x100] sm:$0xff]
        %v5905 = vld [vmem:[#allocation11 + $0x108] sm:$0xff]
        %v5906 = vld [vmem:[#allocation11 + $0x110] sm:$0xff]
        %v5907 = vld [vmem:[#allocation11 + $0x118] sm:$0xff]
        %v5908 = vld [vmem:[#allocation11 + $0x120] sm:$0xff]
        %v5909 = vld [vmem:[#allocation11 + $0x128] sm:$0xff]
        %v5910 = vld [vmem:[#allocation11 + $0x130] sm:$0xff]
        %v5911 = vld [vmem:[#allocation11 + $0x138] sm:$0xff]
        %v5912 = vld [vmem:[#allocation11 + $0x140] sm:$0xff]
        %v5913 = vld [vmem:[#allocation11 + $0x148] sm:$0xff]
        %v5914 = vld [vmem:[#allocation11 + $0x150] sm:$0xff]
        %v5915 = vld [vmem:[#allocation11 + $0x158] sm:$0xff]
        %v5916 = vld [vmem:[#allocation11 + $0x160] sm:$0xff]
        %v5917 = vld [vmem:[#allocation11 + $0x168] sm:$0xff]
        %v5918 = vld [vmem:[#allocation11 + $0x170] sm:$0xff]
        %v5919 = vld [vmem:[#allocation11 + $0x178] sm:$0xff]
        %v5920 = vld [vmem:[#allocation11 + $0x180] sm:$0xff]
        %v5921 = vld [vmem:[#allocation11 + $0x188] sm:$0xff]
        %v5922 = vld [vmem:[#allocation11 + $0x190] sm:$0xff]
        %v5923 = vld [vmem:[#allocation11 + $0x198] sm:$0xff]
        %v5924 = vld [vmem:[#allocation11 + $0x1a0] sm:$0xff]
        %v5925 = vld [vmem:[#allocation11 + $0x1a8] sm:$0xff]
        %v5926 = vld [vmem:[#allocation11 + $0x1b0] sm:$0xff]
        %v5927 = vld [vmem:[#allocation11 + $0x1b8] sm:$0xff]
        %v5928 = vld [vmem:[#allocation11 + $0x1c0] sm:$0xff]
        %v5929 = vld [vmem:[#allocation11 + $0x1c8] sm:$0xff]
        %v5930 = vld [vmem:[#allocation11 + $0x1d0] sm:$0xff]
        %v5931 = vld [vmem:[#allocation11 + $0x1d8] sm:$0xff]
        %v5932 = vld [vmem:[#allocation11 + $0x1e0] sm:$0xff]
        %v5933 = vld [vmem:[#allocation11 + $0x1e8] sm:$0xff]
        %v5934 = vld [vmem:[#allocation11 + $0x1f0] sm:$0xff]
        %v5935 = vld [vmem:[#allocation11 + $0x1f8] sm:$0xff]
        %v5936 = vld [vmem:[#allocation11 + $0x200] sm:$0xff]
        %v5937 = vld [vmem:[#allocation11 + $0x208] sm:$0xff]
        %v5938 = vld [vmem:[#allocation11 + $0x210] sm:$0xff]
        %v5939 = vld [vmem:[#allocation11 + $0x218] sm:$0xff]
        %v5940 = vld [vmem:[#allocation11 + $0x220] sm:$0xff]
        %v5941 = vld [vmem:[#allocation11 + $0x228] sm:$0xff]
        %v5942 = vld [vmem:[#allocation11 + $0x230] sm:$0xff]
        %v5943 = vld [vmem:[#allocation11 + $0x238] sm:$0xff]
        %v5944 = vld [vmem:[#allocation11 + $0x240] sm:$0xff]
        %v5945 = vld [vmem:[#allocation11 + $0x248] sm:$0xff]
        %v5946 = vld [vmem:[#allocation11 + $0x250] sm:$0xff]
        %v5947 = vld [vmem:[#allocation11 + $0x258] sm:$0xff]
        %v5948 = vld [vmem:[#allocation11 + $0x260] sm:$0xff]
        %v5949 = vld [vmem:[#allocation11 + $0x268] sm:$0xff]
        %v5950 = vld [vmem:[#allocation11 + $0x270] sm:$0xff]
        %v5951 = vld [vmem:[#allocation11 + $0x278] sm:$0xff]
        %v5952 = vld [vmem:[#allocation11 + $0x280] sm:$0xff]
        %v5953 = vld [vmem:[#allocation11 + $0x288] sm:$0xff]
        %v5954 = vld [vmem:[#allocation11 + $0x290] sm:$0xff]
        %v5955 = vld [vmem:[#allocation11 + $0x298] sm:$0xff]
        %v5956 = vld [vmem:[#allocation11 + $0x2a0] sm:$0xff]
        %v5957 = vld [vmem:[#allocation11 + $0x2a8] sm:$0xff]
        %v5958 = vld [vmem:[#allocation11 + $0x2b0] sm:$0xff]
        %v5959 = vld [vmem:[#allocation11 + $0x2b8] sm:$0xff]
        %v5960 = vld [vmem:[#allocation11 + $0x2c0] sm:$0xff]
        %v5961 = vld [vmem:[#allocation11 + $0x2c8] sm:$0xff]
        %v5962 = vld [vmem:[#allocation11 + $0x2d0] sm:$0xff]
        %v5963 = vld [vmem:[#allocation11 + $0x2d8] sm:$0xff]
        %v5964 = vld [vmem:[#allocation11 + $0x2e0] sm:$0xff]
        %v5965 = vld [vmem:[#allocation11 + $0x2e8] sm:$0xff]
        %v5966 = vld [vmem:[#allocation11 + $0x2f0] sm:$0xff]
        %v5967 = vld [vmem:[#allocation11 + $0x2f8] sm:$0xff]
        %v5968 = vld [vmem:[%s6] sm:$0xf]
        %v5970 = vperm.slane %v5968, 0
        %v5971 = vperm.slane %v5968, 1
        %v5972 = vperm.slane %v5968, 2
        %v5973 = vperm.slane %v5968, 3
        %v6074 = vunpack.c.l.b16 %v5872
        %v6075 = vunpack.c.h.b16 %v5872
        %v6076 = vunpack.c.l.b16 %v5873
        %v6077 = vunpack.c.h.b16 %v5873
        %v6078 = vunpack.c.l.b16 %v5874
        %v6079 = vunpack.c.h.b16 %v5874
        %v6080 = vunpack.c.l.b16 %v5875
        %v6081 = vunpack.c.h.b16 %v5875
        %v6082 = vunpack.c.l.b16 %v5876
        %v6083 = vunpack.c.h.b16 %v5876
        %v6084 = vunpack.c.l.b16 %v5877
        %v6085 = vunpack.c.h.b16 %v5877
        %v6086 = vunpack.c.l.b16 %v5878
        %v6087 = vunpack.c.h.b16 %v5878
        %v6088 = vunpack.c.l.b16 %v5879
        %v6089 = vunpack.c.h.b16 %v5879
        %v6090 = vunpack.c.l.b16 %v5880
        %v6091 = vunpack.c.h.b16 %v5880
        %v6092 = vunpack.c.l.b16 %v5881
        %v6093 = vunpack.c.h.b16 %v5881
        %v6094 = vunpack.c.l.b16 %v5882
        %v6095 = vunpack.c.h.b16 %v5882
        %v6096 = vunpack.c.l.b16 %v5883
        %v6097 = vunpack.c.h.b16 %v5883
        %v6098 = vunpack.c.l.b16 %v5884
        %v6099 = vunpack.c.h.b16 %v5884
        %v6100 = vunpack.c.l.b16 %v5885
        %v6101 = vunpack.c.h.b16 %v5885
        %v6102 = vunpack.c.l.b16 %v5886
        %v6103 = vunpack.c.h.b16 %v5886
        %v6104 = vunpack.c.l.b16 %v5887
        %v6105 = vunpack.c.h.b16 %v5887
        %v6106 = vunpack.c.l.b16 %v5888
        %v6107 = vunpack.c.h.b16 %v5888
        %v6108 = vunpack.c.l.b16 %v5889
        %v6109 = vunpack.c.h.b16 %v5889
        %v6110 = vunpack.c.l.b16 %v5890
        %v6111 = vunpack.c.h.b16 %v5890
        %v6112 = vunpack.c.l.b16 %v5891
        %v6113 = vunpack.c.h.b16 %v5891
        %v6114 = vunpack.c.l.b16 %v5892
        %v6115 = vunpack.c.h.b16 %v5892
        %v6116 = vunpack.c.l.b16 %v5893
        %v6117 = vunpack.c.h.b16 %v5893
        %v6118 = vunpack.c.l.b16 %v5894
        %v6119 = vunpack.c.h.b16 %v5894
        %v6120 = vunpack.c.l.b16 %v5895
        %v6121 = vunpack.c.h.b16 %v5895
        %v6122 = vunpack.c.l.b16 %v5896
        %v6123 = vunpack.c.h.b16 %v5896
        %v6124 = vunpack.c.l.b16 %v5897
        %v6125 = vunpack.c.h.b16 %v5897
        %v6126 = vunpack.c.l.b16 %v5898
        %v6127 = vunpack.c.h.b16 %v5898
        %v6128 = vunpack.c.l.b16 %v5899
        %v6129 = vunpack.c.h.b16 %v5899
        %v6130 = vunpack.c.l.b16 %v5900
        %v6131 = vunpack.c.h.b16 %v5900
        %v6132 = vunpack.c.l.b16 %v5901
        %v6133 = vunpack.c.h.b16 %v5901
        %v6134 = vunpack.c.l.b16 %v5902
        %v6135 = vunpack.c.h.b16 %v5902
        %v6136 = vunpack.c.l.b16 %v5903
        %v6137 = vunpack.c.h.b16 %v5903
        %v6138 = vunpack.c.l.b16 %v5904
        %v6139 = vunpack.c.h.b16 %v5904
        %v6140 = vunpack.c.l.b16 %v5905
        %v6141 = vunpack.c.h.b16 %v5905
        %v6142 = vunpack.c.l.b16 %v5906
        %v6143 = vunpack.c.h.b16 %v5906
        %v6144 = vunpack.c.l.b16 %v5907
        %v6145 = vunpack.c.h.b16 %v5907
        %v6146 = vunpack.c.l.b16 %v5908
        %v6147 = vunpack.c.h.b16 %v5908
        %v6148 = vunpack.c.l.b16 %v5909
        %v6149 = vunpack.c.h.b16 %v5909
        %v6150 = vunpack.c.l.b16 %v5910
        %v6151 = vunpack.c.h.b16 %v5910
        %v6152 = vunpack.c.l.b16 %v5911
        %v6153 = vunpack.c.h.b16 %v5911
        %v6154 = vunpack.c.l.b16 %v5912
        %v6155 = vunpack.c.h.b16 %v5912
        %v6156 = vunpack.c.l.b16 %v5913
        %v6157 = vunpack.c.h.b16 %v5913
        %v6158 = vunpack.c.l.b16 %v5914
        %v6159 = vunpack.c.h.b16 %v5914
        %v6160 = vunpack.c.l.b16 %v5915
        %v6161 = vunpack.c.h.b16 %v5915
        %v6162 = vunpack.c.l.b16 %v5916
        %v6163 = vunpack.c.h.b16 %v5916
        %v6164 = vunpack.c.l.b16 %v5917
        %v6165 = vunpack.c.h.b16 %v5917
        %v6166 = vunpack.c.l.b16 %v5918
        %v6167 = vunpack.c.h.b16 %v5918
        %v6168 = vunpack.c.l.b16 %v5919
        %v6169 = vunpack.c.h.b16 %v5919
        %v6170 = vunpack.c.l.b16 %v5920
        %v6171 = vunpack.c.h.b16 %v5920
        %v6172 = vunpack.c.l.b16 %v5921
        %v6173 = vunpack.c.h.b16 %v5921
        %v6174 = vunpack.c.l.b16 %v5922
        %v6175 = vunpack.c.h.b16 %v5922
        %v6176 = vunpack.c.l.b16 %v5923
        %v6177 = vunpack.c.h.b16 %v5923
        %v6178 = vunpack.c.l.b16 %v5924
        %v6179 = vunpack.c.h.b16 %v5924
        %v6180 = vunpack.c.l.b16 %v5925
        %v6181 = vunpack.c.h.b16 %v5925
        %v6182 = vunpack.c.l.b16 %v5926
        %v6183 = vunpack.c.h.b16 %v5926
        %v6184 = vunpack.c.l.b16 %v5927
        %v6185 = vunpack.c.h.b16 %v5927
        %v6186 = vunpack.c.l.b16 %v5928
        %v6187 = vunpack.c.h.b16 %v5928
        %v6188 = vunpack.c.l.b16 %v5929
        %v6189 = vunpack.c.h.b16 %v5929
        %v6190 = vunpack.c.l.b16 %v5930
        %v6191 = vunpack.c.h.b16 %v5930
        %v6192 = vunpack.c.l.b16 %v5931
        %v6193 = vunpack.c.h.b16 %v5931
        %v6194 = vunpack.c.l.b16 %v5932
        %v6195 = vunpack.c.h.b16 %v5932
        %v6196 = vunpack.c.l.b16 %v5933
        %v6197 = vunpack.c.h.b16 %v5933
        %v6198 = vunpack.c.l.b16 %v5934
        %v6199 = vunpack.c.h.b16 %v5934
        %v6200 = vunpack.c.l.b16 %v5935
        %v6201 = vunpack.c.h.b16 %v5935
        %v6202 = vunpack.c.l.b16 %v5936
        %v6203 = vunpack.c.h.b16 %v5936
        %v6204 = vunpack.c.l.b16 %v5937
        %v6205 = vunpack.c.h.b16 %v5937
        %v6206 = vunpack.c.l.b16 %v5938
        %v6207 = vunpack.c.h.b16 %v5938
        %v6208 = vunpack.c.l.b16 %v5939
        %v6209 = vunpack.c.h.b16 %v5939
        %v6210 = vunpack.c.l.b16 %v5940
        %v6211 = vunpack.c.h.b16 %v5940
        %v6212 = vunpack.c.l.b16 %v5941
        %v6213 = vunpack.c.h.b16 %v5941
        %v6214 = vunpack.c.l.b16 %v5942
        %v6215 = vunpack.c.h.b16 %v5942
        %v6216 = vunpack.c.l.b16 %v5943
        %v6217 = vunpack.c.h.b16 %v5943
        %v6218 = vunpack.c.l.b16 %v5944
        %v6219 = vunpack.c.h.b16 %v5944
        %v6220 = vunpack.c.l.b16 %v5945
        %v6221 = vunpack.c.h.b16 %v5945
        %v6222 = vunpack.c.l.b16 %v5946
        %v6223 = vunpack.c.h.b16 %v5946
        %v6224 = vunpack.c.l.b16 %v5947
        %v6225 = vunpack.c.h.b16 %v5947
        %v6226 = vunpack.c.l.b16 %v5948
        %v6227 = vunpack.c.h.b16 %v5948
        %v6228 = vunpack.c.l.b16 %v5949
        %v6229 = vunpack.c.h.b16 %v5949
        %v6230 = vunpack.c.l.b16 %v5950
        %v6231 = vunpack.c.h.b16 %v5950
        %v6232 = vunpack.c.l.b16 %v5951
        %v6233 = vunpack.c.h.b16 %v5951
        %v6234 = vunpack.c.l.b16 %v5952
        %v6235 = vunpack.c.h.b16 %v5952
        %v6236 = vunpack.c.l.b16 %v5953
        %v6237 = vunpack.c.h.b16 %v5953
        %v6238 = vunpack.c.l.b16 %v5954
        %v6239 = vunpack.c.h.b16 %v5954
        %v6240 = vunpack.c.l.b16 %v5955
        %v6241 = vunpack.c.h.b16 %v5955
        %v6242 = vunpack.c.l.b16 %v5956
        %v6243 = vunpack.c.h.b16 %v5956
        %v6244 = vunpack.c.l.b16 %v5957
        %v6245 = vunpack.c.h.b16 %v5957
        %v6246 = vunpack.c.l.b16 %v5958
        %v6247 = vunpack.c.h.b16 %v5958
        %v6248 = vunpack.c.l.b16 %v5959
        %v6249 = vunpack.c.h.b16 %v5959
        %v6250 = vunpack.c.l.b16 %v5960
        %v6251 = vunpack.c.h.b16 %v5960
        %v6252 = vunpack.c.l.b16 %v5961
        %v6253 = vunpack.c.h.b16 %v5961
        %v6254 = vunpack.c.l.b16 %v5962
        %v6255 = vunpack.c.h.b16 %v5962
        %v6256 = vunpack.c.l.b16 %v5963
        %v6257 = vunpack.c.h.b16 %v5963
        %v6258 = vunpack.c.l.b16 %v5964
        %v6259 = vunpack.c.h.b16 %v5964
        %v6260 = vunpack.c.l.b16 %v5965
        %v6261 = vunpack.c.h.b16 %v5965
        %v6262 = vunpack.c.l.b16 %v5966
        %v6263 = vunpack.c.h.b16 %v5966
        %v6264 = vunpack.c.l.b16 %v5967
        %v6265 = vunpack.c.h.b16 %v5967
        %v6266 = vpack.c.b16 %v6078, %v6074
        %v6267 = vpack.c.b16 %v6079, %v6075
        %v6268 = vpack.c.b16 %v6080, %v6076
        %v6269 = vpack.c.b16 %v6081, %v6077
        %v6270 = vpack.c.b16 %v6086, %v6082
        %v6271 = vpack.c.b16 %v6087, %v6083
        %v6272 = vpack.c.b16 %v6088, %v6084
        %v6273 = vpack.c.b16 %v6089, %v6085
        %v6274 = vpack.c.b16 %v6094, %v6090
        %v6275 = vpack.c.b16 %v6095, %v6091
        %v6276 = vpack.c.b16 %v6096, %v6092
        %v6277 = vpack.c.b16 %v6097, %v6093
        %v6278 = vpack.c.b16 %v6102, %v6098
        %v6279 = vpack.c.b16 %v6103, %v6099
        %v6280 = vpack.c.b16 %v6104, %v6100
        %v6281 = vpack.c.b16 %v6105, %v6101
        %v6282 = vpack.c.b16 %v6110, %v6106
        %v6283 = vpack.c.b16 %v6111, %v6107
        %v6284 = vpack.c.b16 %v6112, %v6108
        %v6285 = vpack.c.b16 %v6113, %v6109
        %v6286 = vpack.c.b16 %v6118, %v6114
        %v6287 = vpack.c.b16 %v6119, %v6115
        %v6288 = vpack.c.b16 %v6120, %v6116
        %v6289 = vpack.c.b16 %v6121, %v6117
        %v6290 = vpack.c.b16 %v6126, %v6122
        %v6291 = vpack.c.b16 %v6127, %v6123
        %v6292 = vpack.c.b16 %v6128, %v6124
        %v6293 = vpack.c.b16 %v6129, %v6125
        %v6294 = vpack.c.b16 %v6134, %v6130
        %v6295 = vpack.c.b16 %v6135, %v6131
        %v6296 = vpack.c.b16 %v6136, %v6132
        %v6297 = vpack.c.b16 %v6137, %v6133
        %v6298 = vpack.c.b16 %v6142, %v6138
        %v6299 = vpack.c.b16 %v6143, %v6139
        %v6300 = vpack.c.b16 %v6144, %v6140
        %v6301 = vpack.c.b16 %v6145, %v6141
        %v6302 = vpack.c.b16 %v6150, %v6146
        %v6303 = vpack.c.b16 %v6151, %v6147
        %v6304 = vpack.c.b16 %v6152, %v6148
        %v6305 = vpack.c.b16 %v6153, %v6149
        %v6306 = vpack.c.b16 %v6158, %v6154
        %v6307 = vpack.c.b16 %v6159, %v6155
        %v6308 = vpack.c.b16 %v6160, %v6156
        %v6309 = vpack.c.b16 %v6161, %v6157
        %v6310 = vpack.c.b16 %v6166, %v6162
        %v6311 = vpack.c.b16 %v6167, %v6163
        %v6312 = vpack.c.b16 %v6168, %v6164
        %v6313 = vpack.c.b16 %v6169, %v6165
        %v6314 = vpack.c.b16 %v6174, %v6170
        %v6315 = vpack.c.b16 %v6175, %v6171
        %v6316 = vpack.c.b16 %v6176, %v6172
        %v6317 = vpack.c.b16 %v6177, %v6173
        %v6318 = vpack.c.b16 %v6182, %v6178
        %v6319 = vpack.c.b16 %v6183, %v6179
        %v6320 = vpack.c.b16 %v6184, %v6180
        %v6321 = vpack.c.b16 %v6185, %v6181
        %v6322 = vpack.c.b16 %v6190, %v6186
        %v6323 = vpack.c.b16 %v6191, %v6187
        %v6324 = vpack.c.b16 %v6192, %v6188
        %v6325 = vpack.c.b16 %v6193, %v6189
        %v6326 = vpack.c.b16 %v6198, %v6194
        %v6327 = vpack.c.b16 %v6199, %v6195
        %v6328 = vpack.c.b16 %v6200, %v6196
        %v6329 = vpack.c.b16 %v6201, %v6197
        %v6330 = vpack.c.b16 %v6206, %v6202
        %v6331 = vpack.c.b16 %v6207, %v6203
        %v6332 = vpack.c.b16 %v6208, %v6204
        %v6333 = vpack.c.b16 %v6209, %v6205
        %v6334 = vpack.c.b16 %v6214, %v6210
        %v6335 = vpack.c.b16 %v6215, %v6211
        %v6336 = vpack.c.b16 %v6216, %v6212
        %v6337 = vpack.c.b16 %v6217, %v6213
        %v6338 = vpack.c.b16 %v6222, %v6218
        %v6339 = vpack.c.b16 %v6223, %v6219
        %v6340 = vpack.c.b16 %v6224, %v6220
        %v6341 = vpack.c.b16 %v6225, %v6221
        %v6342 = vpack.c.b16 %v6230, %v6226
        %v6343 = vpack.c.b16 %v6231, %v6227
        %v6344 = vpack.c.b16 %v6232, %v6228
        %v6345 = vpack.c.b16 %v6233, %v6229
        %v6346 = vpack.c.b16 %v6238, %v6234
        %v6347 = vpack.c.b16 %v6239, %v6235
        %v6348 = vpack.c.b16 %v6240, %v6236
        %v6349 = vpack.c.b16 %v6241, %v6237
        %v6350 = vpack.c.b16 %v6246, %v6242
        %v6351 = vpack.c.b16 %v6247, %v6243
        %v6352 = vpack.c.b16 %v6248, %v6244
        %v6353 = vpack.c.b16 %v6249, %v6245
        %v6354 = vpack.c.b16 %v6254, %v6250
        %v6355 = vpack.c.b16 %v6255, %v6251
        %v6356 = vpack.c.b16 %v6256, %v6252
        %v6357 = vpack.c.b16 %v6257, %v6253
        %v6358 = vpack.c.b16 %v6262, %v6258
        %v6359 = vpack.c.b16 %v6263, %v6259
        %v6360 = vpack.c.b16 %v6264, %v6260
        %v6361 = vpack.c.b16 %v6265, %v6261
        %6458 = vmatpush.bf16.msra.mxu0 %v6294
        %6459 = vmatpush.bf16.msra.mxu0 %v6290
        %6460 = vmatpush.bf16.msra.mxu0 %v6286
        %6461 = vmatpush.bf16.msra.mxu0 %v6282
        %6462 = vmatpush.bf16.msra.mxu0 %v6278
        %6463 = vmatpush.bf16.msra.mxu0 %v6274
        %6464 = vmatpush.bf16.msra.mxu0 %v6270
        %6465 = vmatpush.bf16.msra.mxu0 %v6266
        %6466 = vmatmul.bf16.gmra.mxu0 %v5680
        %v6467 = vpop.f32.mrf.mxu0
        %v6468 = vadd.f32 %v5970, %v6467
        %v6469 = vpop.f32.mrf.mxu0
        %v6470 = vadd.f32 %v5970, %v6469
        %6471 = vmatmul.bf16.gmra.mxu0 %v5681
        %v6472 = vpop.f32.mrf.mxu0
        %v6473 = vadd.f32 %v5970, %v6472
        %v6474 = vpop.f32.mrf.mxu0
        %v6475 = vadd.f32 %v5970, %v6474
        %6476 = vmatmul.bf16.gmra.mxu0 %v5682
        %v6477 = vpop.f32.mrf.mxu0
        %v6478 = vadd.f32 %v5970, %v6477
        %v6479 = vpop.f32.mrf.mxu0
        %v6480 = vadd.f32 %v5970, %v6479
        %6481 = vmatmul.bf16.gmra.mxu0 %v5683
        %v6482 = vpop.f32.mrf.mxu0
        %v6483 = vadd.f32 %v5970, %v6482
        %v6484 = vpop.f32.mrf.mxu0
        %v6485 = vadd.f32 %v5970, %v6484
        %6486 = vmatmul.bf16.gmra.mxu0 %v5684
        %v6487 = vpop.f32.mrf.mxu0
        %v6488 = vadd.f32 %v5970, %v6487
        %v6489 = vpop.f32.mrf.mxu0
        %v6490 = vadd.f32 %v5970, %v6489
        %6491 = vmatmul.bf16.gmra.mxu0 %v5685
        %v6492 = vpop.f32.mrf.mxu0
        %v6493 = vadd.f32 %v5970, %v6492
        %v6494 = vpop.f32.mrf.mxu0
        %v6495 = vadd.f32 %v5970, %v6494
        %6496 = vmatmul.bf16.gmra.mxu0 %v5686
        %v6497 = vpop.f32.mrf.mxu0
        %v6498 = vadd.f32 %v5970, %v6497
        %v6499 = vpop.f32.mrf.mxu0
        %v6500 = vadd.f32 %v5970, %v6499
        %6501 = vmatmul.bf16.gmra.mxu0 %v5687
        %v6502 = vpop.f32.mrf.mxu0
        %v6503 = vadd.f32 %v5970, %v6502
        %v6504 = vpop.f32.mrf.mxu0
        %v6505 = vadd.f32 %v5970, %v6504
        %6506 = vmatmul.bf16.gmra.mxu0 %v5688
        %v6507 = vpop.f32.mrf.mxu0
        %v6508 = vadd.f32 %v5970, %v6507
        %v6509 = vpop.f32.mrf.mxu0
        %v6510 = vadd.f32 %v5970, %v6509
        %6511 = vmatmul.bf16.gmra.mxu0 %v5689
        %v6512 = vpop.f32.mrf.mxu0
        %v6513 = vadd.f32 %v5970, %v6512
        %v6514 = vpop.f32.mrf.mxu0
        %v6515 = vadd.f32 %v5970, %v6514
        %6516 = vmatmul.bf16.gmra.mxu0 %v5690
        %v6517 = vpop.f32.mrf.mxu0
        %v6518 = vadd.f32 %v5970, %v6517
        %v6519 = vpop.f32.mrf.mxu0
        %v6520 = vadd.f32 %v5970, %v6519
        %6521 = vmatmul.bf16.gmra.mxu0 %v5691
        %v6522 = vpop.f32.mrf.mxu0
        %v6523 = vadd.f32 %v5970, %v6522
        %v6524 = vpop.f32.mrf.mxu0
        %v6525 = vadd.f32 %v5970, %v6524
        %6526 = vmatmul.bf16.gmra.mxu0 %v5692
        %v6527 = vpop.f32.mrf.mxu0
        %v6528 = vadd.f32 %v5970, %v6527
        %v6529 = vpop.f32.mrf.mxu0
        %v6530 = vadd.f32 %v5970, %v6529
        %6531 = vmatmul.bf16.gmra.mxu0 %v5693
        %v6532 = vpop.f32.mrf.mxu0
        %v6533 = vadd.f32 %v5970, %v6532
        %v6534 = vpop.f32.mrf.mxu0
        %v6535 = vadd.f32 %v5970, %v6534
        %6536 = vmatmul.bf16.gmra.mxu0 %v5694
        %v6537 = vpop.f32.mrf.mxu0
        %v6538 = vadd.f32 %v5970, %v6537
        %v6539 = vpop.f32.mrf.mxu0
        %v6540 = vadd.f32 %v5970, %v6539
        %6541 = vmatmul.bf16.gmra.mxu0 %v5695
        %v6542 = vpop.f32.mrf.mxu0
        %v6543 = vadd.f32 %v5970, %v6542
        %v6544 = vpop.f32.mrf.mxu0
        %v6545 = vadd.f32 %v5970, %v6544
        %6546 = vdwg.mxu0
        %6547 = vmatpush.bf16.msra.mxu0 %v6326
        %6548 = vmatpush.bf16.msra.mxu0 %v6322
        %6549 = vmatpush.bf16.msra.mxu0 %v6318
        %6550 = vmatpush.bf16.msra.mxu0 %v6314
        %6551 = vmatpush.bf16.msra.mxu0 %v6310
        %6552 = vmatpush.bf16.msra.mxu0 %v6306
        %6553 = vmatpush.bf16.msra.mxu0 %v6302
        %6554 = vmatpush.bf16.msra.mxu0 %v6298
        %6555 = vmatmul.bf16.gmra.mxu0 %v5808
        %v6556 = vpop.f32.mrf.mxu0
        %v6557 = vadd.f32 %v6468, %v6556
        %v6558 = vpop.f32.mrf.mxu0
        %v6559 = vadd.f32 %v6470, %v6558
        %6560 = vmatmul.bf16.gmra.mxu0 %v5810
        %v6561 = vpop.f32.mrf.mxu0
        %v6562 = vadd.f32 %v6473, %v6561
        %v6563 = vpop.f32.mrf.mxu0
        %v6564 = vadd.f32 %v6475, %v6563
        %6565 = vmatmul.bf16.gmra.mxu0 %v5812
        %v6566 = vpop.f32.mrf.mxu0
        %v6567 = vadd.f32 %v6478, %v6566
        %v6568 = vpop.f32.mrf.mxu0
        %v6569 = vadd.f32 %v6480, %v6568
        %6570 = vmatmul.bf16.gmra.mxu0 %v5814
        %v6571 = vpop.f32.mrf.mxu0
        %v6572 = vadd.f32 %v6483, %v6571
        %v6573 = vpop.f32.mrf.mxu0
        %v6574 = vadd.f32 %v6485, %v6573
        %6575 = vmatmul.bf16.gmra.mxu0 %v5816
        %v6576 = vpop.f32.mrf.mxu0
        %v6577 = vadd.f32 %v6488, %v6576
        %v6578 = vpop.f32.mrf.mxu0
        %v6579 = vadd.f32 %v6490, %v6578
        %6580 = vmatmul.bf16.gmra.mxu0 %v5818
        %v6581 = vpop.f32.mrf.mxu0
        %v6582 = vadd.f32 %v6493, %v6581
        %v6583 = vpop.f32.mrf.mxu0
        %v6584 = vadd.f32 %v6495, %v6583
        %6585 = vmatmul.bf16.gmra.mxu0 %v5820
        %v6586 = vpop.f32.mrf.mxu0
        %v6587 = vadd.f32 %v6498, %v6586
        %v6588 = vpop.f32.mrf.mxu0
        %v6589 = vadd.f32 %v6500, %v6588
        %6590 = vmatmul.bf16.gmra.mxu0 %v5822
        %v6591 = vpop.f32.mrf.mxu0
        %v6592 = vadd.f32 %v6503, %v6591
        %v6593 = vpop.f32.mrf.mxu0
        %v6594 = vadd.f32 %v6505, %v6593
        %6595 = vmatmul.bf16.gmra.mxu0 %v5824
        %v6596 = vpop.f32.mrf.mxu0
        %v6597 = vadd.f32 %v6508, %v6596
        %v6598 = vpop.f32.mrf.mxu0
        %v6599 = vadd.f32 %v6510, %v6598
        %6600 = vmatmul.bf16.gmra.mxu0 %v5826
        %v6601 = vpop.f32.mrf.mxu0
        %v6602 = vadd.f32 %v6513, %v6601
        %v6603 = vpop.f32.mrf.mxu0
        %v6604 = vadd.f32 %v6515, %v6603
        %6605 = vmatmul.bf16.gmra.mxu0 %v5828
        %v6606 = vpop.f32.mrf.mxu0
        %v6607 = vadd.f32 %v6518, %v6606
        %v6608 = vpop.f32.mrf.mxu0
        %v6609 = vadd.f32 %v6520, %v6608
        %6610 = vmatmul.bf16.gmra.mxu0 %v5830
        %v6611 = vpop.f32.mrf.mxu0
        %v6612 = vadd.f32 %v6523, %v6611
        %v6613 = vpop.f32.mrf.mxu0
        %v6614 = vadd.f32 %v6525, %v6613
        %6615 = vmatmul.bf16.gmra.mxu0 %v5832
        %v6616 = vpop.f32.mrf.mxu0
        %v6617 = vadd.f32 %v6528, %v6616
        %v6618 = vpop.f32.mrf.mxu0
        %v6619 = vadd.f32 %v6530, %v6618
        %6620 = vmatmul.bf16.gmra.mxu0 %v5834
        %v6621 = vpop.f32.mrf.mxu0
        %v6622 = vadd.f32 %v6533, %v6621
        %v6623 = vpop.f32.mrf.mxu0
        %v6624 = vadd.f32 %v6535, %v6623
        %6625 = vmatmul.bf16.gmra.mxu0 %v5836
        %v6626 = vpop.f32.mrf.mxu0
        %v6627 = vadd.f32 %v6538, %v6626
        %v6628 = vpop.f32.mrf.mxu0
        %v6629 = vadd.f32 %v6540, %v6628
        %6630 = vmatmul.bf16.gmra.mxu0 %v5838
        %v6631 = vpop.f32.mrf.mxu0
        %v6632 = vadd.f32 %v6543, %v6631
        %v6633 = vpop.f32.mrf.mxu0
        %v6634 = vadd.f32 %v6545, %v6633
        %6635 = vdwg.mxu0
        %6636 = vmatpush.bf16.msra.mxu0 %v6358
        %6637 = vmatpush.bf16.msra.mxu0 %v6354
        %6638 = vmatpush.bf16.msra.mxu0 %v6350
        %6639 = vmatpush.bf16.msra.mxu0 %v6346
        %6640 = vmatpush.bf16.msra.mxu0 %v6342
        %6641 = vmatpush.bf16.msra.mxu0 %v6338
        %6642 = vmatpush.bf16.msra.mxu0 %v6334
        %6643 = vmatpush.bf16.msra.mxu0 %v6330
        %6644 = vmatmul.bf16.gmra.mxu0 %v5809
        %v6645 = vpop.f32.mrf.mxu0
        %v6646 = vadd.f32 %v6557, %v6645
        %v6647 = vpop.f32.mrf.mxu0
        %v6648 = vadd.f32 %v6559, %v6647
        %6649 = vmatmul.bf16.gmra.mxu0 %v5811
        %v6650 = vpop.f32.mrf.mxu0
        %v6651 = vadd.f32 %v6562, %v6650
        %v6652 = vpop.f32.mrf.mxu0
        %v6653 = vadd.f32 %v6564, %v6652
        %6654 = vmatmul.bf16.gmra.mxu0 %v5813
        %v6655 = vpop.f32.mrf.mxu0
        %v6656 = vadd.f32 %v6567, %v6655
        %v6657 = vpop.f32.mrf.mxu0
        %v6658 = vadd.f32 %v6569, %v6657
        %6659 = vmatmul.bf16.gmra.mxu0 %v5815
        %v6660 = vpop.f32.mrf.mxu0
        %v6661 = vadd.f32 %v6572, %v6660
        %v6662 = vpop.f32.mrf.mxu0
        %v6663 = vadd.f32 %v6574, %v6662
        %6664 = vmatmul.bf16.gmra.mxu0 %v5817
        %v6665 = vpop.f32.mrf.mxu0
        %v6666 = vadd.f32 %v6577, %v6665
        %v6667 = vpop.f32.mrf.mxu0
        %v6668 = vadd.f32 %v6579, %v6667
        %6669 = vmatmul.bf16.gmra.mxu0 %v5819
        %v6670 = vpop.f32.mrf.mxu0
        %v6671 = vadd.f32 %v6582, %v6670
        %v6672 = vpop.f32.mrf.mxu0
        %v6673 = vadd.f32 %v6584, %v6672
        %6674 = vmatmul.bf16.gmra.mxu0 %v5821
        %v6675 = vpop.f32.mrf.mxu0
        %v6676 = vadd.f32 %v6587, %v6675
        %v6677 = vpop.f32.mrf.mxu0
        %v6678 = vadd.f32 %v6589, %v6677
        %6679 = vmatmul.bf16.gmra.mxu0 %v5823
        %v6680 = vpop.f32.mrf.mxu0
        %v6681 = vadd.f32 %v6592, %v6680
        %v6682 = vpop.f32.mrf.mxu0
        %v6683 = vadd.f32 %v6594, %v6682
        %6684 = vmatmul.bf16.gmra.mxu0 %v5825
        %v6685 = vpop.f32.mrf.mxu0
        %v6686 = vadd.f32 %v6597, %v6685
        %v6687 = vpop.f32.mrf.mxu0
        %v6688 = vadd.f32 %v6599, %v6687
        %6689 = vmatmul.bf16.gmra.mxu0 %v5827
        %v6690 = vpop.f32.mrf.mxu0
        %v6691 = vadd.f32 %v6602, %v6690
        %v6692 = vpop.f32.mrf.mxu0
        %v6693 = vadd.f32 %v6604, %v6692
        %6694 = vmatmul.bf16.gmra.mxu0 %v5829
        %v6695 = vpop.f32.mrf.mxu0
        %v6696 = vadd.f32 %v6607, %v6695
        %v6697 = vpop.f32.mrf.mxu0
        %v6698 = vadd.f32 %v6609, %v6697
        %6699 = vmatmul.bf16.gmra.mxu0 %v5831
        %v6700 = vpop.f32.mrf.mxu0
        %v6701 = vadd.f32 %v6612, %v6700
        %v6702 = vpop.f32.mrf.mxu0
        %v6703 = vadd.f32 %v6614, %v6702
        %6704 = vmatmul.bf16.gmra.mxu0 %v5833
        %v6705 = vpop.f32.mrf.mxu0
        %v6706 = vadd.f32 %v6617, %v6705
        %v6707 = vpop.f32.mrf.mxu0
        %v6708 = vadd.f32 %v6619, %v6707
        %6709 = vmatmul.bf16.gmra.mxu0 %v5835
        %v6710 = vpop.f32.mrf.mxu0
        %v6711 = vadd.f32 %v6622, %v6710
        %v6712 = vpop.f32.mrf.mxu0
        %v6713 = vadd.f32 %v6624, %v6712
        %6714 = vmatmul.bf16.gmra.mxu0 %v5837
        %v6715 = vpop.f32.mrf.mxu0
        %v6716 = vadd.f32 %v6627, %v6715
        %v6717 = vpop.f32.mrf.mxu0
        %v6718 = vadd.f32 %v6629, %v6717
        %6719 = vmatmul.bf16.gmra.mxu0 %v5839
        %v6720 = vpop.f32.mrf.mxu0
        %v6721 = vadd.f32 %v6632, %v6720
        %v6722 = vpop.f32.mrf.mxu0
        %v6723 = vadd.f32 %v6634, %v6722
        %6724 = vdwg.mxu0
        %6725 = vmatpush.bf16.msra.mxu0 %v6295
        %6726 = vmatpush.bf16.msra.mxu0 %v6291
        %6727 = vmatpush.bf16.msra.mxu0 %v6287
        %6728 = vmatpush.bf16.msra.mxu0 %v6283
        %6729 = vmatpush.bf16.msra.mxu0 %v6279
        %6730 = vmatpush.bf16.msra.mxu0 %v6275
        %6731 = vmatpush.bf16.msra.mxu0 %v6271
        %6732 = vmatpush.bf16.msra.mxu0 %v6267
        %6733 = vmatmul.bf16.gmra.mxu0 %v5680
        %v6734 = vpop.f32.mrf.mxu0
        %v6735 = vadd.f32 %v5971, %v6734
        %v6736 = vpop.f32.mrf.mxu0
        %v6737 = vadd.f32 %v5971, %v6736
        %6738 = vmatmul.bf16.gmra.mxu0 %v5681
        %v6739 = vpop.f32.mrf.mxu0
        %v6740 = vadd.f32 %v5971, %v6739
        %v6741 = vpop.f32.mrf.mxu0
        %v6742 = vadd.f32 %v5971, %v6741
        %6743 = vmatmul.bf16.gmra.mxu0 %v5682
        %v6744 = vpop.f32.mrf.mxu0
        %v6745 = vadd.f32 %v5971, %v6744
        %v6746 = vpop.f32.mrf.mxu0
        %v6747 = vadd.f32 %v5971, %v6746
        %6748 = vmatmul.bf16.gmra.mxu0 %v5683
        %v6749 = vpop.f32.mrf.mxu0
        %v6750 = vadd.f32 %v5971, %v6749
        %v6751 = vpop.f32.mrf.mxu0
        %v6752 = vadd.f32 %v5971, %v6751
        %6753 = vmatmul.bf16.gmra.mxu0 %v5684
        %v6754 = vpop.f32.mrf.mxu0
        %v6755 = vadd.f32 %v5971, %v6754
        %v6756 = vpop.f32.mrf.mxu0
        %v6757 = vadd.f32 %v5971, %v6756
        %6758 = vmatmul.bf16.gmra.mxu0 %v5685
        %v6759 = vpop.f32.mrf.mxu0
        %v6760 = vadd.f32 %v5971, %v6759
        %v6761 = vpop.f32.mrf.mxu0
        %v6762 = vadd.f32 %v5971, %v6761
        %6763 = vmatmul.bf16.gmra.mxu0 %v5686
        %v6764 = vpop.f32.mrf.mxu0
        %v6765 = vadd.f32 %v5971, %v6764
        %v6766 = vpop.f32.mrf.mxu0
        %v6767 = vadd.f32 %v5971, %v6766
        %6768 = vmatmul.bf16.gmra.mxu0 %v5687
        %v6769 = vpop.f32.mrf.mxu0
        %v6770 = vadd.f32 %v5971, %v6769
        %v6771 = vpop.f32.mrf.mxu0
        %v6772 = vadd.f32 %v5971, %v6771
        %6773 = vmatmul.bf16.gmra.mxu0 %v5688
        %v6774 = vpop.f32.mrf.mxu0
        %v6775 = vadd.f32 %v5971, %v6774
        %v6776 = vpop.f32.mrf.mxu0
        %v6777 = vadd.f32 %v5971, %v6776
        %6778 = vmatmul.bf16.gmra.mxu0 %v5689
        %v6779 = vpop.f32.mrf.mxu0
        %v6780 = vadd.f32 %v5971, %v6779
        %v6781 = vpop.f32.mrf.mxu0
        %v6782 = vadd.f32 %v5971, %v6781
        %6783 = vmatmul.bf16.gmra.mxu0 %v5690
        %v6784 = vpop.f32.mrf.mxu0
        %v6785 = vadd.f32 %v5971, %v6784
        %v6786 = vpop.f32.mrf.mxu0
        %v6787 = vadd.f32 %v5971, %v6786
        %6788 = vmatmul.bf16.gmra.mxu0 %v5691
        %v6789 = vpop.f32.mrf.mxu0
        %v6790 = vadd.f32 %v5971, %v6789
        %v6791 = vpop.f32.mrf.mxu0
        %v6792 = vadd.f32 %v5971, %v6791
        %6793 = vmatmul.bf16.gmra.mxu0 %v5692
        %v6794 = vpop.f32.mrf.mxu0
        %v6795 = vadd.f32 %v5971, %v6794
        %v6796 = vpop.f32.mrf.mxu0
        %v6797 = vadd.f32 %v5971, %v6796
        %6798 = vmatmul.bf16.gmra.mxu0 %v5693
        %v6799 = vpop.f32.mrf.mxu0
        %v6800 = vadd.f32 %v5971, %v6799
        %v6801 = vpop.f32.mrf.mxu0
        %v6802 = vadd.f32 %v5971, %v6801
        %6803 = vmatmul.bf16.gmra.mxu0 %v5694
        %v6804 = vpop.f32.mrf.mxu0
        %v6805 = vadd.f32 %v5971, %v6804
        %v6806 = vpop.f32.mrf.mxu0
        %v6807 = vadd.f32 %v5971, %v6806
        %6808 = vmatmul.bf16.gmra.mxu0 %v5695
        %v6809 = vpop.f32.mrf.mxu0
        %v6810 = vadd.f32 %v5971, %v6809
        %v6811 = vpop.f32.mrf.mxu0
        %v6812 = vadd.f32 %v5971, %v6811
        %6813 = vdwg.mxu0
        %6814 = vmatpush.bf16.msra.mxu0 %v6327
        %6815 = vmatpush.bf16.msra.mxu0 %v6323
        %6816 = vmatpush.bf16.msra.mxu0 %v6319
        %6817 = vmatpush.bf16.msra.mxu0 %v6315
        %6818 = vmatpush.bf16.msra.mxu0 %v6311
        %6819 = vmatpush.bf16.msra.mxu0 %v6307
        %6820 = vmatpush.bf16.msra.mxu0 %v6303
        %6821 = vmatpush.bf16.msra.mxu0 %v6299
        %6822 = vmatmul.bf16.gmra.mxu0 %v5808
        %v6823 = vpop.f32.mrf.mxu0
        %v6824 = vadd.f32 %v6735, %v6823
        %v6825 = vpop.f32.mrf.mxu0
        %v6826 = vadd.f32 %v6737, %v6825
        %6827 = vmatmul.bf16.gmra.mxu0 %v5810
        %v6828 = vpop.f32.mrf.mxu0
        %v6829 = vadd.f32 %v6740, %v6828
        %v6830 = vpop.f32.mrf.mxu0
        %v6831 = vadd.f32 %v6742, %v6830
        %6832 = vmatmul.bf16.gmra.mxu0 %v5812
        %v6833 = vpop.f32.mrf.mxu0
        %v6834 = vadd.f32 %v6745, %v6833
        %v6835 = vpop.f32.mrf.mxu0
        %v6836 = vadd.f32 %v6747, %v6835
        %6837 = vmatmul.bf16.gmra.mxu0 %v5814
        %v6838 = vpop.f32.mrf.mxu0
        %v6839 = vadd.f32 %v6750, %v6838
        %v6840 = vpop.f32.mrf.mxu0
        %v6841 = vadd.f32 %v6752, %v6840
        %6842 = vmatmul.bf16.gmra.mxu0 %v5816
        %v6843 = vpop.f32.mrf.mxu0
        %v6844 = vadd.f32 %v6755, %v6843
        %v6845 = vpop.f32.mrf.mxu0
        %v6846 = vadd.f32 %v6757, %v6845
        %6847 = vmatmul.bf16.gmra.mxu0 %v5818
        %v6848 = vpop.f32.mrf.mxu0
        %v6849 = vadd.f32 %v6760, %v6848
        %v6850 = vpop.f32.mrf.mxu0
        %v6851 = vadd.f32 %v6762, %v6850
        %6852 = vmatmul.bf16.gmra.mxu0 %v5820
        %v6853 = vpop.f32.mrf.mxu0
        %v6854 = vadd.f32 %v6765, %v6853
        %v6855 = vpop.f32.mrf.mxu0
        %v6856 = vadd.f32 %v6767, %v6855
        %6857 = vmatmul.bf16.gmra.mxu0 %v5822
        %v6858 = vpop.f32.mrf.mxu0
        %v6859 = vadd.f32 %v6770, %v6858
        %v6860 = vpop.f32.mrf.mxu0
        %v6861 = vadd.f32 %v6772, %v6860
        %6862 = vmatmul.bf16.gmra.mxu0 %v5824
        %v6863 = vpop.f32.mrf.mxu0
        %v6864 = vadd.f32 %v6775, %v6863
        %v6865 = vpop.f32.mrf.mxu0
        %v6866 = vadd.f32 %v6777, %v6865
        %6867 = vmatmul.bf16.gmra.mxu0 %v5826
        %v6868 = vpop.f32.mrf.mxu0
        %v6869 = vadd.f32 %v6780, %v6868
        %v6870 = vpop.f32.mrf.mxu0
        %v6871 = vadd.f32 %v6782, %v6870
        %6872 = vmatmul.bf16.gmra.mxu0 %v5828
        %v6873 = vpop.f32.mrf.mxu0
        %v6874 = vadd.f32 %v6785, %v6873
        %v6875 = vpop.f32.mrf.mxu0
        %v6876 = vadd.f32 %v6787, %v6875
        %6877 = vmatmul.bf16.gmra.mxu0 %v5830
        %v6878 = vpop.f32.mrf.mxu0
        %v6879 = vadd.f32 %v6790, %v6878
        %v6880 = vpop.f32.mrf.mxu0
        %v6881 = vadd.f32 %v6792, %v6880
        %6882 = vmatmul.bf16.gmra.mxu0 %v5832
        %v6883 = vpop.f32.mrf.mxu0
        %v6884 = vadd.f32 %v6795, %v6883
        %v6885 = vpop.f32.mrf.mxu0
        %v6886 = vadd.f32 %v6797, %v6885
        %6887 = vmatmul.bf16.gmra.mxu0 %v5834
        %v6888 = vpop.f32.mrf.mxu0
        %v6889 = vadd.f32 %v6800, %v6888
        %v6890 = vpop.f32.mrf.mxu0
        %v6891 = vadd.f32 %v6802, %v6890
        %6892 = vmatmul.bf16.gmra.mxu0 %v5836
        %v6893 = vpop.f32.mrf.mxu0
        %v6894 = vadd.f32 %v6805, %v6893
        %v6895 = vpop.f32.mrf.mxu0
        %v6896 = vadd.f32 %v6807, %v6895
        %6897 = vmatmul.bf16.gmra.mxu0 %v5838
        %v6898 = vpop.f32.mrf.mxu0
        %v6899 = vadd.f32 %v6810, %v6898
        %v6900 = vpop.f32.mrf.mxu0
        %v6901 = vadd.f32 %v6812, %v6900
        %6902 = vdwg.mxu0
        %6903 = vmatpush.bf16.msra.mxu0 %v6359
        %6904 = vmatpush.bf16.msra.mxu0 %v6355
        %6905 = vmatpush.bf16.msra.mxu0 %v6351
        %6906 = vmatpush.bf16.msra.mxu0 %v6347
        %6907 = vmatpush.bf16.msra.mxu0 %v6343
        %6908 = vmatpush.bf16.msra.mxu0 %v6339
        %6909 = vmatpush.bf16.msra.mxu0 %v6335
        %6910 = vmatpush.bf16.msra.mxu0 %v6331
        %6911 = vmatmul.bf16.gmra.mxu0 %v5809
        %v6912 = vpop.f32.mrf.mxu0
        %v6913 = vadd.f32 %v6824, %v6912
        %v6914 = vpop.f32.mrf.mxu0
        %v6915 = vadd.f32 %v6826, %v6914
        %6916 = vmatmul.bf16.gmra.mxu0 %v5811
        %v6917 = vpop.f32.mrf.mxu0
        %v6918 = vadd.f32 %v6829, %v6917
        %v6919 = vpop.f32.mrf.mxu0
        %v6920 = vadd.f32 %v6831, %v6919
        %6921 = vmatmul.bf16.gmra.mxu0 %v5813
        %v6922 = vpop.f32.mrf.mxu0
        %v6923 = vadd.f32 %v6834, %v6922
        %v6924 = vpop.f32.mrf.mxu0
        %v6925 = vadd.f32 %v6836, %v6924
        %6926 = vmatmul.bf16.gmra.mxu0 %v5815
        %v6927 = vpop.f32.mrf.mxu0
        %v6928 = vadd.f32 %v6839, %v6927
        %v6929 = vpop.f32.mrf.mxu0
        %v6930 = vadd.f32 %v6841, %v6929
        %6931 = vmatmul.bf16.gmra.mxu0 %v5817
        %v6932 = vpop.f32.mrf.mxu0
        %v6933 = vadd.f32 %v6844, %v6932
        %v6934 = vpop.f32.mrf.mxu0
        %v6935 = vadd.f32 %v6846, %v6934
        %6936 = vmatmul.bf16.gmra.mxu0 %v5819
        %v6937 = vpop.f32.mrf.mxu0
        %v6938 = vadd.f32 %v6849, %v6937
        %v6939 = vpop.f32.mrf.mxu0
        %v6940 = vadd.f32 %v6851, %v6939
        %6941 = vmatmul.bf16.gmra.mxu0 %v5821
        %v6942 = vpop.f32.mrf.mxu0
        %v6943 = vadd.f32 %v6854, %v6942
        %v6944 = vpop.f32.mrf.mxu0
        %v6945 = vadd.f32 %v6856, %v6944
        %6946 = vmatmul.bf16.gmra.mxu0 %v5823
        %v6947 = vpop.f32.mrf.mxu0
        %v6948 = vadd.f32 %v6859, %v6947
        %v6949 = vpop.f32.mrf.mxu0
        %v6950 = vadd.f32 %v6861, %v6949
        %6951 = vmatmul.bf16.gmra.mxu0 %v5825
        %v6952 = vpop.f32.mrf.mxu0
        %v6953 = vadd.f32 %v6864, %v6952
        %v6954 = vpop.f32.mrf.mxu0
        %v6955 = vadd.f32 %v6866, %v6954
        %6956 = vmatmul.bf16.gmra.mxu0 %v5827
        %v6957 = vpop.f32.mrf.mxu0
        %v6958 = vadd.f32 %v6869, %v6957
        %v6959 = vpop.f32.mrf.mxu0
        %v6960 = vadd.f32 %v6871, %v6959
        %6961 = vmatmul.bf16.gmra.mxu0 %v5829
        %v6962 = vpop.f32.mrf.mxu0
        %v6963 = vadd.f32 %v6874, %v6962
        %v6964 = vpop.f32.mrf.mxu0
        %v6965 = vadd.f32 %v6876, %v6964
        %6966 = vmatmul.bf16.gmra.mxu0 %v5831
        %v6967 = vpop.f32.mrf.mxu0
        %v6968 = vadd.f32 %v6879, %v6967
        %v6969 = vpop.f32.mrf.mxu0
        %v6970 = vadd.f32 %v6881, %v6969
        %6971 = vmatmul.bf16.gmra.mxu0 %v5833
        %v6972 = vpop.f32.mrf.mxu0
        %v6973 = vadd.f32 %v6884, %v6972
        %v6974 = vpop.f32.mrf.mxu0
        %v6975 = vadd.f32 %v6886, %v6974
        %6976 = vmatmul.bf16.gmra.mxu0 %v5835
        %v6977 = vpop.f32.mrf.mxu0
        %v6978 = vadd.f32 %v6889, %v6977
        %v6979 = vpop.f32.mrf.mxu0
        %v6980 = vadd.f32 %v6891, %v6979
        %6981 = vmatmul.bf16.gmra.mxu0 %v5837
        %v6982 = vpop.f32.mrf.mxu0
        %v6983 = vadd.f32 %v6894, %v6982
        %v6984 = vpop.f32.mrf.mxu0
        %v6985 = vadd.f32 %v6896, %v6984
        %6986 = vmatmul.bf16.gmra.mxu0 %v5839
        %v6987 = vpop.f32.mrf.mxu0
        %v6988 = vadd.f32 %v6899, %v6987
        %v6989 = vpop.f32.mrf.mxu0
        %v6990 = vadd.f32 %v6901, %v6989
        %6991 = vdwg.mxu0
        %6992 = vmatpush.bf16.msra.mxu0 %v6296
        %6993 = vmatpush.bf16.msra.mxu0 %v6292
        %6994 = vmatpush.bf16.msra.mxu0 %v6288
        %6995 = vmatpush.bf16.msra.mxu0 %v6284
        %6996 = vmatpush.bf16.msra.mxu0 %v6280
        %6997 = vmatpush.bf16.msra.mxu0 %v6276
        %6998 = vmatpush.bf16.msra.mxu0 %v6272
        %6999 = vmatpush.bf16.msra.mxu0 %v6268
        %7000 = vmatmul.bf16.gmra.mxu0 %v5680
        %v7001 = vpop.f32.mrf.mxu0
        %v7002 = vadd.f32 %v5972, %v7001
        %v7003 = vpop.f32.mrf.mxu0
        %v7004 = vadd.f32 %v5972, %v7003
        %7005 = vmatmul.bf16.gmra.mxu0 %v5681
        %v7006 = vpop.f32.mrf.mxu0
        %v7007 = vadd.f32 %v5972, %v7006
        %v7008 = vpop.f32.mrf.mxu0
        %v7009 = vadd.f32 %v5972, %v7008
        %7010 = vmatmul.bf16.gmra.mxu0 %v5682
        %v7011 = vpop.f32.mrf.mxu0
        %v7012 = vadd.f32 %v5972, %v7011
        %v7013 = vpop.f32.mrf.mxu0
        %v7014 = vadd.f32 %v5972, %v7013
        %7015 = vmatmul.bf16.gmra.mxu0 %v5683
        %v7016 = vpop.f32.mrf.mxu0
        %v7017 = vadd.f32 %v5972, %v7016
        %v7018 = vpop.f32.mrf.mxu0
        %v7019 = vadd.f32 %v5972, %v7018
        %7020 = vmatmul.bf16.gmra.mxu0 %v5684
        %v7021 = vpop.f32.mrf.mxu0
        %v7022 = vadd.f32 %v5972, %v7021
        %v7023 = vpop.f32.mrf.mxu0
        %v7024 = vadd.f32 %v5972, %v7023
        %7025 = vmatmul.bf16.gmra.mxu0 %v5685
        %v7026 = vpop.f32.mrf.mxu0
        %v7027 = vadd.f32 %v5972, %v7026
        %v7028 = vpop.f32.mrf.mxu0
        %v7029 = vadd.f32 %v5972, %v7028
        %7030 = vmatmul.bf16.gmra.mxu0 %v5686
        %v7031 = vpop.f32.mrf.mxu0
        %v7032 = vadd.f32 %v5972, %v7031
        %v7033 = vpop.f32.mrf.mxu0
        %v7034 = vadd.f32 %v5972, %v7033
        %7035 = vmatmul.bf16.gmra.mxu0 %v5687
        %v7036 = vpop.f32.mrf.mxu0
        %v7037 = vadd.f32 %v5972, %v7036
        %v7038 = vpop.f32.mrf.mxu0
        %v7039 = vadd.f32 %v5972, %v7038
        %7040 = vmatmul.bf16.gmra.mxu0 %v5688
        %v7041 = vpop.f32.mrf.mxu0
        %v7042 = vadd.f32 %v5972, %v7041
        %v7043 = vpop.f32.mrf.mxu0
        %v7044 = vadd.f32 %v5972, %v7043
        %7045 = vmatmul.bf16.gmra.mxu0 %v5689
        %v7046 = vpop.f32.mrf.mxu0
        %v7047 = vadd.f32 %v5972, %v7046
        %v7048 = vpop.f32.mrf.mxu0
        %v7049 = vadd.f32 %v5972, %v7048
        %7050 = vmatmul.bf16.gmra.mxu0 %v5690
        %v7051 = vpop.f32.mrf.mxu0
        %v7052 = vadd.f32 %v5972, %v7051
        %v7053 = vpop.f32.mrf.mxu0
        %v7054 = vadd.f32 %v5972, %v7053
        %7055 = vmatmul.bf16.gmra.mxu0 %v5691
        %v7056 = vpop.f32.mrf.mxu0
        %v7057 = vadd.f32 %v5972, %v7056
        %v7058 = vpop.f32.mrf.mxu0
        %v7059 = vadd.f32 %v5972, %v7058
        %7060 = vmatmul.bf16.gmra.mxu0 %v5692
        %v7061 = vpop.f32.mrf.mxu0
        %v7062 = vadd.f32 %v5972, %v7061
        %v7063 = vpop.f32.mrf.mxu0
        %v7064 = vadd.f32 %v5972, %v7063
        %7065 = vmatmul.bf16.gmra.mxu0 %v5693
        %v7066 = vpop.f32.mrf.mxu0
        %v7067 = vadd.f32 %v5972, %v7066
        %v7068 = vpop.f32.mrf.mxu0
        %v7069 = vadd.f32 %v5972, %v7068
        %7070 = vmatmul.bf16.gmra.mxu0 %v5694
        %v7071 = vpop.f32.mrf.mxu0
        %v7072 = vadd.f32 %v5972, %v7071
        %v7073 = vpop.f32.mrf.mxu0
        %v7074 = vadd.f32 %v5972, %v7073
        %7075 = vmatmul.bf16.gmra.mxu0 %v5695
        %v7076 = vpop.f32.mrf.mxu0
        %v7077 = vadd.f32 %v5972, %v7076
        %v7078 = vpop.f32.mrf.mxu0
        %v7079 = vadd.f32 %v5972, %v7078
        %7080 = vdwg.mxu0
        %7081 = vmatpush.bf16.msra.mxu0 %v6328
        %7082 = vmatpush.bf16.msra.mxu0 %v6324
        %7083 = vmatpush.bf16.msra.mxu0 %v6320
        %7084 = vmatpush.bf16.msra.mxu0 %v6316
        %7085 = vmatpush.bf16.msra.mxu0 %v6312
        %7086 = vmatpush.bf16.msra.mxu0 %v6308
        %7087 = vmatpush.bf16.msra.mxu0 %v6304
        %7088 = vmatpush.bf16.msra.mxu0 %v6300
        %7089 = vmatmul.bf16.gmra.mxu0 %v5808
        %v7090 = vpop.f32.mrf.mxu0
        %v7091 = vadd.f32 %v7002, %v7090
        %v7092 = vpop.f32.mrf.mxu0
        %v7093 = vadd.f32 %v7004, %v7092
        %7094 = vmatmul.bf16.gmra.mxu0 %v5810
        %v7095 = vpop.f32.mrf.mxu0
        %v7096 = vadd.f32 %v7007, %v7095
        %v7097 = vpop.f32.mrf.mxu0
        %v7098 = vadd.f32 %v7009, %v7097
        %7099 = vmatmul.bf16.gmra.mxu0 %v5812
        %v7100 = vpop.f32.mrf.mxu0
        %v7101 = vadd.f32 %v7012, %v7100
        %v7102 = vpop.f32.mrf.mxu0
        %v7103 = vadd.f32 %v7014, %v7102
        %7104 = vmatmul.bf16.gmra.mxu0 %v5814
        %v7105 = vpop.f32.mrf.mxu0
        %v7106 = vadd.f32 %v7017, %v7105
        %v7107 = vpop.f32.mrf.mxu0
        %v7108 = vadd.f32 %v7019, %v7107
        %7109 = vmatmul.bf16.gmra.mxu0 %v5816
        %v7110 = vpop.f32.mrf.mxu0
        %v7111 = vadd.f32 %v7022, %v7110
        %v7112 = vpop.f32.mrf.mxu0
        %v7113 = vadd.f32 %v7024, %v7112
        %7114 = vmatmul.bf16.gmra.mxu0 %v5818
        %v7115 = vpop.f32.mrf.mxu0
        %v7116 = vadd.f32 %v7027, %v7115
        %v7117 = vpop.f32.mrf.mxu0
        %v7118 = vadd.f32 %v7029, %v7117
        %7119 = vmatmul.bf16.gmra.mxu0 %v5820
        %v7120 = vpop.f32.mrf.mxu0
        %v7121 = vadd.f32 %v7032, %v7120
        %v7122 = vpop.f32.mrf.mxu0
        %v7123 = vadd.f32 %v7034, %v7122
        %7124 = vmatmul.bf16.gmra.mxu0 %v5822
        %v7125 = vpop.f32.mrf.mxu0
        %v7126 = vadd.f32 %v7037, %v7125
        %v7127 = vpop.f32.mrf.mxu0
        %v7128 = vadd.f32 %v7039, %v7127
        %7129 = vmatmul.bf16.gmra.mxu0 %v5824
        %v7130 = vpop.f32.mrf.mxu0
        %v7131 = vadd.f32 %v7042, %v7130
        %v7132 = vpop.f32.mrf.mxu0
        %v7133 = vadd.f32 %v7044, %v7132
        %7134 = vmatmul.bf16.gmra.mxu0 %v5826
        %v7135 = vpop.f32.mrf.mxu0
        %v7136 = vadd.f32 %v7047, %v7135
        %v7137 = vpop.f32.mrf.mxu0
        %v7138 = vadd.f32 %v7049, %v7137
        %7139 = vmatmul.bf16.gmra.mxu0 %v5828
        %v7140 = vpop.f32.mrf.mxu0
        %v7141 = vadd.f32 %v7052, %v7140
        %v7142 = vpop.f32.mrf.mxu0
        %v7143 = vadd.f32 %v7054, %v7142
        %7144 = vmatmul.bf16.gmra.mxu0 %v5830
        %v7145 = vpop.f32.mrf.mxu0
        %v7146 = vadd.f32 %v7057, %v7145
        %v7147 = vpop.f32.mrf.mxu0
        %v7148 = vadd.f32 %v7059, %v7147
        %7149 = vmatmul.bf16.gmra.mxu0 %v5832
        %v7150 = vpop.f32.mrf.mxu0
        %v7151 = vadd.f32 %v7062, %v7150
        %v7152 = vpop.f32.mrf.mxu0
        %v7153 = vadd.f32 %v7064, %v7152
        %7154 = vmatmul.bf16.gmra.mxu0 %v5834
        %v7155 = vpop.f32.mrf.mxu0
        %v7156 = vadd.f32 %v7067, %v7155
        %v7157 = vpop.f32.mrf.mxu0
        %v7158 = vadd.f32 %v7069, %v7157
        %7159 = vmatmul.bf16.gmra.mxu0 %v5836
        %v7160 = vpop.f32.mrf.mxu0
        %v7161 = vadd.f32 %v7072, %v7160
        %v7162 = vpop.f32.mrf.mxu0
        %v7163 = vadd.f32 %v7074, %v7162
        %7164 = vmatmul.bf16.gmra.mxu0 %v5838
        %v7165 = vpop.f32.mrf.mxu0
        %v7166 = vadd.f32 %v7077, %v7165
        %v7167 = vpop.f32.mrf.mxu0
        %v7168 = vadd.f32 %v7079, %v7167
        %7169 = vdwg.mxu0
        %7170 = vmatpush.bf16.msra.mxu0 %v6360
        %7171 = vmatpush.bf16.msra.mxu0 %v6356
        %7172 = vmatpush.bf16.msra.mxu0 %v6352
        %7173 = vmatpush.bf16.msra.mxu0 %v6348
        %7174 = vmatpush.bf16.msra.mxu0 %v6344
        %7175 = vmatpush.bf16.msra.mxu0 %v6340
        %7176 = vmatpush.bf16.msra.mxu0 %v6336
        %7177 = vmatpush.bf16.msra.mxu0 %v6332
        %7178 = vmatmul.bf16.gmra.mxu0 %v5809
        %v7179 = vpop.f32.mrf.mxu0
        %v7180 = vadd.f32 %v7091, %v7179
        %v7181 = vpop.f32.mrf.mxu0
        %v7182 = vadd.f32 %v7093, %v7181
        %7183 = vmatmul.bf16.gmra.mxu0 %v5811
        %v7184 = vpop.f32.mrf.mxu0
        %v7185 = vadd.f32 %v7096, %v7184
        %v7186 = vpop.f32.mrf.mxu0
        %v7187 = vadd.f32 %v7098, %v7186
        %7188 = vmatmul.bf16.gmra.mxu0 %v5813
        %v7189 = vpop.f32.mrf.mxu0
        %v7190 = vadd.f32 %v7101, %v7189
        %v7191 = vpop.f32.mrf.mxu0
        %v7192 = vadd.f32 %v7103, %v7191
        %7193 = vmatmul.bf16.gmra.mxu0 %v5815
        %v7194 = vpop.f32.mrf.mxu0
        %v7195 = vadd.f32 %v7106, %v7194
        %v7196 = vpop.f32.mrf.mxu0
        %v7197 = vadd.f32 %v7108, %v7196
        %7198 = vmatmul.bf16.gmra.mxu0 %v5817
        %v7199 = vpop.f32.mrf.mxu0
        %v7200 = vadd.f32 %v7111, %v7199
        %v7201 = vpop.f32.mrf.mxu0
        %v7202 = vadd.f32 %v7113, %v7201
        %7203 = vmatmul.bf16.gmra.mxu0 %v5819
        %v7204 = vpop.f32.mrf.mxu0
        %v7205 = vadd.f32 %v7116, %v7204
        %v7206 = vpop.f32.mrf.mxu0
        %v7207 = vadd.f32 %v7118, %v7206
        %7208 = vmatmul.bf16.gmra.mxu0 %v5821
        %v7209 = vpop.f32.mrf.mxu0
        %v7210 = vadd.f32 %v7121, %v7209
        %v7211 = vpop.f32.mrf.mxu0
        %v7212 = vadd.f32 %v7123, %v7211
        %7213 = vmatmul.bf16.gmra.mxu0 %v5823
        %v7214 = vpop.f32.mrf.mxu0
        %v7215 = vadd.f32 %v7126, %v7214
        %v7216 = vpop.f32.mrf.mxu0
        %v7217 = vadd.f32 %v7128, %v7216
        %7218 = vmatmul.bf16.gmra.mxu0 %v5825
        %v7219 = vpop.f32.mrf.mxu0
        %v7220 = vadd.f32 %v7131, %v7219
        %v7221 = vpop.f32.mrf.mxu0
        %v7222 = vadd.f32 %v7133, %v7221
        %7223 = vmatmul.bf16.gmra.mxu0 %v5827
        %v7224 = vpop.f32.mrf.mxu0
        %v7225 = vadd.f32 %v7136, %v7224
        %v7226 = vpop.f32.mrf.mxu0
        %v7227 = vadd.f32 %v7138, %v7226
        %7228 = vmatmul.bf16.gmra.mxu0 %v5829
        %v7229 = vpop.f32.mrf.mxu0
        %v7230 = vadd.f32 %v7141, %v7229
        %v7231 = vpop.f32.mrf.mxu0
        %v7232 = vadd.f32 %v7143, %v7231
        %7233 = vmatmul.bf16.gmra.mxu0 %v5831
        %v7234 = vpop.f32.mrf.mxu0
        %v7235 = vadd.f32 %v7146, %v7234
        %v7236 = vpop.f32.mrf.mxu0
        %v7237 = vadd.f32 %v7148, %v7236
        %7238 = vmatmul.bf16.gmra.mxu0 %v5833
        %v7239 = vpop.f32.mrf.mxu0
        %v7240 = vadd.f32 %v7151, %v7239
        %v7241 = vpop.f32.mrf.mxu0
        %v7242 = vadd.f32 %v7153, %v7241
        %7243 = vmatmul.bf16.gmra.mxu0 %v5835
        %v7244 = vpop.f32.mrf.mxu0
        %v7245 = vadd.f32 %v7156, %v7244
        %v7246 = vpop.f32.mrf.mxu0
        %v7247 = vadd.f32 %v7158, %v7246
        %7248 = vmatmul.bf16.gmra.mxu0 %v5837
        %v7249 = vpop.f32.mrf.mxu0
        %v7250 = vadd.f32 %v7161, %v7249
        %v7251 = vpop.f32.mrf.mxu0
        %v7252 = vadd.f32 %v7163, %v7251
        %7253 = vmatmul.bf16.gmra.mxu0 %v5839
        %v7254 = vpop.f32.mrf.mxu0
        %v7255 = vadd.f32 %v7166, %v7254
        %v7256 = vpop.f32.mrf.mxu0
        %v7257 = vadd.f32 %v7168, %v7256
        %7258 = vdwg.mxu0
        %7259 = vmatpush.bf16.msra.mxu0 %v6297
        %7260 = vmatpush.bf16.msra.mxu0 %v6293
        %7261 = vmatpush.bf16.msra.mxu0 %v6289
        %7262 = vmatpush.bf16.msra.mxu0 %v6285
        %7263 = vmatpush.bf16.msra.mxu0 %v6281
        %7264 = vmatpush.bf16.msra.mxu0 %v6277
        %7265 = vmatpush.bf16.msra.mxu0 %v6273
        %7266 = vmatpush.bf16.msra.mxu0 %v6269
        %7267 = vmatmul.bf16.gmra.mxu0 %v5680
        %v7268 = vpop.f32.mrf.mxu0
        %v7269 = vadd.f32 %v5973, %v7268
        %v7270 = vpop.f32.mrf.mxu0
        %v7271 = vadd.f32 %v5973, %v7270
        %7272 = vmatmul.bf16.gmra.mxu0 %v5681
        %v7273 = vpop.f32.mrf.mxu0
        %v7274 = vadd.f32 %v5973, %v7273
        %v7275 = vpop.f32.mrf.mxu0
        %v7276 = vadd.f32 %v5973, %v7275
        %7277 = vmatmul.bf16.gmra.mxu0 %v5682
        %v7278 = vpop.f32.mrf.mxu0
        %v7279 = vadd.f32 %v5973, %v7278
        %v7280 = vpop.f32.mrf.mxu0
        %v7281 = vadd.f32 %v5973, %v7280
        %7282 = vmatmul.bf16.gmra.mxu0 %v5683
        %v7283 = vpop.f32.mrf.mxu0
        %v7284 = vadd.f32 %v5973, %v7283
        %v7285 = vpop.f32.mrf.mxu0
        %v7286 = vadd.f32 %v5973, %v7285
        %7287 = vmatmul.bf16.gmra.mxu0 %v5684
        %v7288 = vpop.f32.mrf.mxu0
        %v7289 = vadd.f32 %v5973, %v7288
        %v7290 = vpop.f32.mrf.mxu0
        %v7291 = vadd.f32 %v5973, %v7290
        %7292 = vmatmul.bf16.gmra.mxu0 %v5685
        %v7293 = vpop.f32.mrf.mxu0
        %v7294 = vadd.f32 %v5973, %v7293
        %v7295 = vpop.f32.mrf.mxu0
        %v7296 = vadd.f32 %v5973, %v7295
        %7297 = vmatmul.bf16.gmra.mxu0 %v5686
        %v7298 = vpop.f32.mrf.mxu0
        %v7299 = vadd.f32 %v5973, %v7298
        %v7300 = vpop.f32.mrf.mxu0
        %v7301 = vadd.f32 %v5973, %v7300
        %7302 = vmatmul.bf16.gmra.mxu0 %v5687
        %v7303 = vpop.f32.mrf.mxu0
        %v7304 = vadd.f32 %v5973, %v7303
        %v7305 = vpop.f32.mrf.mxu0
        %v7306 = vadd.f32 %v5973, %v7305
        %7307 = vmatmul.bf16.gmra.mxu0 %v5688
        %v7308 = vpop.f32.mrf.mxu0
        %v7309 = vadd.f32 %v5973, %v7308
        %v7310 = vpop.f32.mrf.mxu0
        %v7311 = vadd.f32 %v5973, %v7310
        %7312 = vmatmul.bf16.gmra.mxu0 %v5689
        %v7313 = vpop.f32.mrf.mxu0
        %v7314 = vadd.f32 %v5973, %v7313
        %v7315 = vpop.f32.mrf.mxu0
        %v7316 = vadd.f32 %v5973, %v7315
        %7317 = vmatmul.bf16.gmra.mxu0 %v5690
        %v7318 = vpop.f32.mrf.mxu0
        %v7319 = vadd.f32 %v5973, %v7318
        %v7320 = vpop.f32.mrf.mxu0
        %v7321 = vadd.f32 %v5973, %v7320
        %7322 = vmatmul.bf16.gmra.mxu0 %v5691
        %v7323 = vpop.f32.mrf.mxu0
        %v7324 = vadd.f32 %v5973, %v7323
        %v7325 = vpop.f32.mrf.mxu0
        %v7326 = vadd.f32 %v5973, %v7325
        %7327 = vmatmul.bf16.gmra.mxu0 %v5692
        %v7328 = vpop.f32.mrf.mxu0
        %v7329 = vadd.f32 %v5973, %v7328
        %v7330 = vpop.f32.mrf.mxu0
        %v7331 = vadd.f32 %v5973, %v7330
        %7332 = vmatmul.bf16.gmra.mxu0 %v5693
        %v7333 = vpop.f32.mrf.mxu0
        %v7334 = vadd.f32 %v5973, %v7333
        %v7335 = vpop.f32.mrf.mxu0
        %v7336 = vadd.f32 %v5973, %v7335
        %7337 = vmatmul.bf16.gmra.mxu0 %v5694
        %v7338 = vpop.f32.mrf.mxu0
        %v7339 = vadd.f32 %v5973, %v7338
        %v7340 = vpop.f32.mrf.mxu0
        %v7341 = vadd.f32 %v5973, %v7340
        %7342 = vmatmul.bf16.gmra.mxu0 %v5695
        %v7343 = vpop.f32.mrf.mxu0
        %v7344 = vadd.f32 %v5973, %v7343
        %v7345 = vpop.f32.mrf.mxu0
        %v7346 = vadd.f32 %v5973, %v7345
        %7347 = vdwg.mxu0
        %7348 = vmatpush.bf16.msra.mxu0 %v6329
        %7349 = vmatpush.bf16.msra.mxu0 %v6325
        %7350 = vmatpush.bf16.msra.mxu0 %v6321
        %7351 = vmatpush.bf16.msra.mxu0 %v6317
        %7352 = vmatpush.bf16.msra.mxu0 %v6313
        %7353 = vmatpush.bf16.msra.mxu0 %v6309
        %7354 = vmatpush.bf16.msra.mxu0 %v6305
        %7355 = vmatpush.bf16.msra.mxu0 %v6301
        %7356 = vmatmul.bf16.gmra.mxu0 %v5808
        %v7357 = vpop.f32.mrf.mxu0
        %v7358 = vadd.f32 %v7269, %v7357
        %v7359 = vpop.f32.mrf.mxu0
        %v7360 = vadd.f32 %v7271, %v7359
        %7361 = vmatmul.bf16.gmra.mxu0 %v5810
        %v7362 = vpop.f32.mrf.mxu0
        %v7363 = vadd.f32 %v7274, %v7362
        %v7364 = vpop.f32.mrf.mxu0
        %v7365 = vadd.f32 %v7276, %v7364
        %7366 = vmatmul.bf16.gmra.mxu0 %v5812
        %v7367 = vpop.f32.mrf.mxu0
        %v7368 = vadd.f32 %v7279, %v7367
        %v7369 = vpop.f32.mrf.mxu0
        %v7370 = vadd.f32 %v7281, %v7369
        %7371 = vmatmul.bf16.gmra.mxu0 %v5814
        %v7372 = vpop.f32.mrf.mxu0
        %v7373 = vadd.f32 %v7284, %v7372
        %v7374 = vpop.f32.mrf.mxu0
        %v7375 = vadd.f32 %v7286, %v7374
        %7376 = vmatmul.bf16.gmra.mxu0 %v5816
        %v7377 = vpop.f32.mrf.mxu0
        %v7378 = vadd.f32 %v7289, %v7377
        %v7379 = vpop.f32.mrf.mxu0
        %v7380 = vadd.f32 %v7291, %v7379
        %7381 = vmatmul.bf16.gmra.mxu0 %v5818
        %v7382 = vpop.f32.mrf.mxu0
        %v7383 = vadd.f32 %v7294, %v7382
        %v7384 = vpop.f32.mrf.mxu0
        %v7385 = vadd.f32 %v7296, %v7384
        %7386 = vmatmul.bf16.gmra.mxu0 %v5820
        %v7387 = vpop.f32.mrf.mxu0
        %v7388 = vadd.f32 %v7299, %v7387
        %v7389 = vpop.f32.mrf.mxu0
        %v7390 = vadd.f32 %v7301, %v7389
        %7391 = vmatmul.bf16.gmra.mxu0 %v5822
        %v7392 = vpop.f32.mrf.mxu0
        %v7393 = vadd.f32 %v7304, %v7392
        %v7394 = vpop.f32.mrf.mxu0
        %v7395 = vadd.f32 %v7306, %v7394
        %7396 = vmatmul.bf16.gmra.mxu0 %v5824
        %v7397 = vpop.f32.mrf.mxu0
        %v7398 = vadd.f32 %v7309, %v7397
        %v7399 = vpop.f32.mrf.mxu0
        %v7400 = vadd.f32 %v7311, %v7399
        %7401 = vmatmul.bf16.gmra.mxu0 %v5826
        %v7402 = vpop.f32.mrf.mxu0
        %v7403 = vadd.f32 %v7314, %v7402
        %v7404 = vpop.f32.mrf.mxu0
        %v7405 = vadd.f32 %v7316, %v7404
        %7406 = vmatmul.bf16.gmra.mxu0 %v5828
        %v7407 = vpop.f32.mrf.mxu0
        %v7408 = vadd.f32 %v7319, %v7407
        %v7409 = vpop.f32.mrf.mxu0
        %v7410 = vadd.f32 %v7321, %v7409
        %7411 = vmatmul.bf16.gmra.mxu0 %v5830
        %v7412 = vpop.f32.mrf.mxu0
        %v7413 = vadd.f32 %v7324, %v7412
        %v7414 = vpop.f32.mrf.mxu0
        %v7415 = vadd.f32 %v7326, %v7414
        %7416 = vmatmul.bf16.gmra.mxu0 %v5832
        %v7417 = vpop.f32.mrf.mxu0
        %v7418 = vadd.f32 %v7329, %v7417
        %v7419 = vpop.f32.mrf.mxu0
        %v7420 = vadd.f32 %v7331, %v7419
        %7421 = vmatmul.bf16.gmra.mxu0 %v5834
        %v7422 = vpop.f32.mrf.mxu0
        %v7423 = vadd.f32 %v7334, %v7422
        %v7424 = vpop.f32.mrf.mxu0
        %v7425 = vadd.f32 %v7336, %v7424
        %7426 = vmatmul.bf16.gmra.mxu0 %v5836
        %v7427 = vpop.f32.mrf.mxu0
        %v7428 = vadd.f32 %v7339, %v7427
        %v7429 = vpop.f32.mrf.mxu0
        %v7430 = vadd.f32 %v7341, %v7429
        %7431 = vmatmul.bf16.gmra.mxu0 %v5838
        %v7432 = vpop.f32.mrf.mxu0
        %v7433 = vadd.f32 %v7344, %v7432
        %v7434 = vpop.f32.mrf.mxu0
        %v7435 = vadd.f32 %v7346, %v7434
        %7436 = vdwg.mxu0
        %7437 = vmatpush.bf16.msra.mxu0 %v6361
        %7438 = vmatpush.bf16.msra.mxu0 %v6357
        %7439 = vmatpush.bf16.msra.mxu0 %v6353
        %7440 = vmatpush.bf16.msra.mxu0 %v6349
        %7441 = vmatpush.bf16.msra.mxu0 %v6345
        %7442 = vmatpush.bf16.msra.mxu0 %v6341
        %7443 = vmatpush.bf16.msra.mxu0 %v6337
        %7444 = vmatpush.bf16.msra.mxu0 %v6333
        %7445 = vmatmul.bf16.gmra.mxu0 %v5809
        %v7446 = vpop.f32.mrf.mxu0
        %v7447 = vadd.f32 %v7358, %v7446
        %v7448 = vpop.f32.mrf.mxu0
        %v7449 = vadd.f32 %v7360, %v7448
        %7450 = vmatmul.bf16.gmra.mxu0 %v5811
        %v7451 = vpop.f32.mrf.mxu0
        %v7452 = vadd.f32 %v7363, %v7451
        %v7453 = vpop.f32.mrf.mxu0
        %v7454 = vadd.f32 %v7365, %v7453
        %7455 = vmatmul.bf16.gmra.mxu0 %v5813
        %v7456 = vpop.f32.mrf.mxu0
        %v7457 = vadd.f32 %v7368, %v7456
        %v7458 = vpop.f32.mrf.mxu0
        %v7459 = vadd.f32 %v7370, %v7458
        %7460 = vmatmul.bf16.gmra.mxu0 %v5815
        %v7461 = vpop.f32.mrf.mxu0
        %v7462 = vadd.f32 %v7373, %v7461
        %v7463 = vpop.f32.mrf.mxu0
        %v7464 = vadd.f32 %v7375, %v7463
        %7465 = vmatmul.bf16.gmra.mxu0 %v5817
        %v7466 = vpop.f32.mrf.mxu0
        %v7467 = vadd.f32 %v7378, %v7466
        %v7468 = vpop.f32.mrf.mxu0
        %v7469 = vadd.f32 %v7380, %v7468
        %7470 = vmatmul.bf16.gmra.mxu0 %v5819
        %v7471 = vpop.f32.mrf.mxu0
        %v7472 = vadd.f32 %v7383, %v7471
        %v7473 = vpop.f32.mrf.mxu0
        %v7474 = vadd.f32 %v7385, %v7473
        %7475 = vmatmul.bf16.gmra.mxu0 %v5821
        %v7476 = vpop.f32.mrf.mxu0
        %v7477 = vadd.f32 %v7388, %v7476
        %v7478 = vpop.f32.mrf.mxu0
        %v7479 = vadd.f32 %v7390, %v7478
        %7480 = vmatmul.bf16.gmra.mxu0 %v5823
        %v7481 = vpop.f32.mrf.mxu0
        %v7482 = vadd.f32 %v7393, %v7481
        %v7483 = vpop.f32.mrf.mxu0
        %v7484 = vadd.f32 %v7395, %v7483
        %7485 = vmatmul.bf16.gmra.mxu0 %v5825
        %v7486 = vpop.f32.mrf.mxu0
        %v7487 = vadd.f32 %v7398, %v7486
        %v7488 = vpop.f32.mrf.mxu0
        %v7489 = vadd.f32 %v7400, %v7488
        %7490 = vmatmul.bf16.gmra.mxu0 %v5827
        %v7491 = vpop.f32.mrf.mxu0
        %v7492 = vadd.f32 %v7403, %v7491
        %v7493 = vpop.f32.mrf.mxu0
        %v7494 = vadd.f32 %v7405, %v7493
        %7495 = vmatmul.bf16.gmra.mxu0 %v5829
        %v7496 = vpop.f32.mrf.mxu0
        %v7497 = vadd.f32 %v7408, %v7496
        %v7498 = vpop.f32.mrf.mxu0
        %v7499 = vadd.f32 %v7410, %v7498
        %7500 = vmatmul.bf16.gmra.mxu0 %v5831
        %v7501 = vpop.f32.mrf.mxu0
        %v7502 = vadd.f32 %v7413, %v7501
        %v7503 = vpop.f32.mrf.mxu0
        %v7504 = vadd.f32 %v7415, %v7503
        %7505 = vmatmul.bf16.gmra.mxu0 %v5833
        %v7506 = vpop.f32.mrf.mxu0
        %v7507 = vadd.f32 %v7418, %v7506
        %v7508 = vpop.f32.mrf.mxu0
        %v7509 = vadd.f32 %v7420, %v7508
        %7510 = vmatmul.bf16.gmra.mxu0 %v5835
        %v7511 = vpop.f32.mrf.mxu0
        %v7512 = vadd.f32 %v7423, %v7511
        %v7513 = vpop.f32.mrf.mxu0
        %v7514 = vadd.f32 %v7425, %v7513
        %7515 = vmatmul.bf16.gmra.mxu0 %v5837
        %v7516 = vpop.f32.mrf.mxu0
        %v7517 = vadd.f32 %v7428, %v7516
        %v7518 = vpop.f32.mrf.mxu0
        %v7519 = vadd.f32 %v7430, %v7518
        %7520 = vmatmul.bf16.gmra.mxu0 %v5839
        %v7521 = vpop.f32.mrf.mxu0
        %v7522 = vadd.f32 %v7433, %v7521
        %v7523 = vpop.f32.mrf.mxu0
        %v7524 = vadd.f32 %v7435, %v7523
        %7525 = vdwg.mxu0
        %v7526 = vmax.f32 %v6646, 0.0
        %v7527 = vmax.f32 %v6913, 0.0
        %v7528 = vmax.f32 %v7180, 0.0
        %v7529 = vmax.f32 %v7447, 0.0
        %v7530 = vmax.f32 %v6648, 0.0
        %v7531 = vmax.f32 %v6915, 0.0
        %v7532 = vmax.f32 %v7182, 0.0
        %v7533 = vmax.f32 %v7449, 0.0
        %v7534 = vmax.f32 %v6651, 0.0
        %v7535 = vmax.f32 %v6918, 0.0
        %v7536 = vmax.f32 %v7185, 0.0
        %v7537 = vmax.f32 %v7452, 0.0
        %v7538 = vmax.f32 %v6653, 0.0
        %v7539 = vmax.f32 %v6920, 0.0
        %v7540 = vmax.f32 %v7187, 0.0
        %v7541 = vmax.f32 %v7454, 0.0
        %v7542 = vmax.f32 %v6656, 0.0
        %v7543 = vmax.f32 %v6923, 0.0
        %v7544 = vmax.f32 %v7190, 0.0
        %v7545 = vmax.f32 %v7457, 0.0
        %v7546 = vmax.f32 %v6658, 0.0
        %v7547 = vmax.f32 %v6925, 0.0
        %v7548 = vmax.f32 %v7192, 0.0
        %v7549 = vmax.f32 %v7459, 0.0
        %v7550 = vmax.f32 %v6661, 0.0
        %v7551 = vmax.f32 %v6928, 0.0
        %v7552 = vmax.f32 %v7195, 0.0
        %v7553 = vmax.f32 %v7462, 0.0
        %v7554 = vmax.f32 %v6663, 0.0
        %v7555 = vmax.f32 %v6930, 0.0
        %v7556 = vmax.f32 %v7197, 0.0
        %v7557 = vmax.f32 %v7464, 0.0
        %v7558 = vmax.f32 %v6666, 0.0
        %v7559 = vmax.f32 %v6933, 0.0
        %v7560 = vmax.f32 %v7200, 0.0
        %v7561 = vmax.f32 %v7467, 0.0
        %v7562 = vmax.f32 %v6668, 0.0
        %v7563 = vmax.f32 %v6935, 0.0
        %v7564 = vmax.f32 %v7202, 0.0
        %v7565 = vmax.f32 %v7469, 0.0
        %v7566 = vmax.f32 %v6671, 0.0
        %v7567 = vmax.f32 %v6938, 0.0
        %v7568 = vmax.f32 %v7205, 0.0
        %v7569 = vmax.f32 %v7472, 0.0
        %v7570 = vmax.f32 %v6673, 0.0
        %v7571 = vmax.f32 %v6940, 0.0
        %v7572 = vmax.f32 %v7207, 0.0
        %v7573 = vmax.f32 %v7474, 0.0
        %v7574 = vmax.f32 %v6676, 0.0
        %v7575 = vmax.f32 %v6943, 0.0
        %v7576 = vmax.f32 %v7210, 0.0
        %v7577 = vmax.f32 %v7477, 0.0
        %v7578 = vmax.f32 %v6678, 0.0
        %v7579 = vmax.f32 %v6945, 0.0
        %v7580 = vmax.f32 %v7212, 0.0
        %v7581 = vmax.f32 %v7479, 0.0
        %v7582 = vmax.f32 %v6681, 0.0
        %v7583 = vmax.f32 %v6948, 0.0
        %v7584 = vmax.f32 %v7215, 0.0
        %v7585 = vmax.f32 %v7482, 0.0
        %v7586 = vmax.f32 %v6683, 0.0
        %v7587 = vmax.f32 %v6950, 0.0
        %v7588 = vmax.f32 %v7217, 0.0
        %v7589 = vmax.f32 %v7484, 0.0
        %v7590 = vmax.f32 %v6686, 0.0
        %v7591 = vmax.f32 %v6953, 0.0
        %v7592 = vmax.f32 %v7220, 0.0
        %v7593 = vmax.f32 %v7487, 0.0
        %v7594 = vmax.f32 %v6688, 0.0
        %v7595 = vmax.f32 %v6955, 0.0
        %v7596 = vmax.f32 %v7222, 0.0
        %v7597 = vmax.f32 %v7489, 0.0
        %v7598 = vmax.f32 %v6691, 0.0
        %v7599 = vmax.f32 %v6958, 0.0
        %v7600 = vmax.f32 %v7225, 0.0
        %v7601 = vmax.f32 %v7492, 0.0
        %v7602 = vmax.f32 %v6693, 0.0
        %v7603 = vmax.f32 %v6960, 0.0
        %v7604 = vmax.f32 %v7227, 0.0
        %v7605 = vmax.f32 %v7494, 0.0
        %v7606 = vmax.f32 %v6696, 0.0
        %v7607 = vmax.f32 %v6963, 0.0
        %v7608 = vmax.f32 %v7230, 0.0
        %v7609 = vmax.f32 %v7497, 0.0
        %v7610 = vmax.f32 %v6698, 0.0
        %v7611 = vmax.f32 %v6965, 0.0
        %v7612 = vmax.f32 %v7232, 0.0
        %v7613 = vmax.f32 %v7499, 0.0
        %v7614 = vmax.f32 %v6701, 0.0
        %v7615 = vmax.f32 %v6968, 0.0
        %v7616 = vmax.f32 %v7235, 0.0
        %v7617 = vmax.f32 %v7502, 0.0
        %v7618 = vmax.f32 %v6703, 0.0
        %v7619 = vmax.f32 %v6970, 0.0
        %v7620 = vmax.f32 %v7237, 0.0
        %v7621 = vmax.f32 %v7504, 0.0
        %v7622 = vmax.f32 %v6706, 0.0
        %v7623 = vmax.f32 %v6973, 0.0
        %v7624 = vmax.f32 %v7240, 0.0
        %v7625 = vmax.f32 %v7507, 0.0
        %v7626 = vmax.f32 %v6708, 0.0
        %v7627 = vmax.f32 %v6975, 0.0
        %v7628 = vmax.f32 %v7242, 0.0
        %v7629 = vmax.f32 %v7509, 0.0
        %v7630 = vmax.f32 %v6711, 0.0
        %v7631 = vmax.f32 %v6978, 0.0
        %v7632 = vmax.f32 %v7245, 0.0
        %v7633 = vmax.f32 %v7512, 0.0
        %v7634 = vmax.f32 %v6713, 0.0
        %v7635 = vmax.f32 %v6980, 0.0
        %v7636 = vmax.f32 %v7247, 0.0
        %v7637 = vmax.f32 %v7514, 0.0
        %v7638 = vmax.f32 %v6716, 0.0
        %v7639 = vmax.f32 %v6983, 0.0
        %v7640 = vmax.f32 %v7250, 0.0
        %v7641 = vmax.f32 %v7517, 0.0
        %v7642 = vmax.f32 %v6718, 0.0
        %v7643 = vmax.f32 %v6985, 0.0
        %v7644 = vmax.f32 %v7252, 0.0
        %v7645 = vmax.f32 %v7519, 0.0
        %v7646 = vmax.f32 %v6721, 0.0
        %v7647 = vmax.f32 %v6988, 0.0
        %v7648 = vmax.f32 %v7255, 0.0
        %v7649 = vmax.f32 %v7522, 0.0
        %v7650 = vmax.f32 %v6723, 0.0
        %v7651 = vmax.f32 %v6990, 0.0
        %v7652 = vmax.f32 %v7257, 0.0
        %v7653 = vmax.f32 %v7524, 0.0
        %7654 = vst [vmem:[%s376] sm:$0xff] %v7526
        %7655 = vst [vmem:[%s376 + $0x8] sm:$0xff] %v7527
        %7656 = vst [vmem:[%s376 + $0x10] sm:$0xff] %v7528
        %7657 = vst [vmem:[%s376 + $0x18] sm:$0xff] %v7529
        %7658 = vst [vmem:[%s376 + $0x20] sm:$0xff] %v7530
        %7659 = vst [vmem:[%s376 + $0x28] sm:$0xff] %v7531
        %7660 = vst [vmem:[%s376 + $0x30] sm:$0xff] %v7532
        %7661 = vst [vmem:[%s376 + $0x38] sm:$0xff] %v7533
        %7662 = vst [vmem:[%s376 + $0x40] sm:$0xff] %v7534
        %7663 = vst [vmem:[%s376 + $0x48] sm:$0xff] %v7535
        %7664 = vst [vmem:[%s376 + $0x50] sm:$0xff] %v7536
        %7665 = vst [vmem:[%s376 + $0x58] sm:$0xff] %v7537
        %7666 = vst [vmem:[%s376 + $0x60] sm:$0xff] %v7538
        %7667 = vst [vmem:[%s376 + $0x68] sm:$0xff] %v7539
        %7668 = vst [vmem:[%s376 + $0x70] sm:$0xff] %v7540
        %7669 = vst [vmem:[%s376 + $0x78] sm:$0xff] %v7541
        %7670 = vst [vmem:[%s376 + $0x80] sm:$0xff] %v7542
        %7671 = vst [vmem:[%s376 + $0x88] sm:$0xff] %v7543
        %7672 = vst [vmem:[%s376 + $0x90] sm:$0xff] %v7544
        %7673 = vst [vmem:[%s376 + $0x98] sm:$0xff] %v7545
        %7674 = vst [vmem:[%s376 + $0xa0] sm:$0xff] %v7546
        %7675 = vst [vmem:[%s376 + $0xa8] sm:$0xff] %v7547
        %7676 = vst [vmem:[%s376 + $0xb0] sm:$0xff] %v7548
        %7677 = vst [vmem:[%s376 + $0xb8] sm:$0xff] %v7549
        %7678 = vst [vmem:[%s376 + $0xc0] sm:$0xff] %v7550
        %7679 = vst [vmem:[%s376 + $0xc8] sm:$0xff] %v7551
        %7680 = vst [vmem:[%s376 + $0xd0] sm:$0xff] %v7552
        %7681 = vst [vmem:[%s376 + $0xd8] sm:$0xff] %v7553
        %7682 = vst [vmem:[%s376 + $0xe0] sm:$0xff] %v7554
        %7683 = vst [vmem:[%s376 + $0xe8] sm:$0xff] %v7555
        %7684 = vst [vmem:[%s376 + $0xf0] sm:$0xff] %v7556
        %7685 = vst [vmem:[%s376 + $0xf8] sm:$0xff] %v7557
        %7686 = vst [vmem:[%s376 + $0x100] sm:$0xff] %v7558
        %7687 = vst [vmem:[%s376 + $0x108] sm:$0xff] %v7559
        %7688 = vst [vmem:[%s376 + $0x110] sm:$0xff] %v7560
        %7689 = vst [vmem:[%s376 + $0x118] sm:$0xff] %v7561
        %7690 = vst [vmem:[%s376 + $0x120] sm:$0xff] %v7562
        %7691 = vst [vmem:[%s376 + $0x128] sm:$0xff] %v7563
        %7692 = vst [vmem:[%s376 + $0x130] sm:$0xff] %v7564
        %7693 = vst [vmem:[%s376 + $0x138] sm:$0xff] %v7565
        %7694 = vst [vmem:[%s376 + $0x140] sm:$0xff] %v7566
        %7695 = vst [vmem:[%s376 + $0x148] sm:$0xff] %v7567
        %7696 = vst [vmem:[%s376 + $0x150] sm:$0xff] %v7568
        %7697 = vst [vmem:[%s376 + $0x158] sm:$0xff] %v7569
        %7698 = vst [vmem:[%s376 + $0x160] sm:$0xff] %v7570
        %7699 = vst [vmem:[%s376 + $0x168] sm:$0xff] %v7571
        %7700 = vst [vmem:[%s376 + $0x170] sm:$0xff] %v7572
        %7701 = vst [vmem:[%s376 + $0x178] sm:$0xff] %v7573
        %7702 = vst [vmem:[%s376 + $0x180] sm:$0xff] %v7574
        %7703 = vst [vmem:[%s376 + $0x188] sm:$0xff] %v7575
        %7704 = vst [vmem:[%s376 + $0x190] sm:$0xff] %v7576
        %7705 = vst [vmem:[%s376 + $0x198] sm:$0xff] %v7577
        %7706 = vst [vmem:[%s376 + $0x1a0] sm:$0xff] %v7578
        %7707 = vst [vmem:[%s376 + $0x1a8] sm:$0xff] %v7579
        %7708 = vst [vmem:[%s376 + $0x1b0] sm:$0xff] %v7580
        %7709 = vst [vmem:[%s376 + $0x1b8] sm:$0xff] %v7581
        %7710 = vst [vmem:[%s376 + $0x1c0] sm:$0xff] %v7582
        %7711 = vst [vmem:[%s376 + $0x1c8] sm:$0xff] %v7583
        %7712 = vst [vmem:[%s376 + $0x1d0] sm:$0xff] %v7584
        %7713 = vst [vmem:[%s376 + $0x1d8] sm:$0xff] %v7585
        %7714 = vst [vmem:[%s376 + $0x1e0] sm:$0xff] %v7586
        %7715 = vst [vmem:[%s376 + $0x1e8] sm:$0xff] %v7587
        %7716 = vst [vmem:[%s376 + $0x1f0] sm:$0xff] %v7588
        %7717 = vst [vmem:[%s376 + $0x1f8] sm:$0xff] %v7589
        %7718 = vst [vmem:[%s376 + $0x200] sm:$0xff] %v7590
        %7719 = vst [vmem:[%s376 + $0x208] sm:$0xff] %v7591
        %7720 = vst [vmem:[%s376 + $0x210] sm:$0xff] %v7592
        %7721 = vst [vmem:[%s376 + $0x218] sm:$0xff] %v7593
        %7722 = vst [vmem:[%s376 + $0x220] sm:$0xff] %v7594
        %7723 = vst [vmem:[%s376 + $0x228] sm:$0xff] %v7595
        %7724 = vst [vmem:[%s376 + $0x230] sm:$0xff] %v7596
        %7725 = vst [vmem:[%s376 + $0x238] sm:$0xff] %v7597
        %7726 = vst [vmem:[%s376 + $0x240] sm:$0xff] %v7598
        %7727 = vst [vmem:[%s376 + $0x248] sm:$0xff] %v7599
        %7728 = vst [vmem:[%s376 + $0x250] sm:$0xff] %v7600
        %7729 = vst [vmem:[%s376 + $0x258] sm:$0xff] %v7601
        %7730 = vst [vmem:[%s376 + $0x260] sm:$0xff] %v7602
        %7731 = vst [vmem:[%s376 + $0x268] sm:$0xff] %v7603
        %7732 = vst [vmem:[%s376 + $0x270] sm:$0xff] %v7604
        %7733 = vst [vmem:[%s376 + $0x278] sm:$0xff] %v7605
        %7734 = vst [vmem:[%s376 + $0x280] sm:$0xff] %v7606
        %7735 = vst [vmem:[%s376 + $0x288] sm:$0xff] %v7607
        %7736 = vst [vmem:[%s376 + $0x290] sm:$0xff] %v7608
        %7737 = vst [vmem:[%s376 + $0x298] sm:$0xff] %v7609
        %7738 = vst [vmem:[%s376 + $0x2a0] sm:$0xff] %v7610
        %7739 = vst [vmem:[%s376 + $0x2a8] sm:$0xff] %v7611
        %7740 = vst [vmem:[%s376 + $0x2b0] sm:$0xff] %v7612
        %7741 = vst [vmem:[%s376 + $0x2b8] sm:$0xff] %v7613
        %7742 = vst [vmem:[%s376 + $0x2c0] sm:$0xff] %v7614
        %7743 = vst [vmem:[%s376 + $0x2c8] sm:$0xff] %v7615
        %7744 = vst [vmem:[%s376 + $0x2d0] sm:$0xff] %v7616
        %7745 = vst [vmem:[%s376 + $0x2d8] sm:$0xff] %v7617
        %7746 = vst [vmem:[%s376 + $0x2e0] sm:$0xff] %v7618
        %7747 = vst [vmem:[%s376 + $0x2e8] sm:$0xff] %v7619
        %7748 = vst [vmem:[%s376 + $0x2f0] sm:$0xff] %v7620
        %7749 = vst [vmem:[%s376 + $0x2f8] sm:$0xff] %v7621
        %7750 = vst [vmem:[%s376 + $0x300] sm:$0xff] %v7622
        %7751 = vst [vmem:[%s376 + $0x308] sm:$0xff] %v7623
        %7752 = vst [vmem:[%s376 + $0x310] sm:$0xff] %v7624
        %7753 = vst [vmem:[%s376 + $0x318] sm:$0xff] %v7625
        %7754 = vst [vmem:[%s376 + $0x320] sm:$0xff] %v7626
        %7755 = vst [vmem:[%s376 + $0x328] sm:$0xff] %v7627
        %7756 = vst [vmem:[%s376 + $0x330] sm:$0xff] %v7628
        %7757 = vst [vmem:[%s376 + $0x338] sm:$0xff] %v7629
        %7758 = vst [vmem:[%s376 + $0x340] sm:$0xff] %v7630
        %7759 = vst [vmem:[%s376 + $0x348] sm:$0xff] %v7631
        %7760 = vst [vmem:[%s376 + $0x350] sm:$0xff] %v7632
        %7761 = vst [vmem:[%s376 + $0x358] sm:$0xff] %v7633
        %7762 = vst [vmem:[%s376 + $0x360] sm:$0xff] %v7634
        %7763 = vst [vmem:[%s376 + $0x368] sm:$0xff] %v7635
        %7764 = vst [vmem:[%s376 + $0x370] sm:$0xff] %v7636
        %7765 = vst [vmem:[%s376 + $0x378] sm:$0xff] %v7637
        %7766 = vst [vmem:[%s376 + $0x380] sm:$0xff] %v7638
        %7767 = vst [vmem:[%s376 + $0x388] sm:$0xff] %v7639
        %7768 = vst [vmem:[%s376 + $0x390] sm:$0xff] %v7640
        %7769 = vst [vmem:[%s376 + $0x398] sm:$0xff] %v7641
        %7770 = vst [vmem:[%s376 + $0x3a0] sm:$0xff] %v7642
        %7771 = vst [vmem:[%s376 + $0x3a8] sm:$0xff] %v7643
        %7772 = vst [vmem:[%s376 + $0x3b0] sm:$0xff] %v7644
        %7773 = vst [vmem:[%s376 + $0x3b8] sm:$0xff] %v7645
        %7774 = vst [vmem:[%s376 + $0x3c0] sm:$0xff] %v7646
        %7775 = vst [vmem:[%s376 + $0x3c8] sm:$0xff] %v7647
        %7776 = vst [vmem:[%s376 + $0x3d0] sm:$0xff] %v7648
        %7777 = vst [vmem:[%s376 + $0x3d8] sm:$0xff] %v7649
        %7778 = vst [vmem:[%s376 + $0x3e0] sm:$0xff] %v7650
        %7779 = vst [vmem:[%s376 + $0x3e8] sm:$0xff] %v7651
        %7780 = vst [vmem:[%s376 + $0x3f0] sm:$0xff] %v7652
        %7781 = vst [vmem:[%s376 + $0x3f8] sm:$0xff] %v7653
        %s7782 = sand.u32 %s200, 1
        %s7783 = scalar_lea.sflag [#allocation5], %s7782
        %s7784 = sand.u32 %s200, 1
        %s7785 = smul.addr %s7784, 1024
        %s7786 = scalar_lea.vmem [#allocation12], %s7785
        // Predicated region
        $region73: #{tpu_custom_call.1} parent=47 // pred_check
          %p7787 = pneg %p210
        $region74: #{tpu_custom_call.1} parent=47 // pred_check_branch
          %7789 = sbr.rel (%p7787) target = $region76
        $region75: #{tpu_custom_call.1} parent=47 // pred_region
          %s7790 = smul.u32 16, %s31
          %7792 = vsyncadd %s7783, 0
          %s7793 = smul.addr %s7790, 8
          %s7794 = smul.addr %s30, 128
          %s7795 = sadd.s32 %s7793, %s7794
          %s7796 = smul.addr %s7795, 8
          %s7797 = scalar_lea.hbm %s7, %s7796
          %s7798 = sshll.u32 %s7786, 4
          %s7799 = int_to_ptr.vmem [resolvable:$true] %s7798
          %s7800 = sshll.u32 %s7797, 4
          %s7801 = int_to_ptr.hbm [resolvable:$true] %s7800
          %7806 = dma.vmem_to_hbm [thread:$0]  %s7799, 16384, %s7801, %s7783, 512, 512, 32
        $region76: #{tpu_custom_call.1} parent=47 // pred_fallthru
          _
      $region48: #{tpu_custom_call.1} parent=5 // pred_fallthru
        _
      %p7807 = scmp.le.s32.totalorder 2, %s21
      // Predicated region
      $region77: #{tpu_custom_call.1} parent=5 // pred_check
        %p7808 = pneg %p7807
      $region78: #{tpu_custom_call.1} parent=5 // pred_check_branch
        %7810 = sbr.rel (%p7808) target = $region80
      $region79: #{tpu_custom_call.1} parent=5 // pred_region
        %s7811 = ssub.s32 %s21, 2
        // Predicated region
        $region81: #{tpu_custom_call.1} parent=79 // pred_check
          %p7812 = pneg %p216
        $region82: #{tpu_custom_call.1} parent=79 // pred_check_branch
          %7814 = sbr.rel (%p7812) target = $region84
        $region83: #{tpu_custom_call.1} parent=79 // pred_region
          %s7815 = sand.u32 %s201, 1
          %s7816 = scalar_lea.sflag [#allocation5], %s7815
          %s7817 = sand.u32 %s201, 1
          %s7818 = smul.addr %s7817, 1024
          %s7819 = scalar_lea.vmem [#allocation12], %s7818
          %7821 = dma.done %s7816, 16384
        $region84: #{tpu_custom_call.1} parent=79 // pred_fallthru
          _
      $region80: #{tpu_custom_call.1} parent=5 // pred_fallthru
        _
    $region6: #{tpu_custom_call.1} parent=1 // loop_footer
      %s25 = sadd.s32 1, %s21
    $region7: #{tpu_custom_call.1} parent=1 // loop_footer_branch
      %20 = sbr.rel target = $region3
    $region8: #{tpu_custom_call.1} parent=1 // loop_exit
      _
    %7822 = vsyncpa [#allocation4], 1
    %s7823 = scalar_lea.sflag [#allocation4], 1
    %7824 = vsyncpa %s7823, 1
    %7825 = vsyncpa [#allocation7], 1
    %7826 = vsyncpa [#allocation10], 1
    %7827 = vsyncpa [#allocation5], 1
    %s7828 = scalar_lea.sflag [#allocation5], 1
    %7829 = vsyncpa %s7828, 1

</llo_original>
